<compile_context>
chip_gen: v7x
topology: tpu7x:2x2x1
jax: 0.10.0
libtpu: 0.0.40
codegen_flags: <defaults>
</compile_context>

<pallas_src>
import math

import jax
import jax.numpy as jnp
from jax import lax
from jax.experimental import pallas as pl
from jax.experimental.pallas import tpu as pltpu


# ---------------------------------------------------------------------------
# Pass 1: per-edge messages (+ folded linear_2)  — grid over edge tiles
# ---------------------------------------------------------------------------
def edge_message_kernel(xw_ref, ep_ref, fc1_ref, fc2_ref, w2_ref, mid_ref):
    f32 = jnp.float32
    bf16 = jnp.bfloat16
    TE = ep_ref.shape[0]
    N = xw_ref.shape[0]

    ep = ep_ref[...]                                   # (TE, 16) packed stream
    z = ep[:, 0:8]                                     # edge_scalars
    a_s = ep[:, 8:9]
    a_x = ep[:, 9:10]
    a_y = ep[:, 10:11]
    a_z = ep[:, 11:12]
    src_i = ep[:, 12:13].astype(jnp.int32)             # edge_src (int-in-float, exact)

    # Gather node -> edge: one-hot (TE,N) bf16 x hi/lo-split features (N,64) bf16.
    # One-hot rows are exact in bf16 and hi+lo reconstructs the f32 features,
    # so this runs at the bf16 MXU rate with no precision loss.
    iota_n = lax.broadcasted_iota(jnp.int32, (TE, N), 1)
    gmat = (iota_n == src_i).astype(bf16)              # (TE, N)
    g = jnp.dot(gmat, xw_ref[...], preferred_element_type=f32)     # (TE, 64)
    he = g[:, 0:32] + g[:, 32:64]                      # (TE, 32) == (x @ w1)[src]

    # Per-edge MLP -> tensor-product path weights (norms folded into fc1/fc2).
    h1 = jax.nn.silu(jnp.dot(z, fc1_ref[...], preferred_element_type=f32))
    wtp = jnp.dot(h1, fc2_ref[...], preferred_element_type=f32)    # (TE, 32)
    pw0 = wtp[:, 0:8]      # 0e x 0e -> 0e
    pw1 = wtp[:, 8:16]     # 0e x 1o -> 1o
    pw2 = wtp[:, 16:24]    # 1o x 0e -> 1o
    pw3 = wtp[:, 24:32]    # 1o x 1o -> 0e

    hs = he[:, 0:8]
    hvx = he[:, 8:16]
    hvy = he[:, 16:24]
    hvz = he[:, 24:32]
    inv_s3 = 1.0 / math.sqrt(3.0)
    vdot = hvx * a_x + hvy * a_y + hvz * a_z           # 1o . 1o contraction

    # 'uvu' weighted tensor product as ONE 64-lane-wide product of two
    # concatenated slabs (no narrow masked stores).
    w64 = jnp.concatenate(
        [pw0 * a_s, pw3 * inv_s3, pw1 * a_x, pw2 * a_s,
         pw1 * a_y, pw2 * a_s, pw1 * a_z, pw2 * a_s], axis=1)      # (TE, 64)
    f64 = jnp.concatenate([hs, vdot, hs, hvx, hs, hvy, hs, hvz], axis=1)
    tp64 = w64 * f64                                               # (TE, 64)

    # linear_2 folded here (segment-sum commutes with it); 1/sqrt(16) and
    # 1/sqrt(num_neighbors) folded into w2 in the wrapper.
    mid = jnp.dot(tp64, w2_ref[...], preferred_element_type=f32)   # (TE, 32)

    # Emit hi/lo bf16 split (same HBM bytes as f32x32); pass 2 re-reads `mid`
    # N/TN times, so the split is done once per edge, here.
    mid_hi = mid.astype(bf16)
    mid_lo = (mid - mid_hi.astype(f32)).astype(bf16)
    mid_ref[...] = jnp.concatenate([mid_hi, mid_lo], axis=1)       # one full store


# ---------------------------------------------------------------------------
# Pass 2: scatter-add (edge -> node) + self-connection
#         grid = (node tiles [parallel], edge tiles [arbitrary / reduction])
# ---------------------------------------------------------------------------
def scatter_sc_kernel(dst_ref, mid_ref, x_ref, na_ref, wsc_ref, out_ref):
    f32 = jnp.float32
    bf16 = jnp.bfloat16
    TN = out_ref.shape[0]
    TE = mid_ref.shape[0]
    j = pl.program_id(1)

    # Scatter one-hot built directly in (TN, TE) orientation (edge_dst arrives
    # lane-major (1,TE) -> no transpose).  Loop-invariant iota; the node-tile
    # offset is folded into dst (a (1,TE) subtract, not a (TN,TE) add).
    node0 = pl.program_id(0) * TN
    iota = lax.broadcasted_iota(jnp.int32, (TN, TE), 0)
    dst_rel = dst_ref[...].astype(jnp.int32) - node0               # (1, TE)
    smat = (iota == dst_rel).astype(bf16)                          # (TN, TE)

    part = jnp.dot(smat, mid_ref[...], preferred_element_type=f32)  # (TN, 64)
    contrib = part[:, 0:32] + part[:, 32:64]                        # exact hi+lo

    # Accumulate directly into the resident output block: first edge tile
    # writes, later tiles add (no zero-fill, no scratch->out copy).
    @pl.when(j == 0)
    def _():
        out_ref[...] = contrib

    @pl.when(j > 0)
    def _():
        out_ref[...] += contrib

    @pl.when(j == pl.num_programs(1) - 1)
    def _():
        # self-connection: block-diagonal (32,32) matmul scaled by node_attr.
        sc = jnp.dot(x_ref[...], wsc_ref[...],
                     preferred_element_type=f32) * na_ref[...]
        out_ref[...] += sc


# ---------------------------------------------------------------------------
# Wrapper
# ---------------------------------------------------------------------------
def _block_diag_32(ws, wv):
    """Block-diagonal [ws, wv, wv, wv] -> (32, 32)."""
    W = jnp.zeros((32, 32), jnp.float32)
    W = W.at[0:8, 0:8].set(ws)
    W = W.at[8:16, 8:16].set(wv)
    W = W.at[16:24, 16:24].set(wv)
    W = W.at[24:32, 24:32].set(wv)
    return W


def _block_diag_64(ws, wv):
    """Block-diagonal [ws(16x8), wv, wv, wv] -> (64, 32)."""
    W = jnp.zeros((64, 32), jnp.float32)
    W = W.at[0:16, 0:8].set(ws)
    W = W.at[16:32, 8:16].set(wv)
    W = W.at[32:48, 16:24].set(wv)
    W = W.at[48:64, 24:32].set(wv)
    return W


def convolution_forward(node_input, node_attr, edge_src, edge_dst,
                        edge_attr, edge_scalars, params, num_neighbors,
                        *, edge_tile=512, node_tile=128):
    N = node_input.shape[0]
    E = edge_src.shape[0]
    TE = min(edge_tile, E)
    TN = min(node_tile, N)
    assert E % TE == 0 and N % TN == 0, "toy driver assumes exact tiling"

    inv_s8 = 1.0 / math.sqrt(8.0)
    inv_s16 = 1.0 / math.sqrt(16.0)
    inv_nn = 1.0 / math.sqrt(float(num_neighbors))

    # Fold fan-in / neighbor normalizations into the (tiny) weight matrices.
    w1_blk = _block_diag_32(params["w_lin1_s"], params["w_lin1_v"]) * inv_s8
    w2_blk = _block_diag_64(params["w_lin2_s"], params["w_lin2_v"]) * (inv_s16 * inv_nn)
    wsc_blk = _block_diag_32(params["w_sc_s"], params["w_sc_v"]) * inv_s8
    fc1 = params["w_fc1"].astype(jnp.float32) * inv_s8
    fc2 = params["w_fc2"].astype(jnp.float32) * inv_s16

    x = node_input.astype(jnp.float32)
    na = node_attr.astype(jnp.float32)

    # linear_1 hoisted out of the edge loop: applied once per node here
    # (row-gather commutes with a per-row linear map), O(N) instead of O(E).
    xw = jnp.dot(x, w1_blk)                                        # (N, 32) f32
    # hi/lo bf16 split: the one-hot gather of [hi|lo] reconstructs the f32
    # features exactly while the MXU runs at the bf16 rate.
    xw_hi = xw.astype(jnp.bfloat16)
    xw_lo = (xw - xw_hi.astype(jnp.float32)).astype(jnp.bfloat16)
    xw_cat = jnp.concatenate([xw_hi, xw_lo], axis=1)               # (N, 64) bf16

    # Pack the three per-edge streams into ONE (E,16) array (one DMA stream):
    # [ edge_scalars(8) | edge_attr(4) | edge_src as f32(1) | pad(3) ].
    src_f = edge_src.astype(jnp.float32).reshape(E, 1)
    epack = jnp.concatenate(
        [edge_scalars.astype(jnp.float32), edge_attr.astype(jnp.float32),
         src_f, jnp.zeros((E, 3), jnp.float32)], axis=1)           # (E, 16)
    # edge_dst lane-major (1,E): the (TN,TE) scatter one-hot builds transpose-free.
    dst_f = edge_dst.astype(jnp.float32).reshape(1, E)

    n_et = E // TE
    n_nt = N // TN

    cost1 = pl.CostEstimate(
        flops=int(2 * E * N * 64 + 2 * E * (8 * 16 + 16 * 32 + 64 * 32) + 8 * E * 64),
        transcendentals=int(E * 16),
        bytes_accessed=int(n_et * N * 64 * 2 + E * 16 * 4 + E * 64 * 2))
    cost2 = pl.CostEstimate(
        flops=int(2 * N * E * 64 + 2 * N * 32 * 32 + N * E),
        transcendentals=0,
        bytes_accessed=int(n_nt * E * (64 * 2 + 4) + N * (32 + 1 + 32) * 4))

    # 32 MiB scoped VMEM is safe on every generation (above the v5e 16 MiB
    # default, within the v7x 64 MiB physical).  Re-derive for large N: the
    # (TE,N) gather one-hot and the resident (N,64) feature block scale with N.
    vmem_limit = 32 * 1024 * 1024

    # ---- pass 1: per-edge messages (+ folded linear_2) ----
    mid = pl.pallas_call(
        edge_message_kernel,
        out_shape=jax.ShapeDtypeStruct((E, 64), jnp.bfloat16),
        grid_spec=pltpu.PrefetchScalarGridSpec(
            num_scalar_prefetch=0,
            grid=(n_et,),
            in_specs=[
                pl.BlockSpec((N, 64), lambda j: (0, 0)),    # xw hi|lo (resident)
                pl.BlockSpec((TE, 16), lambda j: (j, 0)),   # packed edge stream
                pl.BlockSpec((8, 16), lambda j: (0, 0)),    # fc1
                pl.BlockSpec((16, 32), lambda j: (0, 0)),   # fc2
                pl.BlockSpec((64, 32), lambda j: (0, 0)),   # lin2 (block-diag)
            ],
            out_specs=pl.BlockSpec((TE, 64), lambda j: (j, 0)),
        ),
        compiler_params=pltpu.CompilerParams(
            dimension_semantics=("parallel",),
            vmem_limit_bytes=vmem_limit),
        cost_estimate=cost1,
    )(xw_cat, epack, fc1, fc2, w2_blk)

    # ---- pass 2: scatter-add + self-connection ----
    out = pl.pallas_call(
        scatter_sc_kernel,
        out_shape=jax.ShapeDtypeStruct((N, 32), jnp.float32),
        grid_spec=pltpu.PrefetchScalarGridSpec(
            num_scalar_prefetch=0,
            grid=(n_nt, n_et),
            in_specs=[
                pl.BlockSpec((1, TE), lambda i, j: (0, j)),    # edge_dst (lane-major)
                # (add pipeline_mode=pl.Buffered(3) here if a DMA bubble remains)
                pl.BlockSpec((TE, 64), lambda i, j: (j, 0)),   # mid messages (bf16 hi|lo)
                pl.BlockSpec((TN, 32), lambda i, j: (i, 0)),   # node_input tile (sc)
                pl.BlockSpec((TN, 1), lambda i, j: (i, 0)),    # node_attr tile
                pl.BlockSpec((32, 32), lambda i, j: (0, 0)),   # sc weights (block-diag)
            ],
            out_specs=pl.BlockSpec((TN, 32), lambda i, j: (i, 0)),  # resident accumulator
        ),
        compiler_params=pltpu.CompilerParams(
            dimension_semantics=("parallel", "arbitrary"),
            vmem_limit_bytes=vmem_limit),
        cost_estimate=cost2,
    )(dst_f, mid, x, na, wsc_blk)

    return out


# ---------------------------------------------------------------------------
# Pure-JAX reference with identical math (gather / segment-sum)
# ---------------------------------------------------------------------------
def reference_forward(node_input, node_attr, edge_src, edge_dst,
                      edge_attr, edge_scalars, params, num_neighbors):
    N = node_input.shape[0]
    inv_s8 = 1.0 / math.sqrt(8.0)
    inv_s16 = 1.0 / math.sqrt(16.0)
    inv_s3 = 1.0 / math.sqrt(3.0)

    xs = node_input[:, 0:8]
    xv = node_input[:, 8:].reshape(N, 3, 8)                # (N, 3, 8) m-major

    hs = xs @ params["w_lin1_s"] * inv_s8
    hv = jnp.einsum("nmu,uk->nmk", xv, params["w_lin1_v"]) * inv_s8

    es = hs[edge_src]                                      # (E, 8)
    ev = hv[edge_src]                                      # (E, 3, 8)

    h1 = jax.nn.silu(edge_scalars @ params["w_fc1"] * inv_s8)
    wtp = h1 @ params["w_fc2"] * inv_s16
    w0, w1, w2, w3 = wtp[:, :8], wtp[:, 8:16], wtp[:, 16:24], wtp[:, 24:32]

    a_s = edge_attr[:, 0:1]
    a_v = edge_attr[:, 1:4]                                # (E, 3)

    m0 = w0 * es * a_s
    m1 = w3 * jnp.einsum("emu,em->eu", ev, a_v) * inv_s3
    m2 = w1[:, None, :] * es[:, None, :] * a_v[:, :, None]      # (E, 3, 8)
    m3 = w2[:, None, :] * ev * a_s[:, :, None]                   # (E, 3, 8)

    mid = jnp.concatenate(
        [m0, m1,
         m2[:, 0], m3[:, 0], m2[:, 1], m3[:, 1], m2[:, 2], m3[:, 2]], axis=1)

    node_mid = jax.ops.segment_sum(mid, edge_dst, num_segments=N)
    node_mid = node_mid / math.sqrt(num_neighbors)

    ns = node_mid[:, 0:16]
    nv = node_mid[:, 16:].reshape(N, 3, 16)

    os_ = ns @ params["w_lin2_s"] * inv_s16
    ov = jnp.einsum("nmu,uk->nmk", nv, params["w_lin2_v"]) * inv_s16

    sc_s = (xs @ params["w_sc_s"]) * node_attr * inv_s8
    sc_v = jnp.einsum("nmu,uk->nmk", xv, params["w_sc_v"]) \
        * node_attr[:, :, None] * inv_s8

    out_v = (ov + sc_v).reshape(N, 24)
    return jnp.concatenate([os_ + sc_s, out_v], axis=1)


if __name__ == "__main__":
    key = jax.random.PRNGKey(0)
    ks = jax.random.split(key, 16)

    N, E = 256, 1024                     # 2 node tiles (TN=128) x 2 edge tiles (TE=512)
    num_neighbors = float(E) / float(N)

    node_input = jax.random.normal(ks[0], (N, 32), jnp.float32)
    node_attr = jax.random.normal(ks[1], (N, 1), jnp.float32)
    edge_src = jax.random.randint(ks[2], (E,), 0, N, dtype=jnp.int32)
    edge_dst = jax.random.randint(ks[3], (E,), 0, N, dtype=jnp.int32)
    edge_attr = jax.random.normal(ks[4], (E, 4), jnp.float32)
    edge_scalars = jax.random.normal(ks[5], (E, 8), jnp.float32)

    params = {
        "w_lin1_s": jax.random.normal(ks[6], (8, 8), jnp.float32),
        "w_lin1_v": jax.random.normal(ks[7], (8, 8), jnp.float32),
        "w_fc1":    jax.random.normal(ks[8], (8, 16), jnp.float32),
        "w_fc2":    jax.random.normal(ks[9], (16, 32), jnp.float32),
        "w_lin2_s": jax.random.normal(ks[10], (16, 8), jnp.float32),
        "w_lin2_v": jax.random.normal(ks[11], (16, 8), jnp.float32),
        "w_sc_s":   jax.random.normal(ks[12], (8, 8), jnp.float32),
        "w_sc_v":   jax.random.normal(ks[13], (8, 8), jnp.float32),
    }

    out = convolution_forward(node_input, node_attr, edge_src, edge_dst,
                              edge_attr, edge_scalars, params, num_neighbors,
                              edge_tile=512, node_tile=128)
    out = jax.block_until_ready(out)

    ref = reference_forward(node_input, node_attr, edge_src, edge_dst,
                            edge_attr, edge_scalars, params, num_neighbors)

    assert out.shape == (N, 32) and out.dtype == jnp.float32
    max_err = float(jnp.max(jnp.abs(out - ref)))
    assert jnp.allclose(out, ref, atol=1e-3, rtol=1e-3), \
        f"max abs err {max_err}"
    print("KERNEL_OK")
</pallas_src>

<mosaic_0001>
module attributes {stable_mosaic.version = 11 : i64} {
  func.func @edge_message_kernel(%arg0: i32, %arg1: memref<256x64xbf16, #tpu.memory_space<vmem>>, %arg2: memref<512x16xf32, #tpu.memory_space<vmem>>, %arg3: memref<8x16xf32, #tpu.memory_space<vmem>>, %arg4: memref<16x32xf32, #tpu.memory_space<vmem>>, %arg5: memref<64x32xf32, #tpu.memory_space<vmem>>, %arg6: memref<512x64xbf16, #tpu.memory_space<vmem>>) attributes {dimension_semantics = [#tpu.dimension_semantics<parallel>], iteration_bounds = array<i64: 2>, scalar_prefetch = 0 : i64, scratch_operands = 0 : i64, tpu.core_type = #tpu.core_type<tc>, window_params = [{pipeline_mode = #tpu.pipeline_mode<synchronous>, transform_indices = @transform_0, window_bounds = array<i64: 256, 64>}, {transform_indices = @transform_1, window_bounds = array<i64: 512, 16>}, {pipeline_mode = #tpu.pipeline_mode<synchronous>, transform_indices = @transform_2, window_bounds = array<i64: 8, 16>}, {pipeline_mode = #tpu.pipeline_mode<synchronous>, transform_indices = @transform_3, window_bounds = array<i64: 16, 32>}, {pipeline_mode = #tpu.pipeline_mode<synchronous>, transform_indices = @transform_4, window_bounds = array<i64: 64, 32>}, {transform_indices = @transform_5, window_bounds = array<i64: 512, 64>}]} {
    %c0 = arith.constant 0 : index
    %c0_0 = arith.constant 0 : index
    %0 = vector.load %arg2[%c0, %c0_0] : memref<512x16xf32, #tpu.memory_space<vmem>>, vector<512x16xf32>
    %1 = vector.extract_strided_slice %0 {offsets = [0, 0], sizes = [512, 8], strides = [1, 1]} : vector<512x16xf32> to vector<512x8xf32>
    %2 = vector.extract_strided_slice %0 {offsets = [0, 8], sizes = [512, 1], strides = [1, 1]} : vector<512x16xf32> to vector<512x1xf32>
    %3 = vector.extract_strided_slice %0 {offsets = [0, 9], sizes = [512, 1], strides = [1, 1]} : vector<512x16xf32> to vector<512x1xf32>
    %4 = vector.extract_strided_slice %0 {offsets = [0, 10], sizes = [512, 1], strides = [1, 1]} : vector<512x16xf32> to vector<512x1xf32>
    %5 = vector.extract_strided_slice %0 {offsets = [0, 11], sizes = [512, 1], strides = [1, 1]} : vector<512x16xf32> to vector<512x1xf32>
    %6 = vector.extract_strided_slice %0 {offsets = [0, 12], sizes = [512, 1], strides = [1, 1]} : vector<512x16xf32> to vector<512x1xf32>
    %7 = arith.fptosi %6 : vector<512x1xf32> to vector<512x1xi32>
    %8 = tpu.iota {dimensions = array<i32: 1>} : vector<512x256xi32>
    %9 = vector.broadcast %7 : vector<512x1xi32> to vector<512x256xi32>
    %10 = arith.cmpi eq, %8, %9 : vector<512x256xi32>
    %11 = arith.extui %10 : vector<512x256xi1> to vector<512x256xi32>
    %12 = arith.sitofp %11 : vector<512x256xi32> to vector<512x256xf32>
    %13 = arith.truncf %12 : vector<512x256xf32> to vector<512x256xbf16>
    %c0_1 = arith.constant 0 : index
    %c0_2 = arith.constant 0 : index
    %14 = vector.load %arg1[%c0_1, %c0_2] : memref<256x64xbf16, #tpu.memory_space<vmem>>, vector<256x64xbf16>
    %cst = arith.constant dense<0.000000e+00> : vector<512x64xf32>
    %15 = tpu.matmul %13, %14, %cst {dimension_numbers = #tpu.dot_dimension_numbers<[1], [0], [0], [1], [0, 0, 1, 1], [], []>} : vector<512x256xbf16>, vector<256x64xbf16>, vector<512x64xf32> -> vector<512x64xf32>
    %16 = vector.extract_strided_slice %15 {offsets = [0, 0], sizes = [512, 32], strides = [1, 1]} : vector<512x64xf32> to vector<512x32xf32>
    %17 = vector.extract_strided_slice %15 {offsets = [0, 32], sizes = [512, 32], strides = [1, 1]} : vector<512x64xf32> to vector<512x32xf32>
    %18 = arith.addf %16, %17 : vector<512x32xf32>
    %c0_3 = arith.constant 0 : index
    %c0_4 = arith.constant 0 : index
    %19 = vector.load %arg3[%c0_3, %c0_4] : memref<8x16xf32, #tpu.memory_space<vmem>>, vector<8x16xf32>
    %cst_5 = arith.constant dense<0.000000e+00> : vector<512x16xf32>
    %20 = tpu.matmul %1, %19, %cst_5 {dimension_numbers = #tpu.dot_dimension_numbers<[1], [0], [0], [1], [0, 0, 1, 1], [], []>} : vector<512x8xf32>, vector<8x16xf32>, vector<512x16xf32> -> vector<512x16xf32>
    %21 = arith.negf %20 : vector<512x16xf32>
    %22 = math.exp %21 : vector<512x16xf32>
    %cst_6 = arith.constant 1.000000e+00 : f32
    %23 = vector.broadcast %cst_6 : f32 to vector<512x16xf32>
    %24 = arith.addf %23, %22 : vector<512x16xf32>
    %25 = arith.divf %23, %24 : vector<512x16xf32>
    %26 = arith.mulf %20, %25 : vector<512x16xf32>
    %c0_7 = arith.constant 0 : index
    %c0_8 = arith.constant 0 : index
    %27 = vector.load %arg4[%c0_7, %c0_8] : memref<16x32xf32, #tpu.memory_space<vmem>>, vector<16x32xf32>
    %cst_9 = arith.constant dense<0.000000e+00> : vector<512x32xf32>
    %28 = tpu.matmul %26, %27, %cst_9 {dimension_numbers = #tpu.dot_dimension_numbers<[1], [0], [0], [1], [0, 0, 1, 1], [], []>} : vector<512x16xf32>, vector<16x32xf32>, vector<512x32xf32> -> vector<512x32xf32>
    %29 = vector.extract_strided_slice %28 {offsets = [0, 0], sizes = [512, 8], strides = [1, 1]} : vector<512x32xf32> to vector<512x8xf32>
    %30 = vector.extract_strided_slice %28 {offsets = [0, 8], sizes = [512, 8], strides = [1, 1]} : vector<512x32xf32> to vector<512x8xf32>
    %31 = vector.extract_strided_slice %28 {offsets = [0, 16], sizes = [512, 8], strides = [1, 1]} : vector<512x32xf32> to vector<512x8xf32>
    %32 = vector.extract_strided_slice %28 {offsets = [0, 24], sizes = [512, 8], strides = [1, 1]} : vector<512x32xf32> to vector<512x8xf32>
    %33 = vector.extract_strided_slice %18 {offsets = [0, 0], sizes = [512, 8], strides = [1, 1]} : vector<512x32xf32> to vector<512x8xf32>
    %34 = vector.extract_strided_slice %18 {offsets = [0, 8], sizes = [512, 8], strides = [1, 1]} : vector<512x32xf32> to vector<512x8xf32>
    %35 = vector.extract_strided_slice %18 {offsets = [0, 16], sizes = [512, 8], strides = [1, 1]} : vector<512x32xf32> to vector<512x8xf32>
    %36 = vector.extract_strided_slice %18 {offsets = [0, 24], sizes = [512, 8], strides = [1, 1]} : vector<512x32xf32> to vector<512x8xf32>
    %37 = vector.broadcast %3 : vector<512x1xf32> to vector<512x8xf32>
    %38 = arith.mulf %34, %37 : vector<512x8xf32>
    %39 = vector.broadcast %4 : vector<512x1xf32> to vector<512x8xf32>
    %40 = arith.mulf %35, %39 : vector<512x8xf32>
    %41 = arith.addf %38, %40 : vector<512x8xf32>
    %42 = vector.broadcast %5 : vector<512x1xf32> to vector<512x8xf32>
    %43 = arith.mulf %36, %42 : vector<512x8xf32>
    %44 = arith.addf %41, %43 : vector<512x8xf32>
    %45 = vector.broadcast %2 : vector<512x1xf32> to vector<512x8xf32>
    %46 = arith.mulf %29, %45 : vector<512x8xf32>
    %cst_10 = arith.constant 0.577350259 : f32
    %47 = vector.broadcast %cst_10 : f32 to vector<512x8xf32>
    %48 = arith.mulf %32, %47 : vector<512x8xf32>
    %49 = vector.broadcast %3 : vector<512x1xf32> to vector<512x8xf32>
    %50 = arith.mulf %30, %49 : vector<512x8xf32>
    %51 = vector.broadcast %2 : vector<512x1xf32> to vector<512x8xf32>
    %52 = arith.mulf %31, %51 : vector<512x8xf32>
    %53 = vector.broadcast %4 : vector<512x1xf32> to vector<512x8xf32>
    %54 = arith.mulf %30, %53 : vector<512x8xf32>
    %55 = vector.broadcast %2 : vector<512x1xf32> to vector<512x8xf32>
    %56 = arith.mulf %31, %55 : vector<512x8xf32>
    %57 = vector.broadcast %5 : vector<512x1xf32> to vector<512x8xf32>
    %58 = arith.mulf %30, %57 : vector<512x8xf32>
    %59 = vector.broadcast %2 : vector<512x1xf32> to vector<512x8xf32>
    %60 = arith.mulf %31, %59 : vector<512x8xf32>
    %61 = tpu.concatenate %46, %48, %50, %52, %54, %56, %58, %60 in 1 : vector<512x8xf32>, vector<512x8xf32>, vector<512x8xf32>, vector<512x8xf32>, vector<512x8xf32>, vector<512x8xf32>, vector<512x8xf32>, vector<512x8xf32> -> vector<512x64xf32>
    %62 = tpu.concatenate %33, %44, %33, %34, %33, %35, %33, %36 in 1 : vector<512x8xf32>, vector<512x8xf32>, vector<512x8xf32>, vector<512x8xf32>, vector<512x8xf32>, vector<512x8xf32>, vector<512x8xf32>, vector<512x8xf32> -> vector<512x64xf32>
    %63 = arith.mulf %61, %62 : vector<512x64xf32>
    %c0_11 = arith.constant 0 : index
    %c0_12 = arith.constant 0 : index
    %64 = vector.load %arg5[%c0_11, %c0_12] : memref<64x32xf32, #tpu.memory_space<vmem>>, vector<64x32xf32>
    %cst_13 = arith.constant dense<0.000000e+00> : vector<512x32xf32>
    %65 = tpu.matmul %63, %64, %cst_13 {dimension_numbers = #tpu.dot_dimension_numbers<[1], [0], [0], [1], [0, 0, 1, 1], [], []>} : vector<512x64xf32>, vector<64x32xf32>, vector<512x32xf32> -> vector<512x32xf32>
    %66 = arith.truncf %65 : vector<512x32xf32> to vector<512x32xbf16>
    %67 = arith.extf %66 : vector<512x32xbf16> to vector<512x32xf32>
    %68 = arith.subf %65, %67 : vector<512x32xf32>
    %69 = arith.truncf %68 : vector<512x32xf32> to vector<512x32xbf16>
    %70 = tpu.concatenate %66, %69 in 1 : vector<512x32xbf16>, vector<512x32xbf16> -> vector<512x64xbf16>
    %c0_14 = arith.constant 0 : index
    %c0_15 = arith.constant 0 : index
    %71 = vector.load %arg6[%c0_14, %c0_15] : memref<512x64xbf16, #tpu.memory_space<vmem>>, vector<512x64xbf16>
    tpu.vector_store %arg6[%c0_14, %c0_15], %70 {strides = array<i32>} : memref<512x64xbf16, #tpu.memory_space<vmem>>, vector<512x64xbf16>,
    return
  }
  func.func @transform_0(%arg0: i32) -> (i32, i32) {
    %c0_i32 = arith.constant 0 : i32
    %c0_i32_0 = arith.constant 0 : i32
    %c0_i32_1 = arith.constant 0 : i32
    return %c0_i32, %c0_i32_0 : i32, i32
  }
  func.func @transform_1(%arg0: i32) -> (i32, i32) {
    %c0_i32 = arith.constant 0 : i32
    %c0_i32_0 = arith.constant 0 : i32
    return %arg0, %c0_i32 : i32, i32
  }
  func.func @transform_2(%arg0: i32) -> (i32, i32) {
    %c0_i32 = arith.constant 0 : i32
    %c0_i32_0 = arith.constant 0 : i32
    %c0_i32_1 = arith.constant 0 : i32
    return %c0_i32, %c0_i32_0 : i32, i32
  }
  func.func @transform_3(%arg0: i32) -> (i32, i32) {
    %c0_i32 = arith.constant 0 : i32
    %c0_i32_0 = arith.constant 0 : i32
    %c0_i32_1 = arith.constant 0 : i32
    return %c0_i32, %c0_i32_0 : i32, i32
  }
  func.func @transform_4(%arg0: i32) -> (i32, i32) {
    %c0_i32 = arith.constant 0 : i32
    %c0_i32_0 = arith.constant 0 : i32
    %c0_i32_1 = arith.constant 0 : i32
    return %c0_i32, %c0_i32_0 : i32, i32
  }
  func.func @transform_5(%arg0: i32) -> (i32, i32) {
    %c0_i32 = arith.constant 0 : i32
    %c0_i32_0 = arith.constant 0 : i32
    return %arg0, %c0_i32 : i32, i32
  }
}

</mosaic_0001>

<llo_original>
// kernel: tpu_custom_call.1
$region0: #{tpu_custom_call.1}
  #allocation0 [shape = 'u32[]', space=smem, size = 0x4, offset = 0x4, fixed_abs, tag = 'smem constant byte address 0x4 - core index']
  #allocation1 [shape = 'u32[144,128]{1,0:T(1,128)}', space=vmem, size = 0x12000, scoped, tag = 'internal scratch']
  %s0 = inlined_call_operand.vmem [shape: bf16[256,64], index: 0, kind: input, shape index: {}]
  %s1 = inlined_call_operand.vmem [shape: f32[1024,16], index: 1, kind: input, shape index: {}]
  %s2 = inlined_call_operand.vmem [shape: f32[8,16], index: 2, kind: input, shape index: {}]
  %s3 = inlined_call_operand.vmem [shape: f32[16,32], index: 3, kind: input, shape index: {}]
  %s4 = inlined_call_operand.vmem [shape: f32[64,32], index: 4, kind: input, shape index: {}]
  %s5 = inlined_call_operand.vmem [shape: bf16[1024,64], index: 5, kind: output, shape index: {}]
  %s6 = sld [smem:[#allocation0]]
  $region53: #{tpu_custom_call.1} parent=0
    _
  %s8 = ssub.s32 1, %s6
  %s9 = scalar_select 0, %s8, %s6
  loop: start=0, step=1, limit=4
  $region2: #{tpu_custom_call.1} parent=0 // loop_pre_header
    _
  $region3: #{tpu_custom_call.1} parent=0 // loop_header
    %s11 = sphi 0, %s15
    %p12 = scmp.ge.s32.totalorder %s11, 4
    %s19 = sphi 0, %s19
    %s21 = sphi 0, %s19
    %s22 = sphi 0, %s21
    %s36 = sphi 0, %s22
    %s42 = sphi 0, %s44
    %s45 = sphi 0, %s42
    %s46 = sphi 0, %s45
    %s62 = sphi 0, %s46
    %s66 = sphi 0, %s66
    %s68 = sphi 0, %s66
    %s69 = sphi 0, %s68
    %s83 = sphi 0, %s69
    %s87 = sphi 0, %s87
    %s89 = sphi 0, %s87
    %s90 = sphi 0, %s89
    %s104 = sphi 0, %s90
    %s108 = sphi 0, %s108
    %s110 = sphi 0, %s108
    %s111 = sphi 0, %s110
    %s125 = sphi 0, %s111
    %s131 = sphi 0, %s133
    %s134 = sphi 0, %s131
    %s135 = sphi 0, %s134
    %s151 = sphi 0, %s135
  $region4: #{tpu_custom_call.1} parent=0 // loop_header_branch
    %14 = sbr.rel (%p12) target = $region8
  $region5: #{tpu_custom_call.1} parent=0 // loop_body
    %s16 = ssub.s32 %s11, 1
    %s17 = ssub.s32 %s11, 2
    %s18 = sadd.s32 %s11, 1
    %s20 = sadd.s32 %s19, 1
    %p23 = scmp.eq.s32.totalorder %s11, 1
    %p24 = scmp.ne.s32.totalorder %s19, %s21
    %p25 = scmp.eq.s32.totalorder %s11, 0
    %p26 = por %p24, %p25
    %p27 = scmp.ne.s32.totalorder %s19, %s21
    %p28 = scmp.eq.s32.totalorder %s16, 1
    %p29 = por %p27, %p28
    %p30 = scmp.ne.s32.totalorder %s21, %s22
    %p31 = scmp.eq.s32.totalorder %s16, 0
    %p32 = por %p30, %p31
    %p33 = scmp.ne.s32.totalorder %s21, %s22
    %p34 = scmp.eq.s32.totalorder %s17, 1
    %p35 = por %p33, %p34
    %p37 = scmp.ne.s32.totalorder %s22, %s36
    %p38 = scmp.eq.s32.totalorder %s17, 0
    %p39 = por %p37, %p38
    %s40 = ssub.s32 %s11, %s18
    %p41 = scmp.eq.s32.totalorder %s40, 0
    %s43 = sadd.s32 %s42, 1
    %s44 = scalar_select %p41, %s42, %s43
    %p47 = pneg %p41
    %p48 = scmp.eq.s32.totalorder %s11, 1
    %p49 = por %p47, %p48
    %p50 = scmp.ne.s32.totalorder %s42, %s45
    %p51 = scmp.eq.s32.totalorder %s11, 0
    %p52 = por %p50, %p51
    %p53 = scmp.ne.s32.totalorder %s42, %s45
    %p54 = scmp.eq.s32.totalorder %s16, 1
    %p55 = por %p53, %p54
    %p56 = scmp.ne.s32.totalorder %s45, %s46
    %p57 = scmp.eq.s32.totalorder %s16, 0
    %p58 = por %p56, %p57
    %p59 = scmp.ne.s32.totalorder %s45, %s46
    %p60 = scmp.eq.s32.totalorder %s17, 1
    %p61 = por %p59, %p60
    %p63 = scmp.ne.s32.totalorder %s46, %s62
    %p64 = scmp.eq.s32.totalorder %s17, 0
    %p65 = por %p63, %p64
    %s67 = sadd.s32 %s66, 1
    %p70 = scmp.eq.s32.totalorder %s11, 1
    %p71 = scmp.ne.s32.totalorder %s66, %s68
    %p72 = scmp.eq.s32.totalorder %s11, 0
    %p73 = por %p71, %p72
    %p74 = scmp.ne.s32.totalorder %s66, %s68
    %p75 = scmp.eq.s32.totalorder %s16, 1
    %p76 = por %p74, %p75
    %p77 = scmp.ne.s32.totalorder %s68, %s69
    %p78 = scmp.eq.s32.totalorder %s16, 0
    %p79 = por %p77, %p78
    %p80 = scmp.ne.s32.totalorder %s68, %s69
    %p81 = scmp.eq.s32.totalorder %s17, 1
    %p82 = por %p80, %p81
    %p84 = scmp.ne.s32.totalorder %s69, %s83
    %p85 = scmp.eq.s32.totalorder %s17, 0
    %p86 = por %p84, %p85
    %s88 = sadd.s32 %s87, 1
    %p91 = scmp.eq.s32.totalorder %s11, 1
    %p92 = scmp.ne.s32.totalorder %s87, %s89
    %p93 = scmp.eq.s32.totalorder %s11, 0
    %p94 = por %p92, %p93
    %p95 = scmp.ne.s32.totalorder %s87, %s89
    %p96 = scmp.eq.s32.totalorder %s16, 1
    %p97 = por %p95, %p96
    %p98 = scmp.ne.s32.totalorder %s89, %s90
    %p99 = scmp.eq.s32.totalorder %s16, 0
    %p100 = por %p98, %p99
    %p101 = scmp.ne.s32.totalorder %s89, %s90
    %p102 = scmp.eq.s32.totalorder %s17, 1
    %p103 = por %p101, %p102
    %p105 = scmp.ne.s32.totalorder %s90, %s104
    %p106 = scmp.eq.s32.totalorder %s17, 0
    %p107 = por %p105, %p106
    %s109 = sadd.s32 %s108, 1
    %p112 = scmp.eq.s32.totalorder %s11, 1
    %p113 = scmp.ne.s32.totalorder %s108, %s110
    %p114 = scmp.eq.s32.totalorder %s11, 0
    %p115 = por %p113, %p114
    %p116 = scmp.ne.s32.totalorder %s108, %s110
    %p117 = scmp.eq.s32.totalorder %s16, 1
    %p118 = por %p116, %p117
    %p119 = scmp.ne.s32.totalorder %s110, %s111
    %p120 = scmp.eq.s32.totalorder %s16, 0
    %p121 = por %p119, %p120
    %p122 = scmp.ne.s32.totalorder %s110, %s111
    %p123 = scmp.eq.s32.totalorder %s17, 1
    %p124 = por %p122, %p123
    %p126 = scmp.ne.s32.totalorder %s111, %s125
    %p127 = scmp.eq.s32.totalorder %s17, 0
    %p128 = por %p126, %p127
    %s129 = ssub.s32 %s11, %s18
    %p130 = scmp.eq.s32.totalorder %s129, 0
    %s132 = sadd.s32 %s131, 1
    %s133 = scalar_select %p130, %s131, %s132
    %p136 = pneg %p130
    %p137 = scmp.eq.s32.totalorder %s11, 1
    %p138 = por %p136, %p137
    %p139 = scmp.ne.s32.totalorder %s131, %s134
    %p140 = scmp.eq.s32.totalorder %s11, 0
    %p141 = por %p139, %p140
    %p142 = scmp.ne.s32.totalorder %s131, %s134
    %p143 = scmp.eq.s32.totalorder %s16, 1
    %p144 = por %p142, %p143
    %p145 = scmp.ne.s32.totalorder %s134, %s135
    %p146 = scmp.eq.s32.totalorder %s16, 0
    %p147 = por %p145, %p146
    %p148 = scmp.ne.s32.totalorder %s134, %s135
    %p149 = scmp.eq.s32.totalorder %s17, 1
    %p150 = por %p148, %p149
    %p152 = scmp.ne.s32.totalorder %s135, %s151
    %p153 = scmp.eq.s32.totalorder %s17, 0
    %p154 = por %p152, %p153
    %p155 = scmp.le.s32.totalorder 1, %s11
    %p156 = scmp.lt.s32.totalorder %s11, 3
    %p157 = pnand %p155, %p156
    %p158 = pneg %p157
    // Predicated region
    $region9: #{tpu_custom_call.1} parent=5 // pred_check
      _
    $region10: #{tpu_custom_call.1} parent=5 // pred_check_branch
      %160 = sbr.rel (%p157) target = $region12
    $region11: #{tpu_custom_call.1} parent=5 // pred_region
      %s161 = ssub.s32 %s11, 1
      // Predicated region
      $region13: #{tpu_custom_call.1} parent=11 // pred_check
        %p162 = pneg %p32
      $region14: #{tpu_custom_call.1} parent=11 // pred_check_branch
        %164 = sbr.rel (%p162) target = $region16
      $region15: #{tpu_custom_call.1} parent=11 // pred_region
        _
      $region16: #{tpu_custom_call.1} parent=11 // pred_fallthru
        _
      // Predicated region
      $region17: #{tpu_custom_call.1} parent=11 // pred_check
        %p165 = pneg %p79
      $region18: #{tpu_custom_call.1} parent=11 // pred_check_branch
        %167 = sbr.rel (%p165) target = $region20
      $region19: #{tpu_custom_call.1} parent=11 // pred_region
        _
      $region20: #{tpu_custom_call.1} parent=11 // pred_fallthru
        _
      // Predicated region
      $region21: #{tpu_custom_call.1} parent=11 // pred_check
        %p168 = pneg %p100
      $region22: #{tpu_custom_call.1} parent=11 // pred_check_branch
        %170 = sbr.rel (%p168) target = $region24
      $region23: #{tpu_custom_call.1} parent=11 // pred_region
        _
      $region24: #{tpu_custom_call.1} parent=11 // pred_fallthru
        _
      // Predicated region
      $region25: #{tpu_custom_call.1} parent=11 // pred_check
        %p171 = pneg %p121
      $region26: #{tpu_custom_call.1} parent=11 // pred_check_branch
        %173 = sbr.rel (%p171) target = $region28
      $region27: #{tpu_custom_call.1} parent=11 // pred_region
        _
      $region28: #{tpu_custom_call.1} parent=11 // pred_fallthru
        _
    $region12: #{tpu_custom_call.1} parent=5 // pred_fallthru
      _
    %p174 = scmp.lt.s32.totalorder %s11, 2
    // Predicated region
    $region29: #{tpu_custom_call.1} parent=5 // pred_check
      %p175 = pneg %p174
    $region30: #{tpu_custom_call.1} parent=5 // pred_check_branch
      %177 = sbr.rel (%p175) target = $region32
    $region31: #{tpu_custom_call.1} parent=5 // pred_region
      // Predicated region
      $region33: #{tpu_custom_call.1} parent=31 // pred_check
        %p178 = pneg %p52
      $region34: #{tpu_custom_call.1} parent=31 // pred_check_branch
        %180 = sbr.rel (%p178) target = $region36
      $region35: #{tpu_custom_call.1} parent=31 // pred_region
        %s181 = smul.u32 64, %s11
        %p182 = scmp.lt.s32.totalorder %s181, 127
        %s183 = scalar_select %p182, %s181, 127
        %s184 = smul.addr %s183, 8
        %s185 = scalar_lea.vmem %s1, %s184
        %s186 = smul.u32 64, %s11
      $region36: #{tpu_custom_call.1} parent=31 // pred_fallthru
        _
    $region32: #{tpu_custom_call.1} parent=5 // pred_fallthru
      _
    %p187 = scmp.le.s32.totalorder 1, %s11
    %p188 = scmp.lt.s32.totalorder %s11, 3
    %p189 = pnand %p187, %p188
    %p190 = pneg %p189
    // Predicated region
    $region37: #{tpu_custom_call.1} parent=5 // pred_check
      _
    $region38: #{tpu_custom_call.1} parent=5 // pred_check_branch
      %192 = sbr.rel (%p189) target = $region40
    $region39: #{tpu_custom_call.1} parent=5 // pred_region
      %s193 = ssub.s32 %s11, 1
      %p194 = pneg %p32
      %p195 = pneg %p29
      %s196 = smul.u32 64, %s16
      %p197 = scmp.lt.s32.totalorder %s196, 127
      %s198 = scalar_select %p197, %s196, 127
      %s199 = smul.addr %s198, 8
      %s200 = scalar_lea.vmem %s1, %s199
      %p201 = pneg %p58
      %p202 = pneg %p55
      %p203 = pneg %p79
      %p204 = pneg %p76
      %p205 = pneg %p100
      %p206 = pneg %p97
      %p207 = pneg %p121
      %p208 = pneg %p118
      %p209 = pneg %p147
      %p210 = pneg %p144
      %s211 = smul.u32 64, %s16
      %p212 = scmp.lt.s32.totalorder %s211, 127
      %s213 = scalar_select %p212, %s211, 127
      %s214 = smul.addr %s213, 4
      %s215 = scalar_lea.vmem %s5, %s214
      %s216 = smul.u32 64, %s16
      %p217 = scmp.lt.s32.totalorder %s216, 127
      %s218 = scalar_select %p217, %s216, 127
      %s219 = smul.addr %s218, 8
      %s220 = scalar_lea.vmem %s1, %s219
      %s221 = smul.u32 64, %s16
      %s222 = smul.u32 64, %s16
      %p223 = scmp.lt.s32.totalorder %s222, 127
      %s224 = scalar_select %p223, %s222, 127
      %s225 = smul.addr %s224, 4
      %s226 = scalar_lea.vmem %s5, %s225
      %s227 = smul.u32 64, %s16
      %v229 = vld [vmem:[%s220] sm:$0xff]
      %v230 = vld [vmem:[%s220 + $0x8] sm:$0xff]
      %v231 = vld [vmem:[%s220 + $0x10] sm:$0xff]
      %v232 = vld [vmem:[%s220 + $0x18] sm:$0xff]
      %v233 = vld [vmem:[%s220 + $0x20] sm:$0xff]
      %v234 = vld [vmem:[%s220 + $0x28] sm:$0xff]
      %v235 = vld [vmem:[%s220 + $0x30] sm:$0xff]
      %v236 = vld [vmem:[%s220 + $0x38] sm:$0xff]
      %v237 = vld [vmem:[%s220 + $0x40] sm:$0xff]
      %v238 = vld [vmem:[%s220 + $0x48] sm:$0xff]
      %v239 = vld [vmem:[%s220 + $0x50] sm:$0xff]
      %v240 = vld [vmem:[%s220 + $0x58] sm:$0xff]
      %v241 = vld [vmem:[%s220 + $0x60] sm:$0xff]
      %v242 = vld [vmem:[%s220 + $0x68] sm:$0xff]
      %v243 = vld [vmem:[%s220 + $0x70] sm:$0xff]
      %v244 = vld [vmem:[%s220 + $0x78] sm:$0xff]
      %v245 = vld [vmem:[%s220 + $0x80] sm:$0xff]
      %v246 = vld [vmem:[%s220 + $0x88] sm:$0xff]
      %v247 = vld [vmem:[%s220 + $0x90] sm:$0xff]
      %v248 = vld [vmem:[%s220 + $0x98] sm:$0xff]
      %v249 = vld [vmem:[%s220 + $0xa0] sm:$0xff]
      %v250 = vld [vmem:[%s220 + $0xa8] sm:$0xff]
      %v251 = vld [vmem:[%s220 + $0xb0] sm:$0xff]
      %v252 = vld [vmem:[%s220 + $0xb8] sm:$0xff]
      %v253 = vld [vmem:[%s220 + $0xc0] sm:$0xff]
      %v254 = vld [vmem:[%s220 + $0xc8] sm:$0xff]
      %v255 = vld [vmem:[%s220 + $0xd0] sm:$0xff]
      %v256 = vld [vmem:[%s220 + $0xd8] sm:$0xff]
      %v257 = vld [vmem:[%s220 + $0xe0] sm:$0xff]
      %v258 = vld [vmem:[%s220 + $0xe8] sm:$0xff]
      %v259 = vld [vmem:[%s220 + $0xf0] sm:$0xff]
      %v260 = vld [vmem:[%s220 + $0xf8] sm:$0xff]
      %v261 = vld [vmem:[%s220 + $0x100] sm:$0xff]
      %v262 = vld [vmem:[%s220 + $0x108] sm:$0xff]
      %v263 = vld [vmem:[%s220 + $0x110] sm:$0xff]
      %v264 = vld [vmem:[%s220 + $0x118] sm:$0xff]
      %v265 = vld [vmem:[%s220 + $0x120] sm:$0xff]
      %v266 = vld [vmem:[%s220 + $0x128] sm:$0xff]
      %v267 = vld [vmem:[%s220 + $0x130] sm:$0xff]
      %v268 = vld [vmem:[%s220 + $0x138] sm:$0xff]
      %v269 = vld [vmem:[%s220 + $0x140] sm:$0xff]
      %v270 = vld [vmem:[%s220 + $0x148] sm:$0xff]
      %v271 = vld [vmem:[%s220 + $0x150] sm:$0xff]
      %v272 = vld [vmem:[%s220 + $0x158] sm:$0xff]
      %v273 = vld [vmem:[%s220 + $0x160] sm:$0xff]
      %v274 = vld [vmem:[%s220 + $0x168] sm:$0xff]
      %v275 = vld [vmem:[%s220 + $0x170] sm:$0xff]
      %v276 = vld [vmem:[%s220 + $0x178] sm:$0xff]
      %v277 = vld [vmem:[%s220 + $0x180] sm:$0xff]
      %v278 = vld [vmem:[%s220 + $0x188] sm:$0xff]
      %v279 = vld [vmem:[%s220 + $0x190] sm:$0xff]
      %v280 = vld [vmem:[%s220 + $0x198] sm:$0xff]
      %v281 = vld [vmem:[%s220 + $0x1a0] sm:$0xff]
      %v282 = vld [vmem:[%s220 + $0x1a8] sm:$0xff]
      %v283 = vld [vmem:[%s220 + $0x1b0] sm:$0xff]
      %v284 = vld [vmem:[%s220 + $0x1b8] sm:$0xff]
      %v285 = vld [vmem:[%s220 + $0x1c0] sm:$0xff]
      %v286 = vld [vmem:[%s220 + $0x1c8] sm:$0xff]
      %v287 = vld [vmem:[%s220 + $0x1d0] sm:$0xff]
      %v288 = vld [vmem:[%s220 + $0x1d8] sm:$0xff]
      %v289 = vld [vmem:[%s220 + $0x1e0] sm:$0xff]
      %v290 = vld [vmem:[%s220 + $0x1e8] sm:$0xff]
      %v291 = vld [vmem:[%s220 + $0x1f0] sm:$0xff]
      %v292 = vld [vmem:[%s220 + $0x1f8] sm:$0xff]
      %v293 = vcvt.f32.s32.to.zero.pseudo %v229
      %v294 = vcvt.f32.s32.to.zero.pseudo %v230
      %v295 = vcvt.f32.s32.to.zero.pseudo %v231
      %v296 = vcvt.f32.s32.to.zero.pseudo %v232
      %v297 = vcvt.f32.s32.to.zero.pseudo %v233
      %v298 = vcvt.f32.s32.to.zero.pseudo %v234
      %v299 = vcvt.f32.s32.to.zero.pseudo %v235
      %v300 = vcvt.f32.s32.to.zero.pseudo %v236
      %v301 = vcvt.f32.s32.to.zero.pseudo %v237
      %v302 = vcvt.f32.s32.to.zero.pseudo %v238
      %v303 = vcvt.f32.s32.to.zero.pseudo %v239
      %v304 = vcvt.f32.s32.to.zero.pseudo %v240
      %v305 = vcvt.f32.s32.to.zero.pseudo %v241
      %v306 = vcvt.f32.s32.to.zero.pseudo %v242
      %v307 = vcvt.f32.s32.to.zero.pseudo %v243
      %v308 = vcvt.f32.s32.to.zero.pseudo %v244
      %v309 = vcvt.f32.s32.to.zero.pseudo %v245
      %v310 = vcvt.f32.s32.to.zero.pseudo %v246
      %v311 = vcvt.f32.s32.to.zero.pseudo %v247
      %v312 = vcvt.f32.s32.to.zero.pseudo %v248
      %v313 = vcvt.f32.s32.to.zero.pseudo %v249
      %v314 = vcvt.f32.s32.to.zero.pseudo %v250
      %v315 = vcvt.f32.s32.to.zero.pseudo %v251
      %v316 = vcvt.f32.s32.to.zero.pseudo %v252
      %v317 = vcvt.f32.s32.to.zero.pseudo %v253
      %v318 = vcvt.f32.s32.to.zero.pseudo %v254
      %v319 = vcvt.f32.s32.to.zero.pseudo %v255
      %v320 = vcvt.f32.s32.to.zero.pseudo %v256
      %v321 = vcvt.f32.s32.to.zero.pseudo %v257
      %v322 = vcvt.f32.s32.to.zero.pseudo %v258
      %v323 = vcvt.f32.s32.to.zero.pseudo %v259
      %v324 = vcvt.f32.s32.to.zero.pseudo %v260
      %v325 = vcvt.f32.s32.to.zero.pseudo %v261
      %v326 = vcvt.f32.s32.to.zero.pseudo %v262
      %v327 = vcvt.f32.s32.to.zero.pseudo %v263
      %v328 = vcvt.f32.s32.to.zero.pseudo %v264
      %v329 = vcvt.f32.s32.to.zero.pseudo %v265
      %v330 = vcvt.f32.s32.to.zero.pseudo %v266
      %v331 = vcvt.f32.s32.to.zero.pseudo %v267
      %v332 = vcvt.f32.s32.to.zero.pseudo %v268
      %v333 = vcvt.f32.s32.to.zero.pseudo %v269
      %v334 = vcvt.f32.s32.to.zero.pseudo %v270
      %v335 = vcvt.f32.s32.to.zero.pseudo %v271
      %v336 = vcvt.f32.s32.to.zero.pseudo %v272
      %v337 = vcvt.f32.s32.to.zero.pseudo %v273
      %v338 = vcvt.f32.s32.to.zero.pseudo %v274
      %v339 = vcvt.f32.s32.to.zero.pseudo %v275
      %v340 = vcvt.f32.s32.to.zero.pseudo %v276
      %v341 = vcvt.f32.s32.to.zero.pseudo %v277
      %v342 = vcvt.f32.s32.to.zero.pseudo %v278
      %v343 = vcvt.f32.s32.to.zero.pseudo %v279
      %v344 = vcvt.f32.s32.to.zero.pseudo %v280
      %v345 = vcvt.f32.s32.to.zero.pseudo %v281
      %v346 = vcvt.f32.s32.to.zero.pseudo %v282
      %v347 = vcvt.f32.s32.to.zero.pseudo %v283
      %v348 = vcvt.f32.s32.to.zero.pseudo %v284
      %v349 = vcvt.f32.s32.to.zero.pseudo %v285
      %v350 = vcvt.f32.s32.to.zero.pseudo %v286
      %v351 = vcvt.f32.s32.to.zero.pseudo %v287
      %v352 = vcvt.f32.s32.to.zero.pseudo %v288
      %v353 = vcvt.f32.s32.to.zero.pseudo %v289
      %v354 = vcvt.f32.s32.to.zero.pseudo %v290
      %v355 = vcvt.f32.s32.to.zero.pseudo %v291
      %v356 = vcvt.f32.s32.to.zero.pseudo %v292
      %v357 = vlaneseq
      %v358 = vand.u32 %v357, 127
      %v359 = vadd.s32 %v358, 128
      %360 = vset.pattern.permute.xlu0 12
      %361 = vperm.xlu0 %360, %v293
      %v362 = vpop.permute.xlu0 %361
      %363 = vset.pattern.permute.xlu0 12
      %364 = vperm.xlu0 %363, %v294
      %v365 = vpop.permute.xlu0 %364
      %366 = vset.pattern.permute.xlu0 12
      %367 = vperm.xlu0 %366, %v295
      %v368 = vpop.permute.xlu0 %367
      %369 = vset.pattern.permute.xlu0 12
      %370 = vperm.xlu0 %369, %v296
      %v371 = vpop.permute.xlu0 %370
      %372 = vset.pattern.permute.xlu0 12
      %373 = vperm.xlu0 %372, %v297
      %v374 = vpop.permute.xlu0 %373
      %375 = vset.pattern.permute.xlu0 12
      %376 = vperm.xlu0 %375, %v298
      %v377 = vpop.permute.xlu0 %376
      %378 = vset.pattern.permute.xlu0 12
      %379 = vperm.xlu0 %378, %v299
      %v380 = vpop.permute.xlu0 %379
      %381 = vset.pattern.permute.xlu0 12
      %382 = vperm.xlu0 %381, %v300
      %v383 = vpop.permute.xlu0 %382
      %384 = vset.pattern.permute.xlu0 12
      %385 = vperm.xlu0 %384, %v301
      %v386 = vpop.permute.xlu0 %385
      %387 = vset.pattern.permute.xlu0 12
      %388 = vperm.xlu0 %387, %v302
      %v389 = vpop.permute.xlu0 %388
      %390 = vset.pattern.permute.xlu0 12
      %391 = vperm.xlu0 %390, %v303
      %v392 = vpop.permute.xlu0 %391
      %393 = vset.pattern.permute.xlu0 12
      %394 = vperm.xlu0 %393, %v304
      %v395 = vpop.permute.xlu0 %394
      %396 = vset.pattern.permute.xlu0 12
      %397 = vperm.xlu0 %396, %v305
      %v398 = vpop.permute.xlu0 %397
      %399 = vset.pattern.permute.xlu0 12
      %400 = vperm.xlu0 %399, %v306
      %v401 = vpop.permute.xlu0 %400
      %402 = vset.pattern.permute.xlu0 12
      %403 = vperm.xlu0 %402, %v307
      %v404 = vpop.permute.xlu0 %403
      %405 = vset.pattern.permute.xlu0 12
      %406 = vperm.xlu0 %405, %v308
      %v407 = vpop.permute.xlu0 %406
      %408 = vset.pattern.permute.xlu0 12
      %409 = vperm.xlu0 %408, %v309
      %v410 = vpop.permute.xlu0 %409
      %411 = vset.pattern.permute.xlu0 12
      %412 = vperm.xlu0 %411, %v310
      %v413 = vpop.permute.xlu0 %412
      %414 = vset.pattern.permute.xlu0 12
      %415 = vperm.xlu0 %414, %v311
      %v416 = vpop.permute.xlu0 %415
      %417 = vset.pattern.permute.xlu0 12
      %418 = vperm.xlu0 %417, %v312
      %v419 = vpop.permute.xlu0 %418
      %420 = vset.pattern.permute.xlu0 12
      %421 = vperm.xlu0 %420, %v313
      %v422 = vpop.permute.xlu0 %421
      %423 = vset.pattern.permute.xlu0 12
      %424 = vperm.xlu0 %423, %v314
      %v425 = vpop.permute.xlu0 %424
      %426 = vset.pattern.permute.xlu0 12
      %427 = vperm.xlu0 %426, %v315
      %v428 = vpop.permute.xlu0 %427
      %429 = vset.pattern.permute.xlu0 12
      %430 = vperm.xlu0 %429, %v316
      %v431 = vpop.permute.xlu0 %430
      %432 = vset.pattern.permute.xlu0 12
      %433 = vperm.xlu0 %432, %v317
      %v434 = vpop.permute.xlu0 %433
      %435 = vset.pattern.permute.xlu0 12
      %436 = vperm.xlu0 %435, %v318
      %v437 = vpop.permute.xlu0 %436
      %438 = vset.pattern.permute.xlu0 12
      %439 = vperm.xlu0 %438, %v319
      %v440 = vpop.permute.xlu0 %439
      %441 = vset.pattern.permute.xlu0 12
      %442 = vperm.xlu0 %441, %v320
      %v443 = vpop.permute.xlu0 %442
      %444 = vset.pattern.permute.xlu0 12
      %445 = vperm.xlu0 %444, %v321
      %v446 = vpop.permute.xlu0 %445
      %447 = vset.pattern.permute.xlu0 12
      %448 = vperm.xlu0 %447, %v322
      %v449 = vpop.permute.xlu0 %448
      %450 = vset.pattern.permute.xlu0 12
      %451 = vperm.xlu0 %450, %v323
      %v452 = vpop.permute.xlu0 %451
      %453 = vset.pattern.permute.xlu0 12
      %454 = vperm.xlu0 %453, %v324
      %v455 = vpop.permute.xlu0 %454
      %456 = vset.pattern.permute.xlu0 12
      %457 = vperm.xlu0 %456, %v325
      %v458 = vpop.permute.xlu0 %457
      %459 = vset.pattern.permute.xlu0 12
      %460 = vperm.xlu0 %459, %v326
      %v461 = vpop.permute.xlu0 %460
      %462 = vset.pattern.permute.xlu0 12
      %463 = vperm.xlu0 %462, %v327
      %v464 = vpop.permute.xlu0 %463
      %465 = vset.pattern.permute.xlu0 12
      %466 = vperm.xlu0 %465, %v328
      %v467 = vpop.permute.xlu0 %466
      %468 = vset.pattern.permute.xlu0 12
      %469 = vperm.xlu0 %468, %v329
      %v470 = vpop.permute.xlu0 %469
      %471 = vset.pattern.permute.xlu0 12
      %472 = vperm.xlu0 %471, %v330
      %v473 = vpop.permute.xlu0 %472
      %474 = vset.pattern.permute.xlu0 12
      %475 = vperm.xlu0 %474, %v331
      %v476 = vpop.permute.xlu0 %475
      %477 = vset.pattern.permute.xlu0 12
      %478 = vperm.xlu0 %477, %v332
      %v479 = vpop.permute.xlu0 %478
      %480 = vset.pattern.permute.xlu0 12
      %481 = vperm.xlu0 %480, %v333
      %v482 = vpop.permute.xlu0 %481
      %483 = vset.pattern.permute.xlu0 12
      %484 = vperm.xlu0 %483, %v334
      %v485 = vpop.permute.xlu0 %484
      %486 = vset.pattern.permute.xlu0 12
      %487 = vperm.xlu0 %486, %v335
      %v488 = vpop.permute.xlu0 %487
      %489 = vset.pattern.permute.xlu0 12
      %490 = vperm.xlu0 %489, %v336
      %v491 = vpop.permute.xlu0 %490
      %492 = vset.pattern.permute.xlu0 12
      %493 = vperm.xlu0 %492, %v337
      %v494 = vpop.permute.xlu0 %493
      %495 = vset.pattern.permute.xlu0 12
      %496 = vperm.xlu0 %495, %v338
      %v497 = vpop.permute.xlu0 %496
      %498 = vset.pattern.permute.xlu0 12
      %499 = vperm.xlu0 %498, %v339
      %v500 = vpop.permute.xlu0 %499
      %501 = vset.pattern.permute.xlu0 12
      %502 = vperm.xlu0 %501, %v340
      %v503 = vpop.permute.xlu0 %502
      %504 = vset.pattern.permute.xlu0 12
      %505 = vperm.xlu0 %504, %v341
      %v506 = vpop.permute.xlu0 %505
      %507 = vset.pattern.permute.xlu0 12
      %508 = vperm.xlu0 %507, %v342
      %v509 = vpop.permute.xlu0 %508
      %510 = vset.pattern.permute.xlu0 12
      %511 = vperm.xlu0 %510, %v343
      %v512 = vpop.permute.xlu0 %511
      %513 = vset.pattern.permute.xlu0 12
      %514 = vperm.xlu0 %513, %v344
      %v515 = vpop.permute.xlu0 %514
      %516 = vset.pattern.permute.xlu0 12
      %517 = vperm.xlu0 %516, %v345
      %v518 = vpop.permute.xlu0 %517
      %519 = vset.pattern.permute.xlu0 12
      %520 = vperm.xlu0 %519, %v346
      %v521 = vpop.permute.xlu0 %520
      %522 = vset.pattern.permute.xlu0 12
      %523 = vperm.xlu0 %522, %v347
      %v524 = vpop.permute.xlu0 %523
      %525 = vset.pattern.permute.xlu0 12
      %526 = vperm.xlu0 %525, %v348
      %v527 = vpop.permute.xlu0 %526
      %528 = vset.pattern.permute.xlu0 12
      %529 = vperm.xlu0 %528, %v349
      %v530 = vpop.permute.xlu0 %529
      %531 = vset.pattern.permute.xlu0 12
      %532 = vperm.xlu0 %531, %v350
      %v533 = vpop.permute.xlu0 %532
      %534 = vset.pattern.permute.xlu0 12
      %535 = vperm.xlu0 %534, %v351
      %v536 = vpop.permute.xlu0 %535
      %537 = vset.pattern.permute.xlu0 12
      %538 = vperm.xlu0 %537, %v352
      %v539 = vpop.permute.xlu0 %538
      %540 = vset.pattern.permute.xlu0 12
      %541 = vperm.xlu0 %540, %v353
      %v542 = vpop.permute.xlu0 %541
      %543 = vset.pattern.permute.xlu0 12
      %544 = vperm.xlu0 %543, %v354
      %v545 = vpop.permute.xlu0 %544
      %546 = vset.pattern.permute.xlu0 12
      %547 = vperm.xlu0 %546, %v355
      %v548 = vpop.permute.xlu0 %547
      %549 = vset.pattern.permute.xlu0 12
      %550 = vperm.xlu0 %549, %v356
      %v551 = vpop.permute.xlu0 %550
      %vm552 = vcmp.eq.s32.totalorder %v358, %v362
      %vm553 = vcmp.eq.s32.totalorder %v359, %v362
      %vm554 = vcmp.eq.s32.totalorder %v358, %v365
      %vm555 = vcmp.eq.s32.totalorder %v359, %v365
      %vm556 = vcmp.eq.s32.totalorder %v358, %v368
      %vm557 = vcmp.eq.s32.totalorder %v359, %v368
      %vm558 = vcmp.eq.s32.totalorder %v358, %v371
      %vm559 = vcmp.eq.s32.totalorder %v359, %v371
      %vm560 = vcmp.eq.s32.totalorder %v358, %v374
      %vm561 = vcmp.eq.s32.totalorder %v359, %v374
      %vm562 = vcmp.eq.s32.totalorder %v358, %v377
      %vm563 = vcmp.eq.s32.totalorder %v359, %v377
      %vm564 = vcmp.eq.s32.totalorder %v358, %v380
      %vm565 = vcmp.eq.s32.totalorder %v359, %v380
      %vm566 = vcmp.eq.s32.totalorder %v358, %v383
      %vm567 = vcmp.eq.s32.totalorder %v359, %v383
      %vm568 = vcmp.eq.s32.totalorder %v358, %v386
      %vm569 = vcmp.eq.s32.totalorder %v359, %v386
      %vm570 = vcmp.eq.s32.totalorder %v358, %v389
      %vm571 = vcmp.eq.s32.totalorder %v359, %v389
      %vm572 = vcmp.eq.s32.totalorder %v358, %v392
      %vm573 = vcmp.eq.s32.totalorder %v359, %v392
      %vm574 = vcmp.eq.s32.totalorder %v358, %v395
      %vm575 = vcmp.eq.s32.totalorder %v359, %v395
      %vm576 = vcmp.eq.s32.totalorder %v358, %v398
      %vm577 = vcmp.eq.s32.totalorder %v359, %v398
      %vm578 = vcmp.eq.s32.totalorder %v358, %v401
      %vm579 = vcmp.eq.s32.totalorder %v359, %v401
      %vm580 = vcmp.eq.s32.totalorder %v358, %v404
      %vm581 = vcmp.eq.s32.totalorder %v359, %v404
      %vm582 = vcmp.eq.s32.totalorder %v358, %v407
      %vm583 = vcmp.eq.s32.totalorder %v359, %v407
      %vm584 = vcmp.eq.s32.totalorder %v358, %v410
      %vm585 = vcmp.eq.s32.totalorder %v359, %v410
      %vm586 = vcmp.eq.s32.totalorder %v358, %v413
      %vm587 = vcmp.eq.s32.totalorder %v359, %v413
      %vm588 = vcmp.eq.s32.totalorder %v358, %v416
      %vm589 = vcmp.eq.s32.totalorder %v359, %v416
      %vm590 = vcmp.eq.s32.totalorder %v358, %v419
      %vm591 = vcmp.eq.s32.totalorder %v359, %v419
      %vm592 = vcmp.eq.s32.totalorder %v358, %v422
      %vm593 = vcmp.eq.s32.totalorder %v359, %v422
      %vm594 = vcmp.eq.s32.totalorder %v358, %v425
      %vm595 = vcmp.eq.s32.totalorder %v359, %v425
      %vm596 = vcmp.eq.s32.totalorder %v358, %v428
      %vm597 = vcmp.eq.s32.totalorder %v359, %v428
      %vm598 = vcmp.eq.s32.totalorder %v358, %v431
      %vm599 = vcmp.eq.s32.totalorder %v359, %v431
      %vm600 = vcmp.eq.s32.totalorder %v358, %v434
      %vm601 = vcmp.eq.s32.totalorder %v359, %v434
      %vm602 = vcmp.eq.s32.totalorder %v358, %v437
      %vm603 = vcmp.eq.s32.totalorder %v359, %v437
      %vm604 = vcmp.eq.s32.totalorder %v358, %v440
      %vm605 = vcmp.eq.s32.totalorder %v359, %v440
      %vm606 = vcmp.eq.s32.totalorder %v358, %v443
      %vm607 = vcmp.eq.s32.totalorder %v359, %v443
      %vm608 = vcmp.eq.s32.totalorder %v358, %v446
      %vm609 = vcmp.eq.s32.totalorder %v359, %v446
      %vm610 = vcmp.eq.s32.totalorder %v358, %v449
      %vm611 = vcmp.eq.s32.totalorder %v359, %v449
      %vm612 = vcmp.eq.s32.totalorder %v358, %v452
      %vm613 = vcmp.eq.s32.totalorder %v359, %v452
      %vm614 = vcmp.eq.s32.totalorder %v358, %v455
      %vm615 = vcmp.eq.s32.totalorder %v359, %v455
      %vm616 = vcmp.eq.s32.totalorder %v358, %v458
      %vm617 = vcmp.eq.s32.totalorder %v359, %v458
      %vm618 = vcmp.eq.s32.totalorder %v358, %v461
      %vm619 = vcmp.eq.s32.totalorder %v359, %v461
      %vm620 = vcmp.eq.s32.totalorder %v358, %v464
      %vm621 = vcmp.eq.s32.totalorder %v359, %v464
      %vm622 = vcmp.eq.s32.totalorder %v358, %v467
      %vm623 = vcmp.eq.s32.totalorder %v359, %v467
      %vm624 = vcmp.eq.s32.totalorder %v358, %v470
      %vm625 = vcmp.eq.s32.totalorder %v359, %v470
      %vm626 = vcmp.eq.s32.totalorder %v358, %v473
      %vm627 = vcmp.eq.s32.totalorder %v359, %v473
      %vm628 = vcmp.eq.s32.totalorder %v358, %v476
      %vm629 = vcmp.eq.s32.totalorder %v359, %v476
      %vm630 = vcmp.eq.s32.totalorder %v358, %v479
      %vm631 = vcmp.eq.s32.totalorder %v359, %v479
      %vm632 = vcmp.eq.s32.totalorder %v358, %v482
      %vm633 = vcmp.eq.s32.totalorder %v359, %v482
      %vm634 = vcmp.eq.s32.totalorder %v358, %v485
      %vm635 = vcmp.eq.s32.totalorder %v359, %v485
      %vm636 = vcmp.eq.s32.totalorder %v358, %v488
      %vm637 = vcmp.eq.s32.totalorder %v359, %v488
      %vm638 = vcmp.eq.s32.totalorder %v358, %v491
      %vm639 = vcmp.eq.s32.totalorder %v359, %v491
      %vm640 = vcmp.eq.s32.totalorder %v358, %v494
      %vm641 = vcmp.eq.s32.totalorder %v359, %v494
      %vm642 = vcmp.eq.s32.totalorder %v358, %v497
      %vm643 = vcmp.eq.s32.totalorder %v359, %v497
      %vm644 = vcmp.eq.s32.totalorder %v358, %v500
      %vm645 = vcmp.eq.s32.totalorder %v359, %v500
      %vm646 = vcmp.eq.s32.totalorder %v358, %v503
      %vm647 = vcmp.eq.s32.totalorder %v359, %v503
      %vm648 = vcmp.eq.s32.totalorder %v358, %v506
      %vm649 = vcmp.eq.s32.totalorder %v359, %v506
      %vm650 = vcmp.eq.s32.totalorder %v358, %v509
      %vm651 = vcmp.eq.s32.totalorder %v359, %v509
      %vm652 = vcmp.eq.s32.totalorder %v358, %v512
      %vm653 = vcmp.eq.s32.totalorder %v359, %v512
      %vm654 = vcmp.eq.s32.totalorder %v358, %v515
      %vm655 = vcmp.eq.s32.totalorder %v359, %v515
      %vm656 = vcmp.eq.s32.totalorder %v358, %v518
      %vm657 = vcmp.eq.s32.totalorder %v359, %v518
      %vm658 = vcmp.eq.s32.totalorder %v358, %v521
      %vm659 = vcmp.eq.s32.totalorder %v359, %v521
      %vm660 = vcmp.eq.s32.totalorder %v358, %v524
      %vm661 = vcmp.eq.s32.totalorder %v359, %v524
      %vm662 = vcmp.eq.s32.totalorder %v358, %v527
      %vm663 = vcmp.eq.s32.totalorder %v359, %v527
      %vm664 = vcmp.eq.s32.totalorder %v358, %v530
      %vm665 = vcmp.eq.s32.totalorder %v359, %v530
      %vm666 = vcmp.eq.s32.totalorder %v358, %v533
      %vm667 = vcmp.eq.s32.totalorder %v359, %v533
      %vm668 = vcmp.eq.s32.totalorder %v358, %v536
      %vm669 = vcmp.eq.s32.totalorder %v359, %v536
      %vm670 = vcmp.eq.s32.totalorder %v358, %v539
      %vm671 = vcmp.eq.s32.totalorder %v359, %v539
      %vm672 = vcmp.eq.s32.totalorder %v358, %v542
      %vm673 = vcmp.eq.s32.totalorder %v359, %v542
      %vm674 = vcmp.eq.s32.totalorder %v358, %v545
      %vm675 = vcmp.eq.s32.totalorder %v359, %v545
      %vm676 = vcmp.eq.s32.totalorder %v358, %v548
      %vm677 = vcmp.eq.s32.totalorder %v359, %v548
      %vm678 = vcmp.eq.s32.totalorder %v358, %v551
      %vm679 = vcmp.eq.s32.totalorder %v359, %v551
      %v680 = vsel %vm552, 1, 0
      %v681 = vsel %vm553, 1, 0
      %v682 = vsel %vm554, 1, 0
      %v683 = vsel %vm555, 1, 0
      %v684 = vsel %vm556, 1, 0
      %v685 = vsel %vm557, 1, 0
      %v686 = vsel %vm558, 1, 0
      %v687 = vsel %vm559, 1, 0
      %v688 = vsel %vm560, 1, 0
      %v689 = vsel %vm561, 1, 0
      %v690 = vsel %vm562, 1, 0
      %v691 = vsel %vm563, 1, 0
      %v692 = vsel %vm564, 1, 0
      %v693 = vsel %vm565, 1, 0
      %v694 = vsel %vm566, 1, 0
      %v695 = vsel %vm567, 1, 0
      %v696 = vsel %vm568, 1, 0
      %v697 = vsel %vm569, 1, 0
      %v698 = vsel %vm570, 1, 0
      %v699 = vsel %vm571, 1, 0
      %v700 = vsel %vm572, 1, 0
      %v701 = vsel %vm573, 1, 0
      %v702 = vsel %vm574, 1, 0
      %v703 = vsel %vm575, 1, 0
      %v704 = vsel %vm576, 1, 0
      %v705 = vsel %vm577, 1, 0
      %v706 = vsel %vm578, 1, 0
      %v707 = vsel %vm579, 1, 0
      %v708 = vsel %vm580, 1, 0
      %v709 = vsel %vm581, 1, 0
      %v710 = vsel %vm582, 1, 0
      %v711 = vsel %vm583, 1, 0
      %v712 = vsel %vm584, 1, 0
      %v713 = vsel %vm585, 1, 0
      %v714 = vsel %vm586, 1, 0
      %v715 = vsel %vm587, 1, 0
      %v716 = vsel %vm588, 1, 0
      %v717 = vsel %vm589, 1, 0
      %v718 = vsel %vm590, 1, 0
      %v719 = vsel %vm591, 1, 0
      %v720 = vsel %vm592, 1, 0
      %v721 = vsel %vm593, 1, 0
      %v722 = vsel %vm594, 1, 0
      %v723 = vsel %vm595, 1, 0
      %v724 = vsel %vm596, 1, 0
      %v725 = vsel %vm597, 1, 0
      %v726 = vsel %vm598, 1, 0
      %v727 = vsel %vm599, 1, 0
      %v728 = vsel %vm600, 1, 0
      %v729 = vsel %vm601, 1, 0
      %v730 = vsel %vm602, 1, 0
      %v731 = vsel %vm603, 1, 0
      %v732 = vsel %vm604, 1, 0
      %v733 = vsel %vm605, 1, 0
      %v734 = vsel %vm606, 1, 0
      %v735 = vsel %vm607, 1, 0
      %v736 = vsel %vm608, 1, 0
      %v737 = vsel %vm609, 1, 0
      %v738 = vsel %vm610, 1, 0
      %v739 = vsel %vm611, 1, 0
      %v740 = vsel %vm612, 1, 0
      %v741 = vsel %vm613, 1, 0
      %v742 = vsel %vm614, 1, 0
      %v743 = vsel %vm615, 1, 0
      %v744 = vsel %vm616, 1, 0
      %v745 = vsel %vm617, 1, 0
      %v746 = vsel %vm618, 1, 0
      %v747 = vsel %vm619, 1, 0
      %v748 = vsel %vm620, 1, 0
      %v749 = vsel %vm621, 1, 0
      %v750 = vsel %vm622, 1, 0
      %v751 = vsel %vm623, 1, 0
      %v752 = vsel %vm624, 1, 0
      %v753 = vsel %vm625, 1, 0
      %v754 = vsel %vm626, 1, 0
      %v755 = vsel %vm627, 1, 0
      %v756 = vsel %vm628, 1, 0
      %v757 = vsel %vm629, 1, 0
      %v758 = vsel %vm630, 1, 0
      %v759 = vsel %vm631, 1, 0
      %v760 = vsel %vm632, 1, 0
      %v761 = vsel %vm633, 1, 0
      %v762 = vsel %vm634, 1, 0
      %v763 = vsel %vm635, 1, 0
      %v764 = vsel %vm636, 1, 0
      %v765 = vsel %vm637, 1, 0
      %v766 = vsel %vm638, 1, 0
      %v767 = vsel %vm639, 1, 0
      %v768 = vsel %vm640, 1, 0
      %v769 = vsel %vm641, 1, 0
      %v770 = vsel %vm642, 1, 0
      %v771 = vsel %vm643, 1, 0
      %v772 = vsel %vm644, 1, 0
      %v773 = vsel %vm645, 1, 0
      %v774 = vsel %vm646, 1, 0
      %v775 = vsel %vm647, 1, 0
      %v776 = vsel %vm648, 1, 0
      %v777 = vsel %vm649, 1, 0
      %v778 = vsel %vm650, 1, 0
      %v779 = vsel %vm651, 1, 0
      %v780 = vsel %vm652, 1, 0
      %v781 = vsel %vm653, 1, 0
      %v782 = vsel %vm654, 1, 0
      %v783 = vsel %vm655, 1, 0
      %v784 = vsel %vm656, 1, 0
      %v785 = vsel %vm657, 1, 0
      %v786 = vsel %vm658, 1, 0
      %v787 = vsel %vm659, 1, 0
      %v788 = vsel %vm660, 1, 0
      %v789 = vsel %vm661, 1, 0
      %v790 = vsel %vm662, 1, 0
      %v791 = vsel %vm663, 1, 0
      %v792 = vsel %vm664, 1, 0
      %v793 = vsel %vm665, 1, 0
      %v794 = vsel %vm666, 1, 0
      %v795 = vsel %vm667, 1, 0
      %v796 = vsel %vm668, 1, 0
      %v797 = vsel %vm669, 1, 0
      %v798 = vsel %vm670, 1, 0
      %v799 = vsel %vm671, 1, 0
      %v800 = vsel %vm672, 1, 0
      %v801 = vsel %vm673, 1, 0
      %v802 = vsel %vm674, 1, 0
      %v803 = vsel %vm675, 1, 0
      %v804 = vsel %vm676, 1, 0
      %v805 = vsel %vm677, 1, 0
      %v806 = vsel %vm678, 1, 0
      %v807 = vsel %vm679, 1, 0
      %v808 = vcvt.s32.f32 %v680
      %v809 = vcvt.s32.f32 %v681
      %v810 = vcvt.s32.f32 %v682
      %v811 = vcvt.s32.f32 %v683
      %v812 = vcvt.s32.f32 %v684
      %v813 = vcvt.s32.f32 %v685
      %v814 = vcvt.s32.f32 %v686
      %v815 = vcvt.s32.f32 %v687
      %v816 = vcvt.s32.f32 %v688
      %v817 = vcvt.s32.f32 %v689
      %v818 = vcvt.s32.f32 %v690
      %v819 = vcvt.s32.f32 %v691
      %v820 = vcvt.s32.f32 %v692
      %v821 = vcvt.s32.f32 %v693
      %v822 = vcvt.s32.f32 %v694
      %v823 = vcvt.s32.f32 %v695
      %v824 = vcvt.s32.f32 %v696
      %v825 = vcvt.s32.f32 %v697
      %v826 = vcvt.s32.f32 %v698
      %v827 = vcvt.s32.f32 %v699
      %v828 = vcvt.s32.f32 %v700
      %v829 = vcvt.s32.f32 %v701
      %v830 = vcvt.s32.f32 %v702
      %v831 = vcvt.s32.f32 %v703
      %v832 = vcvt.s32.f32 %v704
      %v833 = vcvt.s32.f32 %v705
      %v834 = vcvt.s32.f32 %v706
      %v835 = vcvt.s32.f32 %v707
      %v836 = vcvt.s32.f32 %v708
      %v837 = vcvt.s32.f32 %v709
      %v838 = vcvt.s32.f32 %v710
      %v839 = vcvt.s32.f32 %v711
      %v840 = vcvt.s32.f32 %v712
      %v841 = vcvt.s32.f32 %v713
      %v842 = vcvt.s32.f32 %v714
      %v843 = vcvt.s32.f32 %v715
      %v844 = vcvt.s32.f32 %v716
      %v845 = vcvt.s32.f32 %v717
      %v846 = vcvt.s32.f32 %v718
      %v847 = vcvt.s32.f32 %v719
      %v848 = vcvt.s32.f32 %v720
      %v849 = vcvt.s32.f32 %v721
      %v850 = vcvt.s32.f32 %v722
      %v851 = vcvt.s32.f32 %v723
      %v852 = vcvt.s32.f32 %v724
      %v853 = vcvt.s32.f32 %v725
      %v854 = vcvt.s32.f32 %v726
      %v855 = vcvt.s32.f32 %v727
      %v856 = vcvt.s32.f32 %v728
      %v857 = vcvt.s32.f32 %v729
      %v858 = vcvt.s32.f32 %v730
      %v859 = vcvt.s32.f32 %v731
      %v860 = vcvt.s32.f32 %v732
      %v861 = vcvt.s32.f32 %v733
      %v862 = vcvt.s32.f32 %v734
      %v863 = vcvt.s32.f32 %v735
      %v864 = vcvt.s32.f32 %v736
      %v865 = vcvt.s32.f32 %v737
      %v866 = vcvt.s32.f32 %v738
      %v867 = vcvt.s32.f32 %v739
      %v868 = vcvt.s32.f32 %v740
      %v869 = vcvt.s32.f32 %v741
      %v870 = vcvt.s32.f32 %v742
      %v871 = vcvt.s32.f32 %v743
      %v872 = vcvt.s32.f32 %v744
      %v873 = vcvt.s32.f32 %v745
      %v874 = vcvt.s32.f32 %v746
      %v875 = vcvt.s32.f32 %v747
      %v876 = vcvt.s32.f32 %v748
      %v877 = vcvt.s32.f32 %v749
      %v878 = vcvt.s32.f32 %v750
      %v879 = vcvt.s32.f32 %v751
      %v880 = vcvt.s32.f32 %v752
      %v881 = vcvt.s32.f32 %v753
      %v882 = vcvt.s32.f32 %v754
      %v883 = vcvt.s32.f32 %v755
      %v884 = vcvt.s32.f32 %v756
      %v885 = vcvt.s32.f32 %v757
      %v886 = vcvt.s32.f32 %v758
      %v887 = vcvt.s32.f32 %v759
      %v888 = vcvt.s32.f32 %v760
      %v889 = vcvt.s32.f32 %v761
      %v890 = vcvt.s32.f32 %v762
      %v891 = vcvt.s32.f32 %v763
      %v892 = vcvt.s32.f32 %v764
      %v893 = vcvt.s32.f32 %v765
      %v894 = vcvt.s32.f32 %v766
      %v895 = vcvt.s32.f32 %v767
      %v896 = vcvt.s32.f32 %v768
      %v897 = vcvt.s32.f32 %v769
      %v898 = vcvt.s32.f32 %v770
      %v899 = vcvt.s32.f32 %v771
      %v900 = vcvt.s32.f32 %v772
      %v901 = vcvt.s32.f32 %v773
      %v902 = vcvt.s32.f32 %v774
      %v903 = vcvt.s32.f32 %v775
      %v904 = vcvt.s32.f32 %v776
      %v905 = vcvt.s32.f32 %v777
      %v906 = vcvt.s32.f32 %v778
      %v907 = vcvt.s32.f32 %v779
      %v908 = vcvt.s32.f32 %v780
      %v909 = vcvt.s32.f32 %v781
      %v910 = vcvt.s32.f32 %v782
      %v911 = vcvt.s32.f32 %v783
      %v912 = vcvt.s32.f32 %v784
      %v913 = vcvt.s32.f32 %v785
      %v914 = vcvt.s32.f32 %v786
      %v915 = vcvt.s32.f32 %v787
      %v916 = vcvt.s32.f32 %v788
      %v917 = vcvt.s32.f32 %v789
      %v918 = vcvt.s32.f32 %v790
      %v919 = vcvt.s32.f32 %v791
      %v920 = vcvt.s32.f32 %v792
      %v921 = vcvt.s32.f32 %v793
      %v922 = vcvt.s32.f32 %v794
      %v923 = vcvt.s32.f32 %v795
      %v924 = vcvt.s32.f32 %v796
      %v925 = vcvt.s32.f32 %v797
      %v926 = vcvt.s32.f32 %v798
      %v927 = vcvt.s32.f32 %v799
      %v928 = vcvt.s32.f32 %v800
      %v929 = vcvt.s32.f32 %v801
      %v930 = vcvt.s32.f32 %v802
      %v931 = vcvt.s32.f32 %v803
      %v932 = vcvt.s32.f32 %v804
      %v933 = vcvt.s32.f32 %v805
      %v934 = vcvt.s32.f32 %v806
      %v935 = vcvt.s32.f32 %v807
      %v936 = vpack.c.bf16 %v810, %v808
      %v937 = vpack.c.bf16 %v811, %v809
      %v938 = vpack.c.bf16 %v814, %v812
      %v939 = vpack.c.bf16 %v815, %v813
      %v940 = vpack.c.bf16 %v818, %v816
      %v941 = vpack.c.bf16 %v819, %v817
      %v942 = vpack.c.bf16 %v822, %v820
      %v943 = vpack.c.bf16 %v823, %v821
      %v944 = vpack.c.bf16 %v826, %v824
      %v945 = vpack.c.bf16 %v827, %v825
      %v946 = vpack.c.bf16 %v830, %v828
      %v947 = vpack.c.bf16 %v831, %v829
      %v948 = vpack.c.bf16 %v834, %v832
      %v949 = vpack.c.bf16 %v835, %v833
      %v950 = vpack.c.bf16 %v838, %v836
      %v951 = vpack.c.bf16 %v839, %v837
      %v952 = vpack.c.bf16 %v842, %v840
      %v953 = vpack.c.bf16 %v843, %v841
      %v954 = vpack.c.bf16 %v846, %v844
      %v955 = vpack.c.bf16 %v847, %v845
      %v956 = vpack.c.bf16 %v850, %v848
      %v957 = vpack.c.bf16 %v851, %v849
      %v958 = vpack.c.bf16 %v854, %v852
      %v959 = vpack.c.bf16 %v855, %v853
      %v960 = vpack.c.bf16 %v858, %v856
      %v961 = vpack.c.bf16 %v859, %v857
      %v962 = vpack.c.bf16 %v862, %v860
      %v963 = vpack.c.bf16 %v863, %v861
      %v964 = vpack.c.bf16 %v866, %v864
      %v965 = vpack.c.bf16 %v867, %v865
      %v966 = vpack.c.bf16 %v870, %v868
      %v967 = vpack.c.bf16 %v871, %v869
      %v968 = vpack.c.bf16 %v874, %v872
      %v969 = vpack.c.bf16 %v875, %v873
      %v970 = vpack.c.bf16 %v878, %v876
      %v971 = vpack.c.bf16 %v879, %v877
      %v972 = vpack.c.bf16 %v882, %v880
      %v973 = vpack.c.bf16 %v883, %v881
      %v974 = vpack.c.bf16 %v886, %v884
      %v975 = vpack.c.bf16 %v887, %v885
      %v976 = vpack.c.bf16 %v890, %v888
      %v977 = vpack.c.bf16 %v891, %v889
      %v978 = vpack.c.bf16 %v894, %v892
      %v979 = vpack.c.bf16 %v895, %v893
      %v980 = vpack.c.bf16 %v898, %v896
      %v981 = vpack.c.bf16 %v899, %v897
      %v982 = vpack.c.bf16 %v902, %v900
      %v983 = vpack.c.bf16 %v903, %v901
      %v984 = vpack.c.bf16 %v906, %v904
      %v985 = vpack.c.bf16 %v907, %v905
      %v986 = vpack.c.bf16 %v910, %v908
      %v987 = vpack.c.bf16 %v911, %v909
      %v988 = vpack.c.bf16 %v914, %v912
      %v989 = vpack.c.bf16 %v915, %v913
      %v990 = vpack.c.bf16 %v918, %v916
      %v991 = vpack.c.bf16 %v919, %v917
      %v992 = vpack.c.bf16 %v922, %v920
      %v993 = vpack.c.bf16 %v923, %v921
      %v994 = vpack.c.bf16 %v926, %v924
      %v995 = vpack.c.bf16 %v927, %v925
      %v996 = vpack.c.bf16 %v930, %v928
      %v997 = vpack.c.bf16 %v931, %v929
      %v998 = vpack.c.bf16 %v934, %v932
      %v999 = vpack.c.bf16 %v935, %v933
      %v1000 = vld [vmem:[%s0] sm:$0xf]
      %v1001 = vld [vmem:[%s0 + $0x4] sm:$0xf]
      %v1002 = vld [vmem:[%s0 + $0x8] sm:$0xf]
      %v1003 = vld [vmem:[%s0 + $0xc] sm:$0xf]
      %v1004 = vld [vmem:[%s0 + $0x10] sm:$0xf]
      %v1005 = vld [vmem:[%s0 + $0x14] sm:$0xf]
      %v1006 = vld [vmem:[%s0 + $0x18] sm:$0xf]
      %v1007 = vld [vmem:[%s0 + $0x1c] sm:$0xf]
      %v1008 = vld [vmem:[%s0 + $0x20] sm:$0xf]
      %v1009 = vld [vmem:[%s0 + $0x24] sm:$0xf]
      %v1010 = vld [vmem:[%s0 + $0x28] sm:$0xf]
      %v1011 = vld [vmem:[%s0 + $0x2c] sm:$0xf]
      %v1012 = vld [vmem:[%s0 + $0x30] sm:$0xf]
      %v1013 = vld [vmem:[%s0 + $0x34] sm:$0xf]
      %v1014 = vld [vmem:[%s0 + $0x38] sm:$0xf]
      %v1015 = vld [vmem:[%s0 + $0x3c] sm:$0xf]
      %v1016 = vld [vmem:[%s0 + $0x40] sm:$0xf]
      %v1017 = vld [vmem:[%s0 + $0x44] sm:$0xf]
      %v1018 = vld [vmem:[%s0 + $0x48] sm:$0xf]
      %v1019 = vld [vmem:[%s0 + $0x4c] sm:$0xf]
      %v1020 = vld [vmem:[%s0 + $0x50] sm:$0xf]
      %v1021 = vld [vmem:[%s0 + $0x54] sm:$0xf]
      %v1022 = vld [vmem:[%s0 + $0x58] sm:$0xf]
      %v1023 = vld [vmem:[%s0 + $0x5c] sm:$0xf]
      %v1024 = vld [vmem:[%s0 + $0x60] sm:$0xf]
      %v1025 = vld [vmem:[%s0 + $0x64] sm:$0xf]
      %v1026 = vld [vmem:[%s0 + $0x68] sm:$0xf]
      %v1027 = vld [vmem:[%s0 + $0x6c] sm:$0xf]
      %v1028 = vld [vmem:[%s0 + $0x70] sm:$0xf]
      %v1029 = vld [vmem:[%s0 + $0x74] sm:$0xf]
      %v1030 = vld [vmem:[%s0 + $0x78] sm:$0xf]
      %v1031 = vld [vmem:[%s0 + $0x7c] sm:$0xf]
      %v1064 = vunpack.c.l.b16 %v1000
      %v1065 = vunpack.c.l.b16 %v1001
      %v1066 = vunpack.c.l.b16 %v1002
      %v1067 = vunpack.c.l.b16 %v1003
      %v1068 = vunpack.c.l.b16 %v1004
      %v1069 = vunpack.c.l.b16 %v1005
      %v1070 = vunpack.c.l.b16 %v1006
      %v1071 = vunpack.c.l.b16 %v1007
      %v1072 = vunpack.c.l.b16 %v1008
      %v1073 = vunpack.c.l.b16 %v1009
      %v1074 = vunpack.c.l.b16 %v1010
      %v1075 = vunpack.c.l.b16 %v1011
      %v1076 = vunpack.c.l.b16 %v1012
      %v1077 = vunpack.c.l.b16 %v1013
      %v1078 = vunpack.c.l.b16 %v1014
      %v1079 = vunpack.c.l.b16 %v1015
      %v1080 = vunpack.c.l.b16 %v1016
      %v1081 = vunpack.c.l.b16 %v1017
      %v1082 = vunpack.c.l.b16 %v1018
      %v1083 = vunpack.c.l.b16 %v1019
      %v1084 = vunpack.c.l.b16 %v1020
      %v1085 = vunpack.c.l.b16 %v1021
      %v1086 = vunpack.c.l.b16 %v1022
      %v1087 = vunpack.c.l.b16 %v1023
      %v1088 = vunpack.c.l.b16 %v1024
      %v1089 = vunpack.c.l.b16 %v1025
      %v1090 = vunpack.c.l.b16 %v1026
      %v1091 = vunpack.c.l.b16 %v1027
      %v1092 = vunpack.c.l.b16 %v1028
      %v1093 = vunpack.c.l.b16 %v1029
      %v1094 = vunpack.c.l.b16 %v1030
      %v1095 = vunpack.c.l.b16 %v1031
      %v1096 = vpack.c.b16 %v1065, %v1064
      %v1097 = vpack.c.b16 %v1067, %v1066
      %v1098 = vpack.c.b16 %v1069, %v1068
      %v1099 = vpack.c.b16 %v1071, %v1070
      %v1100 = vpack.c.b16 %v1073, %v1072
      %v1101 = vpack.c.b16 %v1075, %v1074
      %v1102 = vpack.c.b16 %v1077, %v1076
      %v1103 = vpack.c.b16 %v1079, %v1078
      %v1104 = vpack.c.b16 %v1081, %v1080
      %v1105 = vpack.c.b16 %v1083, %v1082
      %v1106 = vpack.c.b16 %v1085, %v1084
      %v1107 = vpack.c.b16 %v1087, %v1086
      %v1108 = vpack.c.b16 %v1089, %v1088
      %v1109 = vpack.c.b16 %v1091, %v1090
      %v1110 = vpack.c.b16 %v1093, %v1092
      %v1111 = vpack.c.b16 %v1095, %v1094
      %1128 = vmatprep.subr.bf16.mxu0 0
      %1129 = vmatpush1.bf16.msra.mxu0 %v1096
      %1130 = vmatprep.subr.bf16.mxu0 0
      %1131 = vmatpush1.bf16.msra.mxu0 %v1097
      %1132 = vmatprep.subr.bf16.mxu0 0
      %1133 = vmatpush1.bf16.msra.mxu0 %v1098
      %1134 = vmatprep.subr.bf16.mxu0 0
      %1135 = vmatpush1.bf16.msra.mxu0 %v1099
      %1136 = vmatprep.subr.bf16.mxu0 0
      %1137 = vmatpush1.bf16.msra.mxu0 %v1100
      %1138 = vmatprep.subr.bf16.mxu0 0
      %1139 = vmatpush1.bf16.msra.mxu0 %v1101
      %1140 = vmatprep.subr.bf16.mxu0 0
      %1141 = vmatpush1.bf16.msra.mxu0 %v1102
      %1142 = vmatprep.subr.bf16.mxu0 0
      %1143 = vmatpush1.bf16.msra.mxu0 %v1103
      %1144 = vmatprep.subr.bf16.mxu0 0
      %1145 = vmatpush1.bf16.msra.mxu0 %v1104
      %1146 = vmatprep.subr.bf16.mxu0 0
      %1147 = vmatpush1.bf16.msra.mxu0 %v1105
      %1148 = vmatprep.subr.bf16.mxu0 0
      %1149 = vmatpush1.bf16.msra.mxu0 %v1106
      %1150 = vmatprep.subr.bf16.mxu0 0
      %1151 = vmatpush1.bf16.msra.mxu0 %v1107
      %1152 = vmatprep.subr.bf16.mxu0 0
      %1153 = vmatpush1.bf16.msra.mxu0 %v1108
      %1154 = vmatprep.subr.bf16.mxu0 0
      %1155 = vmatpush1.bf16.msra.mxu0 %v1109
      %1156 = vmatprep.subr.bf16.mxu0 0
      %1157 = vmatpush1.bf16.msra.mxu0 %v1110
      %1158 = vmatprep.subr.bf16.mxu0 0
      %1159 = vmatpush1.bf16.msra.mxu0 %v1111
      %1160 = vmatprep.mubr.bf16.mxu0 %v937
      %1161 = vmatmul.mubr.bf16.gmra.mrb[0].mxu0 %v936
      %v1162 = vpop.f32.mrb[0].mxu0
      %v1163 = vadd.f32 0.0, %v1162
      %v1164 = vpop.f32.mrb[0].mxu0
      %v1165 = vpop.f32.mrb[0].mxu0
      %v1166 = vadd.f32 0.0, %v1165
      %v1167 = vpop.f32.mrb[0].mxu0
      %1168 = vmatprep.mubr.bf16.mxu0 %v939
      %1169 = vmatmul.mubr.bf16.gmra.mrb[0].mxu0 %v938
      %v1170 = vpop.f32.mrb[0].mxu0
      %v1171 = vadd.f32 0.0, %v1170
      %v1172 = vpop.f32.mrb[0].mxu0
      %v1173 = vpop.f32.mrb[0].mxu0
      %v1174 = vadd.f32 0.0, %v1173
      %v1175 = vpop.f32.mrb[0].mxu0
      %1176 = vmatprep.mubr.bf16.mxu0 %v941
      %1177 = vmatmul.mubr.bf16.gmra.mrb[0].mxu0 %v940
      %v1178 = vpop.f32.mrb[0].mxu0
      %v1179 = vadd.f32 0.0, %v1178
      %v1180 = vpop.f32.mrb[0].mxu0
      %v1181 = vpop.f32.mrb[0].mxu0
      %v1182 = vadd.f32 0.0, %v1181
      %v1183 = vpop.f32.mrb[0].mxu0
      %1184 = vmatprep.mubr.bf16.mxu0 %v943
      %1185 = vmatmul.mubr.bf16.gmra.mrb[0].mxu0 %v942
      %v1186 = vpop.f32.mrb[0].mxu0
      %v1187 = vadd.f32 0.0, %v1186
      %v1188 = vpop.f32.mrb[0].mxu0
      %v1189 = vpop.f32.mrb[0].mxu0
      %v1190 = vadd.f32 0.0, %v1189
      %v1191 = vpop.f32.mrb[0].mxu0
      %1192 = vmatprep.mubr.bf16.mxu0 %v945
      %1193 = vmatmul.mubr.bf16.gmra.mrb[0].mxu0 %v944
      %v1194 = vpop.f32.mrb[0].mxu0
      %v1195 = vadd.f32 0.0, %v1194
      %v1196 = vpop.f32.mrb[0].mxu0
      %v1197 = vpop.f32.mrb[0].mxu0
      %v1198 = vadd.f32 0.0, %v1197
      %v1199 = vpop.f32.mrb[0].mxu0
      %1200 = vmatprep.mubr.bf16.mxu0 %v947
      %1201 = vmatmul.mubr.bf16.gmra.mrb[0].mxu0 %v946
      %v1202 = vpop.f32.mrb[0].mxu0
      %v1203 = vadd.f32 0.0, %v1202
      %v1204 = vpop.f32.mrb[0].mxu0
      %v1205 = vpop.f32.mrb[0].mxu0
      %v1206 = vadd.f32 0.0, %v1205
      %v1207 = vpop.f32.mrb[0].mxu0
      %1208 = vmatprep.mubr.bf16.mxu0 %v949
      %1209 = vmatmul.mubr.bf16.gmra.mrb[0].mxu0 %v948
      %v1210 = vpop.f32.mrb[0].mxu0
      %v1211 = vadd.f32 0.0, %v1210
      %v1212 = vpop.f32.mrb[0].mxu0
      %v1213 = vpop.f32.mrb[0].mxu0
      %v1214 = vadd.f32 0.0, %v1213
      %v1215 = vpop.f32.mrb[0].mxu0
      %1216 = vmatprep.mubr.bf16.mxu0 %v951
      %1217 = vmatmul.mubr.bf16.gmra.mrb[0].mxu0 %v950
      %v1218 = vpop.f32.mrb[0].mxu0
      %v1219 = vadd.f32 0.0, %v1218
      %v1220 = vpop.f32.mrb[0].mxu0
      %v1221 = vpop.f32.mrb[0].mxu0
      %v1222 = vadd.f32 0.0, %v1221
      %v1223 = vpop.f32.mrb[0].mxu0
      %1224 = vmatprep.mubr.bf16.mxu0 %v953
      %1225 = vmatmul.mubr.bf16.gmra.mrb[0].mxu0 %v952
      %v1226 = vpop.f32.mrb[0].mxu0
      %v1227 = vadd.f32 0.0, %v1226
      %v1228 = vpop.f32.mrb[0].mxu0
      %v1229 = vpop.f32.mrb[0].mxu0
      %v1230 = vadd.f32 0.0, %v1229
      %v1231 = vpop.f32.mrb[0].mxu0
      %1232 = vmatprep.mubr.bf16.mxu0 %v955
      %1233 = vmatmul.mubr.bf16.gmra.mrb[0].mxu0 %v954
      %v1234 = vpop.f32.mrb[0].mxu0
      %v1235 = vadd.f32 0.0, %v1234
      %v1236 = vpop.f32.mrb[0].mxu0
      %v1237 = vpop.f32.mrb[0].mxu0
      %v1238 = vadd.f32 0.0, %v1237
      %v1239 = vpop.f32.mrb[0].mxu0
      %1240 = vmatprep.mubr.bf16.mxu0 %v957
      %1241 = vmatmul.mubr.bf16.gmra.mrb[0].mxu0 %v956
      %v1242 = vpop.f32.mrb[0].mxu0
      %v1243 = vadd.f32 0.0, %v1242
      %v1244 = vpop.f32.mrb[0].mxu0
      %v1245 = vpop.f32.mrb[0].mxu0
      %v1246 = vadd.f32 0.0, %v1245
      %v1247 = vpop.f32.mrb[0].mxu0
      %1248 = vmatprep.mubr.bf16.mxu0 %v959
      %1249 = vmatmul.mubr.bf16.gmra.mrb[0].mxu0 %v958
      %v1250 = vpop.f32.mrb[0].mxu0
      %v1251 = vadd.f32 0.0, %v1250
      %v1252 = vpop.f32.mrb[0].mxu0
      %v1253 = vpop.f32.mrb[0].mxu0
      %v1254 = vadd.f32 0.0, %v1253
      %v1255 = vpop.f32.mrb[0].mxu0
      %1256 = vmatprep.mubr.bf16.mxu0 %v961
      %1257 = vmatmul.mubr.bf16.gmra.mrb[0].mxu0 %v960
      %v1258 = vpop.f32.mrb[0].mxu0
      %v1259 = vadd.f32 0.0, %v1258
      %v1260 = vpop.f32.mrb[0].mxu0
      %v1261 = vpop.f32.mrb[0].mxu0
      %v1262 = vadd.f32 0.0, %v1261
      %v1263 = vpop.f32.mrb[0].mxu0
      %1264 = vmatprep.mubr.bf16.mxu0 %v963
      %1265 = vmatmul.mubr.bf16.gmra.mrb[0].mxu0 %v962
      %v1266 = vpop.f32.mrb[0].mxu0
      %v1267 = vadd.f32 0.0, %v1266
      %v1268 = vpop.f32.mrb[0].mxu0
      %v1269 = vpop.f32.mrb[0].mxu0
      %v1270 = vadd.f32 0.0, %v1269
      %v1271 = vpop.f32.mrb[0].mxu0
      %1272 = vmatprep.mubr.bf16.mxu0 %v965
      %1273 = vmatmul.mubr.bf16.gmra.mrb[0].mxu0 %v964
      %v1274 = vpop.f32.mrb[0].mxu0
      %v1275 = vadd.f32 0.0, %v1274
      %v1276 = vpop.f32.mrb[0].mxu0
      %v1277 = vpop.f32.mrb[0].mxu0
      %v1278 = vadd.f32 0.0, %v1277
      %v1279 = vpop.f32.mrb[0].mxu0
      %1280 = vmatprep.mubr.bf16.mxu0 %v967
      %1281 = vmatmul.mubr.bf16.gmra.mrb[0].mxu0 %v966
      %v1282 = vpop.f32.mrb[0].mxu0
      %v1283 = vadd.f32 0.0, %v1282
      %v1284 = vpop.f32.mrb[0].mxu0
      %v1285 = vpop.f32.mrb[0].mxu0
      %v1286 = vadd.f32 0.0, %v1285
      %v1287 = vpop.f32.mrb[0].mxu0
      %1288 = vmatprep.mubr.bf16.mxu0 %v969
      %1289 = vmatmul.mubr.bf16.gmra.mrb[0].mxu0 %v968
      %v1290 = vpop.f32.mrb[0].mxu0
      %v1291 = vadd.f32 0.0, %v1290
      %v1292 = vpop.f32.mrb[0].mxu0
      %v1293 = vpop.f32.mrb[0].mxu0
      %v1294 = vadd.f32 0.0, %v1293
      %v1295 = vpop.f32.mrb[0].mxu0
      %1296 = vmatprep.mubr.bf16.mxu0 %v971
      %1297 = vmatmul.mubr.bf16.gmra.mrb[0].mxu0 %v970
      %v1298 = vpop.f32.mrb[0].mxu0
      %v1299 = vadd.f32 0.0, %v1298
      %v1300 = vpop.f32.mrb[0].mxu0
      %v1301 = vpop.f32.mrb[0].mxu0
      %v1302 = vadd.f32 0.0, %v1301
      %v1303 = vpop.f32.mrb[0].mxu0
      %1304 = vmatprep.mubr.bf16.mxu0 %v973
      %1305 = vmatmul.mubr.bf16.gmra.mrb[0].mxu0 %v972
      %v1306 = vpop.f32.mrb[0].mxu0
      %v1307 = vadd.f32 0.0, %v1306
      %v1308 = vpop.f32.mrb[0].mxu0
      %v1309 = vpop.f32.mrb[0].mxu0
      %v1310 = vadd.f32 0.0, %v1309
      %v1311 = vpop.f32.mrb[0].mxu0
      %1312 = vmatprep.mubr.bf16.mxu0 %v975
      %1313 = vmatmul.mubr.bf16.gmra.mrb[0].mxu0 %v974
      %v1314 = vpop.f32.mrb[0].mxu0
      %v1315 = vadd.f32 0.0, %v1314
      %v1316 = vpop.f32.mrb[0].mxu0
      %v1317 = vpop.f32.mrb[0].mxu0
      %v1318 = vadd.f32 0.0, %v1317
      %v1319 = vpop.f32.mrb[0].mxu0
      %1320 = vmatprep.mubr.bf16.mxu0 %v977
      %1321 = vmatmul.mubr.bf16.gmra.mrb[0].mxu0 %v976
      %v1322 = vpop.f32.mrb[0].mxu0
      %v1323 = vadd.f32 0.0, %v1322
      %v1324 = vpop.f32.mrb[0].mxu0
      %v1325 = vpop.f32.mrb[0].mxu0
      %v1326 = vadd.f32 0.0, %v1325
      %v1327 = vpop.f32.mrb[0].mxu0
      %1328 = vmatprep.mubr.bf16.mxu0 %v979
      %1329 = vmatmul.mubr.bf16.gmra.mrb[0].mxu0 %v978
      %v1330 = vpop.f32.mrb[0].mxu0
      %v1331 = vadd.f32 0.0, %v1330
      %v1332 = vpop.f32.mrb[0].mxu0
      %v1333 = vpop.f32.mrb[0].mxu0
      %v1334 = vadd.f32 0.0, %v1333
      %v1335 = vpop.f32.mrb[0].mxu0
      %1336 = vmatprep.mubr.bf16.mxu0 %v981
      %1337 = vmatmul.mubr.bf16.gmra.mrb[0].mxu0 %v980
      %v1338 = vpop.f32.mrb[0].mxu0
      %v1339 = vadd.f32 0.0, %v1338
      %v1340 = vpop.f32.mrb[0].mxu0
      %v1341 = vpop.f32.mrb[0].mxu0
      %v1342 = vadd.f32 0.0, %v1341
      %v1343 = vpop.f32.mrb[0].mxu0
      %1344 = vmatprep.mubr.bf16.mxu0 %v983
      %1345 = vmatmul.mubr.bf16.gmra.mrb[0].mxu0 %v982
      %v1346 = vpop.f32.mrb[0].mxu0
      %v1347 = vadd.f32 0.0, %v1346
      %v1348 = vpop.f32.mrb[0].mxu0
      %v1349 = vpop.f32.mrb[0].mxu0
      %v1350 = vadd.f32 0.0, %v1349
      %v1351 = vpop.f32.mrb[0].mxu0
      %1352 = vmatprep.mubr.bf16.mxu0 %v985
      %1353 = vmatmul.mubr.bf16.gmra.mrb[0].mxu0 %v984
      %v1354 = vpop.f32.mrb[0].mxu0
      %v1355 = vadd.f32 0.0, %v1354
      %v1356 = vpop.f32.mrb[0].mxu0
      %v1357 = vpop.f32.mrb[0].mxu0
      %v1358 = vadd.f32 0.0, %v1357
      %v1359 = vpop.f32.mrb[0].mxu0
      %1360 = vmatprep.mubr.bf16.mxu0 %v987
      %1361 = vmatmul.mubr.bf16.gmra.mrb[0].mxu0 %v986
      %v1362 = vpop.f32.mrb[0].mxu0
      %v1363 = vadd.f32 0.0, %v1362
      %v1364 = vpop.f32.mrb[0].mxu0
      %v1365 = vpop.f32.mrb[0].mxu0
      %v1366 = vadd.f32 0.0, %v1365
      %v1367 = vpop.f32.mrb[0].mxu0
      %1368 = vmatprep.mubr.bf16.mxu0 %v989
      %1369 = vmatmul.mubr.bf16.gmra.mrb[0].mxu0 %v988
      %v1370 = vpop.f32.mrb[0].mxu0
      %v1371 = vadd.f32 0.0, %v1370
      %v1372 = vpop.f32.mrb[0].mxu0
      %v1373 = vpop.f32.mrb[0].mxu0
      %v1374 = vadd.f32 0.0, %v1373
      %v1375 = vpop.f32.mrb[0].mxu0
      %1376 = vmatprep.mubr.bf16.mxu0 %v991
      %1377 = vmatmul.mubr.bf16.gmra.mrb[0].mxu0 %v990
      %v1378 = vpop.f32.mrb[0].mxu0
      %v1379 = vadd.f32 0.0, %v1378
      %v1380 = vpop.f32.mrb[0].mxu0
      %v1381 = vpop.f32.mrb[0].mxu0
      %v1382 = vadd.f32 0.0, %v1381
      %v1383 = vpop.f32.mrb[0].mxu0
      %1384 = vmatprep.mubr.bf16.mxu0 %v993
      %1385 = vmatmul.mubr.bf16.gmra.mrb[0].mxu0 %v992
      %v1386 = vpop.f32.mrb[0].mxu0
      %v1387 = vadd.f32 0.0, %v1386
      %v1388 = vpop.f32.mrb[0].mxu0
      %v1389 = vpop.f32.mrb[0].mxu0
      %v1390 = vadd.f32 0.0, %v1389
      %v1391 = vpop.f32.mrb[0].mxu0
      %1392 = vmatprep.mubr.bf16.mxu0 %v995
      %1393 = vmatmul.mubr.bf16.gmra.mrb[0].mxu0 %v994
      %v1394 = vpop.f32.mrb[0].mxu0
      %v1395 = vadd.f32 0.0, %v1394
      %v1396 = vpop.f32.mrb[0].mxu0
      %v1397 = vpop.f32.mrb[0].mxu0
      %v1398 = vadd.f32 0.0, %v1397
      %v1399 = vpop.f32.mrb[0].mxu0
      %1400 = vmatprep.mubr.bf16.mxu0 %v997
      %1401 = vmatmul.mubr.bf16.gmra.mrb[0].mxu0 %v996
      %v1402 = vpop.f32.mrb[0].mxu0
      %v1403 = vadd.f32 0.0, %v1402
      %v1404 = vpop.f32.mrb[0].mxu0
      %v1405 = vpop.f32.mrb[0].mxu0
      %v1406 = vadd.f32 0.0, %v1405
      %v1407 = vpop.f32.mrb[0].mxu0
      %1408 = vmatprep.mubr.bf16.mxu0 %v999
      %1409 = vmatmul.mubr.bf16.gmra.mrb[0].mxu0 %v998
      %v1410 = vpop.f32.mrb[0].mxu0
      %v1411 = vadd.f32 0.0, %v1410
      %v1412 = vpop.f32.mrb[0].mxu0
      %v1413 = vpop.f32.mrb[0].mxu0
      %v1414 = vadd.f32 0.0, %v1413
      %v1415 = vpop.f32.mrb[0].mxu0
      %1416 = vdwg.mxu0
      %1481 = vrot.lane.b32.xlu0 %v1163, 96
      %v1482 = vpop.permute.xlu0 %1481
      %1483 = vrot.lane.b32.xlu0 %v1166, 96
      %v1484 = vpop.permute.xlu0 %1483
      %1485 = vrot.lane.b32.xlu0 %v1171, 96
      %v1486 = vpop.permute.xlu0 %1485
      %1487 = vrot.lane.b32.xlu0 %v1174, 96
      %v1488 = vpop.permute.xlu0 %1487
      %1489 = vrot.lane.b32.xlu0 %v1179, 96
      %v1490 = vpop.permute.xlu0 %1489
      %1491 = vrot.lane.b32.xlu0 %v1182, 96
      %v1492 = vpop.permute.xlu0 %1491
      %1493 = vrot.lane.b32.xlu0 %v1187, 96
      %v1494 = vpop.permute.xlu0 %1493
      %1495 = vrot.lane.b32.xlu0 %v1190, 96
      %v1496 = vpop.permute.xlu0 %1495
      %1497 = vrot.lane.b32.xlu0 %v1195, 96
      %v1498 = vpop.permute.xlu0 %1497
      %1499 = vrot.lane.b32.xlu0 %v1198, 96
      %v1500 = vpop.permute.xlu0 %1499
      %1501 = vrot.lane.b32.xlu0 %v1203, 96
      %v1502 = vpop.permute.xlu0 %1501
      %1503 = vrot.lane.b32.xlu0 %v1206, 96
      %v1504 = vpop.permute.xlu0 %1503
      %1505 = vrot.lane.b32.xlu0 %v1211, 96
      %v1506 = vpop.permute.xlu0 %1505
      %1507 = vrot.lane.b32.xlu0 %v1214, 96
      %v1508 = vpop.permute.xlu0 %1507
      %1509 = vrot.lane.b32.xlu0 %v1219, 96
      %v1510 = vpop.permute.xlu0 %1509
      %1511 = vrot.lane.b32.xlu0 %v1222, 96
      %v1512 = vpop.permute.xlu0 %1511
      %1513 = vrot.lane.b32.xlu0 %v1227, 96
      %v1514 = vpop.permute.xlu0 %1513
      %1515 = vrot.lane.b32.xlu0 %v1230, 96
      %v1516 = vpop.permute.xlu0 %1515
      %1517 = vrot.lane.b32.xlu0 %v1235, 96
      %v1518 = vpop.permute.xlu0 %1517
      %1519 = vrot.lane.b32.xlu0 %v1238, 96
      %v1520 = vpop.permute.xlu0 %1519
      %1521 = vrot.lane.b32.xlu0 %v1243, 96
      %v1522 = vpop.permute.xlu0 %1521
      %1523 = vrot.lane.b32.xlu0 %v1246, 96
      %v1524 = vpop.permute.xlu0 %1523
      %1525 = vrot.lane.b32.xlu0 %v1251, 96
      %v1526 = vpop.permute.xlu0 %1525
      %1527 = vrot.lane.b32.xlu0 %v1254, 96
      %v1528 = vpop.permute.xlu0 %1527
      %1529 = vrot.lane.b32.xlu0 %v1259, 96
      %v1530 = vpop.permute.xlu0 %1529
      %1531 = vrot.lane.b32.xlu0 %v1262, 96
      %v1532 = vpop.permute.xlu0 %1531
      %1533 = vrot.lane.b32.xlu0 %v1267, 96
      %v1534 = vpop.permute.xlu0 %1533
      %1535 = vrot.lane.b32.xlu0 %v1270, 96
      %v1536 = vpop.permute.xlu0 %1535
      %1537 = vrot.lane.b32.xlu0 %v1275, 96
      %v1538 = vpop.permute.xlu0 %1537
      %1539 = vrot.lane.b32.xlu0 %v1278, 96
      %v1540 = vpop.permute.xlu0 %1539
      %1541 = vrot.lane.b32.xlu0 %v1283, 96
      %v1542 = vpop.permute.xlu0 %1541
      %1543 = vrot.lane.b32.xlu0 %v1286, 96
      %v1544 = vpop.permute.xlu0 %1543
      %1545 = vrot.lane.b32.xlu0 %v1291, 96
      %v1546 = vpop.permute.xlu0 %1545
      %1547 = vrot.lane.b32.xlu0 %v1294, 96
      %v1548 = vpop.permute.xlu0 %1547
      %1549 = vrot.lane.b32.xlu0 %v1299, 96
      %v1550 = vpop.permute.xlu0 %1549
      %1551 = vrot.lane.b32.xlu0 %v1302, 96
      %v1552 = vpop.permute.xlu0 %1551
      %1553 = vrot.lane.b32.xlu0 %v1307, 96
      %v1554 = vpop.permute.xlu0 %1553
      %1555 = vrot.lane.b32.xlu0 %v1310, 96
      %v1556 = vpop.permute.xlu0 %1555
      %1557 = vrot.lane.b32.xlu0 %v1315, 96
      %v1558 = vpop.permute.xlu0 %1557
      %1559 = vrot.lane.b32.xlu0 %v1318, 96
      %v1560 = vpop.permute.xlu0 %1559
      %1561 = vrot.lane.b32.xlu0 %v1323, 96
      %v1562 = vpop.permute.xlu0 %1561
      %1563 = vrot.lane.b32.xlu0 %v1326, 96
      %v1564 = vpop.permute.xlu0 %1563
      %1565 = vrot.lane.b32.xlu0 %v1331, 96
      %v1566 = vpop.permute.xlu0 %1565
      %1567 = vrot.lane.b32.xlu0 %v1334, 96
      %v1568 = vpop.permute.xlu0 %1567
      %1569 = vrot.lane.b32.xlu0 %v1339, 96
      %v1570 = vpop.permute.xlu0 %1569
      %1571 = vrot.lane.b32.xlu0 %v1342, 96
      %v1572 = vpop.permute.xlu0 %1571
      %1573 = vrot.lane.b32.xlu0 %v1347, 96
      %v1574 = vpop.permute.xlu0 %1573
      %1575 = vrot.lane.b32.xlu0 %v1350, 96
      %v1576 = vpop.permute.xlu0 %1575
      %1577 = vrot.lane.b32.xlu0 %v1355, 96
      %v1578 = vpop.permute.xlu0 %1577
      %1579 = vrot.lane.b32.xlu0 %v1358, 96
      %v1580 = vpop.permute.xlu0 %1579
      %1581 = vrot.lane.b32.xlu0 %v1363, 96
      %v1582 = vpop.permute.xlu0 %1581
      %1583 = vrot.lane.b32.xlu0 %v1366, 96
      %v1584 = vpop.permute.xlu0 %1583
      %1585 = vrot.lane.b32.xlu0 %v1371, 96
      %v1586 = vpop.permute.xlu0 %1585
      %1587 = vrot.lane.b32.xlu0 %v1374, 96
      %v1588 = vpop.permute.xlu0 %1587
      %1589 = vrot.lane.b32.xlu0 %v1379, 96
      %v1590 = vpop.permute.xlu0 %1589
      %1591 = vrot.lane.b32.xlu0 %v1382, 96
      %v1592 = vpop.permute.xlu0 %1591
      %1593 = vrot.lane.b32.xlu0 %v1387, 96
      %v1594 = vpop.permute.xlu0 %1593
      %1595 = vrot.lane.b32.xlu0 %v1390, 96
      %v1596 = vpop.permute.xlu0 %1595
      %1597 = vrot.lane.b32.xlu0 %v1395, 96
      %v1598 = vpop.permute.xlu0 %1597
      %1599 = vrot.lane.b32.xlu0 %v1398, 96
      %v1600 = vpop.permute.xlu0 %1599
      %1601 = vrot.lane.b32.xlu0 %v1403, 96
      %v1602 = vpop.permute.xlu0 %1601
      %1603 = vrot.lane.b32.xlu0 %v1406, 96
      %v1604 = vpop.permute.xlu0 %1603
      %1605 = vrot.lane.b32.xlu0 %v1411, 96
      %v1606 = vpop.permute.xlu0 %1605
      %1607 = vrot.lane.b32.xlu0 %v1414, 96
      %v1608 = vpop.permute.xlu0 %1607
      %v1673 = vadd.f32 %v1163, %v1482
      %v1674 = vadd.f32 %v1166, %v1484
      %v1675 = vadd.f32 %v1171, %v1486
      %v1676 = vadd.f32 %v1174, %v1488
      %v1677 = vadd.f32 %v1179, %v1490
      %v1678 = vadd.f32 %v1182, %v1492
      %v1679 = vadd.f32 %v1187, %v1494
      %v1680 = vadd.f32 %v1190, %v1496
      %v1681 = vadd.f32 %v1195, %v1498
      %v1682 = vadd.f32 %v1198, %v1500
      %v1683 = vadd.f32 %v1203, %v1502
      %v1684 = vadd.f32 %v1206, %v1504
      %v1685 = vadd.f32 %v1211, %v1506
      %v1686 = vadd.f32 %v1214, %v1508
      %v1687 = vadd.f32 %v1219, %v1510
      %v1688 = vadd.f32 %v1222, %v1512
      %v1689 = vadd.f32 %v1227, %v1514
      %v1690 = vadd.f32 %v1230, %v1516
      %v1691 = vadd.f32 %v1235, %v1518
      %v1692 = vadd.f32 %v1238, %v1520
      %v1693 = vadd.f32 %v1243, %v1522
      %v1694 = vadd.f32 %v1246, %v1524
      %v1695 = vadd.f32 %v1251, %v1526
      %v1696 = vadd.f32 %v1254, %v1528
      %v1697 = vadd.f32 %v1259, %v1530
      %v1698 = vadd.f32 %v1262, %v1532
      %v1699 = vadd.f32 %v1267, %v1534
      %v1700 = vadd.f32 %v1270, %v1536
      %v1701 = vadd.f32 %v1275, %v1538
      %v1702 = vadd.f32 %v1278, %v1540
      %v1703 = vadd.f32 %v1283, %v1542
      %v1704 = vadd.f32 %v1286, %v1544
      %v1705 = vadd.f32 %v1291, %v1546
      %v1706 = vadd.f32 %v1294, %v1548
      %v1707 = vadd.f32 %v1299, %v1550
      %v1708 = vadd.f32 %v1302, %v1552
      %v1709 = vadd.f32 %v1307, %v1554
      %v1710 = vadd.f32 %v1310, %v1556
      %v1711 = vadd.f32 %v1315, %v1558
      %v1712 = vadd.f32 %v1318, %v1560
      %v1713 = vadd.f32 %v1323, %v1562
      %v1714 = vadd.f32 %v1326, %v1564
      %v1715 = vadd.f32 %v1331, %v1566
      %v1716 = vadd.f32 %v1334, %v1568
      %v1717 = vadd.f32 %v1339, %v1570
      %v1718 = vadd.f32 %v1342, %v1572
      %v1719 = vadd.f32 %v1347, %v1574
      %v1720 = vadd.f32 %v1350, %v1576
      %v1721 = vadd.f32 %v1355, %v1578
      %v1722 = vadd.f32 %v1358, %v1580
      %v1723 = vadd.f32 %v1363, %v1582
      %v1724 = vadd.f32 %v1366, %v1584
      %v1725 = vadd.f32 %v1371, %v1586
      %v1726 = vadd.f32 %v1374, %v1588
      %v1727 = vadd.f32 %v1379, %v1590
      %v1728 = vadd.f32 %v1382, %v1592
      %v1729 = vadd.f32 %v1387, %v1594
      %v1730 = vadd.f32 %v1390, %v1596
      %v1731 = vadd.f32 %v1395, %v1598
      %v1732 = vadd.f32 %v1398, %v1600
      %v1733 = vadd.f32 %v1403, %v1602
      %v1734 = vadd.f32 %v1406, %v1604
      %v1735 = vadd.f32 %v1411, %v1606
      %v1736 = vadd.f32 %v1414, %v1608
      %v1737 = vld [vmem:[%s2] sm:$0xff]
      %vm1738 = vcmask 64512
      %v1740 = vsel %vm1738, %v229, 0
      %v1743 = vsel %vm1738, %v230, 0
      %v1746 = vsel %vm1738, %v231, 0
      %v1749 = vsel %vm1738, %v232, 0
      %v1752 = vsel %vm1738, %v233, 0
      %v1755 = vsel %vm1738, %v234, 0
      %v1758 = vsel %vm1738, %v235, 0
      %v1761 = vsel %vm1738, %v236, 0
      %v1764 = vsel %vm1738, %v237, 0
      %v1767 = vsel %vm1738, %v238, 0
      %v1770 = vsel %vm1738, %v239, 0
      %v1773 = vsel %vm1738, %v240, 0
      %v1776 = vsel %vm1738, %v241, 0
      %v1779 = vsel %vm1738, %v242, 0
      %v1782 = vsel %vm1738, %v243, 0
      %v1785 = vsel %vm1738, %v244, 0
      %v1788 = vsel %vm1738, %v245, 0
      %v1791 = vsel %vm1738, %v246, 0
      %v1794 = vsel %vm1738, %v247, 0
      %v1797 = vsel %vm1738, %v248, 0
      %v1800 = vsel %vm1738, %v249, 0
      %v1803 = vsel %vm1738, %v250, 0
      %v1806 = vsel %vm1738, %v251, 0
      %v1809 = vsel %vm1738, %v252, 0
      %v1812 = vsel %vm1738, %v253, 0
      %v1815 = vsel %vm1738, %v254, 0
      %v1818 = vsel %vm1738, %v255, 0
      %v1821 = vsel %vm1738, %v256, 0
      %v1824 = vsel %vm1738, %v257, 0
      %v1827 = vsel %vm1738, %v258, 0
      %v1830 = vsel %vm1738, %v259, 0
      %v1833 = vsel %vm1738, %v260, 0
      %v1836 = vsel %vm1738, %v261, 0
      %v1839 = vsel %vm1738, %v262, 0
      %v1842 = vsel %vm1738, %v263, 0
      %v1845 = vsel %vm1738, %v264, 0
      %v1848 = vsel %vm1738, %v265, 0
      %v1851 = vsel %vm1738, %v266, 0
      %v1854 = vsel %vm1738, %v267, 0
      %v1857 = vsel %vm1738, %v268, 0
      %v1860 = vsel %vm1738, %v269, 0
      %v1863 = vsel %vm1738, %v270, 0
      %v1866 = vsel %vm1738, %v271, 0
      %v1869 = vsel %vm1738, %v272, 0
      %v1872 = vsel %vm1738, %v273, 0
      %v1875 = vsel %vm1738, %v274, 0
      %v1878 = vsel %vm1738, %v275, 0
      %v1881 = vsel %vm1738, %v276, 0
      %v1884 = vsel %vm1738, %v277, 0
      %v1887 = vsel %vm1738, %v278, 0
      %v1890 = vsel %vm1738, %v279, 0
      %v1893 = vsel %vm1738, %v280, 0
      %v1896 = vsel %vm1738, %v281, 0
      %v1899 = vsel %vm1738, %v282, 0
      %v1902 = vsel %vm1738, %v283, 0
      %v1905 = vsel %vm1738, %v284, 0
      %v1908 = vsel %vm1738, %v285, 0
      %v1911 = vsel %vm1738, %v286, 0
      %v1914 = vsel %vm1738, %v287, 0
      %v1917 = vsel %vm1738, %v288, 0
      %v1920 = vsel %vm1738, %v289, 0
      %v1923 = vsel %vm1738, %v290, 0
      %v1926 = vsel %vm1738, %v291, 0
      %v1929 = vsel %vm1738, %v292, 0
      %1931 = vmatprep.subr.mxu0 0.0
      %1932 = vmatpush1.msra.mxu0 %v1737
      %1933 = vmatprep.subr.mxu0 0.0
      %1934 = vmatpush1.msra.mxu0 0.0
      %1935 = vmatprep.subr.mxu0 0.0
      %1936 = vmatpush1.msra.mxu0 0.0
      %1937 = vmatprep.subr.mxu0 0.0
      %1938 = vmatpush1.msra.mxu0 0.0
      %1939 = vmatprep.subr.mxu0 0.0
      %1940 = vmatpush1.msra.mxu0 0.0
      %1941 = vmatprep.subr.mxu0 0.0
      %1942 = vmatpush1.msra.mxu0 0.0
      %1943 = vmatprep.subr.mxu0 0.0
      %1944 = vmatpush1.msra.mxu0 0.0
      %1945 = vmatprep.subr.mxu0 0.0
      %1946 = vmatpush1.msra.mxu0 0.0
      %1947 = vmatprep.subr.mxu0 0.0
      %1948 = vmatpush1.msra.mxu0 0.0
      %1949 = vmatprep.subr.mxu0 0.0
      %1950 = vmatpush1.msra.mxu0 0.0
      %1951 = vmatprep.subr.mxu0 0.0
      %1952 = vmatpush1.msra.mxu0 0.0
      %1953 = vmatprep.subr.mxu0 0.0
      %1954 = vmatpush1.msra.mxu0 0.0
      %1955 = vmatprep.subr.mxu0 0.0
      %1956 = vmatpush1.msra.mxu0 0.0
      %1957 = vmatprep.subr.mxu0 0.0
      %1958 = vmatpush1.msra.mxu0 0.0
      %1959 = vmatprep.subr.mxu0 0.0
      %1960 = vmatpush1.msra.mxu0 0.0
      %1961 = vmatprep.subr.mxu0 0.0
      %1962 = vmatpush1.msra.mxu0 0.0
      %1963 = vmatprep.subr.mxu0 0.0
      %1964 = vmatpush1.msra.mxu0 0.0
      %1965 = vmatprep.subr.mxu0 0.0
      %1966 = vmatpush1.msra.mxu0 0.0
      %1967 = vmatprep.subr.mxu0 0.0
      %1968 = vmatpush1.msra.mxu0 0.0
      %1969 = vmatprep.subr.mxu0 0.0
      %1970 = vmatpush1.msra.mxu0 0.0
      %1971 = vmatprep.subr.mxu0 0.0
      %1972 = vmatpush1.msra.mxu0 0.0
      %1973 = vmatprep.subr.mxu0 0.0
      %1974 = vmatpush1.msra.mxu0 0.0
      %1975 = vmatprep.subr.mxu0 0.0
      %1976 = vmatpush1.msra.mxu0 0.0
      %1977 = vmatprep.subr.mxu0 0.0
      %1978 = vmatpush1.msra.mxu0 0.0
      %1979 = vmatprep.subr.mxu0 0.0
      %1980 = vmatpush1.msra.mxu0 0.0
      %1981 = vmatprep.subr.mxu0 0.0
      %1982 = vmatpush1.msra.mxu0 0.0
      %1983 = vmatprep.subr.mxu0 0.0
      %1984 = vmatpush1.msra.mxu0 0.0
      %1985 = vmatprep.subr.mxu0 0.0
      %1986 = vmatpush1.msra.mxu0 0.0
      %1987 = vmatprep.subr.mxu0 0.0
      %1988 = vmatpush1.msra.mxu0 0.0
      %1989 = vmatprep.subr.mxu0 0.0
      %1990 = vmatpush1.msra.mxu0 0.0
      %1991 = vmatprep.subr.mxu0 0.0
      %1992 = vmatpush1.msra.mxu0 0.0
      %1993 = vmatprep.subr.mxu0 0.0
      %1994 = vmatpush1.msra.mxu0 0.0
      %1995 = vmatprep.mubr.f32.mxu0 0.0
      %1996 = vmatmul.mubr.f32.gmra.mrb[0].mxu0 %v1740
      %v1997 = vpop.f32.mrb[0].mxu0
      %v1998 = vadd.f32 0.0, %v1997
      %v1999 = vpop.f32.mrb[0].mxu0
      %2000 = vmatprep.mubr.f32.mxu0 0.0
      %2001 = vmatmul.mubr.f32.gmra.mrb[0].mxu0 %v1743
      %v2002 = vpop.f32.mrb[0].mxu0
      %v2003 = vadd.f32 0.0, %v2002
      %v2004 = vpop.f32.mrb[0].mxu0
      %2005 = vmatprep.mubr.f32.mxu0 0.0
      %2006 = vmatmul.mubr.f32.gmra.mrb[0].mxu0 %v1746
      %v2007 = vpop.f32.mrb[0].mxu0
      %v2008 = vadd.f32 0.0, %v2007
      %v2009 = vpop.f32.mrb[0].mxu0
      %2010 = vmatprep.mubr.f32.mxu0 0.0
      %2011 = vmatmul.mubr.f32.gmra.mrb[0].mxu0 %v1749
      %v2012 = vpop.f32.mrb[0].mxu0
      %v2013 = vadd.f32 0.0, %v2012
      %v2014 = vpop.f32.mrb[0].mxu0
      %2015 = vmatprep.mubr.f32.mxu0 0.0
      %2016 = vmatmul.mubr.f32.gmra.mrb[0].mxu0 %v1752
      %v2017 = vpop.f32.mrb[0].mxu0
      %v2018 = vadd.f32 0.0, %v2017
      %v2019 = vpop.f32.mrb[0].mxu0
      %2020 = vmatprep.mubr.f32.mxu0 0.0
      %2021 = vmatmul.mubr.f32.gmra.mrb[0].mxu0 %v1755
      %v2022 = vpop.f32.mrb[0].mxu0
      %v2023 = vadd.f32 0.0, %v2022
      %v2024 = vpop.f32.mrb[0].mxu0
      %2025 = vmatprep.mubr.f32.mxu0 0.0
      %2026 = vmatmul.mubr.f32.gmra.mrb[0].mxu0 %v1758
      %v2027 = vpop.f32.mrb[0].mxu0
      %v2028 = vadd.f32 0.0, %v2027
      %v2029 = vpop.f32.mrb[0].mxu0
      %2030 = vmatprep.mubr.f32.mxu0 0.0
      %2031 = vmatmul.mubr.f32.gmra.mrb[0].mxu0 %v1761
      %v2032 = vpop.f32.mrb[0].mxu0
      %v2033 = vadd.f32 0.0, %v2032
      %v2034 = vpop.f32.mrb[0].mxu0
      %2035 = vmatprep.mubr.f32.mxu0 0.0
      %2036 = vmatmul.mubr.f32.gmra.mrb[0].mxu0 %v1764
      %v2037 = vpop.f32.mrb[0].mxu0
      %v2038 = vadd.f32 0.0, %v2037
      %v2039 = vpop.f32.mrb[0].mxu0
      %2040 = vmatprep.mubr.f32.mxu0 0.0
      %2041 = vmatmul.mubr.f32.gmra.mrb[0].mxu0 %v1767
      %v2042 = vpop.f32.mrb[0].mxu0
      %v2043 = vadd.f32 0.0, %v2042
      %v2044 = vpop.f32.mrb[0].mxu0
      %2045 = vmatprep.mubr.f32.mxu0 0.0
      %2046 = vmatmul.mubr.f32.gmra.mrb[0].mxu0 %v1770
      %v2047 = vpop.f32.mrb[0].mxu0
      %v2048 = vadd.f32 0.0, %v2047
      %v2049 = vpop.f32.mrb[0].mxu0
      %2050 = vmatprep.mubr.f32.mxu0 0.0
      %2051 = vmatmul.mubr.f32.gmra.mrb[0].mxu0 %v1773
      %v2052 = vpop.f32.mrb[0].mxu0
      %v2053 = vadd.f32 0.0, %v2052
      %v2054 = vpop.f32.mrb[0].mxu0
      %2055 = vmatprep.mubr.f32.mxu0 0.0
      %2056 = vmatmul.mubr.f32.gmra.mrb[0].mxu0 %v1776
      %v2057 = vpop.f32.mrb[0].mxu0
      %v2058 = vadd.f32 0.0, %v2057
      %v2059 = vpop.f32.mrb[0].mxu0
      %2060 = vmatprep.mubr.f32.mxu0 0.0
      %2061 = vmatmul.mubr.f32.gmra.mrb[0].mxu0 %v1779
      %v2062 = vpop.f32.mrb[0].mxu0
      %v2063 = vadd.f32 0.0, %v2062
      %v2064 = vpop.f32.mrb[0].mxu0
      %2065 = vmatprep.mubr.f32.mxu0 0.0
      %2066 = vmatmul.mubr.f32.gmra.mrb[0].mxu0 %v1782
      %v2067 = vpop.f32.mrb[0].mxu0
      %v2068 = vadd.f32 0.0, %v2067
      %v2069 = vpop.f32.mrb[0].mxu0
      %2070 = vmatprep.mubr.f32.mxu0 0.0
      %2071 = vmatmul.mubr.f32.gmra.mrb[0].mxu0 %v1785
      %v2072 = vpop.f32.mrb[0].mxu0
      %v2073 = vadd.f32 0.0, %v2072
      %v2074 = vpop.f32.mrb[0].mxu0
      %2075 = vmatprep.mubr.f32.mxu0 0.0
      %2076 = vmatmul.mubr.f32.gmra.mrb[0].mxu0 %v1788
      %v2077 = vpop.f32.mrb[0].mxu0
      %v2078 = vadd.f32 0.0, %v2077
      %v2079 = vpop.f32.mrb[0].mxu0
      %2080 = vmatprep.mubr.f32.mxu0 0.0
      %2081 = vmatmul.mubr.f32.gmra.mrb[0].mxu0 %v1791
      %v2082 = vpop.f32.mrb[0].mxu0
      %v2083 = vadd.f32 0.0, %v2082
      %v2084 = vpop.f32.mrb[0].mxu0
      %2085 = vmatprep.mubr.f32.mxu0 0.0
      %2086 = vmatmul.mubr.f32.gmra.mrb[0].mxu0 %v1794
      %v2087 = vpop.f32.mrb[0].mxu0
      %v2088 = vadd.f32 0.0, %v2087
      %v2089 = vpop.f32.mrb[0].mxu0
      %2090 = vmatprep.mubr.f32.mxu0 0.0
      %2091 = vmatmul.mubr.f32.gmra.mrb[0].mxu0 %v1797
      %v2092 = vpop.f32.mrb[0].mxu0
      %v2093 = vadd.f32 0.0, %v2092
      %v2094 = vpop.f32.mrb[0].mxu0
      %2095 = vmatprep.mubr.f32.mxu0 0.0
      %2096 = vmatmul.mubr.f32.gmra.mrb[0].mxu0 %v1800
      %v2097 = vpop.f32.mrb[0].mxu0
      %v2098 = vadd.f32 0.0, %v2097
      %v2099 = vpop.f32.mrb[0].mxu0
      %2100 = vmatprep.mubr.f32.mxu0 0.0
      %2101 = vmatmul.mubr.f32.gmra.mrb[0].mxu0 %v1803
      %v2102 = vpop.f32.mrb[0].mxu0
      %v2103 = vadd.f32 0.0, %v2102
      %v2104 = vpop.f32.mrb[0].mxu0
      %2105 = vmatprep.mubr.f32.mxu0 0.0
      %2106 = vmatmul.mubr.f32.gmra.mrb[0].mxu0 %v1806
      %v2107 = vpop.f32.mrb[0].mxu0
      %v2108 = vadd.f32 0.0, %v2107
      %v2109 = vpop.f32.mrb[0].mxu0
      %2110 = vmatprep.mubr.f32.mxu0 0.0
      %2111 = vmatmul.mubr.f32.gmra.mrb[0].mxu0 %v1809
      %v2112 = vpop.f32.mrb[0].mxu0
      %v2113 = vadd.f32 0.0, %v2112
      %v2114 = vpop.f32.mrb[0].mxu0
      %2115 = vmatprep.mubr.f32.mxu0 0.0
      %2116 = vmatmul.mubr.f32.gmra.mrb[0].mxu0 %v1812
      %v2117 = vpop.f32.mrb[0].mxu0
      %v2118 = vadd.f32 0.0, %v2117
      %v2119 = vpop.f32.mrb[0].mxu0
      %2120 = vmatprep.mubr.f32.mxu0 0.0
      %2121 = vmatmul.mubr.f32.gmra.mrb[0].mxu0 %v1815
      %v2122 = vpop.f32.mrb[0].mxu0
      %v2123 = vadd.f32 0.0, %v2122
      %v2124 = vpop.f32.mrb[0].mxu0
      %2125 = vmatprep.mubr.f32.mxu0 0.0
      %2126 = vmatmul.mubr.f32.gmra.mrb[0].mxu0 %v1818
      %v2127 = vpop.f32.mrb[0].mxu0
      %v2128 = vadd.f32 0.0, %v2127
      %v2129 = vpop.f32.mrb[0].mxu0
      %2130 = vmatprep.mubr.f32.mxu0 0.0
      %2131 = vmatmul.mubr.f32.gmra.mrb[0].mxu0 %v1821
      %v2132 = vpop.f32.mrb[0].mxu0
      %v2133 = vadd.f32 0.0, %v2132
      %v2134 = vpop.f32.mrb[0].mxu0
      %2135 = vmatprep.mubr.f32.mxu0 0.0
      %2136 = vmatmul.mubr.f32.gmra.mrb[0].mxu0 %v1824
      %v2137 = vpop.f32.mrb[0].mxu0
      %v2138 = vadd.f32 0.0, %v2137
      %v2139 = vpop.f32.mrb[0].mxu0
      %2140 = vmatprep.mubr.f32.mxu0 0.0
      %2141 = vmatmul.mubr.f32.gmra.mrb[0].mxu0 %v1827
      %v2142 = vpop.f32.mrb[0].mxu0
      %v2143 = vadd.f32 0.0, %v2142
      %v2144 = vpop.f32.mrb[0].mxu0
      %2145 = vmatprep.mubr.f32.mxu0 0.0
      %2146 = vmatmul.mubr.f32.gmra.mrb[0].mxu0 %v1830
      %v2147 = vpop.f32.mrb[0].mxu0
      %v2148 = vadd.f32 0.0, %v2147
      %v2149 = vpop.f32.mrb[0].mxu0
      %2150 = vmatprep.mubr.f32.mxu0 0.0
      %2151 = vmatmul.mubr.f32.gmra.mrb[0].mxu0 %v1833
      %v2152 = vpop.f32.mrb[0].mxu0
      %v2153 = vadd.f32 0.0, %v2152
      %v2154 = vpop.f32.mrb[0].mxu0
      %2155 = vmatprep.mubr.f32.mxu0 0.0
      %2156 = vmatmul.mubr.f32.gmra.mrb[0].mxu0 %v1836
      %v2157 = vpop.f32.mrb[0].mxu0
      %v2158 = vadd.f32 0.0, %v2157
      %v2159 = vpop.f32.mrb[0].mxu0
      %2160 = vmatprep.mubr.f32.mxu0 0.0
      %2161 = vmatmul.mubr.f32.gmra.mrb[0].mxu0 %v1839
      %v2162 = vpop.f32.mrb[0].mxu0
      %v2163 = vadd.f32 0.0, %v2162
      %v2164 = vpop.f32.mrb[0].mxu0
      %2165 = vmatprep.mubr.f32.mxu0 0.0
      %2166 = vmatmul.mubr.f32.gmra.mrb[0].mxu0 %v1842
      %v2167 = vpop.f32.mrb[0].mxu0
      %v2168 = vadd.f32 0.0, %v2167
      %v2169 = vpop.f32.mrb[0].mxu0
      %2170 = vmatprep.mubr.f32.mxu0 0.0
      %2171 = vmatmul.mubr.f32.gmra.mrb[0].mxu0 %v1845
      %v2172 = vpop.f32.mrb[0].mxu0
      %v2173 = vadd.f32 0.0, %v2172
      %v2174 = vpop.f32.mrb[0].mxu0
      %2175 = vmatprep.mubr.f32.mxu0 0.0
      %2176 = vmatmul.mubr.f32.gmra.mrb[0].mxu0 %v1848
      %v2177 = vpop.f32.mrb[0].mxu0
      %v2178 = vadd.f32 0.0, %v2177
      %v2179 = vpop.f32.mrb[0].mxu0
      %2180 = vmatprep.mubr.f32.mxu0 0.0
      %2181 = vmatmul.mubr.f32.gmra.mrb[0].mxu0 %v1851
      %v2182 = vpop.f32.mrb[0].mxu0
      %v2183 = vadd.f32 0.0, %v2182
      %v2184 = vpop.f32.mrb[0].mxu0
      %2185 = vmatprep.mubr.f32.mxu0 0.0
      %2186 = vmatmul.mubr.f32.gmra.mrb[0].mxu0 %v1854
      %v2187 = vpop.f32.mrb[0].mxu0
      %v2188 = vadd.f32 0.0, %v2187
      %v2189 = vpop.f32.mrb[0].mxu0
      %2190 = vmatprep.mubr.f32.mxu0 0.0
      %2191 = vmatmul.mubr.f32.gmra.mrb[0].mxu0 %v1857
      %v2192 = vpop.f32.mrb[0].mxu0
      %v2193 = vadd.f32 0.0, %v2192
      %v2194 = vpop.f32.mrb[0].mxu0
      %2195 = vmatprep.mubr.f32.mxu0 0.0
      %2196 = vmatmul.mubr.f32.gmra.mrb[0].mxu0 %v1860
      %v2197 = vpop.f32.mrb[0].mxu0
      %v2198 = vadd.f32 0.0, %v2197
      %v2199 = vpop.f32.mrb[0].mxu0
      %2200 = vmatprep.mubr.f32.mxu0 0.0
      %2201 = vmatmul.mubr.f32.gmra.mrb[0].mxu0 %v1863
      %v2202 = vpop.f32.mrb[0].mxu0
      %v2203 = vadd.f32 0.0, %v2202
      %v2204 = vpop.f32.mrb[0].mxu0
      %2205 = vmatprep.mubr.f32.mxu0 0.0
      %2206 = vmatmul.mubr.f32.gmra.mrb[0].mxu0 %v1866
      %v2207 = vpop.f32.mrb[0].mxu0
      %v2208 = vadd.f32 0.0, %v2207
      %v2209 = vpop.f32.mrb[0].mxu0
      %2210 = vmatprep.mubr.f32.mxu0 0.0
      %2211 = vmatmul.mubr.f32.gmra.mrb[0].mxu0 %v1869
      %v2212 = vpop.f32.mrb[0].mxu0
      %v2213 = vadd.f32 0.0, %v2212
      %v2214 = vpop.f32.mrb[0].mxu0
      %2215 = vmatprep.mubr.f32.mxu0 0.0
      %2216 = vmatmul.mubr.f32.gmra.mrb[0].mxu0 %v1872
      %v2217 = vpop.f32.mrb[0].mxu0
      %v2218 = vadd.f32 0.0, %v2217
      %v2219 = vpop.f32.mrb[0].mxu0
      %2220 = vmatprep.mubr.f32.mxu0 0.0
      %2221 = vmatmul.mubr.f32.gmra.mrb[0].mxu0 %v1875
      %v2222 = vpop.f32.mrb[0].mxu0
      %v2223 = vadd.f32 0.0, %v2222
      %v2224 = vpop.f32.mrb[0].mxu0
      %2225 = vmatprep.mubr.f32.mxu0 0.0
      %2226 = vmatmul.mubr.f32.gmra.mrb[0].mxu0 %v1878
      %v2227 = vpop.f32.mrb[0].mxu0
      %v2228 = vadd.f32 0.0, %v2227
      %v2229 = vpop.f32.mrb[0].mxu0
      %2230 = vmatprep.mubr.f32.mxu0 0.0
      %2231 = vmatmul.mubr.f32.gmra.mrb[0].mxu0 %v1881
      %v2232 = vpop.f32.mrb[0].mxu0
      %v2233 = vadd.f32 0.0, %v2232
      %v2234 = vpop.f32.mrb[0].mxu0
      %2235 = vmatprep.mubr.f32.mxu0 0.0
      %2236 = vmatmul.mubr.f32.gmra.mrb[0].mxu0 %v1884
      %v2237 = vpop.f32.mrb[0].mxu0
      %v2238 = vadd.f32 0.0, %v2237
      %v2239 = vpop.f32.mrb[0].mxu0
      %2240 = vmatprep.mubr.f32.mxu0 0.0
      %2241 = vmatmul.mubr.f32.gmra.mrb[0].mxu0 %v1887
      %v2242 = vpop.f32.mrb[0].mxu0
      %v2243 = vadd.f32 0.0, %v2242
      %v2244 = vpop.f32.mrb[0].mxu0
      %2245 = vmatprep.mubr.f32.mxu0 0.0
      %2246 = vmatmul.mubr.f32.gmra.mrb[0].mxu0 %v1890
      %v2247 = vpop.f32.mrb[0].mxu0
      %v2248 = vadd.f32 0.0, %v2247
      %v2249 = vpop.f32.mrb[0].mxu0
      %2250 = vmatprep.mubr.f32.mxu0 0.0
      %2251 = vmatmul.mubr.f32.gmra.mrb[0].mxu0 %v1893
      %v2252 = vpop.f32.mrb[0].mxu0
      %v2253 = vadd.f32 0.0, %v2252
      %v2254 = vpop.f32.mrb[0].mxu0
      %2255 = vmatprep.mubr.f32.mxu0 0.0
      %2256 = vmatmul.mubr.f32.gmra.mrb[0].mxu0 %v1896
      %v2257 = vpop.f32.mrb[0].mxu0
      %v2258 = vadd.f32 0.0, %v2257
      %v2259 = vpop.f32.mrb[0].mxu0
      %2260 = vmatprep.mubr.f32.mxu0 0.0
      %2261 = vmatmul.mubr.f32.gmra.mrb[0].mxu0 %v1899
      %v2262 = vpop.f32.mrb[0].mxu0
      %v2263 = vadd.f32 0.0, %v2262
      %v2264 = vpop.f32.mrb[0].mxu0
      %2265 = vmatprep.mubr.f32.mxu0 0.0
      %2266 = vmatmul.mubr.f32.gmra.mrb[0].mxu0 %v1902
      %v2267 = vpop.f32.mrb[0].mxu0
      %v2268 = vadd.f32 0.0, %v2267
      %v2269 = vpop.f32.mrb[0].mxu0
      %2270 = vmatprep.mubr.f32.mxu0 0.0
      %2271 = vmatmul.mubr.f32.gmra.mrb[0].mxu0 %v1905
      %v2272 = vpop.f32.mrb[0].mxu0
      %v2273 = vadd.f32 0.0, %v2272
      %v2274 = vpop.f32.mrb[0].mxu0
      %2275 = vmatprep.mubr.f32.mxu0 0.0
      %2276 = vmatmul.mubr.f32.gmra.mrb[0].mxu0 %v1908
      %v2277 = vpop.f32.mrb[0].mxu0
      %v2278 = vadd.f32 0.0, %v2277
      %v2279 = vpop.f32.mrb[0].mxu0
      %2280 = vmatprep.mubr.f32.mxu0 0.0
      %2281 = vmatmul.mubr.f32.gmra.mrb[0].mxu0 %v1911
      %v2282 = vpop.f32.mrb[0].mxu0
      %v2283 = vadd.f32 0.0, %v2282
      %v2284 = vpop.f32.mrb[0].mxu0
      %2285 = vmatprep.mubr.f32.mxu0 0.0
      %2286 = vmatmul.mubr.f32.gmra.mrb[0].mxu0 %v1914
      %v2287 = vpop.f32.mrb[0].mxu0
      %v2288 = vadd.f32 0.0, %v2287
      %v2289 = vpop.f32.mrb[0].mxu0
      %2290 = vmatprep.mubr.f32.mxu0 0.0
      %2291 = vmatmul.mubr.f32.gmra.mrb[0].mxu0 %v1917
      %v2292 = vpop.f32.mrb[0].mxu0
      %v2293 = vadd.f32 0.0, %v2292
      %v2294 = vpop.f32.mrb[0].mxu0
      %2295 = vmatprep.mubr.f32.mxu0 0.0
      %2296 = vmatmul.mubr.f32.gmra.mrb[0].mxu0 %v1920
      %v2297 = vpop.f32.mrb[0].mxu0
      %v2298 = vadd.f32 0.0, %v2297
      %v2299 = vpop.f32.mrb[0].mxu0
      %2300 = vmatprep.mubr.f32.mxu0 0.0
      %2301 = vmatmul.mubr.f32.gmra.mrb[0].mxu0 %v1923
      %v2302 = vpop.f32.mrb[0].mxu0
      %v2303 = vadd.f32 0.0, %v2302
      %v2304 = vpop.f32.mrb[0].mxu0
      %2305 = vmatprep.mubr.f32.mxu0 0.0
      %2306 = vmatmul.mubr.f32.gmra.mrb[0].mxu0 %v1926
      %v2307 = vpop.f32.mrb[0].mxu0
      %v2308 = vadd.f32 0.0, %v2307
      %v2309 = vpop.f32.mrb[0].mxu0
      %2310 = vmatprep.mubr.f32.mxu0 0.0
      %2311 = vmatmul.mubr.f32.gmra.mrb[0].mxu0 %v1929
      %v2312 = vpop.f32.mrb[0].mxu0
      %v2313 = vadd.f32 0.0, %v2312
      %v2314 = vpop.f32.mrb[0].mxu0
      %2315 = vdwg.mxu0
      %v2316 = vxor.u32 %v1998, 2147483648
      %v2317 = vxor.u32 %v2003, 2147483648
      %v2318 = vxor.u32 %v2008, 2147483648
      %v2319 = vxor.u32 %v2013, 2147483648
      %v2320 = vxor.u32 %v2018, 2147483648
      %v2321 = vxor.u32 %v2023, 2147483648
      %v2322 = vxor.u32 %v2028, 2147483648
      %v2323 = vxor.u32 %v2033, 2147483648
      %v2324 = vxor.u32 %v2038, 2147483648
      %v2325 = vxor.u32 %v2043, 2147483648
      %v2326 = vxor.u32 %v2048, 2147483648
      %v2327 = vxor.u32 %v2053, 2147483648
      %v2328 = vxor.u32 %v2058, 2147483648
      %v2329 = vxor.u32 %v2063, 2147483648
      %v2330 = vxor.u32 %v2068, 2147483648
      %v2331 = vxor.u32 %v2073, 2147483648
      %v2332 = vxor.u32 %v2078, 2147483648
      %v2333 = vxor.u32 %v2083, 2147483648
      %v2334 = vxor.u32 %v2088, 2147483648
      %v2335 = vxor.u32 %v2093, 2147483648
      %v2336 = vxor.u32 %v2098, 2147483648
      %v2337 = vxor.u32 %v2103, 2147483648
      %v2338 = vxor.u32 %v2108, 2147483648
      %v2339 = vxor.u32 %v2113, 2147483648
      %v2340 = vxor.u32 %v2118, 2147483648
      %v2341 = vxor.u32 %v2123, 2147483648
      %v2342 = vxor.u32 %v2128, 2147483648
      %v2343 = vxor.u32 %v2133, 2147483648
      %v2344 = vxor.u32 %v2138, 2147483648
      %v2345 = vxor.u32 %v2143, 2147483648
      %v2346 = vxor.u32 %v2148, 2147483648
      %v2347 = vxor.u32 %v2153, 2147483648
      %v2348 = vxor.u32 %v2158, 2147483648
      %v2349 = vxor.u32 %v2163, 2147483648
      %v2350 = vxor.u32 %v2168, 2147483648
      %v2351 = vxor.u32 %v2173, 2147483648
      %v2352 = vxor.u32 %v2178, 2147483648
      %v2353 = vxor.u32 %v2183, 2147483648
      %v2354 = vxor.u32 %v2188, 2147483648
      %v2355 = vxor.u32 %v2193, 2147483648
      %v2356 = vxor.u32 %v2198, 2147483648
      %v2357 = vxor.u32 %v2203, 2147483648
      %v2358 = vxor.u32 %v2208, 2147483648
      %v2359 = vxor.u32 %v2213, 2147483648
      %v2360 = vxor.u32 %v2218, 2147483648
      %v2361 = vxor.u32 %v2223, 2147483648
      %v2362 = vxor.u32 %v2228, 2147483648
      %v2363 = vxor.u32 %v2233, 2147483648
      %v2364 = vxor.u32 %v2238, 2147483648
      %v2365 = vxor.u32 %v2243, 2147483648
      %v2366 = vxor.u32 %v2248, 2147483648
      %v2367 = vxor.u32 %v2253, 2147483648
      %v2368 = vxor.u32 %v2258, 2147483648
      %v2369 = vxor.u32 %v2263, 2147483648
      %v2370 = vxor.u32 %v2268, 2147483648
      %v2371 = vxor.u32 %v2273, 2147483648
      %v2372 = vxor.u32 %v2278, 2147483648
      %v2373 = vxor.u32 %v2283, 2147483648
      %v2374 = vxor.u32 %v2288, 2147483648
      %v2375 = vxor.u32 %v2293, 2147483648
      %v2376 = vxor.u32 %v2298, 2147483648
      %v2377 = vxor.u32 %v2303, 2147483648
      %v2378 = vxor.u32 %v2308, 2147483648
      %v2379 = vxor.u32 %v2313, 2147483648
      %v2380 = vmul.f32 %v2316, 1.442695
      %v2381 = vpow.pop %v2380
      %v2382 = vmul.f32 %v2317, 1.442695
      %v2383 = vpow.pop %v2382
      %v2384 = vmul.f32 %v2318, 1.442695
      %v2385 = vpow.pop %v2384
      %v2386 = vmul.f32 %v2319, 1.442695
      %v2387 = vpow.pop %v2386
      %v2388 = vmul.f32 %v2320, 1.442695
      %v2389 = vpow.pop %v2388
      %v2390 = vmul.f32 %v2321, 1.442695
      %v2391 = vpow.pop %v2390
      %v2392 = vmul.f32 %v2322, 1.442695
      %v2393 = vpow.pop %v2392
      %v2394 = vmul.f32 %v2323, 1.442695
      %v2395 = vpow.pop %v2394
      %v2396 = vmul.f32 %v2324, 1.442695
      %v2397 = vpow.pop %v2396
      %v2398 = vmul.f32 %v2325, 1.442695
      %v2399 = vpow.pop %v2398
      %v2400 = vmul.f32 %v2326, 1.442695
      %v2401 = vpow.pop %v2400
      %v2402 = vmul.f32 %v2327, 1.442695
      %v2403 = vpow.pop %v2402
      %v2404 = vmul.f32 %v2328, 1.442695
      %v2405 = vpow.pop %v2404
      %v2406 = vmul.f32 %v2329, 1.442695
      %v2407 = vpow.pop %v2406
      %v2408 = vmul.f32 %v2330, 1.442695
      %v2409 = vpow.pop %v2408
      %v2410 = vmul.f32 %v2331, 1.442695
      %v2411 = vpow.pop %v2410
      %v2412 = vmul.f32 %v2332, 1.442695
      %v2413 = vpow.pop %v2412
      %v2414 = vmul.f32 %v2333, 1.442695
      %v2415 = vpow.pop %v2414
      %v2416 = vmul.f32 %v2334, 1.442695
      %v2417 = vpow.pop %v2416
      %v2418 = vmul.f32 %v2335, 1.442695
      %v2419 = vpow.pop %v2418
      %v2420 = vmul.f32 %v2336, 1.442695
      %v2421 = vpow.pop %v2420
      %v2422 = vmul.f32 %v2337, 1.442695
      %v2423 = vpow.pop %v2422
      %v2424 = vmul.f32 %v2338, 1.442695
      %v2425 = vpow.pop %v2424
      %v2426 = vmul.f32 %v2339, 1.442695
      %v2427 = vpow.pop %v2426
      %v2428 = vmul.f32 %v2340, 1.442695
      %v2429 = vpow.pop %v2428
      %v2430 = vmul.f32 %v2341, 1.442695
      %v2431 = vpow.pop %v2430
      %v2432 = vmul.f32 %v2342, 1.442695
      %v2433 = vpow.pop %v2432
      %v2434 = vmul.f32 %v2343, 1.442695
      %v2435 = vpow.pop %v2434
      %v2436 = vmul.f32 %v2344, 1.442695
      %v2437 = vpow.pop %v2436
      %v2438 = vmul.f32 %v2345, 1.442695
      %v2439 = vpow.pop %v2438
      %v2440 = vmul.f32 %v2346, 1.442695
      %v2441 = vpow.pop %v2440
      %v2442 = vmul.f32 %v2347, 1.442695
      %v2443 = vpow.pop %v2442
      %v2444 = vmul.f32 %v2348, 1.442695
      %v2445 = vpow.pop %v2444
      %v2446 = vmul.f32 %v2349, 1.442695
      %v2447 = vpow.pop %v2446
      %v2448 = vmul.f32 %v2350, 1.442695
      %v2449 = vpow.pop %v2448
      %v2450 = vmul.f32 %v2351, 1.442695
      %v2451 = vpow.pop %v2450
      %v2452 = vmul.f32 %v2352, 1.442695
      %v2453 = vpow.pop %v2452
      %v2454 = vmul.f32 %v2353, 1.442695
      %v2455 = vpow.pop %v2454
      %v2456 = vmul.f32 %v2354, 1.442695
      %v2457 = vpow.pop %v2456
      %v2458 = vmul.f32 %v2355, 1.442695
      %v2459 = vpow.pop %v2458
      %v2460 = vmul.f32 %v2356, 1.442695
      %v2461 = vpow.pop %v2460
      %v2462 = vmul.f32 %v2357, 1.442695
      %v2463 = vpow.pop %v2462
      %v2464 = vmul.f32 %v2358, 1.442695
      %v2465 = vpow.pop %v2464
      %v2466 = vmul.f32 %v2359, 1.442695
      %v2467 = vpow.pop %v2466
      %v2468 = vmul.f32 %v2360, 1.442695
      %v2469 = vpow.pop %v2468
      %v2470 = vmul.f32 %v2361, 1.442695
      %v2471 = vpow.pop %v2470
      %v2472 = vmul.f32 %v2362, 1.442695
      %v2473 = vpow.pop %v2472
      %v2474 = vmul.f32 %v2363, 1.442695
      %v2475 = vpow.pop %v2474
      %v2476 = vmul.f32 %v2364, 1.442695
      %v2477 = vpow.pop %v2476
      %v2478 = vmul.f32 %v2365, 1.442695
      %v2479 = vpow.pop %v2478
      %v2480 = vmul.f32 %v2366, 1.442695
      %v2481 = vpow.pop %v2480
      %v2482 = vmul.f32 %v2367, 1.442695
      %v2483 = vpow.pop %v2482
      %v2484 = vmul.f32 %v2368, 1.442695
      %v2485 = vpow.pop %v2484
      %v2486 = vmul.f32 %v2369, 1.442695
      %v2487 = vpow.pop %v2486
      %v2488 = vmul.f32 %v2370, 1.442695
      %v2489 = vpow.pop %v2488
      %v2490 = vmul.f32 %v2371, 1.442695
      %v2491 = vpow.pop %v2490
      %v2492 = vmul.f32 %v2372, 1.442695
      %v2493 = vpow.pop %v2492
      %v2494 = vmul.f32 %v2373, 1.442695
      %v2495 = vpow.pop %v2494
      %v2496 = vmul.f32 %v2374, 1.442695
      %v2497 = vpow.pop %v2496
      %v2498 = vmul.f32 %v2375, 1.442695
      %v2499 = vpow.pop %v2498
      %v2500 = vmul.f32 %v2376, 1.442695
      %v2501 = vpow.pop %v2500
      %v2502 = vmul.f32 %v2377, 1.442695
      %v2503 = vpow.pop %v2502
      %v2504 = vmul.f32 %v2378, 1.442695
      %v2505 = vpow.pop %v2504
      %v2506 = vmul.f32 %v2379, 1.442695
      %v2507 = vpow.pop %v2506
      %v2508 = vadd.f32 %v2381, 1.0
      %v2509 = vadd.f32 %v2383, 1.0
      %v2510 = vadd.f32 %v2385, 1.0
      %v2511 = vadd.f32 %v2387, 1.0
      %v2512 = vadd.f32 %v2389, 1.0
      %v2513 = vadd.f32 %v2391, 1.0
      %v2514 = vadd.f32 %v2393, 1.0
      %v2515 = vadd.f32 %v2395, 1.0
      %v2516 = vadd.f32 %v2397, 1.0
      %v2517 = vadd.f32 %v2399, 1.0
      %v2518 = vadd.f32 %v2401, 1.0
      %v2519 = vadd.f32 %v2403, 1.0
      %v2520 = vadd.f32 %v2405, 1.0
      %v2521 = vadd.f32 %v2407, 1.0
      %v2522 = vadd.f32 %v2409, 1.0
      %v2523 = vadd.f32 %v2411, 1.0
      %v2524 = vadd.f32 %v2413, 1.0
      %v2525 = vadd.f32 %v2415, 1.0
      %v2526 = vadd.f32 %v2417, 1.0
      %v2527 = vadd.f32 %v2419, 1.0
      %v2528 = vadd.f32 %v2421, 1.0
      %v2529 = vadd.f32 %v2423, 1.0
      %v2530 = vadd.f32 %v2425, 1.0
      %v2531 = vadd.f32 %v2427, 1.0
      %v2532 = vadd.f32 %v2429, 1.0
      %v2533 = vadd.f32 %v2431, 1.0
      %v2534 = vadd.f32 %v2433, 1.0
      %v2535 = vadd.f32 %v2435, 1.0
      %v2536 = vadd.f32 %v2437, 1.0
      %v2537 = vadd.f32 %v2439, 1.0
      %v2538 = vadd.f32 %v2441, 1.0
      %v2539 = vadd.f32 %v2443, 1.0
      %v2540 = vadd.f32 %v2445, 1.0
      %v2541 = vadd.f32 %v2447, 1.0
      %v2542 = vadd.f32 %v2449, 1.0
      %v2543 = vadd.f32 %v2451, 1.0
      %v2544 = vadd.f32 %v2453, 1.0
      %v2545 = vadd.f32 %v2455, 1.0
      %v2546 = vadd.f32 %v2457, 1.0
      %v2547 = vadd.f32 %v2459, 1.0
      %v2548 = vadd.f32 %v2461, 1.0
      %v2549 = vadd.f32 %v2463, 1.0
      %v2550 = vadd.f32 %v2465, 1.0
      %v2551 = vadd.f32 %v2467, 1.0
      %v2552 = vadd.f32 %v2469, 1.0
      %v2553 = vadd.f32 %v2471, 1.0
      %v2554 = vadd.f32 %v2473, 1.0
      %v2555 = vadd.f32 %v2475, 1.0
      %v2556 = vadd.f32 %v2477, 1.0
      %v2557 = vadd.f32 %v2479, 1.0
      %v2558 = vadd.f32 %v2481, 1.0
      %v2559 = vadd.f32 %v2483, 1.0
      %v2560 = vadd.f32 %v2485, 1.0
      %v2561 = vadd.f32 %v2487, 1.0
      %v2562 = vadd.f32 %v2489, 1.0
      %v2563 = vadd.f32 %v2491, 1.0
      %v2564 = vadd.f32 %v2493, 1.0
      %v2565 = vadd.f32 %v2495, 1.0
      %v2566 = vadd.f32 %v2497, 1.0
      %v2567 = vadd.f32 %v2499, 1.0
      %v2568 = vadd.f32 %v2501, 1.0
      %v2569 = vadd.f32 %v2503, 1.0
      %v2570 = vadd.f32 %v2505, 1.0
      %v2571 = vadd.f32 %v2507, 1.0
      %v2572 = vrcp.pop %v2508
      %v2573 = vmul.f32 1.0, %v2572
      %v2574 = vrcp.pop %v2509
      %v2575 = vmul.f32 1.0, %v2574
      %v2576 = vrcp.pop %v2510
      %v2577 = vmul.f32 1.0, %v2576
      %v2578 = vrcp.pop %v2511
      %v2579 = vmul.f32 1.0, %v2578
      %v2580 = vrcp.pop %v2512
      %v2581 = vmul.f32 1.0, %v2580
      %v2582 = vrcp.pop %v2513
      %v2583 = vmul.f32 1.0, %v2582
      %v2584 = vrcp.pop %v2514
      %v2585 = vmul.f32 1.0, %v2584
      %v2586 = vrcp.pop %v2515
      %v2587 = vmul.f32 1.0, %v2586
      %v2588 = vrcp.pop %v2516
      %v2589 = vmul.f32 1.0, %v2588
      %v2590 = vrcp.pop %v2517
      %v2591 = vmul.f32 1.0, %v2590
      %v2592 = vrcp.pop %v2518
      %v2593 = vmul.f32 1.0, %v2592
      %v2594 = vrcp.pop %v2519
      %v2595 = vmul.f32 1.0, %v2594
      %v2596 = vrcp.pop %v2520
      %v2597 = vmul.f32 1.0, %v2596
      %v2598 = vrcp.pop %v2521
      %v2599 = vmul.f32 1.0, %v2598
      %v2600 = vrcp.pop %v2522
      %v2601 = vmul.f32 1.0, %v2600
      %v2602 = vrcp.pop %v2523
      %v2603 = vmul.f32 1.0, %v2602
      %v2604 = vrcp.pop %v2524
      %v2605 = vmul.f32 1.0, %v2604
      %v2606 = vrcp.pop %v2525
      %v2607 = vmul.f32 1.0, %v2606
      %v2608 = vrcp.pop %v2526
      %v2609 = vmul.f32 1.0, %v2608
      %v2610 = vrcp.pop %v2527
      %v2611 = vmul.f32 1.0, %v2610
      %v2612 = vrcp.pop %v2528
      %v2613 = vmul.f32 1.0, %v2612
      %v2614 = vrcp.pop %v2529
      %v2615 = vmul.f32 1.0, %v2614
      %v2616 = vrcp.pop %v2530
      %v2617 = vmul.f32 1.0, %v2616
      %v2618 = vrcp.pop %v2531
      %v2619 = vmul.f32 1.0, %v2618
      %v2620 = vrcp.pop %v2532
      %v2621 = vmul.f32 1.0, %v2620
      %v2622 = vrcp.pop %v2533
      %v2623 = vmul.f32 1.0, %v2622
      %v2624 = vrcp.pop %v2534
      %v2625 = vmul.f32 1.0, %v2624
      %v2626 = vrcp.pop %v2535
      %v2627 = vmul.f32 1.0, %v2626
      %v2628 = vrcp.pop %v2536
      %v2629 = vmul.f32 1.0, %v2628
      %v2630 = vrcp.pop %v2537
      %v2631 = vmul.f32 1.0, %v2630
      %v2632 = vrcp.pop %v2538
      %v2633 = vmul.f32 1.0, %v2632
      %v2634 = vrcp.pop %v2539
      %v2635 = vmul.f32 1.0, %v2634
      %v2636 = vrcp.pop %v2540
      %v2637 = vmul.f32 1.0, %v2636
      %v2638 = vrcp.pop %v2541
      %v2639 = vmul.f32 1.0, %v2638
      %v2640 = vrcp.pop %v2542
      %v2641 = vmul.f32 1.0, %v2640
      %v2642 = vrcp.pop %v2543
      %v2643 = vmul.f32 1.0, %v2642
      %v2644 = vrcp.pop %v2544
      %v2645 = vmul.f32 1.0, %v2644
      %v2646 = vrcp.pop %v2545
      %v2647 = vmul.f32 1.0, %v2646
      %v2648 = vrcp.pop %v2546
      %v2649 = vmul.f32 1.0, %v2648
      %v2650 = vrcp.pop %v2547
      %v2651 = vmul.f32 1.0, %v2650
      %v2652 = vrcp.pop %v2548
      %v2653 = vmul.f32 1.0, %v2652
      %v2654 = vrcp.pop %v2549
      %v2655 = vmul.f32 1.0, %v2654
      %v2656 = vrcp.pop %v2550
      %v2657 = vmul.f32 1.0, %v2656
      %v2658 = vrcp.pop %v2551
      %v2659 = vmul.f32 1.0, %v2658
      %v2660 = vrcp.pop %v2552
      %v2661 = vmul.f32 1.0, %v2660
      %v2662 = vrcp.pop %v2553
      %v2663 = vmul.f32 1.0, %v2662
      %v2664 = vrcp.pop %v2554
      %v2665 = vmul.f32 1.0, %v2664
      %v2666 = vrcp.pop %v2555
      %v2667 = vmul.f32 1.0, %v2666
      %v2668 = vrcp.pop %v2556
      %v2669 = vmul.f32 1.0, %v2668
      %v2670 = vrcp.pop %v2557
      %v2671 = vmul.f32 1.0, %v2670
      %v2672 = vrcp.pop %v2558
      %v2673 = vmul.f32 1.0, %v2672
      %v2674 = vrcp.pop %v2559
      %v2675 = vmul.f32 1.0, %v2674
      %v2676 = vrcp.pop %v2560
      %v2677 = vmul.f32 1.0, %v2676
      %v2678 = vrcp.pop %v2561
      %v2679 = vmul.f32 1.0, %v2678
      %v2680 = vrcp.pop %v2562
      %v2681 = vmul.f32 1.0, %v2680
      %v2682 = vrcp.pop %v2563
      %v2683 = vmul.f32 1.0, %v2682
      %v2684 = vrcp.pop %v2564
      %v2685 = vmul.f32 1.0, %v2684
      %v2686 = vrcp.pop %v2565
      %v2687 = vmul.f32 1.0, %v2686
      %v2688 = vrcp.pop %v2566
      %v2689 = vmul.f32 1.0, %v2688
      %v2690 = vrcp.pop %v2567
      %v2691 = vmul.f32 1.0, %v2690
      %v2692 = vrcp.pop %v2568
      %v2693 = vmul.f32 1.0, %v2692
      %v2694 = vrcp.pop %v2569
      %v2695 = vmul.f32 1.0, %v2694
      %v2696 = vrcp.pop %v2570
      %v2697 = vmul.f32 1.0, %v2696
      %v2698 = vrcp.pop %v2571
      %v2699 = vmul.f32 1.0, %v2698
      %v2700 = vmul.f32 %v1998, %v2573
      %v2701 = vmul.f32 %v2003, %v2575
      %v2702 = vmul.f32 %v2008, %v2577
      %v2703 = vmul.f32 %v2013, %v2579
      %v2704 = vmul.f32 %v2018, %v2581
      %v2705 = vmul.f32 %v2023, %v2583
      %v2706 = vmul.f32 %v2028, %v2585
      %v2707 = vmul.f32 %v2033, %v2587
      %v2708 = vmul.f32 %v2038, %v2589
      %v2709 = vmul.f32 %v2043, %v2591
      %v2710 = vmul.f32 %v2048, %v2593
      %v2711 = vmul.f32 %v2053, %v2595
      %v2712 = vmul.f32 %v2058, %v2597
      %v2713 = vmul.f32 %v2063, %v2599
      %v2714 = vmul.f32 %v2068, %v2601
      %v2715 = vmul.f32 %v2073, %v2603
      %v2716 = vmul.f32 %v2078, %v2605
      %v2717 = vmul.f32 %v2083, %v2607
      %v2718 = vmul.f32 %v2088, %v2609
      %v2719 = vmul.f32 %v2093, %v2611
      %v2720 = vmul.f32 %v2098, %v2613
      %v2721 = vmul.f32 %v2103, %v2615
      %v2722 = vmul.f32 %v2108, %v2617
      %v2723 = vmul.f32 %v2113, %v2619
      %v2724 = vmul.f32 %v2118, %v2621
      %v2725 = vmul.f32 %v2123, %v2623
      %v2726 = vmul.f32 %v2128, %v2625
      %v2727 = vmul.f32 %v2133, %v2627
      %v2728 = vmul.f32 %v2138, %v2629
      %v2729 = vmul.f32 %v2143, %v2631
      %v2730 = vmul.f32 %v2148, %v2633
      %v2731 = vmul.f32 %v2153, %v2635
      %v2732 = vmul.f32 %v2158, %v2637
      %v2733 = vmul.f32 %v2163, %v2639
      %v2734 = vmul.f32 %v2168, %v2641
      %v2735 = vmul.f32 %v2173, %v2643
      %v2736 = vmul.f32 %v2178, %v2645
      %v2737 = vmul.f32 %v2183, %v2647
      %v2738 = vmul.f32 %v2188, %v2649
      %v2739 = vmul.f32 %v2193, %v2651
      %v2740 = vmul.f32 %v2198, %v2653
      %v2741 = vmul.f32 %v2203, %v2655
      %v2742 = vmul.f32 %v2208, %v2657
      %v2743 = vmul.f32 %v2213, %v2659
      %v2744 = vmul.f32 %v2218, %v2661
      %v2745 = vmul.f32 %v2223, %v2663
      %v2746 = vmul.f32 %v2228, %v2665
      %v2747 = vmul.f32 %v2233, %v2667
      %v2748 = vmul.f32 %v2238, %v2669
      %v2749 = vmul.f32 %v2243, %v2671
      %v2750 = vmul.f32 %v2248, %v2673
      %v2751 = vmul.f32 %v2253, %v2675
      %v2752 = vmul.f32 %v2258, %v2677
      %v2753 = vmul.f32 %v2263, %v2679
      %v2754 = vmul.f32 %v2268, %v2681
      %v2755 = vmul.f32 %v2273, %v2683
      %v2756 = vmul.f32 %v2278, %v2685
      %v2757 = vmul.f32 %v2283, %v2687
      %v2758 = vmul.f32 %v2288, %v2689
      %v2759 = vmul.f32 %v2293, %v2691
      %v2760 = vmul.f32 %v2298, %v2693
      %v2761 = vmul.f32 %v2303, %v2695
      %v2762 = vmul.f32 %v2308, %v2697
      %v2763 = vmul.f32 %v2313, %v2699
      %v2764 = vld [vmem:[%s3] sm:$0xff]
      %v2765 = vld [vmem:[%s3 + $0x8] sm:$0xff]
      %vm2766 = vcmask 130048
      %v2768 = vsel %vm2766, %v2700, 0
      %v2771 = vsel %vm2766, %v2701, 0
      %v2774 = vsel %vm2766, %v2702, 0
      %v2777 = vsel %vm2766, %v2703, 0
      %v2780 = vsel %vm2766, %v2704, 0
      %v2783 = vsel %vm2766, %v2705, 0
      %v2786 = vsel %vm2766, %v2706, 0
      %v2789 = vsel %vm2766, %v2707, 0
      %v2792 = vsel %vm2766, %v2708, 0
      %v2795 = vsel %vm2766, %v2709, 0
      %v2798 = vsel %vm2766, %v2710, 0
      %v2801 = vsel %vm2766, %v2711, 0
      %v2804 = vsel %vm2766, %v2712, 0
      %v2807 = vsel %vm2766, %v2713, 0
      %v2810 = vsel %vm2766, %v2714, 0
      %v2813 = vsel %vm2766, %v2715, 0
      %v2816 = vsel %vm2766, %v2716, 0
      %v2819 = vsel %vm2766, %v2717, 0
      %v2822 = vsel %vm2766, %v2718, 0
      %v2825 = vsel %vm2766, %v2719, 0
      %v2828 = vsel %vm2766, %v2720, 0
      %v2831 = vsel %vm2766, %v2721, 0
      %v2834 = vsel %vm2766, %v2722, 0
      %v2837 = vsel %vm2766, %v2723, 0
      %v2840 = vsel %vm2766, %v2724, 0
      %v2843 = vsel %vm2766, %v2725, 0
      %v2846 = vsel %vm2766, %v2726, 0
      %v2849 = vsel %vm2766, %v2727, 0
      %v2852 = vsel %vm2766, %v2728, 0
      %v2855 = vsel %vm2766, %v2729, 0
      %v2858 = vsel %vm2766, %v2730, 0
      %v2861 = vsel %vm2766, %v2731, 0
      %v2864 = vsel %vm2766, %v2732, 0
      %v2867 = vsel %vm2766, %v2733, 0
      %v2870 = vsel %vm2766, %v2734, 0
      %v2873 = vsel %vm2766, %v2735, 0
      %v2876 = vsel %vm2766, %v2736, 0
      %v2879 = vsel %vm2766, %v2737, 0
      %v2882 = vsel %vm2766, %v2738, 0
      %v2885 = vsel %vm2766, %v2739, 0
      %v2888 = vsel %vm2766, %v2740, 0
      %v2891 = vsel %vm2766, %v2741, 0
      %v2894 = vsel %vm2766, %v2742, 0
      %v2897 = vsel %vm2766, %v2743, 0
      %v2900 = vsel %vm2766, %v2744, 0
      %v2903 = vsel %vm2766, %v2745, 0
      %v2906 = vsel %vm2766, %v2746, 0
      %v2909 = vsel %vm2766, %v2747, 0
      %v2912 = vsel %vm2766, %v2748, 0
      %v2915 = vsel %vm2766, %v2749, 0
      %v2918 = vsel %vm2766, %v2750, 0
      %v2921 = vsel %vm2766, %v2751, 0
      %v2924 = vsel %vm2766, %v2752, 0
      %v2927 = vsel %vm2766, %v2753, 0
      %v2930 = vsel %vm2766, %v2754, 0
      %v2933 = vsel %vm2766, %v2755, 0
      %v2936 = vsel %vm2766, %v2756, 0
      %v2939 = vsel %vm2766, %v2757, 0
      %v2942 = vsel %vm2766, %v2758, 0
      %v2945 = vsel %vm2766, %v2759, 0
      %v2948 = vsel %vm2766, %v2760, 0
      %v2951 = vsel %vm2766, %v2761, 0
      %v2954 = vsel %vm2766, %v2762, 0
      %v2957 = vsel %vm2766, %v2763, 0
      %2959 = vmatprep.subr.mxu0 0.0
      %2960 = vmatpush1.msra.mxu0 %v2764
      %2961 = vmatprep.subr.mxu0 0.0
      %2962 = vmatpush1.msra.mxu0 %v2765
      %2963 = vmatprep.subr.mxu0 0.0
      %2964 = vmatpush1.msra.mxu0 0.0
      %2965 = vmatprep.subr.mxu0 0.0
      %2966 = vmatpush1.msra.mxu0 0.0
      %2967 = vmatprep.subr.mxu0 0.0
      %2968 = vmatpush1.msra.mxu0 0.0
      %2969 = vmatprep.subr.mxu0 0.0
      %2970 = vmatpush1.msra.mxu0 0.0
      %2971 = vmatprep.subr.mxu0 0.0
      %2972 = vmatpush1.msra.mxu0 0.0
      %2973 = vmatprep.subr.mxu0 0.0
      %2974 = vmatpush1.msra.mxu0 0.0
      %2975 = vmatprep.subr.mxu0 0.0
      %2976 = vmatpush1.msra.mxu0 0.0
      %2977 = vmatprep.subr.mxu0 0.0
      %2978 = vmatpush1.msra.mxu0 0.0
      %2979 = vmatprep.subr.mxu0 0.0
      %2980 = vmatpush1.msra.mxu0 0.0
      %2981 = vmatprep.subr.mxu0 0.0
      %2982 = vmatpush1.msra.mxu0 0.0
      %2983 = vmatprep.subr.mxu0 0.0
      %2984 = vmatpush1.msra.mxu0 0.0
      %2985 = vmatprep.subr.mxu0 0.0
      %2986 = vmatpush1.msra.mxu0 0.0
      %2987 = vmatprep.subr.mxu0 0.0
      %2988 = vmatpush1.msra.mxu0 0.0
      %2989 = vmatprep.subr.mxu0 0.0
      %2990 = vmatpush1.msra.mxu0 0.0
      %2991 = vmatprep.subr.mxu0 0.0
      %2992 = vmatpush1.msra.mxu0 0.0
      %2993 = vmatprep.subr.mxu0 0.0
      %2994 = vmatpush1.msra.mxu0 0.0
      %2995 = vmatprep.subr.mxu0 0.0
      %2996 = vmatpush1.msra.mxu0 0.0
      %2997 = vmatprep.subr.mxu0 0.0
      %2998 = vmatpush1.msra.mxu0 0.0
      %2999 = vmatprep.subr.mxu0 0.0
      %3000 = vmatpush1.msra.mxu0 0.0
      %3001 = vmatprep.subr.mxu0 0.0
      %3002 = vmatpush1.msra.mxu0 0.0
      %3003 = vmatprep.subr.mxu0 0.0
      %3004 = vmatpush1.msra.mxu0 0.0
      %3005 = vmatprep.subr.mxu0 0.0
      %3006 = vmatpush1.msra.mxu0 0.0
      %3007 = vmatprep.subr.mxu0 0.0
      %3008 = vmatpush1.msra.mxu0 0.0
      %3009 = vmatprep.subr.mxu0 0.0
      %3010 = vmatpush1.msra.mxu0 0.0
      %3011 = vmatprep.subr.mxu0 0.0
      %3012 = vmatpush1.msra.mxu0 0.0
      %3013 = vmatprep.subr.mxu0 0.0
      %3014 = vmatpush1.msra.mxu0 0.0
      %3015 = vmatprep.subr.mxu0 0.0
      %3016 = vmatpush1.msra.mxu0 0.0
      %3017 = vmatprep.subr.mxu0 0.0
      %3018 = vmatpush1.msra.mxu0 0.0
      %3019 = vmatprep.subr.mxu0 0.0
      %3020 = vmatpush1.msra.mxu0 0.0
      %3021 = vmatprep.subr.mxu0 0.0
      %3022 = vmatpush1.msra.mxu0 0.0
      %3023 = vmatprep.mubr.f32.mxu0 0.0
      %3024 = vmatmul.mubr.f32.gmra.mrb[0].mxu0 %v2768
      %v3025 = vpop.f32.mrb[0].mxu0
      %v3026 = vadd.f32 0.0, %v3025
      %v3027 = vpop.f32.mrb[0].mxu0
      %3028 = vmatprep.mubr.f32.mxu0 0.0
      %3029 = vmatmul.mubr.f32.gmra.mrb[0].mxu0 %v2771
      %v3030 = vpop.f32.mrb[0].mxu0
      %v3031 = vadd.f32 0.0, %v3030
      %v3032 = vpop.f32.mrb[0].mxu0
      %3033 = vmatprep.mubr.f32.mxu0 0.0
      %3034 = vmatmul.mubr.f32.gmra.mrb[0].mxu0 %v2774
      %v3035 = vpop.f32.mrb[0].mxu0
      %v3036 = vadd.f32 0.0, %v3035
      %v3037 = vpop.f32.mrb[0].mxu0
      %3038 = vmatprep.mubr.f32.mxu0 0.0
      %3039 = vmatmul.mubr.f32.gmra.mrb[0].mxu0 %v2777
      %v3040 = vpop.f32.mrb[0].mxu0
      %v3041 = vadd.f32 0.0, %v3040
      %v3042 = vpop.f32.mrb[0].mxu0
      %3043 = vmatprep.mubr.f32.mxu0 0.0
      %3044 = vmatmul.mubr.f32.gmra.mrb[0].mxu0 %v2780
      %v3045 = vpop.f32.mrb[0].mxu0
      %v3046 = vadd.f32 0.0, %v3045
      %v3047 = vpop.f32.mrb[0].mxu0
      %3048 = vmatprep.mubr.f32.mxu0 0.0
      %3049 = vmatmul.mubr.f32.gmra.mrb[0].mxu0 %v2783
      %v3050 = vpop.f32.mrb[0].mxu0
      %v3051 = vadd.f32 0.0, %v3050
      %v3052 = vpop.f32.mrb[0].mxu0
      %3053 = vmatprep.mubr.f32.mxu0 0.0
      %3054 = vmatmul.mubr.f32.gmra.mrb[0].mxu0 %v2786
      %v3055 = vpop.f32.mrb[0].mxu0
      %v3056 = vadd.f32 0.0, %v3055
      %v3057 = vpop.f32.mrb[0].mxu0
      %3058 = vmatprep.mubr.f32.mxu0 0.0
      %3059 = vmatmul.mubr.f32.gmra.mrb[0].mxu0 %v2789
      %v3060 = vpop.f32.mrb[0].mxu0
      %v3061 = vadd.f32 0.0, %v3060
      %v3062 = vpop.f32.mrb[0].mxu0
      %3063 = vmatprep.mubr.f32.mxu0 0.0
      %3064 = vmatmul.mubr.f32.gmra.mrb[0].mxu0 %v2792
      %v3065 = vpop.f32.mrb[0].mxu0
      %v3066 = vadd.f32 0.0, %v3065
      %v3067 = vpop.f32.mrb[0].mxu0
      %3068 = vmatprep.mubr.f32.mxu0 0.0
      %3069 = vmatmul.mubr.f32.gmra.mrb[0].mxu0 %v2795
      %v3070 = vpop.f32.mrb[0].mxu0
      %v3071 = vadd.f32 0.0, %v3070
      %v3072 = vpop.f32.mrb[0].mxu0
      %3073 = vmatprep.mubr.f32.mxu0 0.0
      %3074 = vmatmul.mubr.f32.gmra.mrb[0].mxu0 %v2798
      %v3075 = vpop.f32.mrb[0].mxu0
      %v3076 = vadd.f32 0.0, %v3075
      %v3077 = vpop.f32.mrb[0].mxu0
      %3078 = vmatprep.mubr.f32.mxu0 0.0
      %3079 = vmatmul.mubr.f32.gmra.mrb[0].mxu0 %v2801
      %v3080 = vpop.f32.mrb[0].mxu0
      %v3081 = vadd.f32 0.0, %v3080
      %v3082 = vpop.f32.mrb[0].mxu0
      %3083 = vmatprep.mubr.f32.mxu0 0.0
      %3084 = vmatmul.mubr.f32.gmra.mrb[0].mxu0 %v2804
      %v3085 = vpop.f32.mrb[0].mxu0
      %v3086 = vadd.f32 0.0, %v3085
      %v3087 = vpop.f32.mrb[0].mxu0
      %3088 = vmatprep.mubr.f32.mxu0 0.0
      %3089 = vmatmul.mubr.f32.gmra.mrb[0].mxu0 %v2807
      %v3090 = vpop.f32.mrb[0].mxu0
      %v3091 = vadd.f32 0.0, %v3090
      %v3092 = vpop.f32.mrb[0].mxu0
      %3093 = vmatprep.mubr.f32.mxu0 0.0
      %3094 = vmatmul.mubr.f32.gmra.mrb[0].mxu0 %v2810
      %v3095 = vpop.f32.mrb[0].mxu0
      %v3096 = vadd.f32 0.0, %v3095
      %v3097 = vpop.f32.mrb[0].mxu0
      %3098 = vmatprep.mubr.f32.mxu0 0.0
      %3099 = vmatmul.mubr.f32.gmra.mrb[0].mxu0 %v2813
      %v3100 = vpop.f32.mrb[0].mxu0
      %v3101 = vadd.f32 0.0, %v3100
      %v3102 = vpop.f32.mrb[0].mxu0
      %3103 = vmatprep.mubr.f32.mxu0 0.0
      %3104 = vmatmul.mubr.f32.gmra.mrb[0].mxu0 %v2816
      %v3105 = vpop.f32.mrb[0].mxu0
      %v3106 = vadd.f32 0.0, %v3105
      %v3107 = vpop.f32.mrb[0].mxu0
      %3108 = vmatprep.mubr.f32.mxu0 0.0
      %3109 = vmatmul.mubr.f32.gmra.mrb[0].mxu0 %v2819
      %v3110 = vpop.f32.mrb[0].mxu0
      %v3111 = vadd.f32 0.0, %v3110
      %v3112 = vpop.f32.mrb[0].mxu0
      %3113 = vmatprep.mubr.f32.mxu0 0.0
      %3114 = vmatmul.mubr.f32.gmra.mrb[0].mxu0 %v2822
      %v3115 = vpop.f32.mrb[0].mxu0
      %v3116 = vadd.f32 0.0, %v3115
      %v3117 = vpop.f32.mrb[0].mxu0
      %3118 = vmatprep.mubr.f32.mxu0 0.0
      %3119 = vmatmul.mubr.f32.gmra.mrb[0].mxu0 %v2825
      %v3120 = vpop.f32.mrb[0].mxu0
      %v3121 = vadd.f32 0.0, %v3120
      %v3122 = vpop.f32.mrb[0].mxu0
      %3123 = vmatprep.mubr.f32.mxu0 0.0
      %3124 = vmatmul.mubr.f32.gmra.mrb[0].mxu0 %v2828
      %v3125 = vpop.f32.mrb[0].mxu0
      %v3126 = vadd.f32 0.0, %v3125
      %v3127 = vpop.f32.mrb[0].mxu0
      %3128 = vmatprep.mubr.f32.mxu0 0.0
      %3129 = vmatmul.mubr.f32.gmra.mrb[0].mxu0 %v2831
      %v3130 = vpop.f32.mrb[0].mxu0
      %v3131 = vadd.f32 0.0, %v3130
      %v3132 = vpop.f32.mrb[0].mxu0
      %3133 = vmatprep.mubr.f32.mxu0 0.0
      %3134 = vmatmul.mubr.f32.gmra.mrb[0].mxu0 %v2834
      %v3135 = vpop.f32.mrb[0].mxu0
      %v3136 = vadd.f32 0.0, %v3135
      %v3137 = vpop.f32.mrb[0].mxu0
      %3138 = vmatprep.mubr.f32.mxu0 0.0
      %3139 = vmatmul.mubr.f32.gmra.mrb[0].mxu0 %v2837
      %v3140 = vpop.f32.mrb[0].mxu0
      %v3141 = vadd.f32 0.0, %v3140
      %v3142 = vpop.f32.mrb[0].mxu0
      %3143 = vmatprep.mubr.f32.mxu0 0.0
      %3144 = vmatmul.mubr.f32.gmra.mrb[0].mxu0 %v2840
      %v3145 = vpop.f32.mrb[0].mxu0
      %v3146 = vadd.f32 0.0, %v3145
      %v3147 = vpop.f32.mrb[0].mxu0
      %3148 = vmatprep.mubr.f32.mxu0 0.0
      %3149 = vmatmul.mubr.f32.gmra.mrb[0].mxu0 %v2843
      %v3150 = vpop.f32.mrb[0].mxu0
      %v3151 = vadd.f32 0.0, %v3150
      %v3152 = vpop.f32.mrb[0].mxu0
      %3153 = vmatprep.mubr.f32.mxu0 0.0
      %3154 = vmatmul.mubr.f32.gmra.mrb[0].mxu0 %v2846
      %v3155 = vpop.f32.mrb[0].mxu0
      %v3156 = vadd.f32 0.0, %v3155
      %v3157 = vpop.f32.mrb[0].mxu0
      %3158 = vmatprep.mubr.f32.mxu0 0.0
      %3159 = vmatmul.mubr.f32.gmra.mrb[0].mxu0 %v2849
      %v3160 = vpop.f32.mrb[0].mxu0
      %v3161 = vadd.f32 0.0, %v3160
      %v3162 = vpop.f32.mrb[0].mxu0
      %3163 = vmatprep.mubr.f32.mxu0 0.0
      %3164 = vmatmul.mubr.f32.gmra.mrb[0].mxu0 %v2852
      %v3165 = vpop.f32.mrb[0].mxu0
      %v3166 = vadd.f32 0.0, %v3165
      %v3167 = vpop.f32.mrb[0].mxu0
      %3168 = vmatprep.mubr.f32.mxu0 0.0
      %3169 = vmatmul.mubr.f32.gmra.mrb[0].mxu0 %v2855
      %v3170 = vpop.f32.mrb[0].mxu0
      %v3171 = vadd.f32 0.0, %v3170
      %v3172 = vpop.f32.mrb[0].mxu0
      %3173 = vmatprep.mubr.f32.mxu0 0.0
      %3174 = vmatmul.mubr.f32.gmra.mrb[0].mxu0 %v2858
      %v3175 = vpop.f32.mrb[0].mxu0
      %v3176 = vadd.f32 0.0, %v3175
      %v3177 = vpop.f32.mrb[0].mxu0
      %3178 = vmatprep.mubr.f32.mxu0 0.0
      %3179 = vmatmul.mubr.f32.gmra.mrb[0].mxu0 %v2861
      %v3180 = vpop.f32.mrb[0].mxu0
      %v3181 = vadd.f32 0.0, %v3180
      %v3182 = vpop.f32.mrb[0].mxu0
      %3183 = vmatprep.mubr.f32.mxu0 0.0
      %3184 = vmatmul.mubr.f32.gmra.mrb[0].mxu0 %v2864
      %v3185 = vpop.f32.mrb[0].mxu0
      %v3186 = vadd.f32 0.0, %v3185
      %v3187 = vpop.f32.mrb[0].mxu0
      %3188 = vmatprep.mubr.f32.mxu0 0.0
      %3189 = vmatmul.mubr.f32.gmra.mrb[0].mxu0 %v2867
      %v3190 = vpop.f32.mrb[0].mxu0
      %v3191 = vadd.f32 0.0, %v3190
      %v3192 = vpop.f32.mrb[0].mxu0
      %3193 = vmatprep.mubr.f32.mxu0 0.0
      %3194 = vmatmul.mubr.f32.gmra.mrb[0].mxu0 %v2870
      %v3195 = vpop.f32.mrb[0].mxu0
      %v3196 = vadd.f32 0.0, %v3195
      %v3197 = vpop.f32.mrb[0].mxu0
      %3198 = vmatprep.mubr.f32.mxu0 0.0
      %3199 = vmatmul.mubr.f32.gmra.mrb[0].mxu0 %v2873
      %v3200 = vpop.f32.mrb[0].mxu0
      %v3201 = vadd.f32 0.0, %v3200
      %v3202 = vpop.f32.mrb[0].mxu0
      %3203 = vmatprep.mubr.f32.mxu0 0.0
      %3204 = vmatmul.mubr.f32.gmra.mrb[0].mxu0 %v2876
      %v3205 = vpop.f32.mrb[0].mxu0
      %v3206 = vadd.f32 0.0, %v3205
      %v3207 = vpop.f32.mrb[0].mxu0
      %3208 = vmatprep.mubr.f32.mxu0 0.0
      %3209 = vmatmul.mubr.f32.gmra.mrb[0].mxu0 %v2879
      %v3210 = vpop.f32.mrb[0].mxu0
      %v3211 = vadd.f32 0.0, %v3210
      %v3212 = vpop.f32.mrb[0].mxu0
      %3213 = vmatprep.mubr.f32.mxu0 0.0
      %3214 = vmatmul.mubr.f32.gmra.mrb[0].mxu0 %v2882
      %v3215 = vpop.f32.mrb[0].mxu0
      %v3216 = vadd.f32 0.0, %v3215
      %v3217 = vpop.f32.mrb[0].mxu0
      %3218 = vmatprep.mubr.f32.mxu0 0.0
      %3219 = vmatmul.mubr.f32.gmra.mrb[0].mxu0 %v2885
      %v3220 = vpop.f32.mrb[0].mxu0
      %v3221 = vadd.f32 0.0, %v3220
      %v3222 = vpop.f32.mrb[0].mxu0
      %3223 = vmatprep.mubr.f32.mxu0 0.0
      %3224 = vmatmul.mubr.f32.gmra.mrb[0].mxu0 %v2888
      %v3225 = vpop.f32.mrb[0].mxu0
      %v3226 = vadd.f32 0.0, %v3225
      %v3227 = vpop.f32.mrb[0].mxu0
      %3228 = vmatprep.mubr.f32.mxu0 0.0
      %3229 = vmatmul.mubr.f32.gmra.mrb[0].mxu0 %v2891
      %v3230 = vpop.f32.mrb[0].mxu0
      %v3231 = vadd.f32 0.0, %v3230
      %v3232 = vpop.f32.mrb[0].mxu0
      %3233 = vmatprep.mubr.f32.mxu0 0.0
      %3234 = vmatmul.mubr.f32.gmra.mrb[0].mxu0 %v2894
      %v3235 = vpop.f32.mrb[0].mxu0
      %v3236 = vadd.f32 0.0, %v3235
      %v3237 = vpop.f32.mrb[0].mxu0
      %3238 = vmatprep.mubr.f32.mxu0 0.0
      %3239 = vmatmul.mubr.f32.gmra.mrb[0].mxu0 %v2897
      %v3240 = vpop.f32.mrb[0].mxu0
      %v3241 = vadd.f32 0.0, %v3240
      %v3242 = vpop.f32.mrb[0].mxu0
      %3243 = vmatprep.mubr.f32.mxu0 0.0
      %3244 = vmatmul.mubr.f32.gmra.mrb[0].mxu0 %v2900
      %v3245 = vpop.f32.mrb[0].mxu0
      %v3246 = vadd.f32 0.0, %v3245
      %v3247 = vpop.f32.mrb[0].mxu0
      %3248 = vmatprep.mubr.f32.mxu0 0.0
      %3249 = vmatmul.mubr.f32.gmra.mrb[0].mxu0 %v2903
      %v3250 = vpop.f32.mrb[0].mxu0
      %v3251 = vadd.f32 0.0, %v3250
      %v3252 = vpop.f32.mrb[0].mxu0
      %3253 = vmatprep.mubr.f32.mxu0 0.0
      %3254 = vmatmul.mubr.f32.gmra.mrb[0].mxu0 %v2906
      %v3255 = vpop.f32.mrb[0].mxu0
      %v3256 = vadd.f32 0.0, %v3255
      %v3257 = vpop.f32.mrb[0].mxu0
      %3258 = vmatprep.mubr.f32.mxu0 0.0
      %3259 = vmatmul.mubr.f32.gmra.mrb[0].mxu0 %v2909
      %v3260 = vpop.f32.mrb[0].mxu0
      %v3261 = vadd.f32 0.0, %v3260
      %v3262 = vpop.f32.mrb[0].mxu0
      %3263 = vmatprep.mubr.f32.mxu0 0.0
      %3264 = vmatmul.mubr.f32.gmra.mrb[0].mxu0 %v2912
      %v3265 = vpop.f32.mrb[0].mxu0
      %v3266 = vadd.f32 0.0, %v3265
      %v3267 = vpop.f32.mrb[0].mxu0
      %3268 = vmatprep.mubr.f32.mxu0 0.0
      %3269 = vmatmul.mubr.f32.gmra.mrb[0].mxu0 %v2915
      %v3270 = vpop.f32.mrb[0].mxu0
      %v3271 = vadd.f32 0.0, %v3270
      %v3272 = vpop.f32.mrb[0].mxu0
      %3273 = vmatprep.mubr.f32.mxu0 0.0
      %3274 = vmatmul.mubr.f32.gmra.mrb[0].mxu0 %v2918
      %v3275 = vpop.f32.mrb[0].mxu0
      %v3276 = vadd.f32 0.0, %v3275
      %v3277 = vpop.f32.mrb[0].mxu0
      %3278 = vmatprep.mubr.f32.mxu0 0.0
      %3279 = vmatmul.mubr.f32.gmra.mrb[0].mxu0 %v2921
      %v3280 = vpop.f32.mrb[0].mxu0
      %v3281 = vadd.f32 0.0, %v3280
      %v3282 = vpop.f32.mrb[0].mxu0
      %3283 = vmatprep.mubr.f32.mxu0 0.0
      %3284 = vmatmul.mubr.f32.gmra.mrb[0].mxu0 %v2924
      %v3285 = vpop.f32.mrb[0].mxu0
      %v3286 = vadd.f32 0.0, %v3285
      %v3287 = vpop.f32.mrb[0].mxu0
      %3288 = vmatprep.mubr.f32.mxu0 0.0
      %3289 = vmatmul.mubr.f32.gmra.mrb[0].mxu0 %v2927
      %v3290 = vpop.f32.mrb[0].mxu0
      %v3291 = vadd.f32 0.0, %v3290
      %v3292 = vpop.f32.mrb[0].mxu0
      %3293 = vmatprep.mubr.f32.mxu0 0.0
      %3294 = vmatmul.mubr.f32.gmra.mrb[0].mxu0 %v2930
      %v3295 = vpop.f32.mrb[0].mxu0
      %v3296 = vadd.f32 0.0, %v3295
      %v3297 = vpop.f32.mrb[0].mxu0
      %3298 = vmatprep.mubr.f32.mxu0 0.0
      %3299 = vmatmul.mubr.f32.gmra.mrb[0].mxu0 %v2933
      %v3300 = vpop.f32.mrb[0].mxu0
      %v3301 = vadd.f32 0.0, %v3300
      %v3302 = vpop.f32.mrb[0].mxu0
      %3303 = vmatprep.mubr.f32.mxu0 0.0
      %3304 = vmatmul.mubr.f32.gmra.mrb[0].mxu0 %v2936
      %v3305 = vpop.f32.mrb[0].mxu0
      %v3306 = vadd.f32 0.0, %v3305
      %v3307 = vpop.f32.mrb[0].mxu0
      %3308 = vmatprep.mubr.f32.mxu0 0.0
      %3309 = vmatmul.mubr.f32.gmra.mrb[0].mxu0 %v2939
      %v3310 = vpop.f32.mrb[0].mxu0
      %v3311 = vadd.f32 0.0, %v3310
      %v3312 = vpop.f32.mrb[0].mxu0
      %3313 = vmatprep.mubr.f32.mxu0 0.0
      %3314 = vmatmul.mubr.f32.gmra.mrb[0].mxu0 %v2942
      %v3315 = vpop.f32.mrb[0].mxu0
      %v3316 = vadd.f32 0.0, %v3315
      %v3317 = vpop.f32.mrb[0].mxu0
      %3318 = vmatprep.mubr.f32.mxu0 0.0
      %3319 = vmatmul.mubr.f32.gmra.mrb[0].mxu0 %v2945
      %v3320 = vpop.f32.mrb[0].mxu0
      %v3321 = vadd.f32 0.0, %v3320
      %v3322 = vpop.f32.mrb[0].mxu0
      %3323 = vmatprep.mubr.f32.mxu0 0.0
      %3324 = vmatmul.mubr.f32.gmra.mrb[0].mxu0 %v2948
      %v3325 = vpop.f32.mrb[0].mxu0
      %v3326 = vadd.f32 0.0, %v3325
      %v3327 = vpop.f32.mrb[0].mxu0
      %3328 = vmatprep.mubr.f32.mxu0 0.0
      %3329 = vmatmul.mubr.f32.gmra.mrb[0].mxu0 %v2951
      %v3330 = vpop.f32.mrb[0].mxu0
      %v3331 = vadd.f32 0.0, %v3330
      %v3332 = vpop.f32.mrb[0].mxu0
      %3333 = vmatprep.mubr.f32.mxu0 0.0
      %3334 = vmatmul.mubr.f32.gmra.mrb[0].mxu0 %v2954
      %v3335 = vpop.f32.mrb[0].mxu0
      %v3336 = vadd.f32 0.0, %v3335
      %v3337 = vpop.f32.mrb[0].mxu0
      %3338 = vmatprep.mubr.f32.mxu0 0.0
      %3339 = vmatmul.mubr.f32.gmra.mrb[0].mxu0 %v2957
      %v3340 = vpop.f32.mrb[0].mxu0
      %v3341 = vadd.f32 0.0, %v3340
      %v3342 = vpop.f32.mrb[0].mxu0
      %3343 = vdwg.mxu0
      %3344 = vset.pattern.permute.xlu0 9
      %3345 = vperm.xlu0 %3344, %v229
      %v3346 = vpop.permute.xlu0 %3345
      %3348 = vset.pattern.permute.xlu0 9
      %3349 = vperm.xlu0 %3348, %v230
      %v3350 = vpop.permute.xlu0 %3349
      %3352 = vset.pattern.permute.xlu0 9
      %3353 = vperm.xlu0 %3352, %v231
      %v3354 = vpop.permute.xlu0 %3353
      %3356 = vset.pattern.permute.xlu0 9
      %3357 = vperm.xlu0 %3356, %v232
      %v3358 = vpop.permute.xlu0 %3357
      %3360 = vset.pattern.permute.xlu0 9
      %3361 = vperm.xlu0 %3360, %v233
      %v3362 = vpop.permute.xlu0 %3361
      %3364 = vset.pattern.permute.xlu0 9
      %3365 = vperm.xlu0 %3364, %v234
      %v3366 = vpop.permute.xlu0 %3365
      %3368 = vset.pattern.permute.xlu0 9
      %3369 = vperm.xlu0 %3368, %v235
      %v3370 = vpop.permute.xlu0 %3369
      %3372 = vset.pattern.permute.xlu0 9
      %3373 = vperm.xlu0 %3372, %v236
      %v3374 = vpop.permute.xlu0 %3373
      %3376 = vset.pattern.permute.xlu0 9
      %3377 = vperm.xlu0 %3376, %v237
      %v3378 = vpop.permute.xlu0 %3377
      %3380 = vset.pattern.permute.xlu0 9
      %3381 = vperm.xlu0 %3380, %v238
      %v3382 = vpop.permute.xlu0 %3381
      %3384 = vset.pattern.permute.xlu0 9
      %3385 = vperm.xlu0 %3384, %v239
      %v3386 = vpop.permute.xlu0 %3385
      %3388 = vset.pattern.permute.xlu0 9
      %3389 = vperm.xlu0 %3388, %v240
      %v3390 = vpop.permute.xlu0 %3389
      %3392 = vset.pattern.permute.xlu0 9
      %3393 = vperm.xlu0 %3392, %v241
      %v3394 = vpop.permute.xlu0 %3393
      %3396 = vset.pattern.permute.xlu0 9
      %3397 = vperm.xlu0 %3396, %v242
      %v3398 = vpop.permute.xlu0 %3397
      %3400 = vset.pattern.permute.xlu0 9
      %3401 = vperm.xlu0 %3400, %v243
      %v3402 = vpop.permute.xlu0 %3401
      %3404 = vset.pattern.permute.xlu0 9
      %3405 = vperm.xlu0 %3404, %v244
      %v3406 = vpop.permute.xlu0 %3405
      %3408 = vset.pattern.permute.xlu0 9
      %3409 = vperm.xlu0 %3408, %v245
      %v3410 = vpop.permute.xlu0 %3409
      %3412 = vset.pattern.permute.xlu0 9
      %3413 = vperm.xlu0 %3412, %v246
      %v3414 = vpop.permute.xlu0 %3413
      %3416 = vset.pattern.permute.xlu0 9
      %3417 = vperm.xlu0 %3416, %v247
      %v3418 = vpop.permute.xlu0 %3417
      %3420 = vset.pattern.permute.xlu0 9
      %3421 = vperm.xlu0 %3420, %v248
      %v3422 = vpop.permute.xlu0 %3421
      %3424 = vset.pattern.permute.xlu0 9
      %3425 = vperm.xlu0 %3424, %v249
      %v3426 = vpop.permute.xlu0 %3425
      %3428 = vset.pattern.permute.xlu0 9
      %3429 = vperm.xlu0 %3428, %v250
      %v3430 = vpop.permute.xlu0 %3429
      %3432 = vset.pattern.permute.xlu0 9
      %3433 = vperm.xlu0 %3432, %v251
      %v3434 = vpop.permute.xlu0 %3433
      %3436 = vset.pattern.permute.xlu0 9
      %3437 = vperm.xlu0 %3436, %v252
      %v3438 = vpop.permute.xlu0 %3437
      %3440 = vset.pattern.permute.xlu0 9
      %3441 = vperm.xlu0 %3440, %v253
      %v3442 = vpop.permute.xlu0 %3441
      %3444 = vset.pattern.permute.xlu0 9
      %3445 = vperm.xlu0 %3444, %v254
      %v3446 = vpop.permute.xlu0 %3445
      %3448 = vset.pattern.permute.xlu0 9
      %3449 = vperm.xlu0 %3448, %v255
      %v3450 = vpop.permute.xlu0 %3449
      %3452 = vset.pattern.permute.xlu0 9
      %3453 = vperm.xlu0 %3452, %v256
      %v3454 = vpop.permute.xlu0 %3453
      %3456 = vset.pattern.permute.xlu0 9
      %3457 = vperm.xlu0 %3456, %v257
      %v3458 = vpop.permute.xlu0 %3457
      %3460 = vset.pattern.permute.xlu0 9
      %3461 = vperm.xlu0 %3460, %v258
      %v3462 = vpop.permute.xlu0 %3461
      %3464 = vset.pattern.permute.xlu0 9
      %3465 = vperm.xlu0 %3464, %v259
      %v3466 = vpop.permute.xlu0 %3465
      %3468 = vset.pattern.permute.xlu0 9
      %3469 = vperm.xlu0 %3468, %v260
      %v3470 = vpop.permute.xlu0 %3469
      %3472 = vset.pattern.permute.xlu0 9
      %3473 = vperm.xlu0 %3472, %v261
      %v3474 = vpop.permute.xlu0 %3473
      %3476 = vset.pattern.permute.xlu0 9
      %3477 = vperm.xlu0 %3476, %v262
      %v3478 = vpop.permute.xlu0 %3477
      %3480 = vset.pattern.permute.xlu0 9
      %3481 = vperm.xlu0 %3480, %v263
      %v3482 = vpop.permute.xlu0 %3481
      %3484 = vset.pattern.permute.xlu0 9
      %3485 = vperm.xlu0 %3484, %v264
      %v3486 = vpop.permute.xlu0 %3485
      %3488 = vset.pattern.permute.xlu0 9
      %3489 = vperm.xlu0 %3488, %v265
      %v3490 = vpop.permute.xlu0 %3489
      %3492 = vset.pattern.permute.xlu0 9
      %3493 = vperm.xlu0 %3492, %v266
      %v3494 = vpop.permute.xlu0 %3493
      %3496 = vset.pattern.permute.xlu0 9
      %3497 = vperm.xlu0 %3496, %v267
      %v3498 = vpop.permute.xlu0 %3497
      %3500 = vset.pattern.permute.xlu0 9
      %3501 = vperm.xlu0 %3500, %v268
      %v3502 = vpop.permute.xlu0 %3501
      %3504 = vset.pattern.permute.xlu0 9
      %3505 = vperm.xlu0 %3504, %v269
      %v3506 = vpop.permute.xlu0 %3505
      %3508 = vset.pattern.permute.xlu0 9
      %3509 = vperm.xlu0 %3508, %v270
      %v3510 = vpop.permute.xlu0 %3509
      %3512 = vset.pattern.permute.xlu0 9
      %3513 = vperm.xlu0 %3512, %v271
      %v3514 = vpop.permute.xlu0 %3513
      %3516 = vset.pattern.permute.xlu0 9
      %3517 = vperm.xlu0 %3516, %v272
      %v3518 = vpop.permute.xlu0 %3517
      %3520 = vset.pattern.permute.xlu0 9
      %3521 = vperm.xlu0 %3520, %v273
      %v3522 = vpop.permute.xlu0 %3521
      %3524 = vset.pattern.permute.xlu0 9
      %3525 = vperm.xlu0 %3524, %v274
      %v3526 = vpop.permute.xlu0 %3525
      %3528 = vset.pattern.permute.xlu0 9
      %3529 = vperm.xlu0 %3528, %v275
      %v3530 = vpop.permute.xlu0 %3529
      %3532 = vset.pattern.permute.xlu0 9
      %3533 = vperm.xlu0 %3532, %v276
      %v3534 = vpop.permute.xlu0 %3533
      %3536 = vset.pattern.permute.xlu0 9
      %3537 = vperm.xlu0 %3536, %v277
      %v3538 = vpop.permute.xlu0 %3537
      %3540 = vset.pattern.permute.xlu0 9
      %3541 = vperm.xlu0 %3540, %v278
      %v3542 = vpop.permute.xlu0 %3541
      %3544 = vset.pattern.permute.xlu0 9
      %3545 = vperm.xlu0 %3544, %v279
      %v3546 = vpop.permute.xlu0 %3545
      %3548 = vset.pattern.permute.xlu0 9
      %3549 = vperm.xlu0 %3548, %v280
      %v3550 = vpop.permute.xlu0 %3549
      %3552 = vset.pattern.permute.xlu0 9
      %3553 = vperm.xlu0 %3552, %v281
      %v3554 = vpop.permute.xlu0 %3553
      %3556 = vset.pattern.permute.xlu0 9
      %3557 = vperm.xlu0 %3556, %v282
      %v3558 = vpop.permute.xlu0 %3557
      %3560 = vset.pattern.permute.xlu0 9
      %3561 = vperm.xlu0 %3560, %v283
      %v3562 = vpop.permute.xlu0 %3561
      %3564 = vset.pattern.permute.xlu0 9
      %3565 = vperm.xlu0 %3564, %v284
      %v3566 = vpop.permute.xlu0 %3565
      %3568 = vset.pattern.permute.xlu0 9
      %3569 = vperm.xlu0 %3568, %v285
      %v3570 = vpop.permute.xlu0 %3569
      %3572 = vset.pattern.permute.xlu0 9
      %3573 = vperm.xlu0 %3572, %v286
      %v3574 = vpop.permute.xlu0 %3573
      %3576 = vset.pattern.permute.xlu0 9
      %3577 = vperm.xlu0 %3576, %v287
      %v3578 = vpop.permute.xlu0 %3577
      %3580 = vset.pattern.permute.xlu0 9
      %3581 = vperm.xlu0 %3580, %v288
      %v3582 = vpop.permute.xlu0 %3581
      %3584 = vset.pattern.permute.xlu0 9
      %3585 = vperm.xlu0 %3584, %v289
      %v3586 = vpop.permute.xlu0 %3585
      %3588 = vset.pattern.permute.xlu0 9
      %3589 = vperm.xlu0 %3588, %v290
      %v3590 = vpop.permute.xlu0 %3589
      %3592 = vset.pattern.permute.xlu0 9
      %3593 = vperm.xlu0 %3592, %v291
      %v3594 = vpop.permute.xlu0 %3593
      %3596 = vset.pattern.permute.xlu0 9
      %3597 = vperm.xlu0 %3596, %v292
      %v3598 = vpop.permute.xlu0 %3597
      %v3600 = vmul.f32 %v1673, %v3346
      %v3601 = vmul.f32 %v1674, %v3350
      %v3602 = vmul.f32 %v1675, %v3354
      %v3603 = vmul.f32 %v1676, %v3358
      %v3604 = vmul.f32 %v1677, %v3362
      %v3605 = vmul.f32 %v1678, %v3366
      %v3606 = vmul.f32 %v1679, %v3370
      %v3607 = vmul.f32 %v1680, %v3374
      %v3608 = vmul.f32 %v1681, %v3378
      %v3609 = vmul.f32 %v1682, %v3382
      %v3610 = vmul.f32 %v1683, %v3386
      %v3611 = vmul.f32 %v1684, %v3390
      %v3612 = vmul.f32 %v1685, %v3394
      %v3613 = vmul.f32 %v1686, %v3398
      %v3614 = vmul.f32 %v1687, %v3402
      %v3615 = vmul.f32 %v1688, %v3406
      %v3616 = vmul.f32 %v1689, %v3410
      %v3617 = vmul.f32 %v1690, %v3414
      %v3618 = vmul.f32 %v1691, %v3418
      %v3619 = vmul.f32 %v1692, %v3422
      %v3620 = vmul.f32 %v1693, %v3426
      %v3621 = vmul.f32 %v1694, %v3430
      %v3622 = vmul.f32 %v1695, %v3434
      %v3623 = vmul.f32 %v1696, %v3438
      %v3624 = vmul.f32 %v1697, %v3442
      %v3625 = vmul.f32 %v1698, %v3446
      %v3626 = vmul.f32 %v1699, %v3450
      %v3627 = vmul.f32 %v1700, %v3454
      %v3628 = vmul.f32 %v1701, %v3458
      %v3629 = vmul.f32 %v1702, %v3462
      %v3630 = vmul.f32 %v1703, %v3466
      %v3631 = vmul.f32 %v1704, %v3470
      %v3632 = vmul.f32 %v1705, %v3474
      %v3633 = vmul.f32 %v1706, %v3478
      %v3634 = vmul.f32 %v1707, %v3482
      %v3635 = vmul.f32 %v1708, %v3486
      %v3636 = vmul.f32 %v1709, %v3490
      %v3637 = vmul.f32 %v1710, %v3494
      %v3638 = vmul.f32 %v1711, %v3498
      %v3639 = vmul.f32 %v1712, %v3502
      %v3640 = vmul.f32 %v1713, %v3506
      %v3641 = vmul.f32 %v1714, %v3510
      %v3642 = vmul.f32 %v1715, %v3514
      %v3643 = vmul.f32 %v1716, %v3518
      %v3644 = vmul.f32 %v1717, %v3522
      %v3645 = vmul.f32 %v1718, %v3526
      %v3646 = vmul.f32 %v1719, %v3530
      %v3647 = vmul.f32 %v1720, %v3534
      %v3648 = vmul.f32 %v1721, %v3538
      %v3649 = vmul.f32 %v1722, %v3542
      %v3650 = vmul.f32 %v1723, %v3546
      %v3651 = vmul.f32 %v1724, %v3550
      %v3652 = vmul.f32 %v1725, %v3554
      %v3653 = vmul.f32 %v1726, %v3558
      %v3654 = vmul.f32 %v1727, %v3562
      %v3655 = vmul.f32 %v1728, %v3566
      %v3656 = vmul.f32 %v1729, %v3570
      %v3657 = vmul.f32 %v1730, %v3574
      %v3658 = vmul.f32 %v1731, %v3578
      %v3659 = vmul.f32 %v1732, %v3582
      %v3660 = vmul.f32 %v1733, %v3586
      %v3661 = vmul.f32 %v1734, %v3590
      %v3662 = vmul.f32 %v1735, %v3594
      %v3663 = vmul.f32 %v1736, %v3598
      %3664 = vset.pattern.permute.xlu0 10
      %3665 = vperm.xlu0 %3664, %v229
      %v3666 = vpop.permute.xlu0 %3665
      %3668 = vset.pattern.permute.xlu0 10
      %3669 = vperm.xlu0 %3668, %v230
      %v3670 = vpop.permute.xlu0 %3669
      %3672 = vset.pattern.permute.xlu0 10
      %3673 = vperm.xlu0 %3672, %v231
      %v3674 = vpop.permute.xlu0 %3673
      %3676 = vset.pattern.permute.xlu0 10
      %3677 = vperm.xlu0 %3676, %v232
      %v3678 = vpop.permute.xlu0 %3677
      %3680 = vset.pattern.permute.xlu0 10
      %3681 = vperm.xlu0 %3680, %v233
      %v3682 = vpop.permute.xlu0 %3681
      %3684 = vset.pattern.permute.xlu0 10
      %3685 = vperm.xlu0 %3684, %v234
      %v3686 = vpop.permute.xlu0 %3685
      %3688 = vset.pattern.permute.xlu0 10
      %3689 = vperm.xlu0 %3688, %v235
      %v3690 = vpop.permute.xlu0 %3689
      %3692 = vset.pattern.permute.xlu0 10
      %3693 = vperm.xlu0 %3692, %v236
      %v3694 = vpop.permute.xlu0 %3693
      %3696 = vset.pattern.permute.xlu0 10
      %3697 = vperm.xlu0 %3696, %v237
      %v3698 = vpop.permute.xlu0 %3697
      %3700 = vset.pattern.permute.xlu0 10
      %3701 = vperm.xlu0 %3700, %v238
      %v3702 = vpop.permute.xlu0 %3701
      %3704 = vset.pattern.permute.xlu0 10
      %3705 = vperm.xlu0 %3704, %v239
      %v3706 = vpop.permute.xlu0 %3705
      %3708 = vset.pattern.permute.xlu0 10
      %3709 = vperm.xlu0 %3708, %v240
      %v3710 = vpop.permute.xlu0 %3709
      %3712 = vset.pattern.permute.xlu0 10
      %3713 = vperm.xlu0 %3712, %v241
      %v3714 = vpop.permute.xlu0 %3713
      %3716 = vset.pattern.permute.xlu0 10
      %3717 = vperm.xlu0 %3716, %v242
      %v3718 = vpop.permute.xlu0 %3717
      %3720 = vset.pattern.permute.xlu0 10
      %3721 = vperm.xlu0 %3720, %v243
      %v3722 = vpop.permute.xlu0 %3721
      %3724 = vset.pattern.permute.xlu0 10
      %3725 = vperm.xlu0 %3724, %v244
      %v3726 = vpop.permute.xlu0 %3725
      %3728 = vset.pattern.permute.xlu0 10
      %3729 = vperm.xlu0 %3728, %v245
      %v3730 = vpop.permute.xlu0 %3729
      %3732 = vset.pattern.permute.xlu0 10
      %3733 = vperm.xlu0 %3732, %v246
      %v3734 = vpop.permute.xlu0 %3733
      %3736 = vset.pattern.permute.xlu0 10
      %3737 = vperm.xlu0 %3736, %v247
      %v3738 = vpop.permute.xlu0 %3737
      %3740 = vset.pattern.permute.xlu0 10
      %3741 = vperm.xlu0 %3740, %v248
      %v3742 = vpop.permute.xlu0 %3741
      %3744 = vset.pattern.permute.xlu0 10
      %3745 = vperm.xlu0 %3744, %v249
      %v3746 = vpop.permute.xlu0 %3745
      %3748 = vset.pattern.permute.xlu0 10
      %3749 = vperm.xlu0 %3748, %v250
      %v3750 = vpop.permute.xlu0 %3749
      %3752 = vset.pattern.permute.xlu0 10
      %3753 = vperm.xlu0 %3752, %v251
      %v3754 = vpop.permute.xlu0 %3753
      %3756 = vset.pattern.permute.xlu0 10
      %3757 = vperm.xlu0 %3756, %v252
      %v3758 = vpop.permute.xlu0 %3757
      %3760 = vset.pattern.permute.xlu0 10
      %3761 = vperm.xlu0 %3760, %v253
      %v3762 = vpop.permute.xlu0 %3761
      %3764 = vset.pattern.permute.xlu0 10
      %3765 = vperm.xlu0 %3764, %v254
      %v3766 = vpop.permute.xlu0 %3765
      %3768 = vset.pattern.permute.xlu0 10
      %3769 = vperm.xlu0 %3768, %v255
      %v3770 = vpop.permute.xlu0 %3769
      %3772 = vset.pattern.permute.xlu0 10
      %3773 = vperm.xlu0 %3772, %v256
      %v3774 = vpop.permute.xlu0 %3773
      %3776 = vset.pattern.permute.xlu0 10
      %3777 = vperm.xlu0 %3776, %v257
      %v3778 = vpop.permute.xlu0 %3777
      %3780 = vset.pattern.permute.xlu0 10
      %3781 = vperm.xlu0 %3780, %v258
      %v3782 = vpop.permute.xlu0 %3781
      %3784 = vset.pattern.permute.xlu0 10
      %3785 = vperm.xlu0 %3784, %v259
      %v3786 = vpop.permute.xlu0 %3785
      %3788 = vset.pattern.permute.xlu0 10
      %3789 = vperm.xlu0 %3788, %v260
      %v3790 = vpop.permute.xlu0 %3789
      %3792 = vset.pattern.permute.xlu0 10
      %3793 = vperm.xlu0 %3792, %v261
      %v3794 = vpop.permute.xlu0 %3793
      %3796 = vset.pattern.permute.xlu0 10
      %3797 = vperm.xlu0 %3796, %v262
      %v3798 = vpop.permute.xlu0 %3797
      %3800 = vset.pattern.permute.xlu0 10
      %3801 = vperm.xlu0 %3800, %v263
      %v3802 = vpop.permute.xlu0 %3801
      %3804 = vset.pattern.permute.xlu0 10
      %3805 = vperm.xlu0 %3804, %v264
      %v3806 = vpop.permute.xlu0 %3805
      %3808 = vset.pattern.permute.xlu0 10
      %3809 = vperm.xlu0 %3808, %v265
      %v3810 = vpop.permute.xlu0 %3809
      %3812 = vset.pattern.permute.xlu0 10
      %3813 = vperm.xlu0 %3812, %v266
      %v3814 = vpop.permute.xlu0 %3813
      %3816 = vset.pattern.permute.xlu0 10
      %3817 = vperm.xlu0 %3816, %v267
      %v3818 = vpop.permute.xlu0 %3817
      %3820 = vset.pattern.permute.xlu0 10
      %3821 = vperm.xlu0 %3820, %v268
      %v3822 = vpop.permute.xlu0 %3821
      %3824 = vset.pattern.permute.xlu0 10
      %3825 = vperm.xlu0 %3824, %v269
      %v3826 = vpop.permute.xlu0 %3825
      %3828 = vset.pattern.permute.xlu0 10
      %3829 = vperm.xlu0 %3828, %v270
      %v3830 = vpop.permute.xlu0 %3829
      %3832 = vset.pattern.permute.xlu0 10
      %3833 = vperm.xlu0 %3832, %v271
      %v3834 = vpop.permute.xlu0 %3833
      %3836 = vset.pattern.permute.xlu0 10
      %3837 = vperm.xlu0 %3836, %v272
      %v3838 = vpop.permute.xlu0 %3837
      %3840 = vset.pattern.permute.xlu0 10
      %3841 = vperm.xlu0 %3840, %v273
      %v3842 = vpop.permute.xlu0 %3841
      %3844 = vset.pattern.permute.xlu0 10
      %3845 = vperm.xlu0 %3844, %v274
      %v3846 = vpop.permute.xlu0 %3845
      %3848 = vset.pattern.permute.xlu0 10
      %3849 = vperm.xlu0 %3848, %v275
      %v3850 = vpop.permute.xlu0 %3849
      %3852 = vset.pattern.permute.xlu0 10
      %3853 = vperm.xlu0 %3852, %v276
      %v3854 = vpop.permute.xlu0 %3853
      %3856 = vset.pattern.permute.xlu0 10
      %3857 = vperm.xlu0 %3856, %v277
      %v3858 = vpop.permute.xlu0 %3857
      %3860 = vset.pattern.permute.xlu0 10
      %3861 = vperm.xlu0 %3860, %v278
      %v3862 = vpop.permute.xlu0 %3861
      %3864 = vset.pattern.permute.xlu0 10
      %3865 = vperm.xlu0 %3864, %v279
      %v3866 = vpop.permute.xlu0 %3865
      %3868 = vset.pattern.permute.xlu0 10
      %3869 = vperm.xlu0 %3868, %v280
      %v3870 = vpop.permute.xlu0 %3869
      %3872 = vset.pattern.permute.xlu0 10
      %3873 = vperm.xlu0 %3872, %v281
      %v3874 = vpop.permute.xlu0 %3873
      %3876 = vset.pattern.permute.xlu0 10
      %3877 = vperm.xlu0 %3876, %v282
      %v3878 = vpop.permute.xlu0 %3877
      %3880 = vset.pattern.permute.xlu0 10
      %3881 = vperm.xlu0 %3880, %v283
      %v3882 = vpop.permute.xlu0 %3881
      %3884 = vset.pattern.permute.xlu0 10
      %3885 = vperm.xlu0 %3884, %v284
      %v3886 = vpop.permute.xlu0 %3885
      %3888 = vset.pattern.permute.xlu0 10
      %3889 = vperm.xlu0 %3888, %v285
      %v3890 = vpop.permute.xlu0 %3889
      %3892 = vset.pattern.permute.xlu0 10
      %3893 = vperm.xlu0 %3892, %v286
      %v3894 = vpop.permute.xlu0 %3893
      %3896 = vset.pattern.permute.xlu0 10
      %3897 = vperm.xlu0 %3896, %v287
      %v3898 = vpop.permute.xlu0 %3897
      %3900 = vset.pattern.permute.xlu0 10
      %3901 = vperm.xlu0 %3900, %v288
      %v3902 = vpop.permute.xlu0 %3901
      %3904 = vset.pattern.permute.xlu0 10
      %3905 = vperm.xlu0 %3904, %v289
      %v3906 = vpop.permute.xlu0 %3905
      %3908 = vset.pattern.permute.xlu0 10
      %3909 = vperm.xlu0 %3908, %v290
      %v3910 = vpop.permute.xlu0 %3909
      %3912 = vset.pattern.permute.xlu0 10
      %3913 = vperm.xlu0 %3912, %v291
      %v3914 = vpop.permute.xlu0 %3913
      %3916 = vset.pattern.permute.xlu0 10
      %3917 = vperm.xlu0 %3916, %v292
      %v3918 = vpop.permute.xlu0 %3917
      %v3920 = vmul.f32 %v1673, %v3666
      %v3921 = vmul.f32 %v1674, %v3670
      %v3922 = vmul.f32 %v1675, %v3674
      %v3923 = vmul.f32 %v1676, %v3678
      %v3924 = vmul.f32 %v1677, %v3682
      %v3925 = vmul.f32 %v1678, %v3686
      %v3926 = vmul.f32 %v1679, %v3690
      %v3927 = vmul.f32 %v1680, %v3694
      %v3928 = vmul.f32 %v1681, %v3698
      %v3929 = vmul.f32 %v1682, %v3702
      %v3930 = vmul.f32 %v1683, %v3706
      %v3931 = vmul.f32 %v1684, %v3710
      %v3932 = vmul.f32 %v1685, %v3714
      %v3933 = vmul.f32 %v1686, %v3718
      %v3934 = vmul.f32 %v1687, %v3722
      %v3935 = vmul.f32 %v1688, %v3726
      %v3936 = vmul.f32 %v1689, %v3730
      %v3937 = vmul.f32 %v1690, %v3734
      %v3938 = vmul.f32 %v1691, %v3738
      %v3939 = vmul.f32 %v1692, %v3742
      %v3940 = vmul.f32 %v1693, %v3746
      %v3941 = vmul.f32 %v1694, %v3750
      %v3942 = vmul.f32 %v1695, %v3754
      %v3943 = vmul.f32 %v1696, %v3758
      %v3944 = vmul.f32 %v1697, %v3762
      %v3945 = vmul.f32 %v1698, %v3766
      %v3946 = vmul.f32 %v1699, %v3770
      %v3947 = vmul.f32 %v1700, %v3774
      %v3948 = vmul.f32 %v1701, %v3778
      %v3949 = vmul.f32 %v1702, %v3782
      %v3950 = vmul.f32 %v1703, %v3786
      %v3951 = vmul.f32 %v1704, %v3790
      %v3952 = vmul.f32 %v1705, %v3794
      %v3953 = vmul.f32 %v1706, %v3798
      %v3954 = vmul.f32 %v1707, %v3802
      %v3955 = vmul.f32 %v1708, %v3806
      %v3956 = vmul.f32 %v1709, %v3810
      %v3957 = vmul.f32 %v1710, %v3814
      %v3958 = vmul.f32 %v1711, %v3818
      %v3959 = vmul.f32 %v1712, %v3822
      %v3960 = vmul.f32 %v1713, %v3826
      %v3961 = vmul.f32 %v1714, %v3830
      %v3962 = vmul.f32 %v1715, %v3834
      %v3963 = vmul.f32 %v1716, %v3838
      %v3964 = vmul.f32 %v1717, %v3842
      %v3965 = vmul.f32 %v1718, %v3846
      %v3966 = vmul.f32 %v1719, %v3850
      %v3967 = vmul.f32 %v1720, %v3854
      %v3968 = vmul.f32 %v1721, %v3858
      %v3969 = vmul.f32 %v1722, %v3862
      %v3970 = vmul.f32 %v1723, %v3866
      %v3971 = vmul.f32 %v1724, %v3870
      %v3972 = vmul.f32 %v1725, %v3874
      %v3973 = vmul.f32 %v1726, %v3878
      %v3974 = vmul.f32 %v1727, %v3882
      %v3975 = vmul.f32 %v1728, %v3886
      %v3976 = vmul.f32 %v1729, %v3890
      %v3977 = vmul.f32 %v1730, %v3894
      %v3978 = vmul.f32 %v1731, %v3898
      %v3979 = vmul.f32 %v1732, %v3902
      %v3980 = vmul.f32 %v1733, %v3906
      %v3981 = vmul.f32 %v1734, %v3910
      %v3982 = vmul.f32 %v1735, %v3914
      %v3983 = vmul.f32 %v1736, %v3918
      %4048 = vrot.lane.b32.xlu0 %v3920, 120
      %v4049 = vpop.permute.xlu0 %4048
      %4050 = vrot.lane.b32.xlu0 %v3921, 120
      %v4051 = vpop.permute.xlu0 %4050
      %4052 = vrot.lane.b32.xlu0 %v3922, 120
      %v4053 = vpop.permute.xlu0 %4052
      %4054 = vrot.lane.b32.xlu0 %v3923, 120
      %v4055 = vpop.permute.xlu0 %4054
      %4056 = vrot.lane.b32.xlu0 %v3924, 120
      %v4057 = vpop.permute.xlu0 %4056
      %4058 = vrot.lane.b32.xlu0 %v3925, 120
      %v4059 = vpop.permute.xlu0 %4058
      %4060 = vrot.lane.b32.xlu0 %v3926, 120
      %v4061 = vpop.permute.xlu0 %4060
      %4062 = vrot.lane.b32.xlu0 %v3927, 120
      %v4063 = vpop.permute.xlu0 %4062
      %4064 = vrot.lane.b32.xlu0 %v3928, 120
      %v4065 = vpop.permute.xlu0 %4064
      %4066 = vrot.lane.b32.xlu0 %v3929, 120
      %v4067 = vpop.permute.xlu0 %4066
      %4068 = vrot.lane.b32.xlu0 %v3930, 120
      %v4069 = vpop.permute.xlu0 %4068
      %4070 = vrot.lane.b32.xlu0 %v3931, 120
      %v4071 = vpop.permute.xlu0 %4070
      %4072 = vrot.lane.b32.xlu0 %v3932, 120
      %v4073 = vpop.permute.xlu0 %4072
      %4074 = vrot.lane.b32.xlu0 %v3933, 120
      %v4075 = vpop.permute.xlu0 %4074
      %4076 = vrot.lane.b32.xlu0 %v3934, 120
      %v4077 = vpop.permute.xlu0 %4076
      %4078 = vrot.lane.b32.xlu0 %v3935, 120
      %v4079 = vpop.permute.xlu0 %4078
      %4080 = vrot.lane.b32.xlu0 %v3936, 120
      %v4081 = vpop.permute.xlu0 %4080
      %4082 = vrot.lane.b32.xlu0 %v3937, 120
      %v4083 = vpop.permute.xlu0 %4082
      %4084 = vrot.lane.b32.xlu0 %v3938, 120
      %v4085 = vpop.permute.xlu0 %4084
      %4086 = vrot.lane.b32.xlu0 %v3939, 120
      %v4087 = vpop.permute.xlu0 %4086
      %4088 = vrot.lane.b32.xlu0 %v3940, 120
      %v4089 = vpop.permute.xlu0 %4088
      %4090 = vrot.lane.b32.xlu0 %v3941, 120
      %v4091 = vpop.permute.xlu0 %4090
      %4092 = vrot.lane.b32.xlu0 %v3942, 120
      %v4093 = vpop.permute.xlu0 %4092
      %4094 = vrot.lane.b32.xlu0 %v3943, 120
      %v4095 = vpop.permute.xlu0 %4094
      %4096 = vrot.lane.b32.xlu0 %v3944, 120
      %v4097 = vpop.permute.xlu0 %4096
      %4098 = vrot.lane.b32.xlu0 %v3945, 120
      %v4099 = vpop.permute.xlu0 %4098
      %4100 = vrot.lane.b32.xlu0 %v3946, 120
      %v4101 = vpop.permute.xlu0 %4100
      %4102 = vrot.lane.b32.xlu0 %v3947, 120
      %v4103 = vpop.permute.xlu0 %4102
      %4104 = vrot.lane.b32.xlu0 %v3948, 120
      %v4105 = vpop.permute.xlu0 %4104
      %4106 = vrot.lane.b32.xlu0 %v3949, 120
      %v4107 = vpop.permute.xlu0 %4106
      %4108 = vrot.lane.b32.xlu0 %v3950, 120
      %v4109 = vpop.permute.xlu0 %4108
      %4110 = vrot.lane.b32.xlu0 %v3951, 120
      %v4111 = vpop.permute.xlu0 %4110
      %4112 = vrot.lane.b32.xlu0 %v3952, 120
      %v4113 = vpop.permute.xlu0 %4112
      %4114 = vrot.lane.b32.xlu0 %v3953, 120
      %v4115 = vpop.permute.xlu0 %4114
      %4116 = vrot.lane.b32.xlu0 %v3954, 120
      %v4117 = vpop.permute.xlu0 %4116
      %4118 = vrot.lane.b32.xlu0 %v3955, 120
      %v4119 = vpop.permute.xlu0 %4118
      %4120 = vrot.lane.b32.xlu0 %v3956, 120
      %v4121 = vpop.permute.xlu0 %4120
      %4122 = vrot.lane.b32.xlu0 %v3957, 120
      %v4123 = vpop.permute.xlu0 %4122
      %4124 = vrot.lane.b32.xlu0 %v3958, 120
      %v4125 = vpop.permute.xlu0 %4124
      %4126 = vrot.lane.b32.xlu0 %v3959, 120
      %v4127 = vpop.permute.xlu0 %4126
      %4128 = vrot.lane.b32.xlu0 %v3960, 120
      %v4129 = vpop.permute.xlu0 %4128
      %4130 = vrot.lane.b32.xlu0 %v3961, 120
      %v4131 = vpop.permute.xlu0 %4130
      %4132 = vrot.lane.b32.xlu0 %v3962, 120
      %v4133 = vpop.permute.xlu0 %4132
      %4134 = vrot.lane.b32.xlu0 %v3963, 120
      %v4135 = vpop.permute.xlu0 %4134
      %4136 = vrot.lane.b32.xlu0 %v3964, 120
      %v4137 = vpop.permute.xlu0 %4136
      %4138 = vrot.lane.b32.xlu0 %v3965, 120
      %v4139 = vpop.permute.xlu0 %4138
      %4140 = vrot.lane.b32.xlu0 %v3966, 120
      %v4141 = vpop.permute.xlu0 %4140
      %4142 = vrot.lane.b32.xlu0 %v3967, 120
      %v4143 = vpop.permute.xlu0 %4142
      %4144 = vrot.lane.b32.xlu0 %v3968, 120
      %v4145 = vpop.permute.xlu0 %4144
      %4146 = vrot.lane.b32.xlu0 %v3969, 120
      %v4147 = vpop.permute.xlu0 %4146
      %4148 = vrot.lane.b32.xlu0 %v3970, 120
      %v4149 = vpop.permute.xlu0 %4148
      %4150 = vrot.lane.b32.xlu0 %v3971, 120
      %v4151 = vpop.permute.xlu0 %4150
      %4152 = vrot.lane.b32.xlu0 %v3972, 120
      %v4153 = vpop.permute.xlu0 %4152
      %4154 = vrot.lane.b32.xlu0 %v3973, 120
      %v4155 = vpop.permute.xlu0 %4154
      %4156 = vrot.lane.b32.xlu0 %v3974, 120
      %v4157 = vpop.permute.xlu0 %4156
      %4158 = vrot.lane.b32.xlu0 %v3975, 120
      %v4159 = vpop.permute.xlu0 %4158
      %4160 = vrot.lane.b32.xlu0 %v3976, 120
      %v4161 = vpop.permute.xlu0 %4160
      %4162 = vrot.lane.b32.xlu0 %v3977, 120
      %v4163 = vpop.permute.xlu0 %4162
      %4164 = vrot.lane.b32.xlu0 %v3978, 120
      %v4165 = vpop.permute.xlu0 %4164
      %4166 = vrot.lane.b32.xlu0 %v3979, 120
      %v4167 = vpop.permute.xlu0 %4166
      %4168 = vrot.lane.b32.xlu0 %v3980, 120
      %v4169 = vpop.permute.xlu0 %4168
      %4170 = vrot.lane.b32.xlu0 %v3981, 120
      %v4171 = vpop.permute.xlu0 %4170
      %4172 = vrot.lane.b32.xlu0 %v3982, 120
      %v4173 = vpop.permute.xlu0 %4172
      %4174 = vrot.lane.b32.xlu0 %v3983, 120
      %v4175 = vpop.permute.xlu0 %4174
      %v4240 = vadd.f32 %v3600, %v4049
      %v4241 = vadd.f32 %v3601, %v4051
      %v4242 = vadd.f32 %v3602, %v4053
      %v4243 = vadd.f32 %v3603, %v4055
      %v4244 = vadd.f32 %v3604, %v4057
      %v4245 = vadd.f32 %v3605, %v4059
      %v4246 = vadd.f32 %v3606, %v4061
      %v4247 = vadd.f32 %v3607, %v4063
      %v4248 = vadd.f32 %v3608, %v4065
      %v4249 = vadd.f32 %v3609, %v4067
      %v4250 = vadd.f32 %v3610, %v4069
      %v4251 = vadd.f32 %v3611, %v4071
      %v4252 = vadd.f32 %v3612, %v4073
      %v4253 = vadd.f32 %v3613, %v4075
      %v4254 = vadd.f32 %v3614, %v4077
      %v4255 = vadd.f32 %v3615, %v4079
      %v4256 = vadd.f32 %v3616, %v4081
      %v4257 = vadd.f32 %v3617, %v4083
      %v4258 = vadd.f32 %v3618, %v4085
      %v4259 = vadd.f32 %v3619, %v4087
      %v4260 = vadd.f32 %v3620, %v4089
      %v4261 = vadd.f32 %v3621, %v4091
      %v4262 = vadd.f32 %v3622, %v4093
      %v4263 = vadd.f32 %v3623, %v4095
      %v4264 = vadd.f32 %v3624, %v4097
      %v4265 = vadd.f32 %v3625, %v4099
      %v4266 = vadd.f32 %v3626, %v4101
      %v4267 = vadd.f32 %v3627, %v4103
      %v4268 = vadd.f32 %v3628, %v4105
      %v4269 = vadd.f32 %v3629, %v4107
      %v4270 = vadd.f32 %v3630, %v4109
      %v4271 = vadd.f32 %v3631, %v4111
      %v4272 = vadd.f32 %v3632, %v4113
      %v4273 = vadd.f32 %v3633, %v4115
      %v4274 = vadd.f32 %v3634, %v4117
      %v4275 = vadd.f32 %v3635, %v4119
      %v4276 = vadd.f32 %v3636, %v4121
      %v4277 = vadd.f32 %v3637, %v4123
      %v4278 = vadd.f32 %v3638, %v4125
      %v4279 = vadd.f32 %v3639, %v4127
      %v4280 = vadd.f32 %v3640, %v4129
      %v4281 = vadd.f32 %v3641, %v4131
      %v4282 = vadd.f32 %v3642, %v4133
      %v4283 = vadd.f32 %v3643, %v4135
      %v4284 = vadd.f32 %v3644, %v4137
      %v4285 = vadd.f32 %v3645, %v4139
      %v4286 = vadd.f32 %v3646, %v4141
      %v4287 = vadd.f32 %v3647, %v4143
      %v4288 = vadd.f32 %v3648, %v4145
      %v4289 = vadd.f32 %v3649, %v4147
      %v4290 = vadd.f32 %v3650, %v4149
      %v4291 = vadd.f32 %v3651, %v4151
      %v4292 = vadd.f32 %v3652, %v4153
      %v4293 = vadd.f32 %v3653, %v4155
      %v4294 = vadd.f32 %v3654, %v4157
      %v4295 = vadd.f32 %v3655, %v4159
      %v4296 = vadd.f32 %v3656, %v4161
      %v4297 = vadd.f32 %v3657, %v4163
      %v4298 = vadd.f32 %v3658, %v4165
      %v4299 = vadd.f32 %v3659, %v4167
      %v4300 = vadd.f32 %v3660, %v4169
      %v4301 = vadd.f32 %v3661, %v4171
      %v4302 = vadd.f32 %v3662, %v4173
      %v4303 = vadd.f32 %v3663, %v4175
      %4304 = vset.pattern.permute.xlu0 11
      %4305 = vperm.xlu0 %4304, %v229
      %v4306 = vpop.permute.xlu0 %4305
      %4308 = vset.pattern.permute.xlu0 11
      %4309 = vperm.xlu0 %4308, %v230
      %v4310 = vpop.permute.xlu0 %4309
      %4312 = vset.pattern.permute.xlu0 11
      %4313 = vperm.xlu0 %4312, %v231
      %v4314 = vpop.permute.xlu0 %4313
      %4316 = vset.pattern.permute.xlu0 11
      %4317 = vperm.xlu0 %4316, %v232
      %v4318 = vpop.permute.xlu0 %4317
      %4320 = vset.pattern.permute.xlu0 11
      %4321 = vperm.xlu0 %4320, %v233
      %v4322 = vpop.permute.xlu0 %4321
      %4324 = vset.pattern.permute.xlu0 11
      %4325 = vperm.xlu0 %4324, %v234
      %v4326 = vpop.permute.xlu0 %4325
      %4328 = vset.pattern.permute.xlu0 11
      %4329 = vperm.xlu0 %4328, %v235
      %v4330 = vpop.permute.xlu0 %4329
      %4332 = vset.pattern.permute.xlu0 11
      %4333 = vperm.xlu0 %4332, %v236
      %v4334 = vpop.permute.xlu0 %4333
      %4336 = vset.pattern.permute.xlu0 11
      %4337 = vperm.xlu0 %4336, %v237
      %v4338 = vpop.permute.xlu0 %4337
      %4340 = vset.pattern.permute.xlu0 11
      %4341 = vperm.xlu0 %4340, %v238
      %v4342 = vpop.permute.xlu0 %4341
      %4344 = vset.pattern.permute.xlu0 11
      %4345 = vperm.xlu0 %4344, %v239
      %v4346 = vpop.permute.xlu0 %4345
      %4348 = vset.pattern.permute.xlu0 11
      %4349 = vperm.xlu0 %4348, %v240
      %v4350 = vpop.permute.xlu0 %4349
      %4352 = vset.pattern.permute.xlu0 11
      %4353 = vperm.xlu0 %4352, %v241
      %v4354 = vpop.permute.xlu0 %4353
      %4356 = vset.pattern.permute.xlu0 11
      %4357 = vperm.xlu0 %4356, %v242
      %v4358 = vpop.permute.xlu0 %4357
      %4360 = vset.pattern.permute.xlu0 11
      %4361 = vperm.xlu0 %4360, %v243
      %v4362 = vpop.permute.xlu0 %4361
      %4364 = vset.pattern.permute.xlu0 11
      %4365 = vperm.xlu0 %4364, %v244
      %v4366 = vpop.permute.xlu0 %4365
      %4368 = vset.pattern.permute.xlu0 11
      %4369 = vperm.xlu0 %4368, %v245
      %v4370 = vpop.permute.xlu0 %4369
      %4372 = vset.pattern.permute.xlu0 11
      %4373 = vperm.xlu0 %4372, %v246
      %v4374 = vpop.permute.xlu0 %4373
      %4376 = vset.pattern.permute.xlu0 11
      %4377 = vperm.xlu0 %4376, %v247
      %v4378 = vpop.permute.xlu0 %4377
      %4380 = vset.pattern.permute.xlu0 11
      %4381 = vperm.xlu0 %4380, %v248
      %v4382 = vpop.permute.xlu0 %4381
      %4384 = vset.pattern.permute.xlu0 11
      %4385 = vperm.xlu0 %4384, %v249
      %v4386 = vpop.permute.xlu0 %4385
      %4388 = vset.pattern.permute.xlu0 11
      %4389 = vperm.xlu0 %4388, %v250
      %v4390 = vpop.permute.xlu0 %4389
      %4392 = vset.pattern.permute.xlu0 11
      %4393 = vperm.xlu0 %4392, %v251
      %v4394 = vpop.permute.xlu0 %4393
      %4396 = vset.pattern.permute.xlu0 11
      %4397 = vperm.xlu0 %4396, %v252
      %v4398 = vpop.permute.xlu0 %4397
      %4400 = vset.pattern.permute.xlu0 11
      %4401 = vperm.xlu0 %4400, %v253
      %v4402 = vpop.permute.xlu0 %4401
      %4404 = vset.pattern.permute.xlu0 11
      %4405 = vperm.xlu0 %4404, %v254
      %v4406 = vpop.permute.xlu0 %4405
      %4408 = vset.pattern.permute.xlu0 11
      %4409 = vperm.xlu0 %4408, %v255
      %v4410 = vpop.permute.xlu0 %4409
      %4412 = vset.pattern.permute.xlu0 11
      %4413 = vperm.xlu0 %4412, %v256
      %v4414 = vpop.permute.xlu0 %4413
      %4416 = vset.pattern.permute.xlu0 11
      %4417 = vperm.xlu0 %4416, %v257
      %v4418 = vpop.permute.xlu0 %4417
      %4420 = vset.pattern.permute.xlu0 11
      %4421 = vperm.xlu0 %4420, %v258
      %v4422 = vpop.permute.xlu0 %4421
      %4424 = vset.pattern.permute.xlu0 11
      %4425 = vperm.xlu0 %4424, %v259
      %v4426 = vpop.permute.xlu0 %4425
      %4428 = vset.pattern.permute.xlu0 11
      %4429 = vperm.xlu0 %4428, %v260
      %v4430 = vpop.permute.xlu0 %4429
      %4432 = vset.pattern.permute.xlu0 11
      %4433 = vperm.xlu0 %4432, %v261
      %v4434 = vpop.permute.xlu0 %4433
      %4436 = vset.pattern.permute.xlu0 11
      %4437 = vperm.xlu0 %4436, %v262
      %v4438 = vpop.permute.xlu0 %4437
      %4440 = vset.pattern.permute.xlu0 11
      %4441 = vperm.xlu0 %4440, %v263
      %v4442 = vpop.permute.xlu0 %4441
      %4444 = vset.pattern.permute.xlu0 11
      %4445 = vperm.xlu0 %4444, %v264
      %v4446 = vpop.permute.xlu0 %4445
      %4448 = vset.pattern.permute.xlu0 11
      %4449 = vperm.xlu0 %4448, %v265
      %v4450 = vpop.permute.xlu0 %4449
      %4452 = vset.pattern.permute.xlu0 11
      %4453 = vperm.xlu0 %4452, %v266
      %v4454 = vpop.permute.xlu0 %4453
      %4456 = vset.pattern.permute.xlu0 11
      %4457 = vperm.xlu0 %4456, %v267
      %v4458 = vpop.permute.xlu0 %4457
      %4460 = vset.pattern.permute.xlu0 11
      %4461 = vperm.xlu0 %4460, %v268
      %v4462 = vpop.permute.xlu0 %4461
      %4464 = vset.pattern.permute.xlu0 11
      %4465 = vperm.xlu0 %4464, %v269
      %v4466 = vpop.permute.xlu0 %4465
      %4468 = vset.pattern.permute.xlu0 11
      %4469 = vperm.xlu0 %4468, %v270
      %v4470 = vpop.permute.xlu0 %4469
      %4472 = vset.pattern.permute.xlu0 11
      %4473 = vperm.xlu0 %4472, %v271
      %v4474 = vpop.permute.xlu0 %4473
      %4476 = vset.pattern.permute.xlu0 11
      %4477 = vperm.xlu0 %4476, %v272
      %v4478 = vpop.permute.xlu0 %4477
      %4480 = vset.pattern.permute.xlu0 11
      %4481 = vperm.xlu0 %4480, %v273
      %v4482 = vpop.permute.xlu0 %4481
      %4484 = vset.pattern.permute.xlu0 11
      %4485 = vperm.xlu0 %4484, %v274
      %v4486 = vpop.permute.xlu0 %4485
      %4488 = vset.pattern.permute.xlu0 11
      %4489 = vperm.xlu0 %4488, %v275
      %v4490 = vpop.permute.xlu0 %4489
      %4492 = vset.pattern.permute.xlu0 11
      %4493 = vperm.xlu0 %4492, %v276
      %v4494 = vpop.permute.xlu0 %4493
      %4496 = vset.pattern.permute.xlu0 11
      %4497 = vperm.xlu0 %4496, %v277
      %v4498 = vpop.permute.xlu0 %4497
      %4500 = vset.pattern.permute.xlu0 11
      %4501 = vperm.xlu0 %4500, %v278
      %v4502 = vpop.permute.xlu0 %4501
      %4504 = vset.pattern.permute.xlu0 11
      %4505 = vperm.xlu0 %4504, %v279
      %v4506 = vpop.permute.xlu0 %4505
      %4508 = vset.pattern.permute.xlu0 11
      %4509 = vperm.xlu0 %4508, %v280
      %v4510 = vpop.permute.xlu0 %4509
      %4512 = vset.pattern.permute.xlu0 11
      %4513 = vperm.xlu0 %4512, %v281
      %v4514 = vpop.permute.xlu0 %4513
      %4516 = vset.pattern.permute.xlu0 11
      %4517 = vperm.xlu0 %4516, %v282
      %v4518 = vpop.permute.xlu0 %4517
      %4520 = vset.pattern.permute.xlu0 11
      %4521 = vperm.xlu0 %4520, %v283
      %v4522 = vpop.permute.xlu0 %4521
      %4524 = vset.pattern.permute.xlu0 11
      %4525 = vperm.xlu0 %4524, %v284
      %v4526 = vpop.permute.xlu0 %4525
      %4528 = vset.pattern.permute.xlu0 11
      %4529 = vperm.xlu0 %4528, %v285
      %v4530 = vpop.permute.xlu0 %4529
      %4532 = vset.pattern.permute.xlu0 11
      %4533 = vperm.xlu0 %4532, %v286
      %v4534 = vpop.permute.xlu0 %4533
      %4536 = vset.pattern.permute.xlu0 11
      %4537 = vperm.xlu0 %4536, %v287
      %v4538 = vpop.permute.xlu0 %4537
      %4540 = vset.pattern.permute.xlu0 11
      %4541 = vperm.xlu0 %4540, %v288
      %v4542 = vpop.permute.xlu0 %4541
      %4544 = vset.pattern.permute.xlu0 11
      %4545 = vperm.xlu0 %4544, %v289
      %v4546 = vpop.permute.xlu0 %4545
      %4548 = vset.pattern.permute.xlu0 11
      %4549 = vperm.xlu0 %4548, %v290
      %v4550 = vpop.permute.xlu0 %4549
      %4552 = vset.pattern.permute.xlu0 11
      %4553 = vperm.xlu0 %4552, %v291
      %v4554 = vpop.permute.xlu0 %4553
      %4556 = vset.pattern.permute.xlu0 11
      %4557 = vperm.xlu0 %4556, %v292
      %v4558 = vpop.permute.xlu0 %4557
      %v4560 = vmul.f32 %v1673, %v4306
      %v4561 = vmul.f32 %v1674, %v4310
      %v4562 = vmul.f32 %v1675, %v4314
      %v4563 = vmul.f32 %v1676, %v4318
      %v4564 = vmul.f32 %v1677, %v4322
      %v4565 = vmul.f32 %v1678, %v4326
      %v4566 = vmul.f32 %v1679, %v4330
      %v4567 = vmul.f32 %v1680, %v4334
      %v4568 = vmul.f32 %v1681, %v4338
      %v4569 = vmul.f32 %v1682, %v4342
      %v4570 = vmul.f32 %v1683, %v4346
      %v4571 = vmul.f32 %v1684, %v4350
      %v4572 = vmul.f32 %v1685, %v4354
      %v4573 = vmul.f32 %v1686, %v4358
      %v4574 = vmul.f32 %v1687, %v4362
      %v4575 = vmul.f32 %v1688, %v4366
      %v4576 = vmul.f32 %v1689, %v4370
      %v4577 = vmul.f32 %v1690, %v4374
      %v4578 = vmul.f32 %v1691, %v4378
      %v4579 = vmul.f32 %v1692, %v4382
      %v4580 = vmul.f32 %v1693, %v4386
      %v4581 = vmul.f32 %v1694, %v4390
      %v4582 = vmul.f32 %v1695, %v4394
      %v4583 = vmul.f32 %v1696, %v4398
      %v4584 = vmul.f32 %v1697, %v4402
      %v4585 = vmul.f32 %v1698, %v4406
      %v4586 = vmul.f32 %v1699, %v4410
      %v4587 = vmul.f32 %v1700, %v4414
      %v4588 = vmul.f32 %v1701, %v4418
      %v4589 = vmul.f32 %v1702, %v4422
      %v4590 = vmul.f32 %v1703, %v4426
      %v4591 = vmul.f32 %v1704, %v4430
      %v4592 = vmul.f32 %v1705, %v4434
      %v4593 = vmul.f32 %v1706, %v4438
      %v4594 = vmul.f32 %v1707, %v4442
      %v4595 = vmul.f32 %v1708, %v4446
      %v4596 = vmul.f32 %v1709, %v4450
      %v4597 = vmul.f32 %v1710, %v4454
      %v4598 = vmul.f32 %v1711, %v4458
      %v4599 = vmul.f32 %v1712, %v4462
      %v4600 = vmul.f32 %v1713, %v4466
      %v4601 = vmul.f32 %v1714, %v4470
      %v4602 = vmul.f32 %v1715, %v4474
      %v4603 = vmul.f32 %v1716, %v4478
      %v4604 = vmul.f32 %v1717, %v4482
      %v4605 = vmul.f32 %v1718, %v4486
      %v4606 = vmul.f32 %v1719, %v4490
      %v4607 = vmul.f32 %v1720, %v4494
      %v4608 = vmul.f32 %v1721, %v4498
      %v4609 = vmul.f32 %v1722, %v4502
      %v4610 = vmul.f32 %v1723, %v4506
      %v4611 = vmul.f32 %v1724, %v4510
      %v4612 = vmul.f32 %v1725, %v4514
      %v4613 = vmul.f32 %v1726, %v4518
      %v4614 = vmul.f32 %v1727, %v4522
      %v4615 = vmul.f32 %v1728, %v4526
      %v4616 = vmul.f32 %v1729, %v4530
      %v4617 = vmul.f32 %v1730, %v4534
      %v4618 = vmul.f32 %v1731, %v4538
      %v4619 = vmul.f32 %v1732, %v4542
      %v4620 = vmul.f32 %v1733, %v4546
      %v4621 = vmul.f32 %v1734, %v4550
      %v4622 = vmul.f32 %v1735, %v4554
      %v4623 = vmul.f32 %v1736, %v4558
      %4688 = vrot.lane.b32.xlu0 %v4560, 112
      %v4689 = vpop.permute.xlu0 %4688
      %4690 = vrot.lane.b32.xlu0 %v4561, 112
      %v4691 = vpop.permute.xlu0 %4690
      %4692 = vrot.lane.b32.xlu0 %v4562, 112
      %v4693 = vpop.permute.xlu0 %4692
      %4694 = vrot.lane.b32.xlu0 %v4563, 112
      %v4695 = vpop.permute.xlu0 %4694
      %4696 = vrot.lane.b32.xlu0 %v4564, 112
      %v4697 = vpop.permute.xlu0 %4696
      %4698 = vrot.lane.b32.xlu0 %v4565, 112
      %v4699 = vpop.permute.xlu0 %4698
      %4700 = vrot.lane.b32.xlu0 %v4566, 112
      %v4701 = vpop.permute.xlu0 %4700
      %4702 = vrot.lane.b32.xlu0 %v4567, 112
      %v4703 = vpop.permute.xlu0 %4702
      %4704 = vrot.lane.b32.xlu0 %v4568, 112
      %v4705 = vpop.permute.xlu0 %4704
      %4706 = vrot.lane.b32.xlu0 %v4569, 112
      %v4707 = vpop.permute.xlu0 %4706
      %4708 = vrot.lane.b32.xlu0 %v4570, 112
      %v4709 = vpop.permute.xlu0 %4708
      %4710 = vrot.lane.b32.xlu0 %v4571, 112
      %v4711 = vpop.permute.xlu0 %4710
      %4712 = vrot.lane.b32.xlu0 %v4572, 112
      %v4713 = vpop.permute.xlu0 %4712
      %4714 = vrot.lane.b32.xlu0 %v4573, 112
      %v4715 = vpop.permute.xlu0 %4714
      %4716 = vrot.lane.b32.xlu0 %v4574, 112
      %v4717 = vpop.permute.xlu0 %4716
      %4718 = vrot.lane.b32.xlu0 %v4575, 112
      %v4719 = vpop.permute.xlu0 %4718
      %4720 = vrot.lane.b32.xlu0 %v4576, 112
      %v4721 = vpop.permute.xlu0 %4720
      %4722 = vrot.lane.b32.xlu0 %v4577, 112
      %v4723 = vpop.permute.xlu0 %4722
      %4724 = vrot.lane.b32.xlu0 %v4578, 112
      %v4725 = vpop.permute.xlu0 %4724
      %4726 = vrot.lane.b32.xlu0 %v4579, 112
      %v4727 = vpop.permute.xlu0 %4726
      %4728 = vrot.lane.b32.xlu0 %v4580, 112
      %v4729 = vpop.permute.xlu0 %4728
      %4730 = vrot.lane.b32.xlu0 %v4581, 112
      %v4731 = vpop.permute.xlu0 %4730
      %4732 = vrot.lane.b32.xlu0 %v4582, 112
      %v4733 = vpop.permute.xlu0 %4732
      %4734 = vrot.lane.b32.xlu0 %v4583, 112
      %v4735 = vpop.permute.xlu0 %4734
      %4736 = vrot.lane.b32.xlu0 %v4584, 112
      %v4737 = vpop.permute.xlu0 %4736
      %4738 = vrot.lane.b32.xlu0 %v4585, 112
      %v4739 = vpop.permute.xlu0 %4738
      %4740 = vrot.lane.b32.xlu0 %v4586, 112
      %v4741 = vpop.permute.xlu0 %4740
      %4742 = vrot.lane.b32.xlu0 %v4587, 112
      %v4743 = vpop.permute.xlu0 %4742
      %4744 = vrot.lane.b32.xlu0 %v4588, 112
      %v4745 = vpop.permute.xlu0 %4744
      %4746 = vrot.lane.b32.xlu0 %v4589, 112
      %v4747 = vpop.permute.xlu0 %4746
      %4748 = vrot.lane.b32.xlu0 %v4590, 112
      %v4749 = vpop.permute.xlu0 %4748
      %4750 = vrot.lane.b32.xlu0 %v4591, 112
      %v4751 = vpop.permute.xlu0 %4750
      %4752 = vrot.lane.b32.xlu0 %v4592, 112
      %v4753 = vpop.permute.xlu0 %4752
      %4754 = vrot.lane.b32.xlu0 %v4593, 112
      %v4755 = vpop.permute.xlu0 %4754
      %4756 = vrot.lane.b32.xlu0 %v4594, 112
      %v4757 = vpop.permute.xlu0 %4756
      %4758 = vrot.lane.b32.xlu0 %v4595, 112
      %v4759 = vpop.permute.xlu0 %4758
      %4760 = vrot.lane.b32.xlu0 %v4596, 112
      %v4761 = vpop.permute.xlu0 %4760
      %4762 = vrot.lane.b32.xlu0 %v4597, 112
      %v4763 = vpop.permute.xlu0 %4762
      %4764 = vrot.lane.b32.xlu0 %v4598, 112
      %v4765 = vpop.permute.xlu0 %4764
      %4766 = vrot.lane.b32.xlu0 %v4599, 112
      %v4767 = vpop.permute.xlu0 %4766
      %4768 = vrot.lane.b32.xlu0 %v4600, 112
      %v4769 = vpop.permute.xlu0 %4768
      %4770 = vrot.lane.b32.xlu0 %v4601, 112
      %v4771 = vpop.permute.xlu0 %4770
      %4772 = vrot.lane.b32.xlu0 %v4602, 112
      %v4773 = vpop.permute.xlu0 %4772
      %4774 = vrot.lane.b32.xlu0 %v4603, 112
      %v4775 = vpop.permute.xlu0 %4774
      %4776 = vrot.lane.b32.xlu0 %v4604, 112
      %v4777 = vpop.permute.xlu0 %4776
      %4778 = vrot.lane.b32.xlu0 %v4605, 112
      %v4779 = vpop.permute.xlu0 %4778
      %4780 = vrot.lane.b32.xlu0 %v4606, 112
      %v4781 = vpop.permute.xlu0 %4780
      %4782 = vrot.lane.b32.xlu0 %v4607, 112
      %v4783 = vpop.permute.xlu0 %4782
      %4784 = vrot.lane.b32.xlu0 %v4608, 112
      %v4785 = vpop.permute.xlu0 %4784
      %4786 = vrot.lane.b32.xlu0 %v4609, 112
      %v4787 = vpop.permute.xlu0 %4786
      %4788 = vrot.lane.b32.xlu0 %v4610, 112
      %v4789 = vpop.permute.xlu0 %4788
      %4790 = vrot.lane.b32.xlu0 %v4611, 112
      %v4791 = vpop.permute.xlu0 %4790
      %4792 = vrot.lane.b32.xlu0 %v4612, 112
      %v4793 = vpop.permute.xlu0 %4792
      %4794 = vrot.lane.b32.xlu0 %v4613, 112
      %v4795 = vpop.permute.xlu0 %4794
      %4796 = vrot.lane.b32.xlu0 %v4614, 112
      %v4797 = vpop.permute.xlu0 %4796
      %4798 = vrot.lane.b32.xlu0 %v4615, 112
      %v4799 = vpop.permute.xlu0 %4798
      %4800 = vrot.lane.b32.xlu0 %v4616, 112
      %v4801 = vpop.permute.xlu0 %4800
      %4802 = vrot.lane.b32.xlu0 %v4617, 112
      %v4803 = vpop.permute.xlu0 %4802
      %4804 = vrot.lane.b32.xlu0 %v4618, 112
      %v4805 = vpop.permute.xlu0 %4804
      %4806 = vrot.lane.b32.xlu0 %v4619, 112
      %v4807 = vpop.permute.xlu0 %4806
      %4808 = vrot.lane.b32.xlu0 %v4620, 112
      %v4809 = vpop.permute.xlu0 %4808
      %4810 = vrot.lane.b32.xlu0 %v4621, 112
      %v4811 = vpop.permute.xlu0 %4810
      %4812 = vrot.lane.b32.xlu0 %v4622, 112
      %v4813 = vpop.permute.xlu0 %4812
      %4814 = vrot.lane.b32.xlu0 %v4623, 112
      %v4815 = vpop.permute.xlu0 %4814
      %v4880 = vadd.f32 %v4240, %v4689
      %v4881 = vadd.f32 %v4241, %v4691
      %v4882 = vadd.f32 %v4242, %v4693
      %v4883 = vadd.f32 %v4243, %v4695
      %v4884 = vadd.f32 %v4244, %v4697
      %v4885 = vadd.f32 %v4245, %v4699
      %v4886 = vadd.f32 %v4246, %v4701
      %v4887 = vadd.f32 %v4247, %v4703
      %v4888 = vadd.f32 %v4248, %v4705
      %v4889 = vadd.f32 %v4249, %v4707
      %v4890 = vadd.f32 %v4250, %v4709
      %v4891 = vadd.f32 %v4251, %v4711
      %v4892 = vadd.f32 %v4252, %v4713
      %v4893 = vadd.f32 %v4253, %v4715
      %v4894 = vadd.f32 %v4254, %v4717
      %v4895 = vadd.f32 %v4255, %v4719
      %v4896 = vadd.f32 %v4256, %v4721
      %v4897 = vadd.f32 %v4257, %v4723
      %v4898 = vadd.f32 %v4258, %v4725
      %v4899 = vadd.f32 %v4259, %v4727
      %v4900 = vadd.f32 %v4260, %v4729
      %v4901 = vadd.f32 %v4261, %v4731
      %v4902 = vadd.f32 %v4262, %v4733
      %v4903 = vadd.f32 %v4263, %v4735
      %v4904 = vadd.f32 %v4264, %v4737
      %v4905 = vadd.f32 %v4265, %v4739
      %v4906 = vadd.f32 %v4266, %v4741
      %v4907 = vadd.f32 %v4267, %v4743
      %v4908 = vadd.f32 %v4268, %v4745
      %v4909 = vadd.f32 %v4269, %v4747
      %v4910 = vadd.f32 %v4270, %v4749
      %v4911 = vadd.f32 %v4271, %v4751
      %v4912 = vadd.f32 %v4272, %v4753
      %v4913 = vadd.f32 %v4273, %v4755
      %v4914 = vadd.f32 %v4274, %v4757
      %v4915 = vadd.f32 %v4275, %v4759
      %v4916 = vadd.f32 %v4276, %v4761
      %v4917 = vadd.f32 %v4277, %v4763
      %v4918 = vadd.f32 %v4278, %v4765
      %v4919 = vadd.f32 %v4279, %v4767
      %v4920 = vadd.f32 %v4280, %v4769
      %v4921 = vadd.f32 %v4281, %v4771
      %v4922 = vadd.f32 %v4282, %v4773
      %v4923 = vadd.f32 %v4283, %v4775
      %v4924 = vadd.f32 %v4284, %v4777
      %v4925 = vadd.f32 %v4285, %v4779
      %v4926 = vadd.f32 %v4286, %v4781
      %v4927 = vadd.f32 %v4287, %v4783
      %v4928 = vadd.f32 %v4288, %v4785
      %v4929 = vadd.f32 %v4289, %v4787
      %v4930 = vadd.f32 %v4290, %v4789
      %v4931 = vadd.f32 %v4291, %v4791
      %v4932 = vadd.f32 %v4292, %v4793
      %v4933 = vadd.f32 %v4293, %v4795
      %v4934 = vadd.f32 %v4294, %v4797
      %v4935 = vadd.f32 %v4295, %v4799
      %v4936 = vadd.f32 %v4296, %v4801
      %v4937 = vadd.f32 %v4297, %v4803
      %v4938 = vadd.f32 %v4298, %v4805
      %v4939 = vadd.f32 %v4299, %v4807
      %v4940 = vadd.f32 %v4300, %v4809
      %v4941 = vadd.f32 %v4301, %v4811
      %v4942 = vadd.f32 %v4302, %v4813
      %v4943 = vadd.f32 %v4303, %v4815
      %4944 = vset.pattern.permute.xlu0 8
      %4945 = vperm.xlu0 %4944, %v229
      %v4946 = vpop.permute.xlu0 %4945
      %4948 = vset.pattern.permute.xlu0 8
      %4949 = vperm.xlu0 %4948, %v230
      %v4950 = vpop.permute.xlu0 %4949
      %4952 = vset.pattern.permute.xlu0 8
      %4953 = vperm.xlu0 %4952, %v231
      %v4954 = vpop.permute.xlu0 %4953
      %4956 = vset.pattern.permute.xlu0 8
      %4957 = vperm.xlu0 %4956, %v232
      %v4958 = vpop.permute.xlu0 %4957
      %4960 = vset.pattern.permute.xlu0 8
      %4961 = vperm.xlu0 %4960, %v233
      %v4962 = vpop.permute.xlu0 %4961
      %4964 = vset.pattern.permute.xlu0 8
      %4965 = vperm.xlu0 %4964, %v234
      %v4966 = vpop.permute.xlu0 %4965
      %4968 = vset.pattern.permute.xlu0 8
      %4969 = vperm.xlu0 %4968, %v235
      %v4970 = vpop.permute.xlu0 %4969
      %4972 = vset.pattern.permute.xlu0 8
      %4973 = vperm.xlu0 %4972, %v236
      %v4974 = vpop.permute.xlu0 %4973
      %4976 = vset.pattern.permute.xlu0 8
      %4977 = vperm.xlu0 %4976, %v237
      %v4978 = vpop.permute.xlu0 %4977
      %4980 = vset.pattern.permute.xlu0 8
      %4981 = vperm.xlu0 %4980, %v238
      %v4982 = vpop.permute.xlu0 %4981
      %4984 = vset.pattern.permute.xlu0 8
      %4985 = vperm.xlu0 %4984, %v239
      %v4986 = vpop.permute.xlu0 %4985
      %4988 = vset.pattern.permute.xlu0 8
      %4989 = vperm.xlu0 %4988, %v240
      %v4990 = vpop.permute.xlu0 %4989
      %4992 = vset.pattern.permute.xlu0 8
      %4993 = vperm.xlu0 %4992, %v241
      %v4994 = vpop.permute.xlu0 %4993
      %4996 = vset.pattern.permute.xlu0 8
      %4997 = vperm.xlu0 %4996, %v242
      %v4998 = vpop.permute.xlu0 %4997
      %5000 = vset.pattern.permute.xlu0 8
      %5001 = vperm.xlu0 %5000, %v243
      %v5002 = vpop.permute.xlu0 %5001
      %5004 = vset.pattern.permute.xlu0 8
      %5005 = vperm.xlu0 %5004, %v244
      %v5006 = vpop.permute.xlu0 %5005
      %5008 = vset.pattern.permute.xlu0 8
      %5009 = vperm.xlu0 %5008, %v245
      %v5010 = vpop.permute.xlu0 %5009
      %5012 = vset.pattern.permute.xlu0 8
      %5013 = vperm.xlu0 %5012, %v246
      %v5014 = vpop.permute.xlu0 %5013
      %5016 = vset.pattern.permute.xlu0 8
      %5017 = vperm.xlu0 %5016, %v247
      %v5018 = vpop.permute.xlu0 %5017
      %5020 = vset.pattern.permute.xlu0 8
      %5021 = vperm.xlu0 %5020, %v248
      %v5022 = vpop.permute.xlu0 %5021
      %5024 = vset.pattern.permute.xlu0 8
      %5025 = vperm.xlu0 %5024, %v249
      %v5026 = vpop.permute.xlu0 %5025
      %5028 = vset.pattern.permute.xlu0 8
      %5029 = vperm.xlu0 %5028, %v250
      %v5030 = vpop.permute.xlu0 %5029
      %5032 = vset.pattern.permute.xlu0 8
      %5033 = vperm.xlu0 %5032, %v251
      %v5034 = vpop.permute.xlu0 %5033
      %5036 = vset.pattern.permute.xlu0 8
      %5037 = vperm.xlu0 %5036, %v252
      %v5038 = vpop.permute.xlu0 %5037
      %5040 = vset.pattern.permute.xlu0 8
      %5041 = vperm.xlu0 %5040, %v253
      %v5042 = vpop.permute.xlu0 %5041
      %5044 = vset.pattern.permute.xlu0 8
      %5045 = vperm.xlu0 %5044, %v254
      %v5046 = vpop.permute.xlu0 %5045
      %5048 = vset.pattern.permute.xlu0 8
      %5049 = vperm.xlu0 %5048, %v255
      %v5050 = vpop.permute.xlu0 %5049
      %5052 = vset.pattern.permute.xlu0 8
      %5053 = vperm.xlu0 %5052, %v256
      %v5054 = vpop.permute.xlu0 %5053
      %5056 = vset.pattern.permute.xlu0 8
      %5057 = vperm.xlu0 %5056, %v257
      %v5058 = vpop.permute.xlu0 %5057
      %5060 = vset.pattern.permute.xlu0 8
      %5061 = vperm.xlu0 %5060, %v258
      %v5062 = vpop.permute.xlu0 %5061
      %5064 = vset.pattern.permute.xlu0 8
      %5065 = vperm.xlu0 %5064, %v259
      %v5066 = vpop.permute.xlu0 %5065
      %5068 = vset.pattern.permute.xlu0 8
      %5069 = vperm.xlu0 %5068, %v260
      %v5070 = vpop.permute.xlu0 %5069
      %5072 = vset.pattern.permute.xlu0 8
      %5073 = vperm.xlu0 %5072, %v261
      %v5074 = vpop.permute.xlu0 %5073
      %5076 = vset.pattern.permute.xlu0 8
      %5077 = vperm.xlu0 %5076, %v262
      %v5078 = vpop.permute.xlu0 %5077
      %5080 = vset.pattern.permute.xlu0 8
      %5081 = vperm.xlu0 %5080, %v263
      %v5082 = vpop.permute.xlu0 %5081
      %5084 = vset.pattern.permute.xlu0 8
      %5085 = vperm.xlu0 %5084, %v264
      %v5086 = vpop.permute.xlu0 %5085
      %5088 = vset.pattern.permute.xlu0 8
      %5089 = vperm.xlu0 %5088, %v265
      %v5090 = vpop.permute.xlu0 %5089
      %5092 = vset.pattern.permute.xlu0 8
      %5093 = vperm.xlu0 %5092, %v266
      %v5094 = vpop.permute.xlu0 %5093
      %5096 = vset.pattern.permute.xlu0 8
      %5097 = vperm.xlu0 %5096, %v267
      %v5098 = vpop.permute.xlu0 %5097
      %5100 = vset.pattern.permute.xlu0 8
      %5101 = vperm.xlu0 %5100, %v268
      %v5102 = vpop.permute.xlu0 %5101
      %5104 = vset.pattern.permute.xlu0 8
      %5105 = vperm.xlu0 %5104, %v269
      %v5106 = vpop.permute.xlu0 %5105
      %5108 = vset.pattern.permute.xlu0 8
      %5109 = vperm.xlu0 %5108, %v270
      %v5110 = vpop.permute.xlu0 %5109
      %5112 = vset.pattern.permute.xlu0 8
      %5113 = vperm.xlu0 %5112, %v271
      %v5114 = vpop.permute.xlu0 %5113
      %5116 = vset.pattern.permute.xlu0 8
      %5117 = vperm.xlu0 %5116, %v272
      %v5118 = vpop.permute.xlu0 %5117
      %5120 = vset.pattern.permute.xlu0 8
      %5121 = vperm.xlu0 %5120, %v273
      %v5122 = vpop.permute.xlu0 %5121
      %5124 = vset.pattern.permute.xlu0 8
      %5125 = vperm.xlu0 %5124, %v274
      %v5126 = vpop.permute.xlu0 %5125
      %5128 = vset.pattern.permute.xlu0 8
      %5129 = vperm.xlu0 %5128, %v275
      %v5130 = vpop.permute.xlu0 %5129
      %5132 = vset.pattern.permute.xlu0 8
      %5133 = vperm.xlu0 %5132, %v276
      %v5134 = vpop.permute.xlu0 %5133
      %5136 = vset.pattern.permute.xlu0 8
      %5137 = vperm.xlu0 %5136, %v277
      %v5138 = vpop.permute.xlu0 %5137
      %5140 = vset.pattern.permute.xlu0 8
      %5141 = vperm.xlu0 %5140, %v278
      %v5142 = vpop.permute.xlu0 %5141
      %5144 = vset.pattern.permute.xlu0 8
      %5145 = vperm.xlu0 %5144, %v279
      %v5146 = vpop.permute.xlu0 %5145
      %5148 = vset.pattern.permute.xlu0 8
      %5149 = vperm.xlu0 %5148, %v280
      %v5150 = vpop.permute.xlu0 %5149
      %5152 = vset.pattern.permute.xlu0 8
      %5153 = vperm.xlu0 %5152, %v281
      %v5154 = vpop.permute.xlu0 %5153
      %5156 = vset.pattern.permute.xlu0 8
      %5157 = vperm.xlu0 %5156, %v282
      %v5158 = vpop.permute.xlu0 %5157
      %5160 = vset.pattern.permute.xlu0 8
      %5161 = vperm.xlu0 %5160, %v283
      %v5162 = vpop.permute.xlu0 %5161
      %5164 = vset.pattern.permute.xlu0 8
      %5165 = vperm.xlu0 %5164, %v284
      %v5166 = vpop.permute.xlu0 %5165
      %5168 = vset.pattern.permute.xlu0 8
      %5169 = vperm.xlu0 %5168, %v285
      %v5170 = vpop.permute.xlu0 %5169
      %5172 = vset.pattern.permute.xlu0 8
      %5173 = vperm.xlu0 %5172, %v286
      %v5174 = vpop.permute.xlu0 %5173
      %5176 = vset.pattern.permute.xlu0 8
      %5177 = vperm.xlu0 %5176, %v287
      %v5178 = vpop.permute.xlu0 %5177
      %5180 = vset.pattern.permute.xlu0 8
      %5181 = vperm.xlu0 %5180, %v288
      %v5182 = vpop.permute.xlu0 %5181
      %5184 = vset.pattern.permute.xlu0 8
      %5185 = vperm.xlu0 %5184, %v289
      %v5186 = vpop.permute.xlu0 %5185
      %5188 = vset.pattern.permute.xlu0 8
      %5189 = vperm.xlu0 %5188, %v290
      %v5190 = vpop.permute.xlu0 %5189
      %5192 = vset.pattern.permute.xlu0 8
      %5193 = vperm.xlu0 %5192, %v291
      %v5194 = vpop.permute.xlu0 %5193
      %5196 = vset.pattern.permute.xlu0 8
      %5197 = vperm.xlu0 %5196, %v292
      %v5198 = vpop.permute.xlu0 %5197
      %v5200 = vmul.f32 %v3026, %v4946
      %v5201 = vmul.f32 %v3031, %v4950
      %v5202 = vmul.f32 %v3036, %v4954
      %v5203 = vmul.f32 %v3041, %v4958
      %v5204 = vmul.f32 %v3046, %v4962
      %v5205 = vmul.f32 %v3051, %v4966
      %v5206 = vmul.f32 %v3056, %v4970
      %v5207 = vmul.f32 %v3061, %v4974
      %v5208 = vmul.f32 %v3066, %v4978
      %v5209 = vmul.f32 %v3071, %v4982
      %v5210 = vmul.f32 %v3076, %v4986
      %v5211 = vmul.f32 %v3081, %v4990
      %v5212 = vmul.f32 %v3086, %v4994
      %v5213 = vmul.f32 %v3091, %v4998
      %v5214 = vmul.f32 %v3096, %v5002
      %v5215 = vmul.f32 %v3101, %v5006
      %v5216 = vmul.f32 %v3106, %v5010
      %v5217 = vmul.f32 %v3111, %v5014
      %v5218 = vmul.f32 %v3116, %v5018
      %v5219 = vmul.f32 %v3121, %v5022
      %v5220 = vmul.f32 %v3126, %v5026
      %v5221 = vmul.f32 %v3131, %v5030
      %v5222 = vmul.f32 %v3136, %v5034
      %v5223 = vmul.f32 %v3141, %v5038
      %v5224 = vmul.f32 %v3146, %v5042
      %v5225 = vmul.f32 %v3151, %v5046
      %v5226 = vmul.f32 %v3156, %v5050
      %v5227 = vmul.f32 %v3161, %v5054
      %v5228 = vmul.f32 %v3166, %v5058
      %v5229 = vmul.f32 %v3171, %v5062
      %v5230 = vmul.f32 %v3176, %v5066
      %v5231 = vmul.f32 %v3181, %v5070
      %v5232 = vmul.f32 %v3186, %v5074
      %v5233 = vmul.f32 %v3191, %v5078
      %v5234 = vmul.f32 %v3196, %v5082
      %v5235 = vmul.f32 %v3201, %v5086
      %v5236 = vmul.f32 %v3206, %v5090
      %v5237 = vmul.f32 %v3211, %v5094
      %v5238 = vmul.f32 %v3216, %v5098
      %v5239 = vmul.f32 %v3221, %v5102
      %v5240 = vmul.f32 %v3226, %v5106
      %v5241 = vmul.f32 %v3231, %v5110
      %v5242 = vmul.f32 %v3236, %v5114
      %v5243 = vmul.f32 %v3241, %v5118
      %v5244 = vmul.f32 %v3246, %v5122
      %v5245 = vmul.f32 %v3251, %v5126
      %v5246 = vmul.f32 %v3256, %v5130
      %v5247 = vmul.f32 %v3261, %v5134
      %v5248 = vmul.f32 %v3266, %v5138
      %v5249 = vmul.f32 %v3271, %v5142
      %v5250 = vmul.f32 %v3276, %v5146
      %v5251 = vmul.f32 %v3281, %v5150
      %v5252 = vmul.f32 %v3286, %v5154
      %v5253 = vmul.f32 %v3291, %v5158
      %v5254 = vmul.f32 %v3296, %v5162
      %v5255 = vmul.f32 %v3301, %v5166
      %v5256 = vmul.f32 %v3306, %v5170
      %v5257 = vmul.f32 %v3311, %v5174
      %v5258 = vmul.f32 %v3316, %v5178
      %v5259 = vmul.f32 %v3321, %v5182
      %v5260 = vmul.f32 %v3326, %v5186
      %v5261 = vmul.f32 %v3331, %v5190
      %v5262 = vmul.f32 %v3336, %v5194
      %v5263 = vmul.f32 %v3341, %v5198
      %v5264 = vmul.f32 %v3026, 0.57735026
      %v5265 = vmul.f32 %v3031, 0.57735026
      %v5266 = vmul.f32 %v3036, 0.57735026
      %v5267 = vmul.f32 %v3041, 0.57735026
      %v5268 = vmul.f32 %v3046, 0.57735026
      %v5269 = vmul.f32 %v3051, 0.57735026
      %v5270 = vmul.f32 %v3056, 0.57735026
      %v5271 = vmul.f32 %v3061, 0.57735026
      %v5272 = vmul.f32 %v3066, 0.57735026
      %v5273 = vmul.f32 %v3071, 0.57735026
      %v5274 = vmul.f32 %v3076, 0.57735026
      %v5275 = vmul.f32 %v3081, 0.57735026
      %v5276 = vmul.f32 %v3086, 0.57735026
      %v5277 = vmul.f32 %v3091, 0.57735026
      %v5278 = vmul.f32 %v3096, 0.57735026
      %v5279 = vmul.f32 %v3101, 0.57735026
      %v5280 = vmul.f32 %v3106, 0.57735026
      %v5281 = vmul.f32 %v3111, 0.57735026
      %v5282 = vmul.f32 %v3116, 0.57735026
      %v5283 = vmul.f32 %v3121, 0.57735026
      %v5284 = vmul.f32 %v3126, 0.57735026
      %v5285 = vmul.f32 %v3131, 0.57735026
      %v5286 = vmul.f32 %v3136, 0.57735026
      %v5287 = vmul.f32 %v3141, 0.57735026
      %v5288 = vmul.f32 %v3146, 0.57735026
      %v5289 = vmul.f32 %v3151, 0.57735026
      %v5290 = vmul.f32 %v3156, 0.57735026
      %v5291 = vmul.f32 %v3161, 0.57735026
      %v5292 = vmul.f32 %v3166, 0.57735026
      %v5293 = vmul.f32 %v3171, 0.57735026
      %v5294 = vmul.f32 %v3176, 0.57735026
      %v5295 = vmul.f32 %v3181, 0.57735026
      %v5296 = vmul.f32 %v3186, 0.57735026
      %v5297 = vmul.f32 %v3191, 0.57735026
      %v5298 = vmul.f32 %v3196, 0.57735026
      %v5299 = vmul.f32 %v3201, 0.57735026
      %v5300 = vmul.f32 %v3206, 0.57735026
      %v5301 = vmul.f32 %v3211, 0.57735026
      %v5302 = vmul.f32 %v3216, 0.57735026
      %v5303 = vmul.f32 %v3221, 0.57735026
      %v5304 = vmul.f32 %v3226, 0.57735026
      %v5305 = vmul.f32 %v3231, 0.57735026
      %v5306 = vmul.f32 %v3236, 0.57735026
      %v5307 = vmul.f32 %v3241, 0.57735026
      %v5308 = vmul.f32 %v3246, 0.57735026
      %v5309 = vmul.f32 %v3251, 0.57735026
      %v5310 = vmul.f32 %v3256, 0.57735026
      %v5311 = vmul.f32 %v3261, 0.57735026
      %v5312 = vmul.f32 %v3266, 0.57735026
      %v5313 = vmul.f32 %v3271, 0.57735026
      %v5314 = vmul.f32 %v3276, 0.57735026
      %v5315 = vmul.f32 %v3281, 0.57735026
      %v5316 = vmul.f32 %v3286, 0.57735026
      %v5317 = vmul.f32 %v3291, 0.57735026
      %v5318 = vmul.f32 %v3296, 0.57735026
      %v5319 = vmul.f32 %v3301, 0.57735026
      %v5320 = vmul.f32 %v3306, 0.57735026
      %v5321 = vmul.f32 %v3311, 0.57735026
      %v5322 = vmul.f32 %v3316, 0.57735026
      %v5323 = vmul.f32 %v3321, 0.57735026
      %v5324 = vmul.f32 %v3326, 0.57735026
      %v5325 = vmul.f32 %v3331, 0.57735026
      %v5326 = vmul.f32 %v3336, 0.57735026
      %v5327 = vmul.f32 %v3341, 0.57735026
      %v5328 = vmul.f32 %v3026, %v3346
      %v5329 = vmul.f32 %v3031, %v3350
      %v5330 = vmul.f32 %v3036, %v3354
      %v5331 = vmul.f32 %v3041, %v3358
      %v5332 = vmul.f32 %v3046, %v3362
      %v5333 = vmul.f32 %v3051, %v3366
      %v5334 = vmul.f32 %v3056, %v3370
      %v5335 = vmul.f32 %v3061, %v3374
      %v5336 = vmul.f32 %v3066, %v3378
      %v5337 = vmul.f32 %v3071, %v3382
      %v5338 = vmul.f32 %v3076, %v3386
      %v5339 = vmul.f32 %v3081, %v3390
      %v5340 = vmul.f32 %v3086, %v3394
      %v5341 = vmul.f32 %v3091, %v3398
      %v5342 = vmul.f32 %v3096, %v3402
      %v5343 = vmul.f32 %v3101, %v3406
      %v5344 = vmul.f32 %v3106, %v3410
      %v5345 = vmul.f32 %v3111, %v3414
      %v5346 = vmul.f32 %v3116, %v3418
      %v5347 = vmul.f32 %v3121, %v3422
      %v5348 = vmul.f32 %v3126, %v3426
      %v5349 = vmul.f32 %v3131, %v3430
      %v5350 = vmul.f32 %v3136, %v3434
      %v5351 = vmul.f32 %v3141, %v3438
      %v5352 = vmul.f32 %v3146, %v3442
      %v5353 = vmul.f32 %v3151, %v3446
      %v5354 = vmul.f32 %v3156, %v3450
      %v5355 = vmul.f32 %v3161, %v3454
      %v5356 = vmul.f32 %v3166, %v3458
      %v5357 = vmul.f32 %v3171, %v3462
      %v5358 = vmul.f32 %v3176, %v3466
      %v5359 = vmul.f32 %v3181, %v3470
      %v5360 = vmul.f32 %v3186, %v3474
      %v5361 = vmul.f32 %v3191, %v3478
      %v5362 = vmul.f32 %v3196, %v3482
      %v5363 = vmul.f32 %v3201, %v3486
      %v5364 = vmul.f32 %v3206, %v3490
      %v5365 = vmul.f32 %v3211, %v3494
      %v5366 = vmul.f32 %v3216, %v3498
      %v5367 = vmul.f32 %v3221, %v3502
      %v5368 = vmul.f32 %v3226, %v3506
      %v5369 = vmul.f32 %v3231, %v3510
      %v5370 = vmul.f32 %v3236, %v3514
      %v5371 = vmul.f32 %v3241, %v3518
      %v5372 = vmul.f32 %v3246, %v3522
      %v5373 = vmul.f32 %v3251, %v3526
      %v5374 = vmul.f32 %v3256, %v3530
      %v5375 = vmul.f32 %v3261, %v3534
      %v5376 = vmul.f32 %v3266, %v3538
      %v5377 = vmul.f32 %v3271, %v3542
      %v5378 = vmul.f32 %v3276, %v3546
      %v5379 = vmul.f32 %v3281, %v3550
      %v5380 = vmul.f32 %v3286, %v3554
      %v5381 = vmul.f32 %v3291, %v3558
      %v5382 = vmul.f32 %v3296, %v3562
      %v5383 = vmul.f32 %v3301, %v3566
      %v5384 = vmul.f32 %v3306, %v3570
      %v5385 = vmul.f32 %v3311, %v3574
      %v5386 = vmul.f32 %v3316, %v3578
      %v5387 = vmul.f32 %v3321, %v3582
      %v5388 = vmul.f32 %v3326, %v3586
      %v5389 = vmul.f32 %v3331, %v3590
      %v5390 = vmul.f32 %v3336, %v3594
      %v5391 = vmul.f32 %v3341, %v3598
      %v5392 = vmul.f32 %v3026, %v3666
      %v5393 = vmul.f32 %v3031, %v3670
      %v5394 = vmul.f32 %v3036, %v3674
      %v5395 = vmul.f32 %v3041, %v3678
      %v5396 = vmul.f32 %v3046, %v3682
      %v5397 = vmul.f32 %v3051, %v3686
      %v5398 = vmul.f32 %v3056, %v3690
      %v5399 = vmul.f32 %v3061, %v3694
      %v5400 = vmul.f32 %v3066, %v3698
      %v5401 = vmul.f32 %v3071, %v3702
      %v5402 = vmul.f32 %v3076, %v3706
      %v5403 = vmul.f32 %v3081, %v3710
      %v5404 = vmul.f32 %v3086, %v3714
      %v5405 = vmul.f32 %v3091, %v3718
      %v5406 = vmul.f32 %v3096, %v3722
      %v5407 = vmul.f32 %v3101, %v3726
      %v5408 = vmul.f32 %v3106, %v3730
      %v5409 = vmul.f32 %v3111, %v3734
      %v5410 = vmul.f32 %v3116, %v3738
      %v5411 = vmul.f32 %v3121, %v3742
      %v5412 = vmul.f32 %v3126, %v3746
      %v5413 = vmul.f32 %v3131, %v3750
      %v5414 = vmul.f32 %v3136, %v3754
      %v5415 = vmul.f32 %v3141, %v3758
      %v5416 = vmul.f32 %v3146, %v3762
      %v5417 = vmul.f32 %v3151, %v3766
      %v5418 = vmul.f32 %v3156, %v3770
      %v5419 = vmul.f32 %v3161, %v3774
      %v5420 = vmul.f32 %v3166, %v3778
      %v5421 = vmul.f32 %v3171, %v3782
      %v5422 = vmul.f32 %v3176, %v3786
      %v5423 = vmul.f32 %v3181, %v3790
      %v5424 = vmul.f32 %v3186, %v3794
      %v5425 = vmul.f32 %v3191, %v3798
      %v5426 = vmul.f32 %v3196, %v3802
      %v5427 = vmul.f32 %v3201, %v3806
      %v5428 = vmul.f32 %v3206, %v3810
      %v5429 = vmul.f32 %v3211, %v3814
      %v5430 = vmul.f32 %v3216, %v3818
      %v5431 = vmul.f32 %v3221, %v3822
      %v5432 = vmul.f32 %v3226, %v3826
      %v5433 = vmul.f32 %v3231, %v3830
      %v5434 = vmul.f32 %v3236, %v3834
      %v5435 = vmul.f32 %v3241, %v3838
      %v5436 = vmul.f32 %v3246, %v3842
      %v5437 = vmul.f32 %v3251, %v3846
      %v5438 = vmul.f32 %v3256, %v3850
      %v5439 = vmul.f32 %v3261, %v3854
      %v5440 = vmul.f32 %v3266, %v3858
      %v5441 = vmul.f32 %v3271, %v3862
      %v5442 = vmul.f32 %v3276, %v3866
      %v5443 = vmul.f32 %v3281, %v3870
      %v5444 = vmul.f32 %v3286, %v3874
      %v5445 = vmul.f32 %v3291, %v3878
      %v5446 = vmul.f32 %v3296, %v3882
      %v5447 = vmul.f32 %v3301, %v3886
      %v5448 = vmul.f32 %v3306, %v3890
      %v5449 = vmul.f32 %v3311, %v3894
      %v5450 = vmul.f32 %v3316, %v3898
      %v5451 = vmul.f32 %v3321, %v3902
      %v5452 = vmul.f32 %v3326, %v3906
      %v5453 = vmul.f32 %v3331, %v3910
      %v5454 = vmul.f32 %v3336, %v3914
      %v5455 = vmul.f32 %v3341, %v3918
      %v5456 = vmul.f32 %v3026, %v4306
      %v5457 = vmul.f32 %v3031, %v4310
      %v5458 = vmul.f32 %v3036, %v4314
      %v5459 = vmul.f32 %v3041, %v4318
      %v5460 = vmul.f32 %v3046, %v4322
      %v5461 = vmul.f32 %v3051, %v4326
      %v5462 = vmul.f32 %v3056, %v4330
      %v5463 = vmul.f32 %v3061, %v4334
      %v5464 = vmul.f32 %v3066, %v4338
      %v5465 = vmul.f32 %v3071, %v4342
      %v5466 = vmul.f32 %v3076, %v4346
      %v5467 = vmul.f32 %v3081, %v4350
      %v5468 = vmul.f32 %v3086, %v4354
      %v5469 = vmul.f32 %v3091, %v4358
      %v5470 = vmul.f32 %v3096, %v4362
      %v5471 = vmul.f32 %v3101, %v4366
      %v5472 = vmul.f32 %v3106, %v4370
      %v5473 = vmul.f32 %v3111, %v4374
      %v5474 = vmul.f32 %v3116, %v4378
      %v5475 = vmul.f32 %v3121, %v4382
      %v5476 = vmul.f32 %v3126, %v4386
      %v5477 = vmul.f32 %v3131, %v4390
      %v5478 = vmul.f32 %v3136, %v4394
      %v5479 = vmul.f32 %v3141, %v4398
      %v5480 = vmul.f32 %v3146, %v4402
      %v5481 = vmul.f32 %v3151, %v4406
      %v5482 = vmul.f32 %v3156, %v4410
      %v5483 = vmul.f32 %v3161, %v4414
      %v5484 = vmul.f32 %v3166, %v4418
      %v5485 = vmul.f32 %v3171, %v4422
      %v5486 = vmul.f32 %v3176, %v4426
      %v5487 = vmul.f32 %v3181, %v4430
      %v5488 = vmul.f32 %v3186, %v4434
      %v5489 = vmul.f32 %v3191, %v4438
      %v5490 = vmul.f32 %v3196, %v4442
      %v5491 = vmul.f32 %v3201, %v4446
      %v5492 = vmul.f32 %v3206, %v4450
      %v5493 = vmul.f32 %v3211, %v4454
      %v5494 = vmul.f32 %v3216, %v4458
      %v5495 = vmul.f32 %v3221, %v4462
      %v5496 = vmul.f32 %v3226, %v4466
      %v5497 = vmul.f32 %v3231, %v4470
      %v5498 = vmul.f32 %v3236, %v4474
      %v5499 = vmul.f32 %v3241, %v4478
      %v5500 = vmul.f32 %v3246, %v4482
      %v5501 = vmul.f32 %v3251, %v4486
      %v5502 = vmul.f32 %v3256, %v4490
      %v5503 = vmul.f32 %v3261, %v4494
      %v5504 = vmul.f32 %v3266, %v4498
      %v5505 = vmul.f32 %v3271, %v4502
      %v5506 = vmul.f32 %v3276, %v4506
      %v5507 = vmul.f32 %v3281, %v4510
      %v5508 = vmul.f32 %v3286, %v4514
      %v5509 = vmul.f32 %v3291, %v4518
      %v5510 = vmul.f32 %v3296, %v4522
      %v5511 = vmul.f32 %v3301, %v4526
      %v5512 = vmul.f32 %v3306, %v4530
      %v5513 = vmul.f32 %v3311, %v4534
      %v5514 = vmul.f32 %v3316, %v4538
      %v5515 = vmul.f32 %v3321, %v4542
      %v5516 = vmul.f32 %v3326, %v4546
      %v5517 = vmul.f32 %v3331, %v4550
      %v5518 = vmul.f32 %v3336, %v4554
      %v5519 = vmul.f32 %v3341, %v4558
      %5584 = vrot.lane.b32.xlu0 %v5264, 112
      %v5585 = vpop.permute.xlu0 %5584
      %5586 = vrot.lane.b32.xlu0 %v5265, 112
      %v5587 = vpop.permute.xlu0 %5586
      %5588 = vrot.lane.b32.xlu0 %v5266, 112
      %v5589 = vpop.permute.xlu0 %5588
      %5590 = vrot.lane.b32.xlu0 %v5267, 112
      %v5591 = vpop.permute.xlu0 %5590
      %5592 = vrot.lane.b32.xlu0 %v5268, 112
      %v5593 = vpop.permute.xlu0 %5592
      %5594 = vrot.lane.b32.xlu0 %v5269, 112
      %v5595 = vpop.permute.xlu0 %5594
      %5596 = vrot.lane.b32.xlu0 %v5270, 112
      %v5597 = vpop.permute.xlu0 %5596
      %5598 = vrot.lane.b32.xlu0 %v5271, 112
      %v5599 = vpop.permute.xlu0 %5598
      %5600 = vrot.lane.b32.xlu0 %v5272, 112
      %v5601 = vpop.permute.xlu0 %5600
      %5602 = vrot.lane.b32.xlu0 %v5273, 112
      %v5603 = vpop.permute.xlu0 %5602
      %5604 = vrot.lane.b32.xlu0 %v5274, 112
      %v5605 = vpop.permute.xlu0 %5604
      %5606 = vrot.lane.b32.xlu0 %v5275, 112
      %v5607 = vpop.permute.xlu0 %5606
      %5608 = vrot.lane.b32.xlu0 %v5276, 112
      %v5609 = vpop.permute.xlu0 %5608
      %5610 = vrot.lane.b32.xlu0 %v5277, 112
      %v5611 = vpop.permute.xlu0 %5610
      %5612 = vrot.lane.b32.xlu0 %v5278, 112
      %v5613 = vpop.permute.xlu0 %5612
      %5614 = vrot.lane.b32.xlu0 %v5279, 112
      %v5615 = vpop.permute.xlu0 %5614
      %5616 = vrot.lane.b32.xlu0 %v5280, 112
      %v5617 = vpop.permute.xlu0 %5616
      %5618 = vrot.lane.b32.xlu0 %v5281, 112
      %v5619 = vpop.permute.xlu0 %5618
      %5620 = vrot.lane.b32.xlu0 %v5282, 112
      %v5621 = vpop.permute.xlu0 %5620
      %5622 = vrot.lane.b32.xlu0 %v5283, 112
      %v5623 = vpop.permute.xlu0 %5622
      %5624 = vrot.lane.b32.xlu0 %v5284, 112
      %v5625 = vpop.permute.xlu0 %5624
      %5626 = vrot.lane.b32.xlu0 %v5285, 112
      %v5627 = vpop.permute.xlu0 %5626
      %5628 = vrot.lane.b32.xlu0 %v5286, 112
      %v5629 = vpop.permute.xlu0 %5628
      %5630 = vrot.lane.b32.xlu0 %v5287, 112
      %v5631 = vpop.permute.xlu0 %5630
      %5632 = vrot.lane.b32.xlu0 %v5288, 112
      %v5633 = vpop.permute.xlu0 %5632
      %5634 = vrot.lane.b32.xlu0 %v5289, 112
      %v5635 = vpop.permute.xlu0 %5634
      %5636 = vrot.lane.b32.xlu0 %v5290, 112
      %v5637 = vpop.permute.xlu0 %5636
      %5638 = vrot.lane.b32.xlu0 %v5291, 112
      %v5639 = vpop.permute.xlu0 %5638
      %5640 = vrot.lane.b32.xlu0 %v5292, 112
      %v5641 = vpop.permute.xlu0 %5640
      %5642 = vrot.lane.b32.xlu0 %v5293, 112
      %v5643 = vpop.permute.xlu0 %5642
      %5644 = vrot.lane.b32.xlu0 %v5294, 112
      %v5645 = vpop.permute.xlu0 %5644
      %5646 = vrot.lane.b32.xlu0 %v5295, 112
      %v5647 = vpop.permute.xlu0 %5646
      %5648 = vrot.lane.b32.xlu0 %v5296, 112
      %v5649 = vpop.permute.xlu0 %5648
      %5650 = vrot.lane.b32.xlu0 %v5297, 112
      %v5651 = vpop.permute.xlu0 %5650
      %5652 = vrot.lane.b32.xlu0 %v5298, 112
      %v5653 = vpop.permute.xlu0 %5652
      %5654 = vrot.lane.b32.xlu0 %v5299, 112
      %v5655 = vpop.permute.xlu0 %5654
      %5656 = vrot.lane.b32.xlu0 %v5300, 112
      %v5657 = vpop.permute.xlu0 %5656
      %5658 = vrot.lane.b32.xlu0 %v5301, 112
      %v5659 = vpop.permute.xlu0 %5658
      %5660 = vrot.lane.b32.xlu0 %v5302, 112
      %v5661 = vpop.permute.xlu0 %5660
      %5662 = vrot.lane.b32.xlu0 %v5303, 112
      %v5663 = vpop.permute.xlu0 %5662
      %5664 = vrot.lane.b32.xlu0 %v5304, 112
      %v5665 = vpop.permute.xlu0 %5664
      %5666 = vrot.lane.b32.xlu0 %v5305, 112
      %v5667 = vpop.permute.xlu0 %5666
      %5668 = vrot.lane.b32.xlu0 %v5306, 112
      %v5669 = vpop.permute.xlu0 %5668
      %5670 = vrot.lane.b32.xlu0 %v5307, 112
      %v5671 = vpop.permute.xlu0 %5670
      %5672 = vrot.lane.b32.xlu0 %v5308, 112
      %v5673 = vpop.permute.xlu0 %5672
      %5674 = vrot.lane.b32.xlu0 %v5309, 112
      %v5675 = vpop.permute.xlu0 %5674
      %5676 = vrot.lane.b32.xlu0 %v5310, 112
      %v5677 = vpop.permute.xlu0 %5676
      %5678 = vrot.lane.b32.xlu0 %v5311, 112
      %v5679 = vpop.permute.xlu0 %5678
      %5680 = vrot.lane.b32.xlu0 %v5312, 112
      %v5681 = vpop.permute.xlu0 %5680
      %5682 = vrot.lane.b32.xlu0 %v5313, 112
      %v5683 = vpop.permute.xlu0 %5682
      %5684 = vrot.lane.b32.xlu0 %v5314, 112
      %v5685 = vpop.permute.xlu0 %5684
      %5686 = vrot.lane.b32.xlu0 %v5315, 112
      %v5687 = vpop.permute.xlu0 %5686
      %5688 = vrot.lane.b32.xlu0 %v5316, 112
      %v5689 = vpop.permute.xlu0 %5688
      %5690 = vrot.lane.b32.xlu0 %v5317, 112
      %v5691 = vpop.permute.xlu0 %5690
      %5692 = vrot.lane.b32.xlu0 %v5318, 112
      %v5693 = vpop.permute.xlu0 %5692
      %5694 = vrot.lane.b32.xlu0 %v5319, 112
      %v5695 = vpop.permute.xlu0 %5694
      %5696 = vrot.lane.b32.xlu0 %v5320, 112
      %v5697 = vpop.permute.xlu0 %5696
      %5698 = vrot.lane.b32.xlu0 %v5321, 112
      %v5699 = vpop.permute.xlu0 %5698
      %5700 = vrot.lane.b32.xlu0 %v5322, 112
      %v5701 = vpop.permute.xlu0 %5700
      %5702 = vrot.lane.b32.xlu0 %v5323, 112
      %v5703 = vpop.permute.xlu0 %5702
      %5704 = vrot.lane.b32.xlu0 %v5324, 112
      %v5705 = vpop.permute.xlu0 %5704
      %5706 = vrot.lane.b32.xlu0 %v5325, 112
      %v5707 = vpop.permute.xlu0 %5706
      %5708 = vrot.lane.b32.xlu0 %v5326, 112
      %v5709 = vpop.permute.xlu0 %5708
      %5710 = vrot.lane.b32.xlu0 %v5327, 112
      %v5711 = vpop.permute.xlu0 %5710
      %5840 = vrot.lane.b32.xlu0 %v5328, 8
      %v5841 = vpop.permute.xlu0 %5840
      %5842 = vrot.lane.b32.xlu0 %v5329, 8
      %v5843 = vpop.permute.xlu0 %5842
      %5844 = vrot.lane.b32.xlu0 %v5330, 8
      %v5845 = vpop.permute.xlu0 %5844
      %5846 = vrot.lane.b32.xlu0 %v5331, 8
      %v5847 = vpop.permute.xlu0 %5846
      %5848 = vrot.lane.b32.xlu0 %v5332, 8
      %v5849 = vpop.permute.xlu0 %5848
      %5850 = vrot.lane.b32.xlu0 %v5333, 8
      %v5851 = vpop.permute.xlu0 %5850
      %5852 = vrot.lane.b32.xlu0 %v5334, 8
      %v5853 = vpop.permute.xlu0 %5852
      %5854 = vrot.lane.b32.xlu0 %v5335, 8
      %v5855 = vpop.permute.xlu0 %5854
      %5856 = vrot.lane.b32.xlu0 %v5336, 8
      %v5857 = vpop.permute.xlu0 %5856
      %5858 = vrot.lane.b32.xlu0 %v5337, 8
      %v5859 = vpop.permute.xlu0 %5858
      %5860 = vrot.lane.b32.xlu0 %v5338, 8
      %v5861 = vpop.permute.xlu0 %5860
      %5862 = vrot.lane.b32.xlu0 %v5339, 8
      %v5863 = vpop.permute.xlu0 %5862
      %5864 = vrot.lane.b32.xlu0 %v5340, 8
      %v5865 = vpop.permute.xlu0 %5864
      %5866 = vrot.lane.b32.xlu0 %v5341, 8
      %v5867 = vpop.permute.xlu0 %5866
      %5868 = vrot.lane.b32.xlu0 %v5342, 8
      %v5869 = vpop.permute.xlu0 %5868
      %5870 = vrot.lane.b32.xlu0 %v5343, 8
      %v5871 = vpop.permute.xlu0 %5870
      %5872 = vrot.lane.b32.xlu0 %v5344, 8
      %v5873 = vpop.permute.xlu0 %5872
      %5874 = vrot.lane.b32.xlu0 %v5345, 8
      %v5875 = vpop.permute.xlu0 %5874
      %5876 = vrot.lane.b32.xlu0 %v5346, 8
      %v5877 = vpop.permute.xlu0 %5876
      %5878 = vrot.lane.b32.xlu0 %v5347, 8
      %v5879 = vpop.permute.xlu0 %5878
      %5880 = vrot.lane.b32.xlu0 %v5348, 8
      %v5881 = vpop.permute.xlu0 %5880
      %5882 = vrot.lane.b32.xlu0 %v5349, 8
      %v5883 = vpop.permute.xlu0 %5882
      %5884 = vrot.lane.b32.xlu0 %v5350, 8
      %v5885 = vpop.permute.xlu0 %5884
      %5886 = vrot.lane.b32.xlu0 %v5351, 8
      %v5887 = vpop.permute.xlu0 %5886
      %5888 = vrot.lane.b32.xlu0 %v5352, 8
      %v5889 = vpop.permute.xlu0 %5888
      %5890 = vrot.lane.b32.xlu0 %v5353, 8
      %v5891 = vpop.permute.xlu0 %5890
      %5892 = vrot.lane.b32.xlu0 %v5354, 8
      %v5893 = vpop.permute.xlu0 %5892
      %5894 = vrot.lane.b32.xlu0 %v5355, 8
      %v5895 = vpop.permute.xlu0 %5894
      %5896 = vrot.lane.b32.xlu0 %v5356, 8
      %v5897 = vpop.permute.xlu0 %5896
      %5898 = vrot.lane.b32.xlu0 %v5357, 8
      %v5899 = vpop.permute.xlu0 %5898
      %5900 = vrot.lane.b32.xlu0 %v5358, 8
      %v5901 = vpop.permute.xlu0 %5900
      %5902 = vrot.lane.b32.xlu0 %v5359, 8
      %v5903 = vpop.permute.xlu0 %5902
      %5904 = vrot.lane.b32.xlu0 %v5360, 8
      %v5905 = vpop.permute.xlu0 %5904
      %5906 = vrot.lane.b32.xlu0 %v5361, 8
      %v5907 = vpop.permute.xlu0 %5906
      %5908 = vrot.lane.b32.xlu0 %v5362, 8
      %v5909 = vpop.permute.xlu0 %5908
      %5910 = vrot.lane.b32.xlu0 %v5363, 8
      %v5911 = vpop.permute.xlu0 %5910
      %5912 = vrot.lane.b32.xlu0 %v5364, 8
      %v5913 = vpop.permute.xlu0 %5912
      %5914 = vrot.lane.b32.xlu0 %v5365, 8
      %v5915 = vpop.permute.xlu0 %5914
      %5916 = vrot.lane.b32.xlu0 %v5366, 8
      %v5917 = vpop.permute.xlu0 %5916
      %5918 = vrot.lane.b32.xlu0 %v5367, 8
      %v5919 = vpop.permute.xlu0 %5918
      %5920 = vrot.lane.b32.xlu0 %v5368, 8
      %v5921 = vpop.permute.xlu0 %5920
      %5922 = vrot.lane.b32.xlu0 %v5369, 8
      %v5923 = vpop.permute.xlu0 %5922
      %5924 = vrot.lane.b32.xlu0 %v5370, 8
      %v5925 = vpop.permute.xlu0 %5924
      %5926 = vrot.lane.b32.xlu0 %v5371, 8
      %v5927 = vpop.permute.xlu0 %5926
      %5928 = vrot.lane.b32.xlu0 %v5372, 8
      %v5929 = vpop.permute.xlu0 %5928
      %5930 = vrot.lane.b32.xlu0 %v5373, 8
      %v5931 = vpop.permute.xlu0 %5930
      %5932 = vrot.lane.b32.xlu0 %v5374, 8
      %v5933 = vpop.permute.xlu0 %5932
      %5934 = vrot.lane.b32.xlu0 %v5375, 8
      %v5935 = vpop.permute.xlu0 %5934
      %5936 = vrot.lane.b32.xlu0 %v5376, 8
      %v5937 = vpop.permute.xlu0 %5936
      %5938 = vrot.lane.b32.xlu0 %v5377, 8
      %v5939 = vpop.permute.xlu0 %5938
      %5940 = vrot.lane.b32.xlu0 %v5378, 8
      %v5941 = vpop.permute.xlu0 %5940
      %5942 = vrot.lane.b32.xlu0 %v5379, 8
      %v5943 = vpop.permute.xlu0 %5942
      %5944 = vrot.lane.b32.xlu0 %v5380, 8
      %v5945 = vpop.permute.xlu0 %5944
      %5946 = vrot.lane.b32.xlu0 %v5381, 8
      %v5947 = vpop.permute.xlu0 %5946
      %5948 = vrot.lane.b32.xlu0 %v5382, 8
      %v5949 = vpop.permute.xlu0 %5948
      %5950 = vrot.lane.b32.xlu0 %v5383, 8
      %v5951 = vpop.permute.xlu0 %5950
      %5952 = vrot.lane.b32.xlu0 %v5384, 8
      %v5953 = vpop.permute.xlu0 %5952
      %5954 = vrot.lane.b32.xlu0 %v5385, 8
      %v5955 = vpop.permute.xlu0 %5954
      %5956 = vrot.lane.b32.xlu0 %v5386, 8
      %v5957 = vpop.permute.xlu0 %5956
      %5958 = vrot.lane.b32.xlu0 %v5387, 8
      %v5959 = vpop.permute.xlu0 %5958
      %5960 = vrot.lane.b32.xlu0 %v5388, 8
      %v5961 = vpop.permute.xlu0 %5960
      %5962 = vrot.lane.b32.xlu0 %v5389, 8
      %v5963 = vpop.permute.xlu0 %5962
      %5964 = vrot.lane.b32.xlu0 %v5390, 8
      %v5965 = vpop.permute.xlu0 %5964
      %5966 = vrot.lane.b32.xlu0 %v5391, 8
      %v5967 = vpop.permute.xlu0 %5966
      %6096 = vrot.lane.b32.xlu0 %v5200, 8
      %v6097 = vpop.permute.xlu0 %6096
      %6098 = vrot.lane.b32.xlu0 %v5201, 8
      %v6099 = vpop.permute.xlu0 %6098
      %6100 = vrot.lane.b32.xlu0 %v5202, 8
      %v6101 = vpop.permute.xlu0 %6100
      %6102 = vrot.lane.b32.xlu0 %v5203, 8
      %v6103 = vpop.permute.xlu0 %6102
      %6104 = vrot.lane.b32.xlu0 %v5204, 8
      %v6105 = vpop.permute.xlu0 %6104
      %6106 = vrot.lane.b32.xlu0 %v5205, 8
      %v6107 = vpop.permute.xlu0 %6106
      %6108 = vrot.lane.b32.xlu0 %v5206, 8
      %v6109 = vpop.permute.xlu0 %6108
      %6110 = vrot.lane.b32.xlu0 %v5207, 8
      %v6111 = vpop.permute.xlu0 %6110
      %6112 = vrot.lane.b32.xlu0 %v5208, 8
      %v6113 = vpop.permute.xlu0 %6112
      %6114 = vrot.lane.b32.xlu0 %v5209, 8
      %v6115 = vpop.permute.xlu0 %6114
      %6116 = vrot.lane.b32.xlu0 %v5210, 8
      %v6117 = vpop.permute.xlu0 %6116
      %6118 = vrot.lane.b32.xlu0 %v5211, 8
      %v6119 = vpop.permute.xlu0 %6118
      %6120 = vrot.lane.b32.xlu0 %v5212, 8
      %v6121 = vpop.permute.xlu0 %6120
      %6122 = vrot.lane.b32.xlu0 %v5213, 8
      %v6123 = vpop.permute.xlu0 %6122
      %6124 = vrot.lane.b32.xlu0 %v5214, 8
      %v6125 = vpop.permute.xlu0 %6124
      %6126 = vrot.lane.b32.xlu0 %v5215, 8
      %v6127 = vpop.permute.xlu0 %6126
      %6128 = vrot.lane.b32.xlu0 %v5216, 8
      %v6129 = vpop.permute.xlu0 %6128
      %6130 = vrot.lane.b32.xlu0 %v5217, 8
      %v6131 = vpop.permute.xlu0 %6130
      %6132 = vrot.lane.b32.xlu0 %v5218, 8
      %v6133 = vpop.permute.xlu0 %6132
      %6134 = vrot.lane.b32.xlu0 %v5219, 8
      %v6135 = vpop.permute.xlu0 %6134
      %6136 = vrot.lane.b32.xlu0 %v5220, 8
      %v6137 = vpop.permute.xlu0 %6136
      %6138 = vrot.lane.b32.xlu0 %v5221, 8
      %v6139 = vpop.permute.xlu0 %6138
      %6140 = vrot.lane.b32.xlu0 %v5222, 8
      %v6141 = vpop.permute.xlu0 %6140
      %6142 = vrot.lane.b32.xlu0 %v5223, 8
      %v6143 = vpop.permute.xlu0 %6142
      %6144 = vrot.lane.b32.xlu0 %v5224, 8
      %v6145 = vpop.permute.xlu0 %6144
      %6146 = vrot.lane.b32.xlu0 %v5225, 8
      %v6147 = vpop.permute.xlu0 %6146
      %6148 = vrot.lane.b32.xlu0 %v5226, 8
      %v6149 = vpop.permute.xlu0 %6148
      %6150 = vrot.lane.b32.xlu0 %v5227, 8
      %v6151 = vpop.permute.xlu0 %6150
      %6152 = vrot.lane.b32.xlu0 %v5228, 8
      %v6153 = vpop.permute.xlu0 %6152
      %6154 = vrot.lane.b32.xlu0 %v5229, 8
      %v6155 = vpop.permute.xlu0 %6154
      %6156 = vrot.lane.b32.xlu0 %v5230, 8
      %v6157 = vpop.permute.xlu0 %6156
      %6158 = vrot.lane.b32.xlu0 %v5231, 8
      %v6159 = vpop.permute.xlu0 %6158
      %6160 = vrot.lane.b32.xlu0 %v5232, 8
      %v6161 = vpop.permute.xlu0 %6160
      %6162 = vrot.lane.b32.xlu0 %v5233, 8
      %v6163 = vpop.permute.xlu0 %6162
      %6164 = vrot.lane.b32.xlu0 %v5234, 8
      %v6165 = vpop.permute.xlu0 %6164
      %6166 = vrot.lane.b32.xlu0 %v5235, 8
      %v6167 = vpop.permute.xlu0 %6166
      %6168 = vrot.lane.b32.xlu0 %v5236, 8
      %v6169 = vpop.permute.xlu0 %6168
      %6170 = vrot.lane.b32.xlu0 %v5237, 8
      %v6171 = vpop.permute.xlu0 %6170
      %6172 = vrot.lane.b32.xlu0 %v5238, 8
      %v6173 = vpop.permute.xlu0 %6172
      %6174 = vrot.lane.b32.xlu0 %v5239, 8
      %v6175 = vpop.permute.xlu0 %6174
      %6176 = vrot.lane.b32.xlu0 %v5240, 8
      %v6177 = vpop.permute.xlu0 %6176
      %6178 = vrot.lane.b32.xlu0 %v5241, 8
      %v6179 = vpop.permute.xlu0 %6178
      %6180 = vrot.lane.b32.xlu0 %v5242, 8
      %v6181 = vpop.permute.xlu0 %6180
      %6182 = vrot.lane.b32.xlu0 %v5243, 8
      %v6183 = vpop.permute.xlu0 %6182
      %6184 = vrot.lane.b32.xlu0 %v5244, 8
      %v6185 = vpop.permute.xlu0 %6184
      %6186 = vrot.lane.b32.xlu0 %v5245, 8
      %v6187 = vpop.permute.xlu0 %6186
      %6188 = vrot.lane.b32.xlu0 %v5246, 8
      %v6189 = vpop.permute.xlu0 %6188
      %6190 = vrot.lane.b32.xlu0 %v5247, 8
      %v6191 = vpop.permute.xlu0 %6190
      %6192 = vrot.lane.b32.xlu0 %v5248, 8
      %v6193 = vpop.permute.xlu0 %6192
      %6194 = vrot.lane.b32.xlu0 %v5249, 8
      %v6195 = vpop.permute.xlu0 %6194
      %6196 = vrot.lane.b32.xlu0 %v5250, 8
      %v6197 = vpop.permute.xlu0 %6196
      %6198 = vrot.lane.b32.xlu0 %v5251, 8
      %v6199 = vpop.permute.xlu0 %6198
      %6200 = vrot.lane.b32.xlu0 %v5252, 8
      %v6201 = vpop.permute.xlu0 %6200
      %6202 = vrot.lane.b32.xlu0 %v5253, 8
      %v6203 = vpop.permute.xlu0 %6202
      %6204 = vrot.lane.b32.xlu0 %v5254, 8
      %v6205 = vpop.permute.xlu0 %6204
      %6206 = vrot.lane.b32.xlu0 %v5255, 8
      %v6207 = vpop.permute.xlu0 %6206
      %6208 = vrot.lane.b32.xlu0 %v5256, 8
      %v6209 = vpop.permute.xlu0 %6208
      %6210 = vrot.lane.b32.xlu0 %v5257, 8
      %v6211 = vpop.permute.xlu0 %6210
      %6212 = vrot.lane.b32.xlu0 %v5258, 8
      %v6213 = vpop.permute.xlu0 %6212
      %6214 = vrot.lane.b32.xlu0 %v5259, 8
      %v6215 = vpop.permute.xlu0 %6214
      %6216 = vrot.lane.b32.xlu0 %v5260, 8
      %v6217 = vpop.permute.xlu0 %6216
      %6218 = vrot.lane.b32.xlu0 %v5261, 8
      %v6219 = vpop.permute.xlu0 %6218
      %6220 = vrot.lane.b32.xlu0 %v5262, 8
      %v6221 = vpop.permute.xlu0 %6220
      %6222 = vrot.lane.b32.xlu0 %v5263, 8
      %v6223 = vpop.permute.xlu0 %6222
      %6352 = vrot.lane.b32.xlu0 %v5392, 24
      %v6353 = vpop.permute.xlu0 %6352
      %6354 = vrot.lane.b32.xlu0 %v5393, 24
      %v6355 = vpop.permute.xlu0 %6354
      %6356 = vrot.lane.b32.xlu0 %v5394, 24
      %v6357 = vpop.permute.xlu0 %6356
      %6358 = vrot.lane.b32.xlu0 %v5395, 24
      %v6359 = vpop.permute.xlu0 %6358
      %6360 = vrot.lane.b32.xlu0 %v5396, 24
      %v6361 = vpop.permute.xlu0 %6360
      %6362 = vrot.lane.b32.xlu0 %v5397, 24
      %v6363 = vpop.permute.xlu0 %6362
      %6364 = vrot.lane.b32.xlu0 %v5398, 24
      %v6365 = vpop.permute.xlu0 %6364
      %6366 = vrot.lane.b32.xlu0 %v5399, 24
      %v6367 = vpop.permute.xlu0 %6366
      %6368 = vrot.lane.b32.xlu0 %v5400, 24
      %v6369 = vpop.permute.xlu0 %6368
      %6370 = vrot.lane.b32.xlu0 %v5401, 24
      %v6371 = vpop.permute.xlu0 %6370
      %6372 = vrot.lane.b32.xlu0 %v5402, 24
      %v6373 = vpop.permute.xlu0 %6372
      %6374 = vrot.lane.b32.xlu0 %v5403, 24
      %v6375 = vpop.permute.xlu0 %6374
      %6376 = vrot.lane.b32.xlu0 %v5404, 24
      %v6377 = vpop.permute.xlu0 %6376
      %6378 = vrot.lane.b32.xlu0 %v5405, 24
      %v6379 = vpop.permute.xlu0 %6378
      %6380 = vrot.lane.b32.xlu0 %v5406, 24
      %v6381 = vpop.permute.xlu0 %6380
      %6382 = vrot.lane.b32.xlu0 %v5407, 24
      %v6383 = vpop.permute.xlu0 %6382
      %6384 = vrot.lane.b32.xlu0 %v5408, 24
      %v6385 = vpop.permute.xlu0 %6384
      %6386 = vrot.lane.b32.xlu0 %v5409, 24
      %v6387 = vpop.permute.xlu0 %6386
      %6388 = vrot.lane.b32.xlu0 %v5410, 24
      %v6389 = vpop.permute.xlu0 %6388
      %6390 = vrot.lane.b32.xlu0 %v5411, 24
      %v6391 = vpop.permute.xlu0 %6390
      %6392 = vrot.lane.b32.xlu0 %v5412, 24
      %v6393 = vpop.permute.xlu0 %6392
      %6394 = vrot.lane.b32.xlu0 %v5413, 24
      %v6395 = vpop.permute.xlu0 %6394
      %6396 = vrot.lane.b32.xlu0 %v5414, 24
      %v6397 = vpop.permute.xlu0 %6396
      %6398 = vrot.lane.b32.xlu0 %v5415, 24
      %v6399 = vpop.permute.xlu0 %6398
      %6400 = vrot.lane.b32.xlu0 %v5416, 24
      %v6401 = vpop.permute.xlu0 %6400
      %6402 = vrot.lane.b32.xlu0 %v5417, 24
      %v6403 = vpop.permute.xlu0 %6402
      %6404 = vrot.lane.b32.xlu0 %v5418, 24
      %v6405 = vpop.permute.xlu0 %6404
      %6406 = vrot.lane.b32.xlu0 %v5419, 24
      %v6407 = vpop.permute.xlu0 %6406
      %6408 = vrot.lane.b32.xlu0 %v5420, 24
      %v6409 = vpop.permute.xlu0 %6408
      %6410 = vrot.lane.b32.xlu0 %v5421, 24
      %v6411 = vpop.permute.xlu0 %6410
      %6412 = vrot.lane.b32.xlu0 %v5422, 24
      %v6413 = vpop.permute.xlu0 %6412
      %6414 = vrot.lane.b32.xlu0 %v5423, 24
      %v6415 = vpop.permute.xlu0 %6414
      %6416 = vrot.lane.b32.xlu0 %v5424, 24
      %v6417 = vpop.permute.xlu0 %6416
      %6418 = vrot.lane.b32.xlu0 %v5425, 24
      %v6419 = vpop.permute.xlu0 %6418
      %6420 = vrot.lane.b32.xlu0 %v5426, 24
      %v6421 = vpop.permute.xlu0 %6420
      %6422 = vrot.lane.b32.xlu0 %v5427, 24
      %v6423 = vpop.permute.xlu0 %6422
      %6424 = vrot.lane.b32.xlu0 %v5428, 24
      %v6425 = vpop.permute.xlu0 %6424
      %6426 = vrot.lane.b32.xlu0 %v5429, 24
      %v6427 = vpop.permute.xlu0 %6426
      %6428 = vrot.lane.b32.xlu0 %v5430, 24
      %v6429 = vpop.permute.xlu0 %6428
      %6430 = vrot.lane.b32.xlu0 %v5431, 24
      %v6431 = vpop.permute.xlu0 %6430
      %6432 = vrot.lane.b32.xlu0 %v5432, 24
      %v6433 = vpop.permute.xlu0 %6432
      %6434 = vrot.lane.b32.xlu0 %v5433, 24
      %v6435 = vpop.permute.xlu0 %6434
      %6436 = vrot.lane.b32.xlu0 %v5434, 24
      %v6437 = vpop.permute.xlu0 %6436
      %6438 = vrot.lane.b32.xlu0 %v5435, 24
      %v6439 = vpop.permute.xlu0 %6438
      %6440 = vrot.lane.b32.xlu0 %v5436, 24
      %v6441 = vpop.permute.xlu0 %6440
      %6442 = vrot.lane.b32.xlu0 %v5437, 24
      %v6443 = vpop.permute.xlu0 %6442
      %6444 = vrot.lane.b32.xlu0 %v5438, 24
      %v6445 = vpop.permute.xlu0 %6444
      %6446 = vrot.lane.b32.xlu0 %v5439, 24
      %v6447 = vpop.permute.xlu0 %6446
      %6448 = vrot.lane.b32.xlu0 %v5440, 24
      %v6449 = vpop.permute.xlu0 %6448
      %6450 = vrot.lane.b32.xlu0 %v5441, 24
      %v6451 = vpop.permute.xlu0 %6450
      %6452 = vrot.lane.b32.xlu0 %v5442, 24
      %v6453 = vpop.permute.xlu0 %6452
      %6454 = vrot.lane.b32.xlu0 %v5443, 24
      %v6455 = vpop.permute.xlu0 %6454
      %6456 = vrot.lane.b32.xlu0 %v5444, 24
      %v6457 = vpop.permute.xlu0 %6456
      %6458 = vrot.lane.b32.xlu0 %v5445, 24
      %v6459 = vpop.permute.xlu0 %6458
      %6460 = vrot.lane.b32.xlu0 %v5446, 24
      %v6461 = vpop.permute.xlu0 %6460
      %6462 = vrot.lane.b32.xlu0 %v5447, 24
      %v6463 = vpop.permute.xlu0 %6462
      %6464 = vrot.lane.b32.xlu0 %v5448, 24
      %v6465 = vpop.permute.xlu0 %6464
      %6466 = vrot.lane.b32.xlu0 %v5449, 24
      %v6467 = vpop.permute.xlu0 %6466
      %6468 = vrot.lane.b32.xlu0 %v5450, 24
      %v6469 = vpop.permute.xlu0 %6468
      %6470 = vrot.lane.b32.xlu0 %v5451, 24
      %v6471 = vpop.permute.xlu0 %6470
      %6472 = vrot.lane.b32.xlu0 %v5452, 24
      %v6473 = vpop.permute.xlu0 %6472
      %6474 = vrot.lane.b32.xlu0 %v5453, 24
      %v6475 = vpop.permute.xlu0 %6474
      %6476 = vrot.lane.b32.xlu0 %v5454, 24
      %v6477 = vpop.permute.xlu0 %6476
      %6478 = vrot.lane.b32.xlu0 %v5455, 24
      %v6479 = vpop.permute.xlu0 %6478
      %6544 = vrot.lane.b32.xlu0 %v5200, 24
      %v6545 = vpop.permute.xlu0 %6544
      %6546 = vrot.lane.b32.xlu0 %v5201, 24
      %v6547 = vpop.permute.xlu0 %6546
      %6548 = vrot.lane.b32.xlu0 %v5202, 24
      %v6549 = vpop.permute.xlu0 %6548
      %6550 = vrot.lane.b32.xlu0 %v5203, 24
      %v6551 = vpop.permute.xlu0 %6550
      %6552 = vrot.lane.b32.xlu0 %v5204, 24
      %v6553 = vpop.permute.xlu0 %6552
      %6554 = vrot.lane.b32.xlu0 %v5205, 24
      %v6555 = vpop.permute.xlu0 %6554
      %6556 = vrot.lane.b32.xlu0 %v5206, 24
      %v6557 = vpop.permute.xlu0 %6556
      %6558 = vrot.lane.b32.xlu0 %v5207, 24
      %v6559 = vpop.permute.xlu0 %6558
      %6560 = vrot.lane.b32.xlu0 %v5208, 24
      %v6561 = vpop.permute.xlu0 %6560
      %6562 = vrot.lane.b32.xlu0 %v5209, 24
      %v6563 = vpop.permute.xlu0 %6562
      %6564 = vrot.lane.b32.xlu0 %v5210, 24
      %v6565 = vpop.permute.xlu0 %6564
      %6566 = vrot.lane.b32.xlu0 %v5211, 24
      %v6567 = vpop.permute.xlu0 %6566
      %6568 = vrot.lane.b32.xlu0 %v5212, 24
      %v6569 = vpop.permute.xlu0 %6568
      %6570 = vrot.lane.b32.xlu0 %v5213, 24
      %v6571 = vpop.permute.xlu0 %6570
      %6572 = vrot.lane.b32.xlu0 %v5214, 24
      %v6573 = vpop.permute.xlu0 %6572
      %6574 = vrot.lane.b32.xlu0 %v5215, 24
      %v6575 = vpop.permute.xlu0 %6574
      %6576 = vrot.lane.b32.xlu0 %v5216, 24
      %v6577 = vpop.permute.xlu0 %6576
      %6578 = vrot.lane.b32.xlu0 %v5217, 24
      %v6579 = vpop.permute.xlu0 %6578
      %6580 = vrot.lane.b32.xlu0 %v5218, 24
      %v6581 = vpop.permute.xlu0 %6580
      %6582 = vrot.lane.b32.xlu0 %v5219, 24
      %v6583 = vpop.permute.xlu0 %6582
      %6584 = vrot.lane.b32.xlu0 %v5220, 24
      %v6585 = vpop.permute.xlu0 %6584
      %6586 = vrot.lane.b32.xlu0 %v5221, 24
      %v6587 = vpop.permute.xlu0 %6586
      %6588 = vrot.lane.b32.xlu0 %v5222, 24
      %v6589 = vpop.permute.xlu0 %6588
      %6590 = vrot.lane.b32.xlu0 %v5223, 24
      %v6591 = vpop.permute.xlu0 %6590
      %6592 = vrot.lane.b32.xlu0 %v5224, 24
      %v6593 = vpop.permute.xlu0 %6592
      %6594 = vrot.lane.b32.xlu0 %v5225, 24
      %v6595 = vpop.permute.xlu0 %6594
      %6596 = vrot.lane.b32.xlu0 %v5226, 24
      %v6597 = vpop.permute.xlu0 %6596
      %6598 = vrot.lane.b32.xlu0 %v5227, 24
      %v6599 = vpop.permute.xlu0 %6598
      %6600 = vrot.lane.b32.xlu0 %v5228, 24
      %v6601 = vpop.permute.xlu0 %6600
      %6602 = vrot.lane.b32.xlu0 %v5229, 24
      %v6603 = vpop.permute.xlu0 %6602
      %6604 = vrot.lane.b32.xlu0 %v5230, 24
      %v6605 = vpop.permute.xlu0 %6604
      %6606 = vrot.lane.b32.xlu0 %v5231, 24
      %v6607 = vpop.permute.xlu0 %6606
      %6608 = vrot.lane.b32.xlu0 %v5232, 24
      %v6609 = vpop.permute.xlu0 %6608
      %6610 = vrot.lane.b32.xlu0 %v5233, 24
      %v6611 = vpop.permute.xlu0 %6610
      %6612 = vrot.lane.b32.xlu0 %v5234, 24
      %v6613 = vpop.permute.xlu0 %6612
      %6614 = vrot.lane.b32.xlu0 %v5235, 24
      %v6615 = vpop.permute.xlu0 %6614
      %6616 = vrot.lane.b32.xlu0 %v5236, 24
      %v6617 = vpop.permute.xlu0 %6616
      %6618 = vrot.lane.b32.xlu0 %v5237, 24
      %v6619 = vpop.permute.xlu0 %6618
      %6620 = vrot.lane.b32.xlu0 %v5238, 24
      %v6621 = vpop.permute.xlu0 %6620
      %6622 = vrot.lane.b32.xlu0 %v5239, 24
      %v6623 = vpop.permute.xlu0 %6622
      %6624 = vrot.lane.b32.xlu0 %v5240, 24
      %v6625 = vpop.permute.xlu0 %6624
      %6626 = vrot.lane.b32.xlu0 %v5241, 24
      %v6627 = vpop.permute.xlu0 %6626
      %6628 = vrot.lane.b32.xlu0 %v5242, 24
      %v6629 = vpop.permute.xlu0 %6628
      %6630 = vrot.lane.b32.xlu0 %v5243, 24
      %v6631 = vpop.permute.xlu0 %6630
      %6632 = vrot.lane.b32.xlu0 %v5244, 24
      %v6633 = vpop.permute.xlu0 %6632
      %6634 = vrot.lane.b32.xlu0 %v5245, 24
      %v6635 = vpop.permute.xlu0 %6634
      %6636 = vrot.lane.b32.xlu0 %v5246, 24
      %v6637 = vpop.permute.xlu0 %6636
      %6638 = vrot.lane.b32.xlu0 %v5247, 24
      %v6639 = vpop.permute.xlu0 %6638
      %6640 = vrot.lane.b32.xlu0 %v5248, 24
      %v6641 = vpop.permute.xlu0 %6640
      %6642 = vrot.lane.b32.xlu0 %v5249, 24
      %v6643 = vpop.permute.xlu0 %6642
      %6644 = vrot.lane.b32.xlu0 %v5250, 24
      %v6645 = vpop.permute.xlu0 %6644
      %6646 = vrot.lane.b32.xlu0 %v5251, 24
      %v6647 = vpop.permute.xlu0 %6646
      %6648 = vrot.lane.b32.xlu0 %v5252, 24
      %v6649 = vpop.permute.xlu0 %6648
      %6650 = vrot.lane.b32.xlu0 %v5253, 24
      %v6651 = vpop.permute.xlu0 %6650
      %6652 = vrot.lane.b32.xlu0 %v5254, 24
      %v6653 = vpop.permute.xlu0 %6652
      %6654 = vrot.lane.b32.xlu0 %v5255, 24
      %v6655 = vpop.permute.xlu0 %6654
      %6656 = vrot.lane.b32.xlu0 %v5256, 24
      %v6657 = vpop.permute.xlu0 %6656
      %6658 = vrot.lane.b32.xlu0 %v5257, 24
      %v6659 = vpop.permute.xlu0 %6658
      %6660 = vrot.lane.b32.xlu0 %v5258, 24
      %v6661 = vpop.permute.xlu0 %6660
      %6662 = vrot.lane.b32.xlu0 %v5259, 24
      %v6663 = vpop.permute.xlu0 %6662
      %6664 = vrot.lane.b32.xlu0 %v5260, 24
      %v6665 = vpop.permute.xlu0 %6664
      %6666 = vrot.lane.b32.xlu0 %v5261, 24
      %v6667 = vpop.permute.xlu0 %6666
      %6668 = vrot.lane.b32.xlu0 %v5262, 24
      %v6669 = vpop.permute.xlu0 %6668
      %6670 = vrot.lane.b32.xlu0 %v5263, 24
      %v6671 = vpop.permute.xlu0 %6670
      %6800 = vrot.lane.b32.xlu0 %v5456, 40
      %v6801 = vpop.permute.xlu0 %6800
      %6802 = vrot.lane.b32.xlu0 %v5457, 40
      %v6803 = vpop.permute.xlu0 %6802
      %6804 = vrot.lane.b32.xlu0 %v5458, 40
      %v6805 = vpop.permute.xlu0 %6804
      %6806 = vrot.lane.b32.xlu0 %v5459, 40
      %v6807 = vpop.permute.xlu0 %6806
      %6808 = vrot.lane.b32.xlu0 %v5460, 40
      %v6809 = vpop.permute.xlu0 %6808
      %6810 = vrot.lane.b32.xlu0 %v5461, 40
      %v6811 = vpop.permute.xlu0 %6810
      %6812 = vrot.lane.b32.xlu0 %v5462, 40
      %v6813 = vpop.permute.xlu0 %6812
      %6814 = vrot.lane.b32.xlu0 %v5463, 40
      %v6815 = vpop.permute.xlu0 %6814
      %6816 = vrot.lane.b32.xlu0 %v5464, 40
      %v6817 = vpop.permute.xlu0 %6816
      %6818 = vrot.lane.b32.xlu0 %v5465, 40
      %v6819 = vpop.permute.xlu0 %6818
      %6820 = vrot.lane.b32.xlu0 %v5466, 40
      %v6821 = vpop.permute.xlu0 %6820
      %6822 = vrot.lane.b32.xlu0 %v5467, 40
      %v6823 = vpop.permute.xlu0 %6822
      %6824 = vrot.lane.b32.xlu0 %v5468, 40
      %v6825 = vpop.permute.xlu0 %6824
      %6826 = vrot.lane.b32.xlu0 %v5469, 40
      %v6827 = vpop.permute.xlu0 %6826
      %6828 = vrot.lane.b32.xlu0 %v5470, 40
      %v6829 = vpop.permute.xlu0 %6828
      %6830 = vrot.lane.b32.xlu0 %v5471, 40
      %v6831 = vpop.permute.xlu0 %6830
      %6832 = vrot.lane.b32.xlu0 %v5472, 40
      %v6833 = vpop.permute.xlu0 %6832
      %6834 = vrot.lane.b32.xlu0 %v5473, 40
      %v6835 = vpop.permute.xlu0 %6834
      %6836 = vrot.lane.b32.xlu0 %v5474, 40
      %v6837 = vpop.permute.xlu0 %6836
      %6838 = vrot.lane.b32.xlu0 %v5475, 40
      %v6839 = vpop.permute.xlu0 %6838
      %6840 = vrot.lane.b32.xlu0 %v5476, 40
      %v6841 = vpop.permute.xlu0 %6840
      %6842 = vrot.lane.b32.xlu0 %v5477, 40
      %v6843 = vpop.permute.xlu0 %6842
      %6844 = vrot.lane.b32.xlu0 %v5478, 40
      %v6845 = vpop.permute.xlu0 %6844
      %6846 = vrot.lane.b32.xlu0 %v5479, 40
      %v6847 = vpop.permute.xlu0 %6846
      %6848 = vrot.lane.b32.xlu0 %v5480, 40
      %v6849 = vpop.permute.xlu0 %6848
      %6850 = vrot.lane.b32.xlu0 %v5481, 40
      %v6851 = vpop.permute.xlu0 %6850
      %6852 = vrot.lane.b32.xlu0 %v5482, 40
      %v6853 = vpop.permute.xlu0 %6852
      %6854 = vrot.lane.b32.xlu0 %v5483, 40
      %v6855 = vpop.permute.xlu0 %6854
      %6856 = vrot.lane.b32.xlu0 %v5484, 40
      %v6857 = vpop.permute.xlu0 %6856
      %6858 = vrot.lane.b32.xlu0 %v5485, 40
      %v6859 = vpop.permute.xlu0 %6858
      %6860 = vrot.lane.b32.xlu0 %v5486, 40
      %v6861 = vpop.permute.xlu0 %6860
      %6862 = vrot.lane.b32.xlu0 %v5487, 40
      %v6863 = vpop.permute.xlu0 %6862
      %6864 = vrot.lane.b32.xlu0 %v5488, 40
      %v6865 = vpop.permute.xlu0 %6864
      %6866 = vrot.lane.b32.xlu0 %v5489, 40
      %v6867 = vpop.permute.xlu0 %6866
      %6868 = vrot.lane.b32.xlu0 %v5490, 40
      %v6869 = vpop.permute.xlu0 %6868
      %6870 = vrot.lane.b32.xlu0 %v5491, 40
      %v6871 = vpop.permute.xlu0 %6870
      %6872 = vrot.lane.b32.xlu0 %v5492, 40
      %v6873 = vpop.permute.xlu0 %6872
      %6874 = vrot.lane.b32.xlu0 %v5493, 40
      %v6875 = vpop.permute.xlu0 %6874
      %6876 = vrot.lane.b32.xlu0 %v5494, 40
      %v6877 = vpop.permute.xlu0 %6876
      %6878 = vrot.lane.b32.xlu0 %v5495, 40
      %v6879 = vpop.permute.xlu0 %6878
      %6880 = vrot.lane.b32.xlu0 %v5496, 40
      %v6881 = vpop.permute.xlu0 %6880
      %6882 = vrot.lane.b32.xlu0 %v5497, 40
      %v6883 = vpop.permute.xlu0 %6882
      %6884 = vrot.lane.b32.xlu0 %v5498, 40
      %v6885 = vpop.permute.xlu0 %6884
      %6886 = vrot.lane.b32.xlu0 %v5499, 40
      %v6887 = vpop.permute.xlu0 %6886
      %6888 = vrot.lane.b32.xlu0 %v5500, 40
      %v6889 = vpop.permute.xlu0 %6888
      %6890 = vrot.lane.b32.xlu0 %v5501, 40
      %v6891 = vpop.permute.xlu0 %6890
      %6892 = vrot.lane.b32.xlu0 %v5502, 40
      %v6893 = vpop.permute.xlu0 %6892
      %6894 = vrot.lane.b32.xlu0 %v5503, 40
      %v6895 = vpop.permute.xlu0 %6894
      %6896 = vrot.lane.b32.xlu0 %v5504, 40
      %v6897 = vpop.permute.xlu0 %6896
      %6898 = vrot.lane.b32.xlu0 %v5505, 40
      %v6899 = vpop.permute.xlu0 %6898
      %6900 = vrot.lane.b32.xlu0 %v5506, 40
      %v6901 = vpop.permute.xlu0 %6900
      %6902 = vrot.lane.b32.xlu0 %v5507, 40
      %v6903 = vpop.permute.xlu0 %6902
      %6904 = vrot.lane.b32.xlu0 %v5508, 40
      %v6905 = vpop.permute.xlu0 %6904
      %6906 = vrot.lane.b32.xlu0 %v5509, 40
      %v6907 = vpop.permute.xlu0 %6906
      %6908 = vrot.lane.b32.xlu0 %v5510, 40
      %v6909 = vpop.permute.xlu0 %6908
      %6910 = vrot.lane.b32.xlu0 %v5511, 40
      %v6911 = vpop.permute.xlu0 %6910
      %6912 = vrot.lane.b32.xlu0 %v5512, 40
      %v6913 = vpop.permute.xlu0 %6912
      %6914 = vrot.lane.b32.xlu0 %v5513, 40
      %v6915 = vpop.permute.xlu0 %6914
      %6916 = vrot.lane.b32.xlu0 %v5514, 40
      %v6917 = vpop.permute.xlu0 %6916
      %6918 = vrot.lane.b32.xlu0 %v5515, 40
      %v6919 = vpop.permute.xlu0 %6918
      %6920 = vrot.lane.b32.xlu0 %v5516, 40
      %v6921 = vpop.permute.xlu0 %6920
      %6922 = vrot.lane.b32.xlu0 %v5517, 40
      %v6923 = vpop.permute.xlu0 %6922
      %6924 = vrot.lane.b32.xlu0 %v5518, 40
      %v6925 = vpop.permute.xlu0 %6924
      %6926 = vrot.lane.b32.xlu0 %v5519, 40
      %v6927 = vpop.permute.xlu0 %6926
      %6992 = vrot.lane.b32.xlu0 %v5200, 40
      %v6993 = vpop.permute.xlu0 %6992
      %6994 = vrot.lane.b32.xlu0 %v5201, 40
      %v6995 = vpop.permute.xlu0 %6994
      %6996 = vrot.lane.b32.xlu0 %v5202, 40
      %v6997 = vpop.permute.xlu0 %6996
      %6998 = vrot.lane.b32.xlu0 %v5203, 40
      %v6999 = vpop.permute.xlu0 %6998
      %7000 = vrot.lane.b32.xlu0 %v5204, 40
      %v7001 = vpop.permute.xlu0 %7000
      %7002 = vrot.lane.b32.xlu0 %v5205, 40
      %v7003 = vpop.permute.xlu0 %7002
      %7004 = vrot.lane.b32.xlu0 %v5206, 40
      %v7005 = vpop.permute.xlu0 %7004
      %7006 = vrot.lane.b32.xlu0 %v5207, 40
      %v7007 = vpop.permute.xlu0 %7006
      %7008 = vrot.lane.b32.xlu0 %v5208, 40
      %v7009 = vpop.permute.xlu0 %7008
      %7010 = vrot.lane.b32.xlu0 %v5209, 40
      %v7011 = vpop.permute.xlu0 %7010
      %7012 = vrot.lane.b32.xlu0 %v5210, 40
      %v7013 = vpop.permute.xlu0 %7012
      %7014 = vrot.lane.b32.xlu0 %v5211, 40
      %v7015 = vpop.permute.xlu0 %7014
      %7016 = vrot.lane.b32.xlu0 %v5212, 40
      %v7017 = vpop.permute.xlu0 %7016
      %7018 = vrot.lane.b32.xlu0 %v5213, 40
      %v7019 = vpop.permute.xlu0 %7018
      %7020 = vrot.lane.b32.xlu0 %v5214, 40
      %v7021 = vpop.permute.xlu0 %7020
      %7022 = vrot.lane.b32.xlu0 %v5215, 40
      %v7023 = vpop.permute.xlu0 %7022
      %7024 = vrot.lane.b32.xlu0 %v5216, 40
      %v7025 = vpop.permute.xlu0 %7024
      %7026 = vrot.lane.b32.xlu0 %v5217, 40
      %v7027 = vpop.permute.xlu0 %7026
      %7028 = vrot.lane.b32.xlu0 %v5218, 40
      %v7029 = vpop.permute.xlu0 %7028
      %7030 = vrot.lane.b32.xlu0 %v5219, 40
      %v7031 = vpop.permute.xlu0 %7030
      %7032 = vrot.lane.b32.xlu0 %v5220, 40
      %v7033 = vpop.permute.xlu0 %7032
      %7034 = vrot.lane.b32.xlu0 %v5221, 40
      %v7035 = vpop.permute.xlu0 %7034
      %7036 = vrot.lane.b32.xlu0 %v5222, 40
      %v7037 = vpop.permute.xlu0 %7036
      %7038 = vrot.lane.b32.xlu0 %v5223, 40
      %v7039 = vpop.permute.xlu0 %7038
      %7040 = vrot.lane.b32.xlu0 %v5224, 40
      %v7041 = vpop.permute.xlu0 %7040
      %7042 = vrot.lane.b32.xlu0 %v5225, 40
      %v7043 = vpop.permute.xlu0 %7042
      %7044 = vrot.lane.b32.xlu0 %v5226, 40
      %v7045 = vpop.permute.xlu0 %7044
      %7046 = vrot.lane.b32.xlu0 %v5227, 40
      %v7047 = vpop.permute.xlu0 %7046
      %7048 = vrot.lane.b32.xlu0 %v5228, 40
      %v7049 = vpop.permute.xlu0 %7048
      %7050 = vrot.lane.b32.xlu0 %v5229, 40
      %v7051 = vpop.permute.xlu0 %7050
      %7052 = vrot.lane.b32.xlu0 %v5230, 40
      %v7053 = vpop.permute.xlu0 %7052
      %7054 = vrot.lane.b32.xlu0 %v5231, 40
      %v7055 = vpop.permute.xlu0 %7054
      %7056 = vrot.lane.b32.xlu0 %v5232, 40
      %v7057 = vpop.permute.xlu0 %7056
      %7058 = vrot.lane.b32.xlu0 %v5233, 40
      %v7059 = vpop.permute.xlu0 %7058
      %7060 = vrot.lane.b32.xlu0 %v5234, 40
      %v7061 = vpop.permute.xlu0 %7060
      %7062 = vrot.lane.b32.xlu0 %v5235, 40
      %v7063 = vpop.permute.xlu0 %7062
      %7064 = vrot.lane.b32.xlu0 %v5236, 40
      %v7065 = vpop.permute.xlu0 %7064
      %7066 = vrot.lane.b32.xlu0 %v5237, 40
      %v7067 = vpop.permute.xlu0 %7066
      %7068 = vrot.lane.b32.xlu0 %v5238, 40
      %v7069 = vpop.permute.xlu0 %7068
      %7070 = vrot.lane.b32.xlu0 %v5239, 40
      %v7071 = vpop.permute.xlu0 %7070
      %7072 = vrot.lane.b32.xlu0 %v5240, 40
      %v7073 = vpop.permute.xlu0 %7072
      %7074 = vrot.lane.b32.xlu0 %v5241, 40
      %v7075 = vpop.permute.xlu0 %7074
      %7076 = vrot.lane.b32.xlu0 %v5242, 40
      %v7077 = vpop.permute.xlu0 %7076
      %7078 = vrot.lane.b32.xlu0 %v5243, 40
      %v7079 = vpop.permute.xlu0 %7078
      %7080 = vrot.lane.b32.xlu0 %v5244, 40
      %v7081 = vpop.permute.xlu0 %7080
      %7082 = vrot.lane.b32.xlu0 %v5245, 40
      %v7083 = vpop.permute.xlu0 %7082
      %7084 = vrot.lane.b32.xlu0 %v5246, 40
      %v7085 = vpop.permute.xlu0 %7084
      %7086 = vrot.lane.b32.xlu0 %v5247, 40
      %v7087 = vpop.permute.xlu0 %7086
      %7088 = vrot.lane.b32.xlu0 %v5248, 40
      %v7089 = vpop.permute.xlu0 %7088
      %7090 = vrot.lane.b32.xlu0 %v5249, 40
      %v7091 = vpop.permute.xlu0 %7090
      %7092 = vrot.lane.b32.xlu0 %v5250, 40
      %v7093 = vpop.permute.xlu0 %7092
      %7094 = vrot.lane.b32.xlu0 %v5251, 40
      %v7095 = vpop.permute.xlu0 %7094
      %7096 = vrot.lane.b32.xlu0 %v5252, 40
      %v7097 = vpop.permute.xlu0 %7096
      %7098 = vrot.lane.b32.xlu0 %v5253, 40
      %v7099 = vpop.permute.xlu0 %7098
      %7100 = vrot.lane.b32.xlu0 %v5254, 40
      %v7101 = vpop.permute.xlu0 %7100
      %7102 = vrot.lane.b32.xlu0 %v5255, 40
      %v7103 = vpop.permute.xlu0 %7102
      %7104 = vrot.lane.b32.xlu0 %v5256, 40
      %v7105 = vpop.permute.xlu0 %7104
      %7106 = vrot.lane.b32.xlu0 %v5257, 40
      %v7107 = vpop.permute.xlu0 %7106
      %7108 = vrot.lane.b32.xlu0 %v5258, 40
      %v7109 = vpop.permute.xlu0 %7108
      %7110 = vrot.lane.b32.xlu0 %v5259, 40
      %v7111 = vpop.permute.xlu0 %7110
      %7112 = vrot.lane.b32.xlu0 %v5260, 40
      %v7113 = vpop.permute.xlu0 %7112
      %7114 = vrot.lane.b32.xlu0 %v5261, 40
      %v7115 = vpop.permute.xlu0 %7114
      %7116 = vrot.lane.b32.xlu0 %v5262, 40
      %v7117 = vpop.permute.xlu0 %7116
      %7118 = vrot.lane.b32.xlu0 %v5263, 40
      %v7119 = vpop.permute.xlu0 %7118
      %v7184 = vsel %vm1738, %v5200, %v5585
      %v7185 = vsel %vm1738, %v5201, %v5587
      %v7186 = vsel %vm1738, %v5202, %v5589
      %v7187 = vsel %vm1738, %v5203, %v5591
      %v7188 = vsel %vm1738, %v5204, %v5593
      %v7189 = vsel %vm1738, %v5205, %v5595
      %v7190 = vsel %vm1738, %v5206, %v5597
      %v7191 = vsel %vm1738, %v5207, %v5599
      %v7192 = vsel %vm1738, %v5208, %v5601
      %v7193 = vsel %vm1738, %v5209, %v5603
      %v7194 = vsel %vm1738, %v5210, %v5605
      %v7195 = vsel %vm1738, %v5211, %v5607
      %v7196 = vsel %vm1738, %v5212, %v5609
      %v7197 = vsel %vm1738, %v5213, %v5611
      %v7198 = vsel %vm1738, %v5214, %v5613
      %v7199 = vsel %vm1738, %v5215, %v5615
      %v7200 = vsel %vm1738, %v5216, %v5617
      %v7201 = vsel %vm1738, %v5217, %v5619
      %v7202 = vsel %vm1738, %v5218, %v5621
      %v7203 = vsel %vm1738, %v5219, %v5623
      %v7204 = vsel %vm1738, %v5220, %v5625
      %v7205 = vsel %vm1738, %v5221, %v5627
      %v7206 = vsel %vm1738, %v5222, %v5629
      %v7207 = vsel %vm1738, %v5223, %v5631
      %v7208 = vsel %vm1738, %v5224, %v5633
      %v7209 = vsel %vm1738, %v5225, %v5635
      %v7210 = vsel %vm1738, %v5226, %v5637
      %v7211 = vsel %vm1738, %v5227, %v5639
      %v7212 = vsel %vm1738, %v5228, %v5641
      %v7213 = vsel %vm1738, %v5229, %v5643
      %v7214 = vsel %vm1738, %v5230, %v5645
      %v7215 = vsel %vm1738, %v5231, %v5647
      %v7216 = vsel %vm1738, %v5232, %v5649
      %v7217 = vsel %vm1738, %v5233, %v5651
      %v7218 = vsel %vm1738, %v5234, %v5653
      %v7219 = vsel %vm1738, %v5235, %v5655
      %v7220 = vsel %vm1738, %v5236, %v5657
      %v7221 = vsel %vm1738, %v5237, %v5659
      %v7222 = vsel %vm1738, %v5238, %v5661
      %v7223 = vsel %vm1738, %v5239, %v5663
      %v7224 = vsel %vm1738, %v5240, %v5665
      %v7225 = vsel %vm1738, %v5241, %v5667
      %v7226 = vsel %vm1738, %v5242, %v5669
      %v7227 = vsel %vm1738, %v5243, %v5671
      %v7228 = vsel %vm1738, %v5244, %v5673
      %v7229 = vsel %vm1738, %v5245, %v5675
      %v7230 = vsel %vm1738, %v5246, %v5677
      %v7231 = vsel %vm1738, %v5247, %v5679
      %v7232 = vsel %vm1738, %v5248, %v5681
      %v7233 = vsel %vm1738, %v5249, %v5683
      %v7234 = vsel %vm1738, %v5250, %v5685
      %v7235 = vsel %vm1738, %v5251, %v5687
      %v7236 = vsel %vm1738, %v5252, %v5689
      %v7237 = vsel %vm1738, %v5253, %v5691
      %v7238 = vsel %vm1738, %v5254, %v5693
      %v7239 = vsel %vm1738, %v5255, %v5695
      %v7240 = vsel %vm1738, %v5256, %v5697
      %v7241 = vsel %vm1738, %v5257, %v5699
      %v7242 = vsel %vm1738, %v5258, %v5701
      %v7243 = vsel %vm1738, %v5259, %v5703
      %v7244 = vsel %vm1738, %v5260, %v5705
      %v7245 = vsel %vm1738, %v5261, %v5707
      %v7246 = vsel %vm1738, %v5262, %v5709
      %v7247 = vsel %vm1738, %v5263, %v5711
      %v7248 = vsel %vm2766, %v7184, %v5841
      %v7249 = vsel %vm2766, %v7185, %v5843
      %v7250 = vsel %vm2766, %v7186, %v5845
      %v7251 = vsel %vm2766, %v7187, %v5847
      %v7252 = vsel %vm2766, %v7188, %v5849
      %v7253 = vsel %vm2766, %v7189, %v5851
      %v7254 = vsel %vm2766, %v7190, %v5853
      %v7255 = vsel %vm2766, %v7191, %v5855
      %v7256 = vsel %vm2766, %v7192, %v5857
      %v7257 = vsel %vm2766, %v7193, %v5859
      %v7258 = vsel %vm2766, %v7194, %v5861
      %v7259 = vsel %vm2766, %v7195, %v5863
      %v7260 = vsel %vm2766, %v7196, %v5865
      %v7261 = vsel %vm2766, %v7197, %v5867
      %v7262 = vsel %vm2766, %v7198, %v5869
      %v7263 = vsel %vm2766, %v7199, %v5871
      %v7264 = vsel %vm2766, %v7200, %v5873
      %v7265 = vsel %vm2766, %v7201, %v5875
      %v7266 = vsel %vm2766, %v7202, %v5877
      %v7267 = vsel %vm2766, %v7203, %v5879
      %v7268 = vsel %vm2766, %v7204, %v5881
      %v7269 = vsel %vm2766, %v7205, %v5883
      %v7270 = vsel %vm2766, %v7206, %v5885
      %v7271 = vsel %vm2766, %v7207, %v5887
      %v7272 = vsel %vm2766, %v7208, %v5889
      %v7273 = vsel %vm2766, %v7209, %v5891
      %v7274 = vsel %vm2766, %v7210, %v5893
      %v7275 = vsel %vm2766, %v7211, %v5895
      %v7276 = vsel %vm2766, %v7212, %v5897
      %v7277 = vsel %vm2766, %v7213, %v5899
      %v7278 = vsel %vm2766, %v7214, %v5901
      %v7279 = vsel %vm2766, %v7215, %v5903
      %v7280 = vsel %vm2766, %v7216, %v5905
      %v7281 = vsel %vm2766, %v7217, %v5907
      %v7282 = vsel %vm2766, %v7218, %v5909
      %v7283 = vsel %vm2766, %v7219, %v5911
      %v7284 = vsel %vm2766, %v7220, %v5913
      %v7285 = vsel %vm2766, %v7221, %v5915
      %v7286 = vsel %vm2766, %v7222, %v5917
      %v7287 = vsel %vm2766, %v7223, %v5919
      %v7288 = vsel %vm2766, %v7224, %v5921
      %v7289 = vsel %vm2766, %v7225, %v5923
      %v7290 = vsel %vm2766, %v7226, %v5925
      %v7291 = vsel %vm2766, %v7227, %v5927
      %v7292 = vsel %vm2766, %v7228, %v5929
      %v7293 = vsel %vm2766, %v7229, %v5931
      %v7294 = vsel %vm2766, %v7230, %v5933
      %v7295 = vsel %vm2766, %v7231, %v5935
      %v7296 = vsel %vm2766, %v7232, %v5937
      %v7297 = vsel %vm2766, %v7233, %v5939
      %v7298 = vsel %vm2766, %v7234, %v5941
      %v7299 = vsel %vm2766, %v7235, %v5943
      %v7300 = vsel %vm2766, %v7236, %v5945
      %v7301 = vsel %vm2766, %v7237, %v5947
      %v7302 = vsel %vm2766, %v7238, %v5949
      %v7303 = vsel %vm2766, %v7239, %v5951
      %v7304 = vsel %vm2766, %v7240, %v5953
      %v7305 = vsel %vm2766, %v7241, %v5955
      %v7306 = vsel %vm2766, %v7242, %v5957
      %v7307 = vsel %vm2766, %v7243, %v5959
      %v7308 = vsel %vm2766, %v7244, %v5961
      %v7309 = vsel %vm2766, %v7245, %v5963
      %v7310 = vsel %vm2766, %v7246, %v5965
      %v7311 = vsel %vm2766, %v7247, %v5967
      %vm7312 = vcmask 195584
      %v7313 = vsel %vm7312, %v7248, %v6097
      %v7314 = vsel %vm7312, %v7249, %v6099
      %v7315 = vsel %vm7312, %v7250, %v6101
      %v7316 = vsel %vm7312, %v7251, %v6103
      %v7317 = vsel %vm7312, %v7252, %v6105
      %v7318 = vsel %vm7312, %v7253, %v6107
      %v7319 = vsel %vm7312, %v7254, %v6109
      %v7320 = vsel %vm7312, %v7255, %v6111
      %v7321 = vsel %vm7312, %v7256, %v6113
      %v7322 = vsel %vm7312, %v7257, %v6115
      %v7323 = vsel %vm7312, %v7258, %v6117
      %v7324 = vsel %vm7312, %v7259, %v6119
      %v7325 = vsel %vm7312, %v7260, %v6121
      %v7326 = vsel %vm7312, %v7261, %v6123
      %v7327 = vsel %vm7312, %v7262, %v6125
      %v7328 = vsel %vm7312, %v7263, %v6127
      %v7329 = vsel %vm7312, %v7264, %v6129
      %v7330 = vsel %vm7312, %v7265, %v6131
      %v7331 = vsel %vm7312, %v7266, %v6133
      %v7332 = vsel %vm7312, %v7267, %v6135
      %v7333 = vsel %vm7312, %v7268, %v6137
      %v7334 = vsel %vm7312, %v7269, %v6139
      %v7335 = vsel %vm7312, %v7270, %v6141
      %v7336 = vsel %vm7312, %v7271, %v6143
      %v7337 = vsel %vm7312, %v7272, %v6145
      %v7338 = vsel %vm7312, %v7273, %v6147
      %v7339 = vsel %vm7312, %v7274, %v6149
      %v7340 = vsel %vm7312, %v7275, %v6151
      %v7341 = vsel %vm7312, %v7276, %v6153
      %v7342 = vsel %vm7312, %v7277, %v6155
      %v7343 = vsel %vm7312, %v7278, %v6157
      %v7344 = vsel %vm7312, %v7279, %v6159
      %v7345 = vsel %vm7312, %v7280, %v6161
      %v7346 = vsel %vm7312, %v7281, %v6163
      %v7347 = vsel %vm7312, %v7282, %v6165
      %v7348 = vsel %vm7312, %v7283, %v6167
      %v7349 = vsel %vm7312, %v7284, %v6169
      %v7350 = vsel %vm7312, %v7285, %v6171
      %v7351 = vsel %vm7312, %v7286, %v6173
      %v7352 = vsel %vm7312, %v7287, %v6175
      %v7353 = vsel %vm7312, %v7288, %v6177
      %v7354 = vsel %vm7312, %v7289, %v6179
      %v7355 = vsel %vm7312, %v7290, %v6181
      %v7356 = vsel %vm7312, %v7291, %v6183
      %v7357 = vsel %vm7312, %v7292, %v6185
      %v7358 = vsel %vm7312, %v7293, %v6187
      %v7359 = vsel %vm7312, %v7294, %v6189
      %v7360 = vsel %vm7312, %v7295, %v6191
      %v7361 = vsel %vm7312, %v7296, %v6193
      %v7362 = vsel %vm7312, %v7297, %v6195
      %v7363 = vsel %vm7312, %v7298, %v6197
      %v7364 = vsel %vm7312, %v7299, %v6199
      %v7365 = vsel %vm7312, %v7300, %v6201
      %v7366 = vsel %vm7312, %v7301, %v6203
      %v7367 = vsel %vm7312, %v7302, %v6205
      %v7368 = vsel %vm7312, %v7303, %v6207
      %v7369 = vsel %vm7312, %v7304, %v6209
      %v7370 = vsel %vm7312, %v7305, %v6211
      %v7371 = vsel %vm7312, %v7306, %v6213
      %v7372 = vsel %vm7312, %v7307, %v6215
      %v7373 = vsel %vm7312, %v7308, %v6217
      %v7374 = vsel %vm7312, %v7309, %v6219
      %v7375 = vsel %vm7312, %v7310, %v6221
      %v7376 = vsel %vm7312, %v7311, %v6223
      %vm7377 = vcmask 261120
      %v7378 = vsel %vm7377, %v7313, %v6353
      %v7379 = vsel %vm7377, %v7314, %v6355
      %v7380 = vsel %vm7377, %v7315, %v6357
      %v7381 = vsel %vm7377, %v7316, %v6359
      %v7382 = vsel %vm7377, %v7317, %v6361
      %v7383 = vsel %vm7377, %v7318, %v6363
      %v7384 = vsel %vm7377, %v7319, %v6365
      %v7385 = vsel %vm7377, %v7320, %v6367
      %v7386 = vsel %vm7377, %v7321, %v6369
      %v7387 = vsel %vm7377, %v7322, %v6371
      %v7388 = vsel %vm7377, %v7323, %v6373
      %v7389 = vsel %vm7377, %v7324, %v6375
      %v7390 = vsel %vm7377, %v7325, %v6377
      %v7391 = vsel %vm7377, %v7326, %v6379
      %v7392 = vsel %vm7377, %v7327, %v6381
      %v7393 = vsel %vm7377, %v7328, %v6383
      %v7394 = vsel %vm7377, %v7329, %v6385
      %v7395 = vsel %vm7377, %v7330, %v6387
      %v7396 = vsel %vm7377, %v7331, %v6389
      %v7397 = vsel %vm7377, %v7332, %v6391
      %v7398 = vsel %vm7377, %v7333, %v6393
      %v7399 = vsel %vm7377, %v7334, %v6395
      %v7400 = vsel %vm7377, %v7335, %v6397
      %v7401 = vsel %vm7377, %v7336, %v6399
      %v7402 = vsel %vm7377, %v7337, %v6401
      %v7403 = vsel %vm7377, %v7338, %v6403
      %v7404 = vsel %vm7377, %v7339, %v6405
      %v7405 = vsel %vm7377, %v7340, %v6407
      %v7406 = vsel %vm7377, %v7341, %v6409
      %v7407 = vsel %vm7377, %v7342, %v6411
      %v7408 = vsel %vm7377, %v7343, %v6413
      %v7409 = vsel %vm7377, %v7344, %v6415
      %v7410 = vsel %vm7377, %v7345, %v6417
      %v7411 = vsel %vm7377, %v7346, %v6419
      %v7412 = vsel %vm7377, %v7347, %v6421
      %v7413 = vsel %vm7377, %v7348, %v6423
      %v7414 = vsel %vm7377, %v7349, %v6425
      %v7415 = vsel %vm7377, %v7350, %v6427
      %v7416 = vsel %vm7377, %v7351, %v6429
      %v7417 = vsel %vm7377, %v7352, %v6431
      %v7418 = vsel %vm7377, %v7353, %v6433
      %v7419 = vsel %vm7377, %v7354, %v6435
      %v7420 = vsel %vm7377, %v7355, %v6437
      %v7421 = vsel %vm7377, %v7356, %v6439
      %v7422 = vsel %vm7377, %v7357, %v6441
      %v7423 = vsel %vm7377, %v7358, %v6443
      %v7424 = vsel %vm7377, %v7359, %v6445
      %v7425 = vsel %vm7377, %v7360, %v6447
      %v7426 = vsel %vm7377, %v7361, %v6449
      %v7427 = vsel %vm7377, %v7362, %v6451
      %v7428 = vsel %vm7377, %v7363, %v6453
      %v7429 = vsel %vm7377, %v7364, %v6455
      %v7430 = vsel %vm7377, %v7365, %v6457
      %v7431 = vsel %vm7377, %v7366, %v6459
      %v7432 = vsel %vm7377, %v7367, %v6461
      %v7433 = vsel %vm7377, %v7368, %v6463
      %v7434 = vsel %vm7377, %v7369, %v6465
      %v7435 = vsel %vm7377, %v7370, %v6467
      %v7436 = vsel %vm7377, %v7371, %v6469
      %v7437 = vsel %vm7377, %v7372, %v6471
      %v7438 = vsel %vm7377, %v7373, %v6473
      %v7439 = vsel %vm7377, %v7374, %v6475
      %v7440 = vsel %vm7377, %v7375, %v6477
      %v7441 = vsel %vm7377, %v7376, %v6479
      %vm7442 = vcmask 326656
      %v7443 = vsel %vm7442, %v7378, %v6545
      %v7444 = vsel %vm7442, %v7379, %v6547
      %v7445 = vsel %vm7442, %v7380, %v6549
      %v7446 = vsel %vm7442, %v7381, %v6551
      %v7447 = vsel %vm7442, %v7382, %v6553
      %v7448 = vsel %vm7442, %v7383, %v6555
      %v7449 = vsel %vm7442, %v7384, %v6557
      %v7450 = vsel %vm7442, %v7385, %v6559
      %v7451 = vsel %vm7442, %v7386, %v6561
      %v7452 = vsel %vm7442, %v7387, %v6563
      %v7453 = vsel %vm7442, %v7388, %v6565
      %v7454 = vsel %vm7442, %v7389, %v6567
      %v7455 = vsel %vm7442, %v7390, %v6569
      %v7456 = vsel %vm7442, %v7391, %v6571
      %v7457 = vsel %vm7442, %v7392, %v6573
      %v7458 = vsel %vm7442, %v7393, %v6575
      %v7459 = vsel %vm7442, %v7394, %v6577
      %v7460 = vsel %vm7442, %v7395, %v6579
      %v7461 = vsel %vm7442, %v7396, %v6581
      %v7462 = vsel %vm7442, %v7397, %v6583
      %v7463 = vsel %vm7442, %v7398, %v6585
      %v7464 = vsel %vm7442, %v7399, %v6587
      %v7465 = vsel %vm7442, %v7400, %v6589
      %v7466 = vsel %vm7442, %v7401, %v6591
      %v7467 = vsel %vm7442, %v7402, %v6593
      %v7468 = vsel %vm7442, %v7403, %v6595
      %v7469 = vsel %vm7442, %v7404, %v6597
      %v7470 = vsel %vm7442, %v7405, %v6599
      %v7471 = vsel %vm7442, %v7406, %v6601
      %v7472 = vsel %vm7442, %v7407, %v6603
      %v7473 = vsel %vm7442, %v7408, %v6605
      %v7474 = vsel %vm7442, %v7409, %v6607
      %v7475 = vsel %vm7442, %v7410, %v6609
      %v7476 = vsel %vm7442, %v7411, %v6611
      %v7477 = vsel %vm7442, %v7412, %v6613
      %v7478 = vsel %vm7442, %v7413, %v6615
      %v7479 = vsel %vm7442, %v7414, %v6617
      %v7480 = vsel %vm7442, %v7415, %v6619
      %v7481 = vsel %vm7442, %v7416, %v6621
      %v7482 = vsel %vm7442, %v7417, %v6623
      %v7483 = vsel %vm7442, %v7418, %v6625
      %v7484 = vsel %vm7442, %v7419, %v6627
      %v7485 = vsel %vm7442, %v7420, %v6629
      %v7486 = vsel %vm7442, %v7421, %v6631
      %v7487 = vsel %vm7442, %v7422, %v6633
      %v7488 = vsel %vm7442, %v7423, %v6635
      %v7489 = vsel %vm7442, %v7424, %v6637
      %v7490 = vsel %vm7442, %v7425, %v6639
      %v7491 = vsel %vm7442, %v7426, %v6641
      %v7492 = vsel %vm7442, %v7427, %v6643
      %v7493 = vsel %vm7442, %v7428, %v6645
      %v7494 = vsel %vm7442, %v7429, %v6647
      %v7495 = vsel %vm7442, %v7430, %v6649
      %v7496 = vsel %vm7442, %v7431, %v6651
      %v7497 = vsel %vm7442, %v7432, %v6653
      %v7498 = vsel %vm7442, %v7433, %v6655
      %v7499 = vsel %vm7442, %v7434, %v6657
      %v7500 = vsel %vm7442, %v7435, %v6659
      %v7501 = vsel %vm7442, %v7436, %v6661
      %v7502 = vsel %vm7442, %v7437, %v6663
      %v7503 = vsel %vm7442, %v7438, %v6665
      %v7504 = vsel %vm7442, %v7439, %v6667
      %v7505 = vsel %vm7442, %v7440, %v6669
      %v7506 = vsel %vm7442, %v7441, %v6671
      %vm7507 = vcmask 392192
      %v7508 = vsel %vm7507, %v7443, %v6801
      %v7509 = vsel %vm7507, %v7444, %v6803
      %v7510 = vsel %vm7507, %v7445, %v6805
      %v7511 = vsel %vm7507, %v7446, %v6807
      %v7512 = vsel %vm7507, %v7447, %v6809
      %v7513 = vsel %vm7507, %v7448, %v6811
      %v7514 = vsel %vm7507, %v7449, %v6813
      %v7515 = vsel %vm7507, %v7450, %v6815
      %v7516 = vsel %vm7507, %v7451, %v6817
      %v7517 = vsel %vm7507, %v7452, %v6819
      %v7518 = vsel %vm7507, %v7453, %v6821
      %v7519 = vsel %vm7507, %v7454, %v6823
      %v7520 = vsel %vm7507, %v7455, %v6825
      %v7521 = vsel %vm7507, %v7456, %v6827
      %v7522 = vsel %vm7507, %v7457, %v6829
      %v7523 = vsel %vm7507, %v7458, %v6831
      %v7524 = vsel %vm7507, %v7459, %v6833
      %v7525 = vsel %vm7507, %v7460, %v6835
      %v7526 = vsel %vm7507, %v7461, %v6837
      %v7527 = vsel %vm7507, %v7462, %v6839
      %v7528 = vsel %vm7507, %v7463, %v6841
      %v7529 = vsel %vm7507, %v7464, %v6843
      %v7530 = vsel %vm7507, %v7465, %v6845
      %v7531 = vsel %vm7507, %v7466, %v6847
      %v7532 = vsel %vm7507, %v7467, %v6849
      %v7533 = vsel %vm7507, %v7468, %v6851
      %v7534 = vsel %vm7507, %v7469, %v6853
      %v7535 = vsel %vm7507, %v7470, %v6855
      %v7536 = vsel %vm7507, %v7471, %v6857
      %v7537 = vsel %vm7507, %v7472, %v6859
      %v7538 = vsel %vm7507, %v7473, %v6861
      %v7539 = vsel %vm7507, %v7474, %v6863
      %v7540 = vsel %vm7507, %v7475, %v6865
      %v7541 = vsel %vm7507, %v7476, %v6867
      %v7542 = vsel %vm7507, %v7477, %v6869
      %v7543 = vsel %vm7507, %v7478, %v6871
      %v7544 = vsel %vm7507, %v7479, %v6873
      %v7545 = vsel %vm7507, %v7480, %v6875
      %v7546 = vsel %vm7507, %v7481, %v6877
      %v7547 = vsel %vm7507, %v7482, %v6879
      %v7548 = vsel %vm7507, %v7483, %v6881
      %v7549 = vsel %vm7507, %v7484, %v6883
      %v7550 = vsel %vm7507, %v7485, %v6885
      %v7551 = vsel %vm7507, %v7486, %v6887
      %v7552 = vsel %vm7507, %v7487, %v6889
      %v7553 = vsel %vm7507, %v7488, %v6891
      %v7554 = vsel %vm7507, %v7489, %v6893
      %v7555 = vsel %vm7507, %v7490, %v6895
      %v7556 = vsel %vm7507, %v7491, %v6897
      %v7557 = vsel %vm7507, %v7492, %v6899
      %v7558 = vsel %vm7507, %v7493, %v6901
      %v7559 = vsel %vm7507, %v7494, %v6903
      %v7560 = vsel %vm7507, %v7495, %v6905
      %v7561 = vsel %vm7507, %v7496, %v6907
      %v7562 = vsel %vm7507, %v7497, %v6909
      %v7563 = vsel %vm7507, %v7498, %v6911
      %v7564 = vsel %vm7507, %v7499, %v6913
      %v7565 = vsel %vm7507, %v7500, %v6915
      %v7566 = vsel %vm7507, %v7501, %v6917
      %v7567 = vsel %vm7507, %v7502, %v6919
      %v7568 = vsel %vm7507, %v7503, %v6921
      %v7569 = vsel %vm7507, %v7504, %v6923
      %v7570 = vsel %vm7507, %v7505, %v6925
      %v7571 = vsel %vm7507, %v7506, %v6927
      %vm7572 = vcmask 457728
      %v7573 = vsel %vm7572, %v7508, %v6993
      %v7574 = vsel %vm7572, %v7509, %v6995
      %v7575 = vsel %vm7572, %v7510, %v6997
      %v7576 = vsel %vm7572, %v7511, %v6999
      %v7577 = vsel %vm7572, %v7512, %v7001
      %v7578 = vsel %vm7572, %v7513, %v7003
      %v7579 = vsel %vm7572, %v7514, %v7005
      %v7580 = vsel %vm7572, %v7515, %v7007
      %v7581 = vsel %vm7572, %v7516, %v7009
      %v7582 = vsel %vm7572, %v7517, %v7011
      %v7583 = vsel %vm7572, %v7518, %v7013
      %v7584 = vsel %vm7572, %v7519, %v7015
      %v7585 = vsel %vm7572, %v7520, %v7017
      %v7586 = vsel %vm7572, %v7521, %v7019
      %v7587 = vsel %vm7572, %v7522, %v7021
      %v7588 = vsel %vm7572, %v7523, %v7023
      %v7589 = vsel %vm7572, %v7524, %v7025
      %v7590 = vsel %vm7572, %v7525, %v7027
      %v7591 = vsel %vm7572, %v7526, %v7029
      %v7592 = vsel %vm7572, %v7527, %v7031
      %v7593 = vsel %vm7572, %v7528, %v7033
      %v7594 = vsel %vm7572, %v7529, %v7035
      %v7595 = vsel %vm7572, %v7530, %v7037
      %v7596 = vsel %vm7572, %v7531, %v7039
      %v7597 = vsel %vm7572, %v7532, %v7041
      %v7598 = vsel %vm7572, %v7533, %v7043
      %v7599 = vsel %vm7572, %v7534, %v7045
      %v7600 = vsel %vm7572, %v7535, %v7047
      %v7601 = vsel %vm7572, %v7536, %v7049
      %v7602 = vsel %vm7572, %v7537, %v7051
      %v7603 = vsel %vm7572, %v7538, %v7053
      %v7604 = vsel %vm7572, %v7539, %v7055
      %v7605 = vsel %vm7572, %v7540, %v7057
      %v7606 = vsel %vm7572, %v7541, %v7059
      %v7607 = vsel %vm7572, %v7542, %v7061
      %v7608 = vsel %vm7572, %v7543, %v7063
      %v7609 = vsel %vm7572, %v7544, %v7065
      %v7610 = vsel %vm7572, %v7545, %v7067
      %v7611 = vsel %vm7572, %v7546, %v7069
      %v7612 = vsel %vm7572, %v7547, %v7071
      %v7613 = vsel %vm7572, %v7548, %v7073
      %v7614 = vsel %vm7572, %v7549, %v7075
      %v7615 = vsel %vm7572, %v7550, %v7077
      %v7616 = vsel %vm7572, %v7551, %v7079
      %v7617 = vsel %vm7572, %v7552, %v7081
      %v7618 = vsel %vm7572, %v7553, %v7083
      %v7619 = vsel %vm7572, %v7554, %v7085
      %v7620 = vsel %vm7572, %v7555, %v7087
      %v7621 = vsel %vm7572, %v7556, %v7089
      %v7622 = vsel %vm7572, %v7557, %v7091
      %v7623 = vsel %vm7572, %v7558, %v7093
      %v7624 = vsel %vm7572, %v7559, %v7095
      %v7625 = vsel %vm7572, %v7560, %v7097
      %v7626 = vsel %vm7572, %v7561, %v7099
      %v7627 = vsel %vm7572, %v7562, %v7101
      %v7628 = vsel %vm7572, %v7563, %v7103
      %v7629 = vsel %vm7572, %v7564, %v7105
      %v7630 = vsel %vm7572, %v7565, %v7107
      %v7631 = vsel %vm7572, %v7566, %v7109
      %v7632 = vsel %vm7572, %v7567, %v7111
      %v7633 = vsel %vm7572, %v7568, %v7113
      %v7634 = vsel %vm7572, %v7569, %v7115
      %v7635 = vsel %vm7572, %v7570, %v7117
      %v7636 = vsel %vm7572, %v7571, %v7119
      %7701 = vrot.lane.b32.xlu0 %v1673, 16
      %v7702 = vpop.permute.xlu0 %7701
      %7703 = vrot.lane.b32.xlu0 %v1674, 16
      %v7704 = vpop.permute.xlu0 %7703
      %7705 = vrot.lane.b32.xlu0 %v1675, 16
      %v7706 = vpop.permute.xlu0 %7705
      %7707 = vrot.lane.b32.xlu0 %v1676, 16
      %v7708 = vpop.permute.xlu0 %7707
      %7709 = vrot.lane.b32.xlu0 %v1677, 16
      %v7710 = vpop.permute.xlu0 %7709
      %7711 = vrot.lane.b32.xlu0 %v1678, 16
      %v7712 = vpop.permute.xlu0 %7711
      %7713 = vrot.lane.b32.xlu0 %v1679, 16
      %v7714 = vpop.permute.xlu0 %7713
      %7715 = vrot.lane.b32.xlu0 %v1680, 16
      %v7716 = vpop.permute.xlu0 %7715
      %7717 = vrot.lane.b32.xlu0 %v1681, 16
      %v7718 = vpop.permute.xlu0 %7717
      %7719 = vrot.lane.b32.xlu0 %v1682, 16
      %v7720 = vpop.permute.xlu0 %7719
      %7721 = vrot.lane.b32.xlu0 %v1683, 16
      %v7722 = vpop.permute.xlu0 %7721
      %7723 = vrot.lane.b32.xlu0 %v1684, 16
      %v7724 = vpop.permute.xlu0 %7723
      %7725 = vrot.lane.b32.xlu0 %v1685, 16
      %v7726 = vpop.permute.xlu0 %7725
      %7727 = vrot.lane.b32.xlu0 %v1686, 16
      %v7728 = vpop.permute.xlu0 %7727
      %7729 = vrot.lane.b32.xlu0 %v1687, 16
      %v7730 = vpop.permute.xlu0 %7729
      %7731 = vrot.lane.b32.xlu0 %v1688, 16
      %v7732 = vpop.permute.xlu0 %7731
      %7733 = vrot.lane.b32.xlu0 %v1689, 16
      %v7734 = vpop.permute.xlu0 %7733
      %7735 = vrot.lane.b32.xlu0 %v1690, 16
      %v7736 = vpop.permute.xlu0 %7735
      %7737 = vrot.lane.b32.xlu0 %v1691, 16
      %v7738 = vpop.permute.xlu0 %7737
      %7739 = vrot.lane.b32.xlu0 %v1692, 16
      %v7740 = vpop.permute.xlu0 %7739
      %7741 = vrot.lane.b32.xlu0 %v1693, 16
      %v7742 = vpop.permute.xlu0 %7741
      %7743 = vrot.lane.b32.xlu0 %v1694, 16
      %v7744 = vpop.permute.xlu0 %7743
      %7745 = vrot.lane.b32.xlu0 %v1695, 16
      %v7746 = vpop.permute.xlu0 %7745
      %7747 = vrot.lane.b32.xlu0 %v1696, 16
      %v7748 = vpop.permute.xlu0 %7747
      %7749 = vrot.lane.b32.xlu0 %v1697, 16
      %v7750 = vpop.permute.xlu0 %7749
      %7751 = vrot.lane.b32.xlu0 %v1698, 16
      %v7752 = vpop.permute.xlu0 %7751
      %7753 = vrot.lane.b32.xlu0 %v1699, 16
      %v7754 = vpop.permute.xlu0 %7753
      %7755 = vrot.lane.b32.xlu0 %v1700, 16
      %v7756 = vpop.permute.xlu0 %7755
      %7757 = vrot.lane.b32.xlu0 %v1701, 16
      %v7758 = vpop.permute.xlu0 %7757
      %7759 = vrot.lane.b32.xlu0 %v1702, 16
      %v7760 = vpop.permute.xlu0 %7759
      %7761 = vrot.lane.b32.xlu0 %v1703, 16
      %v7762 = vpop.permute.xlu0 %7761
      %7763 = vrot.lane.b32.xlu0 %v1704, 16
      %v7764 = vpop.permute.xlu0 %7763
      %7765 = vrot.lane.b32.xlu0 %v1705, 16
      %v7766 = vpop.permute.xlu0 %7765
      %7767 = vrot.lane.b32.xlu0 %v1706, 16
      %v7768 = vpop.permute.xlu0 %7767
      %7769 = vrot.lane.b32.xlu0 %v1707, 16
      %v7770 = vpop.permute.xlu0 %7769
      %7771 = vrot.lane.b32.xlu0 %v1708, 16
      %v7772 = vpop.permute.xlu0 %7771
      %7773 = vrot.lane.b32.xlu0 %v1709, 16
      %v7774 = vpop.permute.xlu0 %7773
      %7775 = vrot.lane.b32.xlu0 %v1710, 16
      %v7776 = vpop.permute.xlu0 %7775
      %7777 = vrot.lane.b32.xlu0 %v1711, 16
      %v7778 = vpop.permute.xlu0 %7777
      %7779 = vrot.lane.b32.xlu0 %v1712, 16
      %v7780 = vpop.permute.xlu0 %7779
      %7781 = vrot.lane.b32.xlu0 %v1713, 16
      %v7782 = vpop.permute.xlu0 %7781
      %7783 = vrot.lane.b32.xlu0 %v1714, 16
      %v7784 = vpop.permute.xlu0 %7783
      %7785 = vrot.lane.b32.xlu0 %v1715, 16
      %v7786 = vpop.permute.xlu0 %7785
      %7787 = vrot.lane.b32.xlu0 %v1716, 16
      %v7788 = vpop.permute.xlu0 %7787
      %7789 = vrot.lane.b32.xlu0 %v1717, 16
      %v7790 = vpop.permute.xlu0 %7789
      %7791 = vrot.lane.b32.xlu0 %v1718, 16
      %v7792 = vpop.permute.xlu0 %7791
      %7793 = vrot.lane.b32.xlu0 %v1719, 16
      %v7794 = vpop.permute.xlu0 %7793
      %7795 = vrot.lane.b32.xlu0 %v1720, 16
      %v7796 = vpop.permute.xlu0 %7795
      %7797 = vrot.lane.b32.xlu0 %v1721, 16
      %v7798 = vpop.permute.xlu0 %7797
      %7799 = vrot.lane.b32.xlu0 %v1722, 16
      %v7800 = vpop.permute.xlu0 %7799
      %7801 = vrot.lane.b32.xlu0 %v1723, 16
      %v7802 = vpop.permute.xlu0 %7801
      %7803 = vrot.lane.b32.xlu0 %v1724, 16
      %v7804 = vpop.permute.xlu0 %7803
      %7805 = vrot.lane.b32.xlu0 %v1725, 16
      %v7806 = vpop.permute.xlu0 %7805
      %7807 = vrot.lane.b32.xlu0 %v1726, 16
      %v7808 = vpop.permute.xlu0 %7807
      %7809 = vrot.lane.b32.xlu0 %v1727, 16
      %v7810 = vpop.permute.xlu0 %7809
      %7811 = vrot.lane.b32.xlu0 %v1728, 16
      %v7812 = vpop.permute.xlu0 %7811
      %7813 = vrot.lane.b32.xlu0 %v1729, 16
      %v7814 = vpop.permute.xlu0 %7813
      %7815 = vrot.lane.b32.xlu0 %v1730, 16
      %v7816 = vpop.permute.xlu0 %7815
      %7817 = vrot.lane.b32.xlu0 %v1731, 16
      %v7818 = vpop.permute.xlu0 %7817
      %7819 = vrot.lane.b32.xlu0 %v1732, 16
      %v7820 = vpop.permute.xlu0 %7819
      %7821 = vrot.lane.b32.xlu0 %v1733, 16
      %v7822 = vpop.permute.xlu0 %7821
      %7823 = vrot.lane.b32.xlu0 %v1734, 16
      %v7824 = vpop.permute.xlu0 %7823
      %7825 = vrot.lane.b32.xlu0 %v1735, 16
      %v7826 = vpop.permute.xlu0 %7825
      %7827 = vrot.lane.b32.xlu0 %v1736, 16
      %v7828 = vpop.permute.xlu0 %7827
      %7893 = vrot.lane.b32.xlu0 %v1673, 32
      %v7894 = vpop.permute.xlu0 %7893
      %7895 = vrot.lane.b32.xlu0 %v1674, 32
      %v7896 = vpop.permute.xlu0 %7895
      %7897 = vrot.lane.b32.xlu0 %v1675, 32
      %v7898 = vpop.permute.xlu0 %7897
      %7899 = vrot.lane.b32.xlu0 %v1676, 32
      %v7900 = vpop.permute.xlu0 %7899
      %7901 = vrot.lane.b32.xlu0 %v1677, 32
      %v7902 = vpop.permute.xlu0 %7901
      %7903 = vrot.lane.b32.xlu0 %v1678, 32
      %v7904 = vpop.permute.xlu0 %7903
      %7905 = vrot.lane.b32.xlu0 %v1679, 32
      %v7906 = vpop.permute.xlu0 %7905
      %7907 = vrot.lane.b32.xlu0 %v1680, 32
      %v7908 = vpop.permute.xlu0 %7907
      %7909 = vrot.lane.b32.xlu0 %v1681, 32
      %v7910 = vpop.permute.xlu0 %7909
      %7911 = vrot.lane.b32.xlu0 %v1682, 32
      %v7912 = vpop.permute.xlu0 %7911
      %7913 = vrot.lane.b32.xlu0 %v1683, 32
      %v7914 = vpop.permute.xlu0 %7913
      %7915 = vrot.lane.b32.xlu0 %v1684, 32
      %v7916 = vpop.permute.xlu0 %7915
      %7917 = vrot.lane.b32.xlu0 %v1685, 32
      %v7918 = vpop.permute.xlu0 %7917
      %7919 = vrot.lane.b32.xlu0 %v1686, 32
      %v7920 = vpop.permute.xlu0 %7919
      %7921 = vrot.lane.b32.xlu0 %v1687, 32
      %v7922 = vpop.permute.xlu0 %7921
      %7923 = vrot.lane.b32.xlu0 %v1688, 32
      %v7924 = vpop.permute.xlu0 %7923
      %7925 = vrot.lane.b32.xlu0 %v1689, 32
      %v7926 = vpop.permute.xlu0 %7925
      %7927 = vrot.lane.b32.xlu0 %v1690, 32
      %v7928 = vpop.permute.xlu0 %7927
      %7929 = vrot.lane.b32.xlu0 %v1691, 32
      %v7930 = vpop.permute.xlu0 %7929
      %7931 = vrot.lane.b32.xlu0 %v1692, 32
      %v7932 = vpop.permute.xlu0 %7931
      %7933 = vrot.lane.b32.xlu0 %v1693, 32
      %v7934 = vpop.permute.xlu0 %7933
      %7935 = vrot.lane.b32.xlu0 %v1694, 32
      %v7936 = vpop.permute.xlu0 %7935
      %7937 = vrot.lane.b32.xlu0 %v1695, 32
      %v7938 = vpop.permute.xlu0 %7937
      %7939 = vrot.lane.b32.xlu0 %v1696, 32
      %v7940 = vpop.permute.xlu0 %7939
      %7941 = vrot.lane.b32.xlu0 %v1697, 32
      %v7942 = vpop.permute.xlu0 %7941
      %7943 = vrot.lane.b32.xlu0 %v1698, 32
      %v7944 = vpop.permute.xlu0 %7943
      %7945 = vrot.lane.b32.xlu0 %v1699, 32
      %v7946 = vpop.permute.xlu0 %7945
      %7947 = vrot.lane.b32.xlu0 %v1700, 32
      %v7948 = vpop.permute.xlu0 %7947
      %7949 = vrot.lane.b32.xlu0 %v1701, 32
      %v7950 = vpop.permute.xlu0 %7949
      %7951 = vrot.lane.b32.xlu0 %v1702, 32
      %v7952 = vpop.permute.xlu0 %7951
      %7953 = vrot.lane.b32.xlu0 %v1703, 32
      %v7954 = vpop.permute.xlu0 %7953
      %7955 = vrot.lane.b32.xlu0 %v1704, 32
      %v7956 = vpop.permute.xlu0 %7955
      %7957 = vrot.lane.b32.xlu0 %v1705, 32
      %v7958 = vpop.permute.xlu0 %7957
      %7959 = vrot.lane.b32.xlu0 %v1706, 32
      %v7960 = vpop.permute.xlu0 %7959
      %7961 = vrot.lane.b32.xlu0 %v1707, 32
      %v7962 = vpop.permute.xlu0 %7961
      %7963 = vrot.lane.b32.xlu0 %v1708, 32
      %v7964 = vpop.permute.xlu0 %7963
      %7965 = vrot.lane.b32.xlu0 %v1709, 32
      %v7966 = vpop.permute.xlu0 %7965
      %7967 = vrot.lane.b32.xlu0 %v1710, 32
      %v7968 = vpop.permute.xlu0 %7967
      %7969 = vrot.lane.b32.xlu0 %v1711, 32
      %v7970 = vpop.permute.xlu0 %7969
      %7971 = vrot.lane.b32.xlu0 %v1712, 32
      %v7972 = vpop.permute.xlu0 %7971
      %7973 = vrot.lane.b32.xlu0 %v1713, 32
      %v7974 = vpop.permute.xlu0 %7973
      %7975 = vrot.lane.b32.xlu0 %v1714, 32
      %v7976 = vpop.permute.xlu0 %7975
      %7977 = vrot.lane.b32.xlu0 %v1715, 32
      %v7978 = vpop.permute.xlu0 %7977
      %7979 = vrot.lane.b32.xlu0 %v1716, 32
      %v7980 = vpop.permute.xlu0 %7979
      %7981 = vrot.lane.b32.xlu0 %v1717, 32
      %v7982 = vpop.permute.xlu0 %7981
      %7983 = vrot.lane.b32.xlu0 %v1718, 32
      %v7984 = vpop.permute.xlu0 %7983
      %7985 = vrot.lane.b32.xlu0 %v1719, 32
      %v7986 = vpop.permute.xlu0 %7985
      %7987 = vrot.lane.b32.xlu0 %v1720, 32
      %v7988 = vpop.permute.xlu0 %7987
      %7989 = vrot.lane.b32.xlu0 %v1721, 32
      %v7990 = vpop.permute.xlu0 %7989
      %7991 = vrot.lane.b32.xlu0 %v1722, 32
      %v7992 = vpop.permute.xlu0 %7991
      %7993 = vrot.lane.b32.xlu0 %v1723, 32
      %v7994 = vpop.permute.xlu0 %7993
      %7995 = vrot.lane.b32.xlu0 %v1724, 32
      %v7996 = vpop.permute.xlu0 %7995
      %7997 = vrot.lane.b32.xlu0 %v1725, 32
      %v7998 = vpop.permute.xlu0 %7997
      %7999 = vrot.lane.b32.xlu0 %v1726, 32
      %v8000 = vpop.permute.xlu0 %7999
      %8001 = vrot.lane.b32.xlu0 %v1727, 32
      %v8002 = vpop.permute.xlu0 %8001
      %8003 = vrot.lane.b32.xlu0 %v1728, 32
      %v8004 = vpop.permute.xlu0 %8003
      %8005 = vrot.lane.b32.xlu0 %v1729, 32
      %v8006 = vpop.permute.xlu0 %8005
      %8007 = vrot.lane.b32.xlu0 %v1730, 32
      %v8008 = vpop.permute.xlu0 %8007
      %8009 = vrot.lane.b32.xlu0 %v1731, 32
      %v8010 = vpop.permute.xlu0 %8009
      %8011 = vrot.lane.b32.xlu0 %v1732, 32
      %v8012 = vpop.permute.xlu0 %8011
      %8013 = vrot.lane.b32.xlu0 %v1733, 32
      %v8014 = vpop.permute.xlu0 %8013
      %8015 = vrot.lane.b32.xlu0 %v1734, 32
      %v8016 = vpop.permute.xlu0 %8015
      %8017 = vrot.lane.b32.xlu0 %v1735, 32
      %v8018 = vpop.permute.xlu0 %8017
      %8019 = vrot.lane.b32.xlu0 %v1736, 32
      %v8020 = vpop.permute.xlu0 %8019
      %8085 = vrot.lane.b32.xlu0 %v1673, 24
      %v8086 = vpop.permute.xlu0 %8085
      %8087 = vrot.lane.b32.xlu0 %v1674, 24
      %v8088 = vpop.permute.xlu0 %8087
      %8089 = vrot.lane.b32.xlu0 %v1675, 24
      %v8090 = vpop.permute.xlu0 %8089
      %8091 = vrot.lane.b32.xlu0 %v1676, 24
      %v8092 = vpop.permute.xlu0 %8091
      %8093 = vrot.lane.b32.xlu0 %v1677, 24
      %v8094 = vpop.permute.xlu0 %8093
      %8095 = vrot.lane.b32.xlu0 %v1678, 24
      %v8096 = vpop.permute.xlu0 %8095
      %8097 = vrot.lane.b32.xlu0 %v1679, 24
      %v8098 = vpop.permute.xlu0 %8097
      %8099 = vrot.lane.b32.xlu0 %v1680, 24
      %v8100 = vpop.permute.xlu0 %8099
      %8101 = vrot.lane.b32.xlu0 %v1681, 24
      %v8102 = vpop.permute.xlu0 %8101
      %8103 = vrot.lane.b32.xlu0 %v1682, 24
      %v8104 = vpop.permute.xlu0 %8103
      %8105 = vrot.lane.b32.xlu0 %v1683, 24
      %v8106 = vpop.permute.xlu0 %8105
      %8107 = vrot.lane.b32.xlu0 %v1684, 24
      %v8108 = vpop.permute.xlu0 %8107
      %8109 = vrot.lane.b32.xlu0 %v1685, 24
      %v8110 = vpop.permute.xlu0 %8109
      %8111 = vrot.lane.b32.xlu0 %v1686, 24
      %v8112 = vpop.permute.xlu0 %8111
      %8113 = vrot.lane.b32.xlu0 %v1687, 24
      %v8114 = vpop.permute.xlu0 %8113
      %8115 = vrot.lane.b32.xlu0 %v1688, 24
      %v8116 = vpop.permute.xlu0 %8115
      %8117 = vrot.lane.b32.xlu0 %v1689, 24
      %v8118 = vpop.permute.xlu0 %8117
      %8119 = vrot.lane.b32.xlu0 %v1690, 24
      %v8120 = vpop.permute.xlu0 %8119
      %8121 = vrot.lane.b32.xlu0 %v1691, 24
      %v8122 = vpop.permute.xlu0 %8121
      %8123 = vrot.lane.b32.xlu0 %v1692, 24
      %v8124 = vpop.permute.xlu0 %8123
      %8125 = vrot.lane.b32.xlu0 %v1693, 24
      %v8126 = vpop.permute.xlu0 %8125
      %8127 = vrot.lane.b32.xlu0 %v1694, 24
      %v8128 = vpop.permute.xlu0 %8127
      %8129 = vrot.lane.b32.xlu0 %v1695, 24
      %v8130 = vpop.permute.xlu0 %8129
      %8131 = vrot.lane.b32.xlu0 %v1696, 24
      %v8132 = vpop.permute.xlu0 %8131
      %8133 = vrot.lane.b32.xlu0 %v1697, 24
      %v8134 = vpop.permute.xlu0 %8133
      %8135 = vrot.lane.b32.xlu0 %v1698, 24
      %v8136 = vpop.permute.xlu0 %8135
      %8137 = vrot.lane.b32.xlu0 %v1699, 24
      %v8138 = vpop.permute.xlu0 %8137
      %8139 = vrot.lane.b32.xlu0 %v1700, 24
      %v8140 = vpop.permute.xlu0 %8139
      %8141 = vrot.lane.b32.xlu0 %v1701, 24
      %v8142 = vpop.permute.xlu0 %8141
      %8143 = vrot.lane.b32.xlu0 %v1702, 24
      %v8144 = vpop.permute.xlu0 %8143
      %8145 = vrot.lane.b32.xlu0 %v1703, 24
      %v8146 = vpop.permute.xlu0 %8145
      %8147 = vrot.lane.b32.xlu0 %v1704, 24
      %v8148 = vpop.permute.xlu0 %8147
      %8149 = vrot.lane.b32.xlu0 %v1705, 24
      %v8150 = vpop.permute.xlu0 %8149
      %8151 = vrot.lane.b32.xlu0 %v1706, 24
      %v8152 = vpop.permute.xlu0 %8151
      %8153 = vrot.lane.b32.xlu0 %v1707, 24
      %v8154 = vpop.permute.xlu0 %8153
      %8155 = vrot.lane.b32.xlu0 %v1708, 24
      %v8156 = vpop.permute.xlu0 %8155
      %8157 = vrot.lane.b32.xlu0 %v1709, 24
      %v8158 = vpop.permute.xlu0 %8157
      %8159 = vrot.lane.b32.xlu0 %v1710, 24
      %v8160 = vpop.permute.xlu0 %8159
      %8161 = vrot.lane.b32.xlu0 %v1711, 24
      %v8162 = vpop.permute.xlu0 %8161
      %8163 = vrot.lane.b32.xlu0 %v1712, 24
      %v8164 = vpop.permute.xlu0 %8163
      %8165 = vrot.lane.b32.xlu0 %v1713, 24
      %v8166 = vpop.permute.xlu0 %8165
      %8167 = vrot.lane.b32.xlu0 %v1714, 24
      %v8168 = vpop.permute.xlu0 %8167
      %8169 = vrot.lane.b32.xlu0 %v1715, 24
      %v8170 = vpop.permute.xlu0 %8169
      %8171 = vrot.lane.b32.xlu0 %v1716, 24
      %v8172 = vpop.permute.xlu0 %8171
      %8173 = vrot.lane.b32.xlu0 %v1717, 24
      %v8174 = vpop.permute.xlu0 %8173
      %8175 = vrot.lane.b32.xlu0 %v1718, 24
      %v8176 = vpop.permute.xlu0 %8175
      %8177 = vrot.lane.b32.xlu0 %v1719, 24
      %v8178 = vpop.permute.xlu0 %8177
      %8179 = vrot.lane.b32.xlu0 %v1720, 24
      %v8180 = vpop.permute.xlu0 %8179
      %8181 = vrot.lane.b32.xlu0 %v1721, 24
      %v8182 = vpop.permute.xlu0 %8181
      %8183 = vrot.lane.b32.xlu0 %v1722, 24
      %v8184 = vpop.permute.xlu0 %8183
      %8185 = vrot.lane.b32.xlu0 %v1723, 24
      %v8186 = vpop.permute.xlu0 %8185
      %8187 = vrot.lane.b32.xlu0 %v1724, 24
      %v8188 = vpop.permute.xlu0 %8187
      %8189 = vrot.lane.b32.xlu0 %v1725, 24
      %v8190 = vpop.permute.xlu0 %8189
      %8191 = vrot.lane.b32.xlu0 %v1726, 24
      %v8192 = vpop.permute.xlu0 %8191
      %8193 = vrot.lane.b32.xlu0 %v1727, 24
      %v8194 = vpop.permute.xlu0 %8193
      %8195 = vrot.lane.b32.xlu0 %v1728, 24
      %v8196 = vpop.permute.xlu0 %8195
      %8197 = vrot.lane.b32.xlu0 %v1729, 24
      %v8198 = vpop.permute.xlu0 %8197
      %8199 = vrot.lane.b32.xlu0 %v1730, 24
      %v8200 = vpop.permute.xlu0 %8199
      %8201 = vrot.lane.b32.xlu0 %v1731, 24
      %v8202 = vpop.permute.xlu0 %8201
      %8203 = vrot.lane.b32.xlu0 %v1732, 24
      %v8204 = vpop.permute.xlu0 %8203
      %8205 = vrot.lane.b32.xlu0 %v1733, 24
      %v8206 = vpop.permute.xlu0 %8205
      %8207 = vrot.lane.b32.xlu0 %v1734, 24
      %v8208 = vpop.permute.xlu0 %8207
      %8209 = vrot.lane.b32.xlu0 %v1735, 24
      %v8210 = vpop.permute.xlu0 %8209
      %8211 = vrot.lane.b32.xlu0 %v1736, 24
      %v8212 = vpop.permute.xlu0 %8211
      %8277 = vrot.lane.b32.xlu0 %v1673, 48
      %v8278 = vpop.permute.xlu0 %8277
      %8279 = vrot.lane.b32.xlu0 %v1674, 48
      %v8280 = vpop.permute.xlu0 %8279
      %8281 = vrot.lane.b32.xlu0 %v1675, 48
      %v8282 = vpop.permute.xlu0 %8281
      %8283 = vrot.lane.b32.xlu0 %v1676, 48
      %v8284 = vpop.permute.xlu0 %8283
      %8285 = vrot.lane.b32.xlu0 %v1677, 48
      %v8286 = vpop.permute.xlu0 %8285
      %8287 = vrot.lane.b32.xlu0 %v1678, 48
      %v8288 = vpop.permute.xlu0 %8287
      %8289 = vrot.lane.b32.xlu0 %v1679, 48
      %v8290 = vpop.permute.xlu0 %8289
      %8291 = vrot.lane.b32.xlu0 %v1680, 48
      %v8292 = vpop.permute.xlu0 %8291
      %8293 = vrot.lane.b32.xlu0 %v1681, 48
      %v8294 = vpop.permute.xlu0 %8293
      %8295 = vrot.lane.b32.xlu0 %v1682, 48
      %v8296 = vpop.permute.xlu0 %8295
      %8297 = vrot.lane.b32.xlu0 %v1683, 48
      %v8298 = vpop.permute.xlu0 %8297
      %8299 = vrot.lane.b32.xlu0 %v1684, 48
      %v8300 = vpop.permute.xlu0 %8299
      %8301 = vrot.lane.b32.xlu0 %v1685, 48
      %v8302 = vpop.permute.xlu0 %8301
      %8303 = vrot.lane.b32.xlu0 %v1686, 48
      %v8304 = vpop.permute.xlu0 %8303
      %8305 = vrot.lane.b32.xlu0 %v1687, 48
      %v8306 = vpop.permute.xlu0 %8305
      %8307 = vrot.lane.b32.xlu0 %v1688, 48
      %v8308 = vpop.permute.xlu0 %8307
      %8309 = vrot.lane.b32.xlu0 %v1689, 48
      %v8310 = vpop.permute.xlu0 %8309
      %8311 = vrot.lane.b32.xlu0 %v1690, 48
      %v8312 = vpop.permute.xlu0 %8311
      %8313 = vrot.lane.b32.xlu0 %v1691, 48
      %v8314 = vpop.permute.xlu0 %8313
      %8315 = vrot.lane.b32.xlu0 %v1692, 48
      %v8316 = vpop.permute.xlu0 %8315
      %8317 = vrot.lane.b32.xlu0 %v1693, 48
      %v8318 = vpop.permute.xlu0 %8317
      %8319 = vrot.lane.b32.xlu0 %v1694, 48
      %v8320 = vpop.permute.xlu0 %8319
      %8321 = vrot.lane.b32.xlu0 %v1695, 48
      %v8322 = vpop.permute.xlu0 %8321
      %8323 = vrot.lane.b32.xlu0 %v1696, 48
      %v8324 = vpop.permute.xlu0 %8323
      %8325 = vrot.lane.b32.xlu0 %v1697, 48
      %v8326 = vpop.permute.xlu0 %8325
      %8327 = vrot.lane.b32.xlu0 %v1698, 48
      %v8328 = vpop.permute.xlu0 %8327
      %8329 = vrot.lane.b32.xlu0 %v1699, 48
      %v8330 = vpop.permute.xlu0 %8329
      %8331 = vrot.lane.b32.xlu0 %v1700, 48
      %v8332 = vpop.permute.xlu0 %8331
      %8333 = vrot.lane.b32.xlu0 %v1701, 48
      %v8334 = vpop.permute.xlu0 %8333
      %8335 = vrot.lane.b32.xlu0 %v1702, 48
      %v8336 = vpop.permute.xlu0 %8335
      %8337 = vrot.lane.b32.xlu0 %v1703, 48
      %v8338 = vpop.permute.xlu0 %8337
      %8339 = vrot.lane.b32.xlu0 %v1704, 48
      %v8340 = vpop.permute.xlu0 %8339
      %8341 = vrot.lane.b32.xlu0 %v1705, 48
      %v8342 = vpop.permute.xlu0 %8341
      %8343 = vrot.lane.b32.xlu0 %v1706, 48
      %v8344 = vpop.permute.xlu0 %8343
      %8345 = vrot.lane.b32.xlu0 %v1707, 48
      %v8346 = vpop.permute.xlu0 %8345
      %8347 = vrot.lane.b32.xlu0 %v1708, 48
      %v8348 = vpop.permute.xlu0 %8347
      %8349 = vrot.lane.b32.xlu0 %v1709, 48
      %v8350 = vpop.permute.xlu0 %8349
      %8351 = vrot.lane.b32.xlu0 %v1710, 48
      %v8352 = vpop.permute.xlu0 %8351
      %8353 = vrot.lane.b32.xlu0 %v1711, 48
      %v8354 = vpop.permute.xlu0 %8353
      %8355 = vrot.lane.b32.xlu0 %v1712, 48
      %v8356 = vpop.permute.xlu0 %8355
      %8357 = vrot.lane.b32.xlu0 %v1713, 48
      %v8358 = vpop.permute.xlu0 %8357
      %8359 = vrot.lane.b32.xlu0 %v1714, 48
      %v8360 = vpop.permute.xlu0 %8359
      %8361 = vrot.lane.b32.xlu0 %v1715, 48
      %v8362 = vpop.permute.xlu0 %8361
      %8363 = vrot.lane.b32.xlu0 %v1716, 48
      %v8364 = vpop.permute.xlu0 %8363
      %8365 = vrot.lane.b32.xlu0 %v1717, 48
      %v8366 = vpop.permute.xlu0 %8365
      %8367 = vrot.lane.b32.xlu0 %v1718, 48
      %v8368 = vpop.permute.xlu0 %8367
      %8369 = vrot.lane.b32.xlu0 %v1719, 48
      %v8370 = vpop.permute.xlu0 %8369
      %8371 = vrot.lane.b32.xlu0 %v1720, 48
      %v8372 = vpop.permute.xlu0 %8371
      %8373 = vrot.lane.b32.xlu0 %v1721, 48
      %v8374 = vpop.permute.xlu0 %8373
      %8375 = vrot.lane.b32.xlu0 %v1722, 48
      %v8376 = vpop.permute.xlu0 %8375
      %8377 = vrot.lane.b32.xlu0 %v1723, 48
      %v8378 = vpop.permute.xlu0 %8377
      %8379 = vrot.lane.b32.xlu0 %v1724, 48
      %v8380 = vpop.permute.xlu0 %8379
      %8381 = vrot.lane.b32.xlu0 %v1725, 48
      %v8382 = vpop.permute.xlu0 %8381
      %8383 = vrot.lane.b32.xlu0 %v1726, 48
      %v8384 = vpop.permute.xlu0 %8383
      %8385 = vrot.lane.b32.xlu0 %v1727, 48
      %v8386 = vpop.permute.xlu0 %8385
      %8387 = vrot.lane.b32.xlu0 %v1728, 48
      %v8388 = vpop.permute.xlu0 %8387
      %8389 = vrot.lane.b32.xlu0 %v1729, 48
      %v8390 = vpop.permute.xlu0 %8389
      %8391 = vrot.lane.b32.xlu0 %v1730, 48
      %v8392 = vpop.permute.xlu0 %8391
      %8393 = vrot.lane.b32.xlu0 %v1731, 48
      %v8394 = vpop.permute.xlu0 %8393
      %8395 = vrot.lane.b32.xlu0 %v1732, 48
      %v8396 = vpop.permute.xlu0 %8395
      %8397 = vrot.lane.b32.xlu0 %v1733, 48
      %v8398 = vpop.permute.xlu0 %8397
      %8399 = vrot.lane.b32.xlu0 %v1734, 48
      %v8400 = vpop.permute.xlu0 %8399
      %8401 = vrot.lane.b32.xlu0 %v1735, 48
      %v8402 = vpop.permute.xlu0 %8401
      %8403 = vrot.lane.b32.xlu0 %v1736, 48
      %v8404 = vpop.permute.xlu0 %8403
      %v8469 = vsel %vm1738, %v1673, %v4880
      %v8470 = vsel %vm1738, %v1674, %v4881
      %v8471 = vsel %vm1738, %v1675, %v4882
      %v8472 = vsel %vm1738, %v1676, %v4883
      %v8473 = vsel %vm1738, %v1677, %v4884
      %v8474 = vsel %vm1738, %v1678, %v4885
      %v8475 = vsel %vm1738, %v1679, %v4886
      %v8476 = vsel %vm1738, %v1680, %v4887
      %v8477 = vsel %vm1738, %v1681, %v4888
      %v8478 = vsel %vm1738, %v1682, %v4889
      %v8479 = vsel %vm1738, %v1683, %v4890
      %v8480 = vsel %vm1738, %v1684, %v4891
      %v8481 = vsel %vm1738, %v1685, %v4892
      %v8482 = vsel %vm1738, %v1686, %v4893
      %v8483 = vsel %vm1738, %v1687, %v4894
      %v8484 = vsel %vm1738, %v1688, %v4895
      %v8485 = vsel %vm1738, %v1689, %v4896
      %v8486 = vsel %vm1738, %v1690, %v4897
      %v8487 = vsel %vm1738, %v1691, %v4898
      %v8488 = vsel %vm1738, %v1692, %v4899
      %v8489 = vsel %vm1738, %v1693, %v4900
      %v8490 = vsel %vm1738, %v1694, %v4901
      %v8491 = vsel %vm1738, %v1695, %v4902
      %v8492 = vsel %vm1738, %v1696, %v4903
      %v8493 = vsel %vm1738, %v1697, %v4904
      %v8494 = vsel %vm1738, %v1698, %v4905
      %v8495 = vsel %vm1738, %v1699, %v4906
      %v8496 = vsel %vm1738, %v1700, %v4907
      %v8497 = vsel %vm1738, %v1701, %v4908
      %v8498 = vsel %vm1738, %v1702, %v4909
      %v8499 = vsel %vm1738, %v1703, %v4910
      %v8500 = vsel %vm1738, %v1704, %v4911
      %v8501 = vsel %vm1738, %v1705, %v4912
      %v8502 = vsel %vm1738, %v1706, %v4913
      %v8503 = vsel %vm1738, %v1707, %v4914
      %v8504 = vsel %vm1738, %v1708, %v4915
      %v8505 = vsel %vm1738, %v1709, %v4916
      %v8506 = vsel %vm1738, %v1710, %v4917
      %v8507 = vsel %vm1738, %v1711, %v4918
      %v8508 = vsel %vm1738, %v1712, %v4919
      %v8509 = vsel %vm1738, %v1713, %v4920
      %v8510 = vsel %vm1738, %v1714, %v4921
      %v8511 = vsel %vm1738, %v1715, %v4922
      %v8512 = vsel %vm1738, %v1716, %v4923
      %v8513 = vsel %vm1738, %v1717, %v4924
      %v8514 = vsel %vm1738, %v1718, %v4925
      %v8515 = vsel %vm1738, %v1719, %v4926
      %v8516 = vsel %vm1738, %v1720, %v4927
      %v8517 = vsel %vm1738, %v1721, %v4928
      %v8518 = vsel %vm1738, %v1722, %v4929
      %v8519 = vsel %vm1738, %v1723, %v4930
      %v8520 = vsel %vm1738, %v1724, %v4931
      %v8521 = vsel %vm1738, %v1725, %v4932
      %v8522 = vsel %vm1738, %v1726, %v4933
      %v8523 = vsel %vm1738, %v1727, %v4934
      %v8524 = vsel %vm1738, %v1728, %v4935
      %v8525 = vsel %vm1738, %v1729, %v4936
      %v8526 = vsel %vm1738, %v1730, %v4937
      %v8527 = vsel %vm1738, %v1731, %v4938
      %v8528 = vsel %vm1738, %v1732, %v4939
      %v8529 = vsel %vm1738, %v1733, %v4940
      %v8530 = vsel %vm1738, %v1734, %v4941
      %v8531 = vsel %vm1738, %v1735, %v4942
      %v8532 = vsel %vm1738, %v1736, %v4943
      %v8533 = vsel %vm2766, %v8469, %v7702
      %v8534 = vsel %vm2766, %v8470, %v7704
      %v8535 = vsel %vm2766, %v8471, %v7706
      %v8536 = vsel %vm2766, %v8472, %v7708
      %v8537 = vsel %vm2766, %v8473, %v7710
      %v8538 = vsel %vm2766, %v8474, %v7712
      %v8539 = vsel %vm2766, %v8475, %v7714
      %v8540 = vsel %vm2766, %v8476, %v7716
      %v8541 = vsel %vm2766, %v8477, %v7718
      %v8542 = vsel %vm2766, %v8478, %v7720
      %v8543 = vsel %vm2766, %v8479, %v7722
      %v8544 = vsel %vm2766, %v8480, %v7724
      %v8545 = vsel %vm2766, %v8481, %v7726
      %v8546 = vsel %vm2766, %v8482, %v7728
      %v8547 = vsel %vm2766, %v8483, %v7730
      %v8548 = vsel %vm2766, %v8484, %v7732
      %v8549 = vsel %vm2766, %v8485, %v7734
      %v8550 = vsel %vm2766, %v8486, %v7736
      %v8551 = vsel %vm2766, %v8487, %v7738
      %v8552 = vsel %vm2766, %v8488, %v7740
      %v8553 = vsel %vm2766, %v8489, %v7742
      %v8554 = vsel %vm2766, %v8490, %v7744
      %v8555 = vsel %vm2766, %v8491, %v7746
      %v8556 = vsel %vm2766, %v8492, %v7748
      %v8557 = vsel %vm2766, %v8493, %v7750
      %v8558 = vsel %vm2766, %v8494, %v7752
      %v8559 = vsel %vm2766, %v8495, %v7754
      %v8560 = vsel %vm2766, %v8496, %v7756
      %v8561 = vsel %vm2766, %v8497, %v7758
      %v8562 = vsel %vm2766, %v8498, %v7760
      %v8563 = vsel %vm2766, %v8499, %v7762
      %v8564 = vsel %vm2766, %v8500, %v7764
      %v8565 = vsel %vm2766, %v8501, %v7766
      %v8566 = vsel %vm2766, %v8502, %v7768
      %v8567 = vsel %vm2766, %v8503, %v7770
      %v8568 = vsel %vm2766, %v8504, %v7772
      %v8569 = vsel %vm2766, %v8505, %v7774
      %v8570 = vsel %vm2766, %v8506, %v7776
      %v8571 = vsel %vm2766, %v8507, %v7778
      %v8572 = vsel %vm2766, %v8508, %v7780
      %v8573 = vsel %vm2766, %v8509, %v7782
      %v8574 = vsel %vm2766, %v8510, %v7784
      %v8575 = vsel %vm2766, %v8511, %v7786
      %v8576 = vsel %vm2766, %v8512, %v7788
      %v8577 = vsel %vm2766, %v8513, %v7790
      %v8578 = vsel %vm2766, %v8514, %v7792
      %v8579 = vsel %vm2766, %v8515, %v7794
      %v8580 = vsel %vm2766, %v8516, %v7796
      %v8581 = vsel %vm2766, %v8517, %v7798
      %v8582 = vsel %vm2766, %v8518, %v7800
      %v8583 = vsel %vm2766, %v8519, %v7802
      %v8584 = vsel %vm2766, %v8520, %v7804
      %v8585 = vsel %vm2766, %v8521, %v7806
      %v8586 = vsel %vm2766, %v8522, %v7808
      %v8587 = vsel %vm2766, %v8523, %v7810
      %v8588 = vsel %vm2766, %v8524, %v7812
      %v8589 = vsel %vm2766, %v8525, %v7814
      %v8590 = vsel %vm2766, %v8526, %v7816
      %v8591 = vsel %vm2766, %v8527, %v7818
      %v8592 = vsel %vm2766, %v8528, %v7820
      %v8593 = vsel %vm2766, %v8529, %v7822
      %v8594 = vsel %vm2766, %v8530, %v7824
      %v8595 = vsel %vm2766, %v8531, %v7826
      %v8596 = vsel %vm2766, %v8532, %v7828
      %v8597 = vsel %vm7312, %v8533, %v7702
      %v8598 = vsel %vm7312, %v8534, %v7704
      %v8599 = vsel %vm7312, %v8535, %v7706
      %v8600 = vsel %vm7312, %v8536, %v7708
      %v8601 = vsel %vm7312, %v8537, %v7710
      %v8602 = vsel %vm7312, %v8538, %v7712
      %v8603 = vsel %vm7312, %v8539, %v7714
      %v8604 = vsel %vm7312, %v8540, %v7716
      %v8605 = vsel %vm7312, %v8541, %v7718
      %v8606 = vsel %vm7312, %v8542, %v7720
      %v8607 = vsel %vm7312, %v8543, %v7722
      %v8608 = vsel %vm7312, %v8544, %v7724
      %v8609 = vsel %vm7312, %v8545, %v7726
      %v8610 = vsel %vm7312, %v8546, %v7728
      %v8611 = vsel %vm7312, %v8547, %v7730
      %v8612 = vsel %vm7312, %v8548, %v7732
      %v8613 = vsel %vm7312, %v8549, %v7734
      %v8614 = vsel %vm7312, %v8550, %v7736
      %v8615 = vsel %vm7312, %v8551, %v7738
      %v8616 = vsel %vm7312, %v8552, %v7740
      %v8617 = vsel %vm7312, %v8553, %v7742
      %v8618 = vsel %vm7312, %v8554, %v7744
      %v8619 = vsel %vm7312, %v8555, %v7746
      %v8620 = vsel %vm7312, %v8556, %v7748
      %v8621 = vsel %vm7312, %v8557, %v7750
      %v8622 = vsel %vm7312, %v8558, %v7752
      %v8623 = vsel %vm7312, %v8559, %v7754
      %v8624 = vsel %vm7312, %v8560, %v7756
      %v8625 = vsel %vm7312, %v8561, %v7758
      %v8626 = vsel %vm7312, %v8562, %v7760
      %v8627 = vsel %vm7312, %v8563, %v7762
      %v8628 = vsel %vm7312, %v8564, %v7764
      %v8629 = vsel %vm7312, %v8565, %v7766
      %v8630 = vsel %vm7312, %v8566, %v7768
      %v8631 = vsel %vm7312, %v8567, %v7770
      %v8632 = vsel %vm7312, %v8568, %v7772
      %v8633 = vsel %vm7312, %v8569, %v7774
      %v8634 = vsel %vm7312, %v8570, %v7776
      %v8635 = vsel %vm7312, %v8571, %v7778
      %v8636 = vsel %vm7312, %v8572, %v7780
      %v8637 = vsel %vm7312, %v8573, %v7782
      %v8638 = vsel %vm7312, %v8574, %v7784
      %v8639 = vsel %vm7312, %v8575, %v7786
      %v8640 = vsel %vm7312, %v8576, %v7788
      %v8641 = vsel %vm7312, %v8577, %v7790
      %v8642 = vsel %vm7312, %v8578, %v7792
      %v8643 = vsel %vm7312, %v8579, %v7794
      %v8644 = vsel %vm7312, %v8580, %v7796
      %v8645 = vsel %vm7312, %v8581, %v7798
      %v8646 = vsel %vm7312, %v8582, %v7800
      %v8647 = vsel %vm7312, %v8583, %v7802
      %v8648 = vsel %vm7312, %v8584, %v7804
      %v8649 = vsel %vm7312, %v8585, %v7806
      %v8650 = vsel %vm7312, %v8586, %v7808
      %v8651 = vsel %vm7312, %v8587, %v7810
      %v8652 = vsel %vm7312, %v8588, %v7812
      %v8653 = vsel %vm7312, %v8589, %v7814
      %v8654 = vsel %vm7312, %v8590, %v7816
      %v8655 = vsel %vm7312, %v8591, %v7818
      %v8656 = vsel %vm7312, %v8592, %v7820
      %v8657 = vsel %vm7312, %v8593, %v7822
      %v8658 = vsel %vm7312, %v8594, %v7824
      %v8659 = vsel %vm7312, %v8595, %v7826
      %v8660 = vsel %vm7312, %v8596, %v7828
      %v8661 = vsel %vm7377, %v8597, %v7894
      %v8662 = vsel %vm7377, %v8598, %v7896
      %v8663 = vsel %vm7377, %v8599, %v7898
      %v8664 = vsel %vm7377, %v8600, %v7900
      %v8665 = vsel %vm7377, %v8601, %v7902
      %v8666 = vsel %vm7377, %v8602, %v7904
      %v8667 = vsel %vm7377, %v8603, %v7906
      %v8668 = vsel %vm7377, %v8604, %v7908
      %v8669 = vsel %vm7377, %v8605, %v7910
      %v8670 = vsel %vm7377, %v8606, %v7912
      %v8671 = vsel %vm7377, %v8607, %v7914
      %v8672 = vsel %vm7377, %v8608, %v7916
      %v8673 = vsel %vm7377, %v8609, %v7918
      %v8674 = vsel %vm7377, %v8610, %v7920
      %v8675 = vsel %vm7377, %v8611, %v7922
      %v8676 = vsel %vm7377, %v8612, %v7924
      %v8677 = vsel %vm7377, %v8613, %v7926
      %v8678 = vsel %vm7377, %v8614, %v7928
      %v8679 = vsel %vm7377, %v8615, %v7930
      %v8680 = vsel %vm7377, %v8616, %v7932
      %v8681 = vsel %vm7377, %v8617, %v7934
      %v8682 = vsel %vm7377, %v8618, %v7936
      %v8683 = vsel %vm7377, %v8619, %v7938
      %v8684 = vsel %vm7377, %v8620, %v7940
      %v8685 = vsel %vm7377, %v8621, %v7942
      %v8686 = vsel %vm7377, %v8622, %v7944
      %v8687 = vsel %vm7377, %v8623, %v7946
      %v8688 = vsel %vm7377, %v8624, %v7948
      %v8689 = vsel %vm7377, %v8625, %v7950
      %v8690 = vsel %vm7377, %v8626, %v7952
      %v8691 = vsel %vm7377, %v8627, %v7954
      %v8692 = vsel %vm7377, %v8628, %v7956
      %v8693 = vsel %vm7377, %v8629, %v7958
      %v8694 = vsel %vm7377, %v8630, %v7960
      %v8695 = vsel %vm7377, %v8631, %v7962
      %v8696 = vsel %vm7377, %v8632, %v7964
      %v8697 = vsel %vm7377, %v8633, %v7966
      %v8698 = vsel %vm7377, %v8634, %v7968
      %v8699 = vsel %vm7377, %v8635, %v7970
      %v8700 = vsel %vm7377, %v8636, %v7972
      %v8701 = vsel %vm7377, %v8637, %v7974
      %v8702 = vsel %vm7377, %v8638, %v7976
      %v8703 = vsel %vm7377, %v8639, %v7978
      %v8704 = vsel %vm7377, %v8640, %v7980
      %v8705 = vsel %vm7377, %v8641, %v7982
      %v8706 = vsel %vm7377, %v8642, %v7984
      %v8707 = vsel %vm7377, %v8643, %v7986
      %v8708 = vsel %vm7377, %v8644, %v7988
      %v8709 = vsel %vm7377, %v8645, %v7990
      %v8710 = vsel %vm7377, %v8646, %v7992
      %v8711 = vsel %vm7377, %v8647, %v7994
      %v8712 = vsel %vm7377, %v8648, %v7996
      %v8713 = vsel %vm7377, %v8649, %v7998
      %v8714 = vsel %vm7377, %v8650, %v8000
      %v8715 = vsel %vm7377, %v8651, %v8002
      %v8716 = vsel %vm7377, %v8652, %v8004
      %v8717 = vsel %vm7377, %v8653, %v8006
      %v8718 = vsel %vm7377, %v8654, %v8008
      %v8719 = vsel %vm7377, %v8655, %v8010
      %v8720 = vsel %vm7377, %v8656, %v8012
      %v8721 = vsel %vm7377, %v8657, %v8014
      %v8722 = vsel %vm7377, %v8658, %v8016
      %v8723 = vsel %vm7377, %v8659, %v8018
      %v8724 = vsel %vm7377, %v8660, %v8020
      %v8725 = vsel %vm7442, %v8661, %v8086
      %v8726 = vsel %vm7442, %v8662, %v8088
      %v8727 = vsel %vm7442, %v8663, %v8090
      %v8728 = vsel %vm7442, %v8664, %v8092
      %v8729 = vsel %vm7442, %v8665, %v8094
      %v8730 = vsel %vm7442, %v8666, %v8096
      %v8731 = vsel %vm7442, %v8667, %v8098
      %v8732 = vsel %vm7442, %v8668, %v8100
      %v8733 = vsel %vm7442, %v8669, %v8102
      %v8734 = vsel %vm7442, %v8670, %v8104
      %v8735 = vsel %vm7442, %v8671, %v8106
      %v8736 = vsel %vm7442, %v8672, %v8108
      %v8737 = vsel %vm7442, %v8673, %v8110
      %v8738 = vsel %vm7442, %v8674, %v8112
      %v8739 = vsel %vm7442, %v8675, %v8114
      %v8740 = vsel %vm7442, %v8676, %v8116
      %v8741 = vsel %vm7442, %v8677, %v8118
      %v8742 = vsel %vm7442, %v8678, %v8120
      %v8743 = vsel %vm7442, %v8679, %v8122
      %v8744 = vsel %vm7442, %v8680, %v8124
      %v8745 = vsel %vm7442, %v8681, %v8126
      %v8746 = vsel %vm7442, %v8682, %v8128
      %v8747 = vsel %vm7442, %v8683, %v8130
      %v8748 = vsel %vm7442, %v8684, %v8132
      %v8749 = vsel %vm7442, %v8685, %v8134
      %v8750 = vsel %vm7442, %v8686, %v8136
      %v8751 = vsel %vm7442, %v8687, %v8138
      %v8752 = vsel %vm7442, %v8688, %v8140
      %v8753 = vsel %vm7442, %v8689, %v8142
      %v8754 = vsel %vm7442, %v8690, %v8144
      %v8755 = vsel %vm7442, %v8691, %v8146
      %v8756 = vsel %vm7442, %v8692, %v8148
      %v8757 = vsel %vm7442, %v8693, %v8150
      %v8758 = vsel %vm7442, %v8694, %v8152
      %v8759 = vsel %vm7442, %v8695, %v8154
      %v8760 = vsel %vm7442, %v8696, %v8156
      %v8761 = vsel %vm7442, %v8697, %v8158
      %v8762 = vsel %vm7442, %v8698, %v8160
      %v8763 = vsel %vm7442, %v8699, %v8162
      %v8764 = vsel %vm7442, %v8700, %v8164
      %v8765 = vsel %vm7442, %v8701, %v8166
      %v8766 = vsel %vm7442, %v8702, %v8168
      %v8767 = vsel %vm7442, %v8703, %v8170
      %v8768 = vsel %vm7442, %v8704, %v8172
      %v8769 = vsel %vm7442, %v8705, %v8174
      %v8770 = vsel %vm7442, %v8706, %v8176
      %v8771 = vsel %vm7442, %v8707, %v8178
      %v8772 = vsel %vm7442, %v8708, %v8180
      %v8773 = vsel %vm7442, %v8709, %v8182
      %v8774 = vsel %vm7442, %v8710, %v8184
      %v8775 = vsel %vm7442, %v8711, %v8186
      %v8776 = vsel %vm7442, %v8712, %v8188
      %v8777 = vsel %vm7442, %v8713, %v8190
      %v8778 = vsel %vm7442, %v8714, %v8192
      %v8779 = vsel %vm7442, %v8715, %v8194
      %v8780 = vsel %vm7442, %v8716, %v8196
      %v8781 = vsel %vm7442, %v8717, %v8198
      %v8782 = vsel %vm7442, %v8718, %v8200
      %v8783 = vsel %vm7442, %v8719, %v8202
      %v8784 = vsel %vm7442, %v8720, %v8204
      %v8785 = vsel %vm7442, %v8721, %v8206
      %v8786 = vsel %vm7442, %v8722, %v8208
      %v8787 = vsel %vm7442, %v8723, %v8210
      %v8788 = vsel %vm7442, %v8724, %v8212
      %v8789 = vsel %vm7507, %v8725, %v8278
      %v8790 = vsel %vm7507, %v8726, %v8280
      %v8791 = vsel %vm7507, %v8727, %v8282
      %v8792 = vsel %vm7507, %v8728, %v8284
      %v8793 = vsel %vm7507, %v8729, %v8286
      %v8794 = vsel %vm7507, %v8730, %v8288
      %v8795 = vsel %vm7507, %v8731, %v8290
      %v8796 = vsel %vm7507, %v8732, %v8292
      %v8797 = vsel %vm7507, %v8733, %v8294
      %v8798 = vsel %vm7507, %v8734, %v8296
      %v8799 = vsel %vm7507, %v8735, %v8298
      %v8800 = vsel %vm7507, %v8736, %v8300
      %v8801 = vsel %vm7507, %v8737, %v8302
      %v8802 = vsel %vm7507, %v8738, %v8304
      %v8803 = vsel %vm7507, %v8739, %v8306
      %v8804 = vsel %vm7507, %v8740, %v8308
      %v8805 = vsel %vm7507, %v8741, %v8310
      %v8806 = vsel %vm7507, %v8742, %v8312
      %v8807 = vsel %vm7507, %v8743, %v8314
      %v8808 = vsel %vm7507, %v8744, %v8316
      %v8809 = vsel %vm7507, %v8745, %v8318
      %v8810 = vsel %vm7507, %v8746, %v8320
      %v8811 = vsel %vm7507, %v8747, %v8322
      %v8812 = vsel %vm7507, %v8748, %v8324
      %v8813 = vsel %vm7507, %v8749, %v8326
      %v8814 = vsel %vm7507, %v8750, %v8328
      %v8815 = vsel %vm7507, %v8751, %v8330
      %v8816 = vsel %vm7507, %v8752, %v8332
      %v8817 = vsel %vm7507, %v8753, %v8334
      %v8818 = vsel %vm7507, %v8754, %v8336
      %v8819 = vsel %vm7507, %v8755, %v8338
      %v8820 = vsel %vm7507, %v8756, %v8340
      %v8821 = vsel %vm7507, %v8757, %v8342
      %v8822 = vsel %vm7507, %v8758, %v8344
      %v8823 = vsel %vm7507, %v8759, %v8346
      %v8824 = vsel %vm7507, %v8760, %v8348
      %v8825 = vsel %vm7507, %v8761, %v8350
      %v8826 = vsel %vm7507, %v8762, %v8352
      %v8827 = vsel %vm7507, %v8763, %v8354
      %v8828 = vsel %vm7507, %v8764, %v8356
      %v8829 = vsel %vm7507, %v8765, %v8358
      %v8830 = vsel %vm7507, %v8766, %v8360
      %v8831 = vsel %vm7507, %v8767, %v8362
      %v8832 = vsel %vm7507, %v8768, %v8364
      %v8833 = vsel %vm7507, %v8769, %v8366
      %v8834 = vsel %vm7507, %v8770, %v8368
      %v8835 = vsel %vm7507, %v8771, %v8370
      %v8836 = vsel %vm7507, %v8772, %v8372
      %v8837 = vsel %vm7507, %v8773, %v8374
      %v8838 = vsel %vm7507, %v8774, %v8376
      %v8839 = vsel %vm7507, %v8775, %v8378
      %v8840 = vsel %vm7507, %v8776, %v8380
      %v8841 = vsel %vm7507, %v8777, %v8382
      %v8842 = vsel %vm7507, %v8778, %v8384
      %v8843 = vsel %vm7507, %v8779, %v8386
      %v8844 = vsel %vm7507, %v8780, %v8388
      %v8845 = vsel %vm7507, %v8781, %v8390
      %v8846 = vsel %vm7507, %v8782, %v8392
      %v8847 = vsel %vm7507, %v8783, %v8394
      %v8848 = vsel %vm7507, %v8784, %v8396
      %v8849 = vsel %vm7507, %v8785, %v8398
      %v8850 = vsel %vm7507, %v8786, %v8400
      %v8851 = vsel %vm7507, %v8787, %v8402
      %v8852 = vsel %vm7507, %v8788, %v8404
      %v8853 = vsel %vm7572, %v8789, %v7894
      %v8854 = vsel %vm7572, %v8790, %v7896
      %v8855 = vsel %vm7572, %v8791, %v7898
      %v8856 = vsel %vm7572, %v8792, %v7900
      %v8857 = vsel %vm7572, %v8793, %v7902
      %v8858 = vsel %vm7572, %v8794, %v7904
      %v8859 = vsel %vm7572, %v8795, %v7906
      %v8860 = vsel %vm7572, %v8796, %v7908
      %v8861 = vsel %vm7572, %v8797, %v7910
      %v8862 = vsel %vm7572, %v8798, %v7912
      %v8863 = vsel %vm7572, %v8799, %v7914
      %v8864 = vsel %vm7572, %v8800, %v7916
      %v8865 = vsel %vm7572, %v8801, %v7918
      %v8866 = vsel %vm7572, %v8802, %v7920
      %v8867 = vsel %vm7572, %v8803, %v7922
      %v8868 = vsel %vm7572, %v8804, %v7924
      %v8869 = vsel %vm7572, %v8805, %v7926
      %v8870 = vsel %vm7572, %v8806, %v7928
      %v8871 = vsel %vm7572, %v8807, %v7930
      %v8872 = vsel %vm7572, %v8808, %v7932
      %v8873 = vsel %vm7572, %v8809, %v7934
      %v8874 = vsel %vm7572, %v8810, %v7936
      %v8875 = vsel %vm7572, %v8811, %v7938
      %v8876 = vsel %vm7572, %v8812, %v7940
      %v8877 = vsel %vm7572, %v8813, %v7942
      %v8878 = vsel %vm7572, %v8814, %v7944
      %v8879 = vsel %vm7572, %v8815, %v7946
      %v8880 = vsel %vm7572, %v8816, %v7948
      %v8881 = vsel %vm7572, %v8817, %v7950
      %v8882 = vsel %vm7572, %v8818, %v7952
      %v8883 = vsel %vm7572, %v8819, %v7954
      %v8884 = vsel %vm7572, %v8820, %v7956
      %v8885 = vsel %vm7572, %v8821, %v7958
      %v8886 = vsel %vm7572, %v8822, %v7960
      %v8887 = vsel %vm7572, %v8823, %v7962
      %v8888 = vsel %vm7572, %v8824, %v7964
      %v8889 = vsel %vm7572, %v8825, %v7966
      %v8890 = vsel %vm7572, %v8826, %v7968
      %v8891 = vsel %vm7572, %v8827, %v7970
      %v8892 = vsel %vm7572, %v8828, %v7972
      %v8893 = vsel %vm7572, %v8829, %v7974
      %v8894 = vsel %vm7572, %v8830, %v7976
      %v8895 = vsel %vm7572, %v8831, %v7978
      %v8896 = vsel %vm7572, %v8832, %v7980
      %v8897 = vsel %vm7572, %v8833, %v7982
      %v8898 = vsel %vm7572, %v8834, %v7984
      %v8899 = vsel %vm7572, %v8835, %v7986
      %v8900 = vsel %vm7572, %v8836, %v7988
      %v8901 = vsel %vm7572, %v8837, %v7990
      %v8902 = vsel %vm7572, %v8838, %v7992
      %v8903 = vsel %vm7572, %v8839, %v7994
      %v8904 = vsel %vm7572, %v8840, %v7996
      %v8905 = vsel %vm7572, %v8841, %v7998
      %v8906 = vsel %vm7572, %v8842, %v8000
      %v8907 = vsel %vm7572, %v8843, %v8002
      %v8908 = vsel %vm7572, %v8844, %v8004
      %v8909 = vsel %vm7572, %v8845, %v8006
      %v8910 = vsel %vm7572, %v8846, %v8008
      %v8911 = vsel %vm7572, %v8847, %v8010
      %v8912 = vsel %vm7572, %v8848, %v8012
      %v8913 = vsel %vm7572, %v8849, %v8014
      %v8914 = vsel %vm7572, %v8850, %v8016
      %v8915 = vsel %vm7572, %v8851, %v8018
      %v8916 = vsel %vm7572, %v8852, %v8020
      %v8917 = vmul.f32 %v7573, %v8853
      %v8918 = vmul.f32 %v7574, %v8854
      %v8919 = vmul.f32 %v7575, %v8855
      %v8920 = vmul.f32 %v7576, %v8856
      %v8921 = vmul.f32 %v7577, %v8857
      %v8922 = vmul.f32 %v7578, %v8858
      %v8923 = vmul.f32 %v7579, %v8859
      %v8924 = vmul.f32 %v7580, %v8860
      %v8925 = vmul.f32 %v7581, %v8861
      %v8926 = vmul.f32 %v7582, %v8862
      %v8927 = vmul.f32 %v7583, %v8863
      %v8928 = vmul.f32 %v7584, %v8864
      %v8929 = vmul.f32 %v7585, %v8865
      %v8930 = vmul.f32 %v7586, %v8866
      %v8931 = vmul.f32 %v7587, %v8867
      %v8932 = vmul.f32 %v7588, %v8868
      %v8933 = vmul.f32 %v7589, %v8869
      %v8934 = vmul.f32 %v7590, %v8870
      %v8935 = vmul.f32 %v7591, %v8871
      %v8936 = vmul.f32 %v7592, %v8872
      %v8937 = vmul.f32 %v7593, %v8873
      %v8938 = vmul.f32 %v7594, %v8874
      %v8939 = vmul.f32 %v7595, %v8875
      %v8940 = vmul.f32 %v7596, %v8876
      %v8941 = vmul.f32 %v7597, %v8877
      %v8942 = vmul.f32 %v7598, %v8878
      %v8943 = vmul.f32 %v7599, %v8879
      %v8944 = vmul.f32 %v7600, %v8880
      %v8945 = vmul.f32 %v7601, %v8881
      %v8946 = vmul.f32 %v7602, %v8882
      %v8947 = vmul.f32 %v7603, %v8883
      %v8948 = vmul.f32 %v7604, %v8884
      %v8949 = vmul.f32 %v7605, %v8885
      %v8950 = vmul.f32 %v7606, %v8886
      %v8951 = vmul.f32 %v7607, %v8887
      %v8952 = vmul.f32 %v7608, %v8888
      %v8953 = vmul.f32 %v7609, %v8889
      %v8954 = vmul.f32 %v7610, %v8890
      %v8955 = vmul.f32 %v7611, %v8891
      %v8956 = vmul.f32 %v7612, %v8892
      %v8957 = vmul.f32 %v7613, %v8893
      %v8958 = vmul.f32 %v7614, %v8894
      %v8959 = vmul.f32 %v7615, %v8895
      %v8960 = vmul.f32 %v7616, %v8896
      %v8961 = vmul.f32 %v7617, %v8897
      %v8962 = vmul.f32 %v7618, %v8898
      %v8963 = vmul.f32 %v7619, %v8899
      %v8964 = vmul.f32 %v7620, %v8900
      %v8965 = vmul.f32 %v7621, %v8901
      %v8966 = vmul.f32 %v7622, %v8902
      %v8967 = vmul.f32 %v7623, %v8903
      %v8968 = vmul.f32 %v7624, %v8904
      %v8969 = vmul.f32 %v7625, %v8905
      %v8970 = vmul.f32 %v7626, %v8906
      %v8971 = vmul.f32 %v7627, %v8907
      %v8972 = vmul.f32 %v7628, %v8908
      %v8973 = vmul.f32 %v7629, %v8909
      %v8974 = vmul.f32 %v7630, %v8910
      %v8975 = vmul.f32 %v7631, %v8911
      %v8976 = vmul.f32 %v7632, %v8912
      %v8977 = vmul.f32 %v7633, %v8913
      %v8978 = vmul.f32 %v7634, %v8914
      %v8979 = vmul.f32 %v7635, %v8915
      %v8980 = vmul.f32 %v7636, %v8916
      %v8981 = vld [vmem:[%s4] sm:$0xff]
      %v8982 = vld [vmem:[%s4 + $0x8] sm:$0xff]
      %v8983 = vld [vmem:[%s4 + $0x10] sm:$0xff]
      %v8984 = vld [vmem:[%s4 + $0x18] sm:$0xff]
      %v8985 = vld [vmem:[%s4 + $0x20] sm:$0xff]
      %v8986 = vld [vmem:[%s4 + $0x28] sm:$0xff]
      %v8987 = vld [vmem:[%s4 + $0x30] sm:$0xff]
      %v8988 = vld [vmem:[%s4 + $0x38] sm:$0xff]
      %vm8989 = vcmask 523264
      %v8991 = vsel %vm8989, %v8917, 0
      %v8994 = vsel %vm8989, %v8918, 0
      %v8997 = vsel %vm8989, %v8919, 0
      %v9000 = vsel %vm8989, %v8920, 0
      %v9003 = vsel %vm8989, %v8921, 0
      %v9006 = vsel %vm8989, %v8922, 0
      %v9009 = vsel %vm8989, %v8923, 0
      %v9012 = vsel %vm8989, %v8924, 0
      %v9015 = vsel %vm8989, %v8925, 0
      %v9018 = vsel %vm8989, %v8926, 0
      %v9021 = vsel %vm8989, %v8927, 0
      %v9024 = vsel %vm8989, %v8928, 0
      %v9027 = vsel %vm8989, %v8929, 0
      %v9030 = vsel %vm8989, %v8930, 0
      %v9033 = vsel %vm8989, %v8931, 0
      %v9036 = vsel %vm8989, %v8932, 0
      %v9039 = vsel %vm8989, %v8933, 0
      %v9042 = vsel %vm8989, %v8934, 0
      %v9045 = vsel %vm8989, %v8935, 0
      %v9048 = vsel %vm8989, %v8936, 0
      %v9051 = vsel %vm8989, %v8937, 0
      %v9054 = vsel %vm8989, %v8938, 0
      %v9057 = vsel %vm8989, %v8939, 0
      %v9060 = vsel %vm8989, %v8940, 0
      %v9063 = vsel %vm8989, %v8941, 0
      %v9066 = vsel %vm8989, %v8942, 0
      %v9069 = vsel %vm8989, %v8943, 0
      %v9072 = vsel %vm8989, %v8944, 0
      %v9075 = vsel %vm8989, %v8945, 0
      %v9078 = vsel %vm8989, %v8946, 0
      %v9081 = vsel %vm8989, %v8947, 0
      %v9084 = vsel %vm8989, %v8948, 0
      %v9087 = vsel %vm8989, %v8949, 0
      %v9090 = vsel %vm8989, %v8950, 0
      %v9093 = vsel %vm8989, %v8951, 0
      %v9096 = vsel %vm8989, %v8952, 0
      %v9099 = vsel %vm8989, %v8953, 0
      %v9102 = vsel %vm8989, %v8954, 0
      %v9105 = vsel %vm8989, %v8955, 0
      %v9108 = vsel %vm8989, %v8956, 0
      %v9111 = vsel %vm8989, %v8957, 0
      %v9114 = vsel %vm8989, %v8958, 0
      %v9117 = vsel %vm8989, %v8959, 0
      %v9120 = vsel %vm8989, %v8960, 0
      %v9123 = vsel %vm8989, %v8961, 0
      %v9126 = vsel %vm8989, %v8962, 0
      %v9129 = vsel %vm8989, %v8963, 0
      %v9132 = vsel %vm8989, %v8964, 0
      %v9135 = vsel %vm8989, %v8965, 0
      %v9138 = vsel %vm8989, %v8966, 0
      %v9141 = vsel %vm8989, %v8967, 0
      %v9144 = vsel %vm8989, %v8968, 0
      %v9147 = vsel %vm8989, %v8969, 0
      %v9150 = vsel %vm8989, %v8970, 0
      %v9153 = vsel %vm8989, %v8971, 0
      %v9156 = vsel %vm8989, %v8972, 0
      %v9159 = vsel %vm8989, %v8973, 0
      %v9162 = vsel %vm8989, %v8974, 0
      %v9165 = vsel %vm8989, %v8975, 0
      %v9168 = vsel %vm8989, %v8976, 0
      %v9171 = vsel %vm8989, %v8977, 0
      %v9174 = vsel %vm8989, %v8978, 0
      %v9177 = vsel %vm8989, %v8979, 0
      %v9180 = vsel %vm8989, %v8980, 0
      %9182 = vmatprep.subr.mxu0 0.0
      %9183 = vmatpush1.msra.mxu0 %v8981
      %9184 = vmatprep.subr.mxu0 0.0
      %9185 = vmatpush1.msra.mxu0 %v8982
      %9186 = vmatprep.subr.mxu0 0.0
      %9187 = vmatpush1.msra.mxu0 %v8983
      %9188 = vmatprep.subr.mxu0 0.0
      %9189 = vmatpush1.msra.mxu0 %v8984
      %9190 = vmatprep.subr.mxu0 0.0
      %9191 = vmatpush1.msra.mxu0 %v8985
      %9192 = vmatprep.subr.mxu0 0.0
      %9193 = vmatpush1.msra.mxu0 %v8986
      %9194 = vmatprep.subr.mxu0 0.0
      %9195 = vmatpush1.msra.mxu0 %v8987
      %9196 = vmatprep.subr.mxu0 0.0
      %9197 = vmatpush1.msra.mxu0 %v8988
      %9198 = vmatprep.subr.mxu0 0.0
      %9199 = vmatpush1.msra.mxu0 0.0
      %9200 = vmatprep.subr.mxu0 0.0
      %9201 = vmatpush1.msra.mxu0 0.0
      %9202 = vmatprep.subr.mxu0 0.0
      %9203 = vmatpush1.msra.mxu0 0.0
      %9204 = vmatprep.subr.mxu0 0.0
      %9205 = vmatpush1.msra.mxu0 0.0
      %9206 = vmatprep.subr.mxu0 0.0
      %9207 = vmatpush1.msra.mxu0 0.0
      %9208 = vmatprep.subr.mxu0 0.0
      %9209 = vmatpush1.msra.mxu0 0.0
      %9210 = vmatprep.subr.mxu0 0.0
      %9211 = vmatpush1.msra.mxu0 0.0
      %9212 = vmatprep.subr.mxu0 0.0
      %9213 = vmatpush1.msra.mxu0 0.0
      %9214 = vmatprep.subr.mxu0 0.0
      %9215 = vmatpush1.msra.mxu0 0.0
      %9216 = vmatprep.subr.mxu0 0.0
      %9217 = vmatpush1.msra.mxu0 0.0
      %9218 = vmatprep.subr.mxu0 0.0
      %9219 = vmatpush1.msra.mxu0 0.0
      %9220 = vmatprep.subr.mxu0 0.0
      %9221 = vmatpush1.msra.mxu0 0.0
      %9222 = vmatprep.subr.mxu0 0.0
      %9223 = vmatpush1.msra.mxu0 0.0
      %9224 = vmatprep.subr.mxu0 0.0
      %9225 = vmatpush1.msra.mxu0 0.0
      %9226 = vmatprep.subr.mxu0 0.0
      %9227 = vmatpush1.msra.mxu0 0.0
      %9228 = vmatprep.subr.mxu0 0.0
      %9229 = vmatpush1.msra.mxu0 0.0
      %9230 = vmatprep.subr.mxu0 0.0
      %9231 = vmatpush1.msra.mxu0 0.0
      %9232 = vmatprep.subr.mxu0 0.0
      %9233 = vmatpush1.msra.mxu0 0.0
      %9234 = vmatprep.subr.mxu0 0.0
      %9235 = vmatpush1.msra.mxu0 0.0
      %9236 = vmatprep.subr.mxu0 0.0
      %9237 = vmatpush1.msra.mxu0 0.0
      %9238 = vmatprep.subr.mxu0 0.0
      %9239 = vmatpush1.msra.mxu0 0.0
      %9240 = vmatprep.subr.mxu0 0.0
      %9241 = vmatpush1.msra.mxu0 0.0
      %9242 = vmatprep.subr.mxu0 0.0
      %9243 = vmatpush1.msra.mxu0 0.0
      %9244 = vmatprep.subr.mxu0 0.0
      %9245 = vmatpush1.msra.mxu0 0.0
      %9246 = vmatprep.mubr.f32.mxu0 0.0
      %9247 = vmatmul.mubr.f32.gmra.mrb[0].mxu0 %v8991
      %v9248 = vpop.f32.mrb[0].mxu0
      %v9249 = vadd.f32 0.0, %v9248
      %v9250 = vpop.f32.mrb[0].mxu0
      %9251 = vmatprep.mubr.f32.mxu0 0.0
      %9252 = vmatmul.mubr.f32.gmra.mrb[0].mxu0 %v8994
      %v9253 = vpop.f32.mrb[0].mxu0
      %v9254 = vadd.f32 0.0, %v9253
      %v9255 = vpop.f32.mrb[0].mxu0
      %9256 = vmatprep.mubr.f32.mxu0 0.0
      %9257 = vmatmul.mubr.f32.gmra.mrb[0].mxu0 %v8997
      %v9258 = vpop.f32.mrb[0].mxu0
      %v9259 = vadd.f32 0.0, %v9258
      %v9260 = vpop.f32.mrb[0].mxu0
      %9261 = vmatprep.mubr.f32.mxu0 0.0
      %9262 = vmatmul.mubr.f32.gmra.mrb[0].mxu0 %v9000
      %v9263 = vpop.f32.mrb[0].mxu0
      %v9264 = vadd.f32 0.0, %v9263
      %v9265 = vpop.f32.mrb[0].mxu0
      %9266 = vmatprep.mubr.f32.mxu0 0.0
      %9267 = vmatmul.mubr.f32.gmra.mrb[0].mxu0 %v9003
      %v9268 = vpop.f32.mrb[0].mxu0
      %v9269 = vadd.f32 0.0, %v9268
      %v9270 = vpop.f32.mrb[0].mxu0
      %9271 = vmatprep.mubr.f32.mxu0 0.0
      %9272 = vmatmul.mubr.f32.gmra.mrb[0].mxu0 %v9006
      %v9273 = vpop.f32.mrb[0].mxu0
      %v9274 = vadd.f32 0.0, %v9273
      %v9275 = vpop.f32.mrb[0].mxu0
      %9276 = vmatprep.mubr.f32.mxu0 0.0
      %9277 = vmatmul.mubr.f32.gmra.mrb[0].mxu0 %v9009
      %v9278 = vpop.f32.mrb[0].mxu0
      %v9279 = vadd.f32 0.0, %v9278
      %v9280 = vpop.f32.mrb[0].mxu0
      %9281 = vmatprep.mubr.f32.mxu0 0.0
      %9282 = vmatmul.mubr.f32.gmra.mrb[0].mxu0 %v9012
      %v9283 = vpop.f32.mrb[0].mxu0
      %v9284 = vadd.f32 0.0, %v9283
      %v9285 = vpop.f32.mrb[0].mxu0
      %9286 = vmatprep.mubr.f32.mxu0 0.0
      %9287 = vmatmul.mubr.f32.gmra.mrb[0].mxu0 %v9015
      %v9288 = vpop.f32.mrb[0].mxu0
      %v9289 = vadd.f32 0.0, %v9288
      %v9290 = vpop.f32.mrb[0].mxu0
      %9291 = vmatprep.mubr.f32.mxu0 0.0
      %9292 = vmatmul.mubr.f32.gmra.mrb[0].mxu0 %v9018
      %v9293 = vpop.f32.mrb[0].mxu0
      %v9294 = vadd.f32 0.0, %v9293
      %v9295 = vpop.f32.mrb[0].mxu0
      %9296 = vmatprep.mubr.f32.mxu0 0.0
      %9297 = vmatmul.mubr.f32.gmra.mrb[0].mxu0 %v9021
      %v9298 = vpop.f32.mrb[0].mxu0
      %v9299 = vadd.f32 0.0, %v9298
      %v9300 = vpop.f32.mrb[0].mxu0
      %9301 = vmatprep.mubr.f32.mxu0 0.0
      %9302 = vmatmul.mubr.f32.gmra.mrb[0].mxu0 %v9024
      %v9303 = vpop.f32.mrb[0].mxu0
      %v9304 = vadd.f32 0.0, %v9303
      %v9305 = vpop.f32.mrb[0].mxu0
      %9306 = vmatprep.mubr.f32.mxu0 0.0
      %9307 = vmatmul.mubr.f32.gmra.mrb[0].mxu0 %v9027
      %v9308 = vpop.f32.mrb[0].mxu0
      %v9309 = vadd.f32 0.0, %v9308
      %v9310 = vpop.f32.mrb[0].mxu0
      %9311 = vmatprep.mubr.f32.mxu0 0.0
      %9312 = vmatmul.mubr.f32.gmra.mrb[0].mxu0 %v9030
      %v9313 = vpop.f32.mrb[0].mxu0
      %v9314 = vadd.f32 0.0, %v9313
      %v9315 = vpop.f32.mrb[0].mxu0
      %9316 = vmatprep.mubr.f32.mxu0 0.0
      %9317 = vmatmul.mubr.f32.gmra.mrb[0].mxu0 %v9033
      %v9318 = vpop.f32.mrb[0].mxu0
      %v9319 = vadd.f32 0.0, %v9318
      %v9320 = vpop.f32.mrb[0].mxu0
      %9321 = vmatprep.mubr.f32.mxu0 0.0
      %9322 = vmatmul.mubr.f32.gmra.mrb[0].mxu0 %v9036
      %v9323 = vpop.f32.mrb[0].mxu0
      %v9324 = vadd.f32 0.0, %v9323
      %v9325 = vpop.f32.mrb[0].mxu0
      %9326 = vmatprep.mubr.f32.mxu0 0.0
      %9327 = vmatmul.mubr.f32.gmra.mrb[0].mxu0 %v9039
      %v9328 = vpop.f32.mrb[0].mxu0
      %v9329 = vadd.f32 0.0, %v9328
      %v9330 = vpop.f32.mrb[0].mxu0
      %9331 = vmatprep.mubr.f32.mxu0 0.0
      %9332 = vmatmul.mubr.f32.gmra.mrb[0].mxu0 %v9042
      %v9333 = vpop.f32.mrb[0].mxu0
      %v9334 = vadd.f32 0.0, %v9333
      %v9335 = vpop.f32.mrb[0].mxu0
      %9336 = vmatprep.mubr.f32.mxu0 0.0
      %9337 = vmatmul.mubr.f32.gmra.mrb[0].mxu0 %v9045
      %v9338 = vpop.f32.mrb[0].mxu0
      %v9339 = vadd.f32 0.0, %v9338
      %v9340 = vpop.f32.mrb[0].mxu0
      %9341 = vmatprep.mubr.f32.mxu0 0.0
      %9342 = vmatmul.mubr.f32.gmra.mrb[0].mxu0 %v9048
      %v9343 = vpop.f32.mrb[0].mxu0
      %v9344 = vadd.f32 0.0, %v9343
      %v9345 = vpop.f32.mrb[0].mxu0
      %9346 = vmatprep.mubr.f32.mxu0 0.0
      %9347 = vmatmul.mubr.f32.gmra.mrb[0].mxu0 %v9051
      %v9348 = vpop.f32.mrb[0].mxu0
      %v9349 = vadd.f32 0.0, %v9348
      %v9350 = vpop.f32.mrb[0].mxu0
      %9351 = vmatprep.mubr.f32.mxu0 0.0
      %9352 = vmatmul.mubr.f32.gmra.mrb[0].mxu0 %v9054
      %v9353 = vpop.f32.mrb[0].mxu0
      %v9354 = vadd.f32 0.0, %v9353
      %v9355 = vpop.f32.mrb[0].mxu0
      %9356 = vmatprep.mubr.f32.mxu0 0.0
      %9357 = vmatmul.mubr.f32.gmra.mrb[0].mxu0 %v9057
      %v9358 = vpop.f32.mrb[0].mxu0
      %v9359 = vadd.f32 0.0, %v9358
      %v9360 = vpop.f32.mrb[0].mxu0
      %9361 = vmatprep.mubr.f32.mxu0 0.0
      %9362 = vmatmul.mubr.f32.gmra.mrb[0].mxu0 %v9060
      %v9363 = vpop.f32.mrb[0].mxu0
      %v9364 = vadd.f32 0.0, %v9363
      %v9365 = vpop.f32.mrb[0].mxu0
      %9366 = vmatprep.mubr.f32.mxu0 0.0
      %9367 = vmatmul.mubr.f32.gmra.mrb[0].mxu0 %v9063
      %v9368 = vpop.f32.mrb[0].mxu0
      %v9369 = vadd.f32 0.0, %v9368
      %v9370 = vpop.f32.mrb[0].mxu0
      %9371 = vmatprep.mubr.f32.mxu0 0.0
      %9372 = vmatmul.mubr.f32.gmra.mrb[0].mxu0 %v9066
      %v9373 = vpop.f32.mrb[0].mxu0
      %v9374 = vadd.f32 0.0, %v9373
      %v9375 = vpop.f32.mrb[0].mxu0
      %9376 = vmatprep.mubr.f32.mxu0 0.0
      %9377 = vmatmul.mubr.f32.gmra.mrb[0].mxu0 %v9069
      %v9378 = vpop.f32.mrb[0].mxu0
      %v9379 = vadd.f32 0.0, %v9378
      %v9380 = vpop.f32.mrb[0].mxu0
      %9381 = vmatprep.mubr.f32.mxu0 0.0
      %9382 = vmatmul.mubr.f32.gmra.mrb[0].mxu0 %v9072
      %v9383 = vpop.f32.mrb[0].mxu0
      %v9384 = vadd.f32 0.0, %v9383
      %v9385 = vpop.f32.mrb[0].mxu0
      %9386 = vmatprep.mubr.f32.mxu0 0.0
      %9387 = vmatmul.mubr.f32.gmra.mrb[0].mxu0 %v9075
      %v9388 = vpop.f32.mrb[0].mxu0
      %v9389 = vadd.f32 0.0, %v9388
      %v9390 = vpop.f32.mrb[0].mxu0
      %9391 = vmatprep.mubr.f32.mxu0 0.0
      %9392 = vmatmul.mubr.f32.gmra.mrb[0].mxu0 %v9078
      %v9393 = vpop.f32.mrb[0].mxu0
      %v9394 = vadd.f32 0.0, %v9393
      %v9395 = vpop.f32.mrb[0].mxu0
      %9396 = vmatprep.mubr.f32.mxu0 0.0
      %9397 = vmatmul.mubr.f32.gmra.mrb[0].mxu0 %v9081
      %v9398 = vpop.f32.mrb[0].mxu0
      %v9399 = vadd.f32 0.0, %v9398
      %v9400 = vpop.f32.mrb[0].mxu0
      %9401 = vmatprep.mubr.f32.mxu0 0.0
      %9402 = vmatmul.mubr.f32.gmra.mrb[0].mxu0 %v9084
      %v9403 = vpop.f32.mrb[0].mxu0
      %v9404 = vadd.f32 0.0, %v9403
      %v9405 = vpop.f32.mrb[0].mxu0
      %9406 = vmatprep.mubr.f32.mxu0 0.0
      %9407 = vmatmul.mubr.f32.gmra.mrb[0].mxu0 %v9087
      %v9408 = vpop.f32.mrb[0].mxu0
      %v9409 = vadd.f32 0.0, %v9408
      %v9410 = vpop.f32.mrb[0].mxu0
      %9411 = vmatprep.mubr.f32.mxu0 0.0
      %9412 = vmatmul.mubr.f32.gmra.mrb[0].mxu0 %v9090
      %v9413 = vpop.f32.mrb[0].mxu0
      %v9414 = vadd.f32 0.0, %v9413
      %v9415 = vpop.f32.mrb[0].mxu0
      %9416 = vmatprep.mubr.f32.mxu0 0.0
      %9417 = vmatmul.mubr.f32.gmra.mrb[0].mxu0 %v9093
      %v9418 = vpop.f32.mrb[0].mxu0
      %v9419 = vadd.f32 0.0, %v9418
      %v9420 = vpop.f32.mrb[0].mxu0
      %9421 = vmatprep.mubr.f32.mxu0 0.0
      %9422 = vmatmul.mubr.f32.gmra.mrb[0].mxu0 %v9096
      %v9423 = vpop.f32.mrb[0].mxu0
      %v9424 = vadd.f32 0.0, %v9423
      %v9425 = vpop.f32.mrb[0].mxu0
      %9426 = vmatprep.mubr.f32.mxu0 0.0
      %9427 = vmatmul.mubr.f32.gmra.mrb[0].mxu0 %v9099
      %v9428 = vpop.f32.mrb[0].mxu0
      %v9429 = vadd.f32 0.0, %v9428
      %v9430 = vpop.f32.mrb[0].mxu0
      %9431 = vmatprep.mubr.f32.mxu0 0.0
      %9432 = vmatmul.mubr.f32.gmra.mrb[0].mxu0 %v9102
      %v9433 = vpop.f32.mrb[0].mxu0
      %v9434 = vadd.f32 0.0, %v9433
      %v9435 = vpop.f32.mrb[0].mxu0
      %9436 = vmatprep.mubr.f32.mxu0 0.0
      %9437 = vmatmul.mubr.f32.gmra.mrb[0].mxu0 %v9105
      %v9438 = vpop.f32.mrb[0].mxu0
      %v9439 = vadd.f32 0.0, %v9438
      %v9440 = vpop.f32.mrb[0].mxu0
      %9441 = vmatprep.mubr.f32.mxu0 0.0
      %9442 = vmatmul.mubr.f32.gmra.mrb[0].mxu0 %v9108
      %v9443 = vpop.f32.mrb[0].mxu0
      %v9444 = vadd.f32 0.0, %v9443
      %v9445 = vpop.f32.mrb[0].mxu0
      %9446 = vmatprep.mubr.f32.mxu0 0.0
      %9447 = vmatmul.mubr.f32.gmra.mrb[0].mxu0 %v9111
      %v9448 = vpop.f32.mrb[0].mxu0
      %v9449 = vadd.f32 0.0, %v9448
      %v9450 = vpop.f32.mrb[0].mxu0
      %9451 = vmatprep.mubr.f32.mxu0 0.0
      %9452 = vmatmul.mubr.f32.gmra.mrb[0].mxu0 %v9114
      %v9453 = vpop.f32.mrb[0].mxu0
      %v9454 = vadd.f32 0.0, %v9453
      %v9455 = vpop.f32.mrb[0].mxu0
      %9456 = vmatprep.mubr.f32.mxu0 0.0
      %9457 = vmatmul.mubr.f32.gmra.mrb[0].mxu0 %v9117
      %v9458 = vpop.f32.mrb[0].mxu0
      %v9459 = vadd.f32 0.0, %v9458
      %v9460 = vpop.f32.mrb[0].mxu0
      %9461 = vmatprep.mubr.f32.mxu0 0.0
      %9462 = vmatmul.mubr.f32.gmra.mrb[0].mxu0 %v9120
      %v9463 = vpop.f32.mrb[0].mxu0
      %v9464 = vadd.f32 0.0, %v9463
      %v9465 = vpop.f32.mrb[0].mxu0
      %9466 = vmatprep.mubr.f32.mxu0 0.0
      %9467 = vmatmul.mubr.f32.gmra.mrb[0].mxu0 %v9123
      %v9468 = vpop.f32.mrb[0].mxu0
      %v9469 = vadd.f32 0.0, %v9468
      %v9470 = vpop.f32.mrb[0].mxu0
      %9471 = vmatprep.mubr.f32.mxu0 0.0
      %9472 = vmatmul.mubr.f32.gmra.mrb[0].mxu0 %v9126
      %v9473 = vpop.f32.mrb[0].mxu0
      %v9474 = vadd.f32 0.0, %v9473
      %v9475 = vpop.f32.mrb[0].mxu0
      %9476 = vmatprep.mubr.f32.mxu0 0.0
      %9477 = vmatmul.mubr.f32.gmra.mrb[0].mxu0 %v9129
      %v9478 = vpop.f32.mrb[0].mxu0
      %v9479 = vadd.f32 0.0, %v9478
      %v9480 = vpop.f32.mrb[0].mxu0
      %9481 = vmatprep.mubr.f32.mxu0 0.0
      %9482 = vmatmul.mubr.f32.gmra.mrb[0].mxu0 %v9132
      %v9483 = vpop.f32.mrb[0].mxu0
      %v9484 = vadd.f32 0.0, %v9483
      %v9485 = vpop.f32.mrb[0].mxu0
      %9486 = vmatprep.mubr.f32.mxu0 0.0
      %9487 = vmatmul.mubr.f32.gmra.mrb[0].mxu0 %v9135
      %v9488 = vpop.f32.mrb[0].mxu0
      %v9489 = vadd.f32 0.0, %v9488
      %v9490 = vpop.f32.mrb[0].mxu0
      %9491 = vmatprep.mubr.f32.mxu0 0.0
      %9492 = vmatmul.mubr.f32.gmra.mrb[0].mxu0 %v9138
      %v9493 = vpop.f32.mrb[0].mxu0
      %v9494 = vadd.f32 0.0, %v9493
      %v9495 = vpop.f32.mrb[0].mxu0
      %9496 = vmatprep.mubr.f32.mxu0 0.0
      %9497 = vmatmul.mubr.f32.gmra.mrb[0].mxu0 %v9141
      %v9498 = vpop.f32.mrb[0].mxu0
      %v9499 = vadd.f32 0.0, %v9498
      %v9500 = vpop.f32.mrb[0].mxu0
      %9501 = vmatprep.mubr.f32.mxu0 0.0
      %9502 = vmatmul.mubr.f32.gmra.mrb[0].mxu0 %v9144
      %v9503 = vpop.f32.mrb[0].mxu0
      %v9504 = vadd.f32 0.0, %v9503
      %v9505 = vpop.f32.mrb[0].mxu0
      %9506 = vmatprep.mubr.f32.mxu0 0.0
      %9507 = vmatmul.mubr.f32.gmra.mrb[0].mxu0 %v9147
      %v9508 = vpop.f32.mrb[0].mxu0
      %v9509 = vadd.f32 0.0, %v9508
      %v9510 = vpop.f32.mrb[0].mxu0
      %9511 = vmatprep.mubr.f32.mxu0 0.0
      %9512 = vmatmul.mubr.f32.gmra.mrb[0].mxu0 %v9150
      %v9513 = vpop.f32.mrb[0].mxu0
      %v9514 = vadd.f32 0.0, %v9513
      %v9515 = vpop.f32.mrb[0].mxu0
      %9516 = vmatprep.mubr.f32.mxu0 0.0
      %9517 = vmatmul.mubr.f32.gmra.mrb[0].mxu0 %v9153
      %v9518 = vpop.f32.mrb[0].mxu0
      %v9519 = vadd.f32 0.0, %v9518
      %v9520 = vpop.f32.mrb[0].mxu0
      %9521 = vmatprep.mubr.f32.mxu0 0.0
      %9522 = vmatmul.mubr.f32.gmra.mrb[0].mxu0 %v9156
      %v9523 = vpop.f32.mrb[0].mxu0
      %v9524 = vadd.f32 0.0, %v9523
      %v9525 = vpop.f32.mrb[0].mxu0
      %9526 = vmatprep.mubr.f32.mxu0 0.0
      %9527 = vmatmul.mubr.f32.gmra.mrb[0].mxu0 %v9159
      %v9528 = vpop.f32.mrb[0].mxu0
      %v9529 = vadd.f32 0.0, %v9528
      %v9530 = vpop.f32.mrb[0].mxu0
      %9531 = vmatprep.mubr.f32.mxu0 0.0
      %9532 = vmatmul.mubr.f32.gmra.mrb[0].mxu0 %v9162
      %v9533 = vpop.f32.mrb[0].mxu0
      %v9534 = vadd.f32 0.0, %v9533
      %v9535 = vpop.f32.mrb[0].mxu0
      %9536 = vmatprep.mubr.f32.mxu0 0.0
      %9537 = vmatmul.mubr.f32.gmra.mrb[0].mxu0 %v9165
      %v9538 = vpop.f32.mrb[0].mxu0
      %v9539 = vadd.f32 0.0, %v9538
      %v9540 = vpop.f32.mrb[0].mxu0
      %9541 = vmatprep.mubr.f32.mxu0 0.0
      %9542 = vmatmul.mubr.f32.gmra.mrb[0].mxu0 %v9168
      %v9543 = vpop.f32.mrb[0].mxu0
      %v9544 = vadd.f32 0.0, %v9543
      %v9545 = vpop.f32.mrb[0].mxu0
      %9546 = vmatprep.mubr.f32.mxu0 0.0
      %9547 = vmatmul.mubr.f32.gmra.mrb[0].mxu0 %v9171
      %v9548 = vpop.f32.mrb[0].mxu0
      %v9549 = vadd.f32 0.0, %v9548
      %v9550 = vpop.f32.mrb[0].mxu0
      %9551 = vmatprep.mubr.f32.mxu0 0.0
      %9552 = vmatmul.mubr.f32.gmra.mrb[0].mxu0 %v9174
      %v9553 = vpop.f32.mrb[0].mxu0
      %v9554 = vadd.f32 0.0, %v9553
      %v9555 = vpop.f32.mrb[0].mxu0
      %9556 = vmatprep.mubr.f32.mxu0 0.0
      %9557 = vmatmul.mubr.f32.gmra.mrb[0].mxu0 %v9177
      %v9558 = vpop.f32.mrb[0].mxu0
      %v9559 = vadd.f32 0.0, %v9558
      %v9560 = vpop.f32.mrb[0].mxu0
      %9561 = vmatprep.mubr.f32.mxu0 0.0
      %9562 = vmatmul.mubr.f32.gmra.mrb[0].mxu0 %v9180
      %v9563 = vpop.f32.mrb[0].mxu0
      %v9564 = vadd.f32 0.0, %v9563
      %v9565 = vpop.f32.mrb[0].mxu0
      %9566 = vdwg.mxu0
      %v9567 = vpack.c.bf16 %v9254, %v9249
      %v9568 = vpack.c.bf16 %v9264, %v9259
      %v9569 = vpack.c.bf16 %v9274, %v9269
      %v9570 = vpack.c.bf16 %v9284, %v9279
      %v9571 = vpack.c.bf16 %v9294, %v9289
      %v9572 = vpack.c.bf16 %v9304, %v9299
      %v9573 = vpack.c.bf16 %v9314, %v9309
      %v9574 = vpack.c.bf16 %v9324, %v9319
      %v9575 = vpack.c.bf16 %v9334, %v9329
      %v9576 = vpack.c.bf16 %v9344, %v9339
      %v9577 = vpack.c.bf16 %v9354, %v9349
      %v9578 = vpack.c.bf16 %v9364, %v9359
      %v9579 = vpack.c.bf16 %v9374, %v9369
      %v9580 = vpack.c.bf16 %v9384, %v9379
      %v9581 = vpack.c.bf16 %v9394, %v9389
      %v9582 = vpack.c.bf16 %v9404, %v9399
      %v9583 = vpack.c.bf16 %v9414, %v9409
      %v9584 = vpack.c.bf16 %v9424, %v9419
      %v9585 = vpack.c.bf16 %v9434, %v9429
      %v9586 = vpack.c.bf16 %v9444, %v9439
      %v9587 = vpack.c.bf16 %v9454, %v9449
      %v9588 = vpack.c.bf16 %v9464, %v9459
      %v9589 = vpack.c.bf16 %v9474, %v9469
      %v9590 = vpack.c.bf16 %v9484, %v9479
      %v9591 = vpack.c.bf16 %v9494, %v9489
      %v9592 = vpack.c.bf16 %v9504, %v9499
      %v9593 = vpack.c.bf16 %v9514, %v9509
      %v9594 = vpack.c.bf16 %v9524, %v9519
      %v9595 = vpack.c.bf16 %v9534, %v9529
      %v9596 = vpack.c.bf16 %v9544, %v9539
      %v9597 = vpack.c.bf16 %v9554, %v9549
      %v9598 = vpack.c.bf16 %v9564, %v9559
      %v9599 = vunpack.c.l.bf16 %v9567
      %v9600 = vunpack.c.h.bf16 %v9567
      %v9601 = vunpack.c.l.bf16 %v9568
      %v9602 = vunpack.c.h.bf16 %v9568
      %v9603 = vunpack.c.l.bf16 %v9569
      %v9604 = vunpack.c.h.bf16 %v9569
      %v9605 = vunpack.c.l.bf16 %v9570
      %v9606 = vunpack.c.h.bf16 %v9570
      %v9607 = vunpack.c.l.bf16 %v9571
      %v9608 = vunpack.c.h.bf16 %v9571
      %v9609 = vunpack.c.l.bf16 %v9572
      %v9610 = vunpack.c.h.bf16 %v9572
      %v9611 = vunpack.c.l.bf16 %v9573
      %v9612 = vunpack.c.h.bf16 %v9573
      %v9613 = vunpack.c.l.bf16 %v9574
      %v9614 = vunpack.c.h.bf16 %v9574
      %v9615 = vunpack.c.l.bf16 %v9575
      %v9616 = vunpack.c.h.bf16 %v9575
      %v9617 = vunpack.c.l.bf16 %v9576
      %v9618 = vunpack.c.h.bf16 %v9576
      %v9619 = vunpack.c.l.bf16 %v9577
      %v9620 = vunpack.c.h.bf16 %v9577
      %v9621 = vunpack.c.l.bf16 %v9578
      %v9622 = vunpack.c.h.bf16 %v9578
      %v9623 = vunpack.c.l.bf16 %v9579
      %v9624 = vunpack.c.h.bf16 %v9579
      %v9625 = vunpack.c.l.bf16 %v9580
      %v9626 = vunpack.c.h.bf16 %v9580
      %v9627 = vunpack.c.l.bf16 %v9581
      %v9628 = vunpack.c.h.bf16 %v9581
      %v9629 = vunpack.c.l.bf16 %v9582
      %v9630 = vunpack.c.h.bf16 %v9582
      %v9631 = vunpack.c.l.bf16 %v9583
      %v9632 = vunpack.c.h.bf16 %v9583
      %v9633 = vunpack.c.l.bf16 %v9584
      %v9634 = vunpack.c.h.bf16 %v9584
      %v9635 = vunpack.c.l.bf16 %v9585
      %v9636 = vunpack.c.h.bf16 %v9585
      %v9637 = vunpack.c.l.bf16 %v9586
      %v9638 = vunpack.c.h.bf16 %v9586
      %v9639 = vunpack.c.l.bf16 %v9587
      %v9640 = vunpack.c.h.bf16 %v9587
      %v9641 = vunpack.c.l.bf16 %v9588
      %v9642 = vunpack.c.h.bf16 %v9588
      %v9643 = vunpack.c.l.bf16 %v9589
      %v9644 = vunpack.c.h.bf16 %v9589
      %v9645 = vunpack.c.l.bf16 %v9590
      %v9646 = vunpack.c.h.bf16 %v9590
      %v9647 = vunpack.c.l.bf16 %v9591
      %v9648 = vunpack.c.h.bf16 %v9591
      %v9649 = vunpack.c.l.bf16 %v9592
      %v9650 = vunpack.c.h.bf16 %v9592
      %v9651 = vunpack.c.l.bf16 %v9593
      %v9652 = vunpack.c.h.bf16 %v9593
      %v9653 = vunpack.c.l.bf16 %v9594
      %v9654 = vunpack.c.h.bf16 %v9594
      %v9655 = vunpack.c.l.bf16 %v9595
      %v9656 = vunpack.c.h.bf16 %v9595
      %v9657 = vunpack.c.l.bf16 %v9596
      %v9658 = vunpack.c.h.bf16 %v9596
      %v9659 = vunpack.c.l.bf16 %v9597
      %v9660 = vunpack.c.h.bf16 %v9597
      %v9661 = vunpack.c.l.bf16 %v9598
      %v9662 = vunpack.c.h.bf16 %v9598
      %v9663 = vsub.f32 %v9249, %v9599
      %v9664 = vsub.f32 %v9254, %v9600
      %v9665 = vsub.f32 %v9259, %v9601
      %v9666 = vsub.f32 %v9264, %v9602
      %v9667 = vsub.f32 %v9269, %v9603
      %v9668 = vsub.f32 %v9274, %v9604
      %v9669 = vsub.f32 %v9279, %v9605
      %v9670 = vsub.f32 %v9284, %v9606
      %v9671 = vsub.f32 %v9289, %v9607
      %v9672 = vsub.f32 %v9294, %v9608
      %v9673 = vsub.f32 %v9299, %v9609
      %v9674 = vsub.f32 %v9304, %v9610
      %v9675 = vsub.f32 %v9309, %v9611
      %v9676 = vsub.f32 %v9314, %v9612
      %v9677 = vsub.f32 %v9319, %v9613
      %v9678 = vsub.f32 %v9324, %v9614
      %v9679 = vsub.f32 %v9329, %v9615
      %v9680 = vsub.f32 %v9334, %v9616
      %v9681 = vsub.f32 %v9339, %v9617
      %v9682 = vsub.f32 %v9344, %v9618
      %v9683 = vsub.f32 %v9349, %v9619
      %v9684 = vsub.f32 %v9354, %v9620
      %v9685 = vsub.f32 %v9359, %v9621
      %v9686 = vsub.f32 %v9364, %v9622
      %v9687 = vsub.f32 %v9369, %v9623
      %v9688 = vsub.f32 %v9374, %v9624
      %v9689 = vsub.f32 %v9379, %v9625
      %v9690 = vsub.f32 %v9384, %v9626
      %v9691 = vsub.f32 %v9389, %v9627
      %v9692 = vsub.f32 %v9394, %v9628
      %v9693 = vsub.f32 %v9399, %v9629
      %v9694 = vsub.f32 %v9404, %v9630
      %v9695 = vsub.f32 %v9409, %v9631
      %v9696 = vsub.f32 %v9414, %v9632
      %v9697 = vsub.f32 %v9419, %v9633
      %v9698 = vsub.f32 %v9424, %v9634
      %v9699 = vsub.f32 %v9429, %v9635
      %v9700 = vsub.f32 %v9434, %v9636
      %v9701 = vsub.f32 %v9439, %v9637
      %v9702 = vsub.f32 %v9444, %v9638
      %v9703 = vsub.f32 %v9449, %v9639
      %v9704 = vsub.f32 %v9454, %v9640
      %v9705 = vsub.f32 %v9459, %v9641
      %v9706 = vsub.f32 %v9464, %v9642
      %v9707 = vsub.f32 %v9469, %v9643
      %v9708 = vsub.f32 %v9474, %v9644
      %v9709 = vsub.f32 %v9479, %v9645
      %v9710 = vsub.f32 %v9484, %v9646
      %v9711 = vsub.f32 %v9489, %v9647
      %v9712 = vsub.f32 %v9494, %v9648
      %v9713 = vsub.f32 %v9499, %v9649
      %v9714 = vsub.f32 %v9504, %v9650
      %v9715 = vsub.f32 %v9509, %v9651
      %v9716 = vsub.f32 %v9514, %v9652
      %v9717 = vsub.f32 %v9519, %v9653
      %v9718 = vsub.f32 %v9524, %v9654
      %v9719 = vsub.f32 %v9529, %v9655
      %v9720 = vsub.f32 %v9534, %v9656
      %v9721 = vsub.f32 %v9539, %v9657
      %v9722 = vsub.f32 %v9544, %v9658
      %v9723 = vsub.f32 %v9549, %v9659
      %v9724 = vsub.f32 %v9554, %v9660
      %v9725 = vsub.f32 %v9559, %v9661
      %v9726 = vsub.f32 %v9564, %v9662
      %v9727 = vpack.c.bf16 %v9664, %v9663
      %v9728 = vpack.c.bf16 %v9666, %v9665
      %v9729 = vpack.c.bf16 %v9668, %v9667
      %v9730 = vpack.c.bf16 %v9670, %v9669
      %v9731 = vpack.c.bf16 %v9672, %v9671
      %v9732 = vpack.c.bf16 %v9674, %v9673
      %v9733 = vpack.c.bf16 %v9676, %v9675
      %v9734 = vpack.c.bf16 %v9678, %v9677
      %v9735 = vpack.c.bf16 %v9680, %v9679
      %v9736 = vpack.c.bf16 %v9682, %v9681
      %v9737 = vpack.c.bf16 %v9684, %v9683
      %v9738 = vpack.c.bf16 %v9686, %v9685
      %v9739 = vpack.c.bf16 %v9688, %v9687
      %v9740 = vpack.c.bf16 %v9690, %v9689
      %v9741 = vpack.c.bf16 %v9692, %v9691
      %v9742 = vpack.c.bf16 %v9694, %v9693
      %v9743 = vpack.c.bf16 %v9696, %v9695
      %v9744 = vpack.c.bf16 %v9698, %v9697
      %v9745 = vpack.c.bf16 %v9700, %v9699
      %v9746 = vpack.c.bf16 %v9702, %v9701
      %v9747 = vpack.c.bf16 %v9704, %v9703
      %v9748 = vpack.c.bf16 %v9706, %v9705
      %v9749 = vpack.c.bf16 %v9708, %v9707
      %v9750 = vpack.c.bf16 %v9710, %v9709
      %v9751 = vpack.c.bf16 %v9712, %v9711
      %v9752 = vpack.c.bf16 %v9714, %v9713
      %v9753 = vpack.c.bf16 %v9716, %v9715
      %v9754 = vpack.c.bf16 %v9718, %v9717
      %v9755 = vpack.c.bf16 %v9720, %v9719
      %v9756 = vpack.c.bf16 %v9722, %v9721
      %v9757 = vpack.c.bf16 %v9724, %v9723
      %v9758 = vpack.c.bf16 %v9726, %v9725
      %9791 = vrot.lane.b32.xlu0 %v9727, 32
      %v9792 = vpop.permute.xlu0 %9791
      %9793 = vrot.lane.b32.xlu0 %v9728, 32
      %v9794 = vpop.permute.xlu0 %9793
      %9795 = vrot.lane.b32.xlu0 %v9729, 32
      %v9796 = vpop.permute.xlu0 %9795
      %9797 = vrot.lane.b32.xlu0 %v9730, 32
      %v9798 = vpop.permute.xlu0 %9797
      %9799 = vrot.lane.b32.xlu0 %v9731, 32
      %v9800 = vpop.permute.xlu0 %9799
      %9801 = vrot.lane.b32.xlu0 %v9732, 32
      %v9802 = vpop.permute.xlu0 %9801
      %9803 = vrot.lane.b32.xlu0 %v9733, 32
      %v9804 = vpop.permute.xlu0 %9803
      %9805 = vrot.lane.b32.xlu0 %v9734, 32
      %v9806 = vpop.permute.xlu0 %9805
      %9807 = vrot.lane.b32.xlu0 %v9735, 32
      %v9808 = vpop.permute.xlu0 %9807
      %9809 = vrot.lane.b32.xlu0 %v9736, 32
      %v9810 = vpop.permute.xlu0 %9809
      %9811 = vrot.lane.b32.xlu0 %v9737, 32
      %v9812 = vpop.permute.xlu0 %9811
      %9813 = vrot.lane.b32.xlu0 %v9738, 32
      %v9814 = vpop.permute.xlu0 %9813
      %9815 = vrot.lane.b32.xlu0 %v9739, 32
      %v9816 = vpop.permute.xlu0 %9815
      %9817 = vrot.lane.b32.xlu0 %v9740, 32
      %v9818 = vpop.permute.xlu0 %9817
      %9819 = vrot.lane.b32.xlu0 %v9741, 32
      %v9820 = vpop.permute.xlu0 %9819
      %9821 = vrot.lane.b32.xlu0 %v9742, 32
      %v9822 = vpop.permute.xlu0 %9821
      %9823 = vrot.lane.b32.xlu0 %v9743, 32
      %v9824 = vpop.permute.xlu0 %9823
      %9825 = vrot.lane.b32.xlu0 %v9744, 32
      %v9826 = vpop.permute.xlu0 %9825
      %9827 = vrot.lane.b32.xlu0 %v9745, 32
      %v9828 = vpop.permute.xlu0 %9827
      %9829 = vrot.lane.b32.xlu0 %v9746, 32
      %v9830 = vpop.permute.xlu0 %9829
      %9831 = vrot.lane.b32.xlu0 %v9747, 32
      %v9832 = vpop.permute.xlu0 %9831
      %9833 = vrot.lane.b32.xlu0 %v9748, 32
      %v9834 = vpop.permute.xlu0 %9833
      %9835 = vrot.lane.b32.xlu0 %v9749, 32
      %v9836 = vpop.permute.xlu0 %9835
      %9837 = vrot.lane.b32.xlu0 %v9750, 32
      %v9838 = vpop.permute.xlu0 %9837
      %9839 = vrot.lane.b32.xlu0 %v9751, 32
      %v9840 = vpop.permute.xlu0 %9839
      %9841 = vrot.lane.b32.xlu0 %v9752, 32
      %v9842 = vpop.permute.xlu0 %9841
      %9843 = vrot.lane.b32.xlu0 %v9753, 32
      %v9844 = vpop.permute.xlu0 %9843
      %9845 = vrot.lane.b32.xlu0 %v9754, 32
      %v9846 = vpop.permute.xlu0 %9845
      %9847 = vrot.lane.b32.xlu0 %v9755, 32
      %v9848 = vpop.permute.xlu0 %9847
      %9849 = vrot.lane.b32.xlu0 %v9756, 32
      %v9850 = vpop.permute.xlu0 %9849
      %9851 = vrot.lane.b32.xlu0 %v9757, 32
      %v9852 = vpop.permute.xlu0 %9851
      %9853 = vrot.lane.b32.xlu0 %v9758, 32
      %v9854 = vpop.permute.xlu0 %9853
      %v9857 = vsel %vm7377, %v9567, %v9792
      %v9860 = vsel %vm7377, %v9568, %v9794
      %v9863 = vsel %vm7377, %v9569, %v9796
      %v9866 = vsel %vm7377, %v9570, %v9798
      %v9869 = vsel %vm7377, %v9571, %v9800
      %v9872 = vsel %vm7377, %v9572, %v9802
      %v9875 = vsel %vm7377, %v9573, %v9804
      %v9878 = vsel %vm7377, %v9574, %v9806
      %v9881 = vsel %vm7377, %v9575, %v9808
      %v9884 = vsel %vm7377, %v9576, %v9810
      %v9887 = vsel %vm7377, %v9577, %v9812
      %v9890 = vsel %vm7377, %v9578, %v9814
      %v9893 = vsel %vm7377, %v9579, %v9816
      %v9896 = vsel %vm7377, %v9580, %v9818
      %v9899 = vsel %vm7377, %v9581, %v9820
      %v9902 = vsel %vm7377, %v9582, %v9822
      %v9905 = vsel %vm7377, %v9583, %v9824
      %v9908 = vsel %vm7377, %v9584, %v9826
      %v9911 = vsel %vm7377, %v9585, %v9828
      %v9914 = vsel %vm7377, %v9586, %v9830
      %v9917 = vsel %vm7377, %v9587, %v9832
      %v9920 = vsel %vm7377, %v9588, %v9834
      %v9923 = vsel %vm7377, %v9589, %v9836
      %v9926 = vsel %vm7377, %v9590, %v9838
      %v9929 = vsel %vm7377, %v9591, %v9840
      %v9932 = vsel %vm7377, %v9592, %v9842
      %v9935 = vsel %vm7377, %v9593, %v9844
      %v9938 = vsel %vm7377, %v9594, %v9846
      %v9941 = vsel %vm7377, %v9595, %v9848
      %v9944 = vsel %vm7377, %v9596, %v9850
      %v9947 = vsel %vm7377, %v9597, %v9852
      %v9950 = vsel %vm7377, %v9598, %v9854
      %v9983 = vunpack.c.l.b16 %v9857
      %v9984 = vunpack.c.h.b16 %v9857
      %v9985 = vunpack.c.l.b16 %v9860
      %v9986 = vunpack.c.h.b16 %v9860
      %v9987 = vunpack.c.l.b16 %v9863
      %v9988 = vunpack.c.h.b16 %v9863
      %v9989 = vunpack.c.l.b16 %v9866
      %v9990 = vunpack.c.h.b16 %v9866
      %v9991 = vunpack.c.l.b16 %v9869
      %v9992 = vunpack.c.h.b16 %v9869
      %v9993 = vunpack.c.l.b16 %v9872
      %v9994 = vunpack.c.h.b16 %v9872
      %v9995 = vunpack.c.l.b16 %v9875
      %v9996 = vunpack.c.h.b16 %v9875
      %v9997 = vunpack.c.l.b16 %v9878
      %v9998 = vunpack.c.h.b16 %v9878
      %v9999 = vunpack.c.l.b16 %v9881
      %v10000 = vunpack.c.h.b16 %v9881
      %v10001 = vunpack.c.l.b16 %v9884
      %v10002 = vunpack.c.h.b16 %v9884
      %v10003 = vunpack.c.l.b16 %v9887
      %v10004 = vunpack.c.h.b16 %v9887
      %v10005 = vunpack.c.l.b16 %v9890
      %v10006 = vunpack.c.h.b16 %v9890
      %v10007 = vunpack.c.l.b16 %v9893
      %v10008 = vunpack.c.h.b16 %v9893
      %v10009 = vunpack.c.l.b16 %v9896
      %v10010 = vunpack.c.h.b16 %v9896
      %v10011 = vunpack.c.l.b16 %v9899
      %v10012 = vunpack.c.h.b16 %v9899
      %v10013 = vunpack.c.l.b16 %v9902
      %v10014 = vunpack.c.h.b16 %v9902
      %v10015 = vunpack.c.l.b16 %v9905
      %v10016 = vunpack.c.h.b16 %v9905
      %v10017 = vunpack.c.l.b16 %v9908
      %v10018 = vunpack.c.h.b16 %v9908
      %v10019 = vunpack.c.l.b16 %v9911
      %v10020 = vunpack.c.h.b16 %v9911
      %v10021 = vunpack.c.l.b16 %v9914
      %v10022 = vunpack.c.h.b16 %v9914
      %v10023 = vunpack.c.l.b16 %v9917
      %v10024 = vunpack.c.h.b16 %v9917
      %v10025 = vunpack.c.l.b16 %v9920
      %v10026 = vunpack.c.h.b16 %v9920
      %v10027 = vunpack.c.l.b16 %v9923
      %v10028 = vunpack.c.h.b16 %v9923
      %v10029 = vunpack.c.l.b16 %v9926
      %v10030 = vunpack.c.h.b16 %v9926
      %v10031 = vunpack.c.l.b16 %v9929
      %v10032 = vunpack.c.h.b16 %v9929
      %v10033 = vunpack.c.l.b16 %v9932
      %v10034 = vunpack.c.h.b16 %v9932
      %v10035 = vunpack.c.l.b16 %v9935
      %v10036 = vunpack.c.h.b16 %v9935
      %v10037 = vunpack.c.l.b16 %v9938
      %v10038 = vunpack.c.h.b16 %v9938
      %v10039 = vunpack.c.l.b16 %v9941
      %v10040 = vunpack.c.h.b16 %v9941
      %v10041 = vunpack.c.l.b16 %v9944
      %v10042 = vunpack.c.h.b16 %v9944
      %v10043 = vunpack.c.l.b16 %v9947
      %v10044 = vunpack.c.h.b16 %v9947
      %v10045 = vunpack.c.l.b16 %v9950
      %v10046 = vunpack.c.h.b16 %v9950
      %v10047 = vpack.c.b16 %v9983, %v9983
      %v10048 = vpack.c.b16 %v9984, %v9984
      %v10049 = vpack.c.b16 %v9985, %v9985
      %v10050 = vpack.c.b16 %v9986, %v9986
      %v10051 = vpack.c.b16 %v9987, %v9987
      %v10052 = vpack.c.b16 %v9988, %v9988
      %v10053 = vpack.c.b16 %v9989, %v9989
      %v10054 = vpack.c.b16 %v9990, %v9990
      %v10055 = vpack.c.b16 %v9991, %v9991
      %v10056 = vpack.c.b16 %v9992, %v9992
      %v10057 = vpack.c.b16 %v9993, %v9993
      %v10058 = vpack.c.b16 %v9994, %v9994
      %v10059 = vpack.c.b16 %v9995, %v9995
      %v10060 = vpack.c.b16 %v9996, %v9996
      %v10061 = vpack.c.b16 %v9997, %v9997
      %v10062 = vpack.c.b16 %v9998, %v9998
      %v10063 = vpack.c.b16 %v9999, %v9999
      %v10064 = vpack.c.b16 %v10000, %v10000
      %v10065 = vpack.c.b16 %v10001, %v10001
      %v10066 = vpack.c.b16 %v10002, %v10002
      %v10067 = vpack.c.b16 %v10003, %v10003
      %v10068 = vpack.c.b16 %v10004, %v10004
      %v10069 = vpack.c.b16 %v10005, %v10005
      %v10070 = vpack.c.b16 %v10006, %v10006
      %v10071 = vpack.c.b16 %v10007, %v10007
      %v10072 = vpack.c.b16 %v10008, %v10008
      %v10073 = vpack.c.b16 %v10009, %v10009
      %v10074 = vpack.c.b16 %v10010, %v10010
      %v10075 = vpack.c.b16 %v10011, %v10011
      %v10076 = vpack.c.b16 %v10012, %v10012
      %v10077 = vpack.c.b16 %v10013, %v10013
      %v10078 = vpack.c.b16 %v10014, %v10014
      %v10079 = vpack.c.b16 %v10015, %v10015
      %v10080 = vpack.c.b16 %v10016, %v10016
      %v10081 = vpack.c.b16 %v10017, %v10017
      %v10082 = vpack.c.b16 %v10018, %v10018
      %v10083 = vpack.c.b16 %v10019, %v10019
      %v10084 = vpack.c.b16 %v10020, %v10020
      %v10085 = vpack.c.b16 %v10021, %v10021
      %v10086 = vpack.c.b16 %v10022, %v10022
      %v10087 = vpack.c.b16 %v10023, %v10023
      %v10088 = vpack.c.b16 %v10024, %v10024
      %v10089 = vpack.c.b16 %v10025, %v10025
      %v10090 = vpack.c.b16 %v10026, %v10026
      %v10091 = vpack.c.b16 %v10027, %v10027
      %v10092 = vpack.c.b16 %v10028, %v10028
      %v10093 = vpack.c.b16 %v10029, %v10029
      %v10094 = vpack.c.b16 %v10030, %v10030
      %v10095 = vpack.c.b16 %v10031, %v10031
      %v10096 = vpack.c.b16 %v10032, %v10032
      %v10097 = vpack.c.b16 %v10033, %v10033
      %v10098 = vpack.c.b16 %v10034, %v10034
      %v10099 = vpack.c.b16 %v10035, %v10035
      %v10100 = vpack.c.b16 %v10036, %v10036
      %v10101 = vpack.c.b16 %v10037, %v10037
      %v10102 = vpack.c.b16 %v10038, %v10038
      %v10103 = vpack.c.b16 %v10039, %v10039
      %v10104 = vpack.c.b16 %v10040, %v10040
      %v10105 = vpack.c.b16 %v10041, %v10041
      %v10106 = vpack.c.b16 %v10042, %v10042
      %v10107 = vpack.c.b16 %v10043, %v10043
      %v10108 = vpack.c.b16 %v10044, %v10044
      %v10109 = vpack.c.b16 %v10045, %v10045
      %v10110 = vpack.c.b16 %v10046, %v10046
      %vm10175 = vcmask 519168
      %10176 = vst.msk [vmem:[%s226] sm:$0xf] %vm10175, %v10047
      %10177 = vst.msk [vmem:[%s226 + $0x4] sm:$0xf] %vm10175, %v10048
      %10178 = vst.msk [vmem:[%s226 + $0x8] sm:$0xf] %vm10175, %v10049
      %10179 = vst.msk [vmem:[%s226 + $0xc] sm:$0xf] %vm10175, %v10050
      %10180 = vst.msk [vmem:[%s226 + $0x10] sm:$0xf] %vm10175, %v10051
      %10181 = vst.msk [vmem:[%s226 + $0x14] sm:$0xf] %vm10175, %v10052
      %10182 = vst.msk [vmem:[%s226 + $0x18] sm:$0xf] %vm10175, %v10053
      %10183 = vst.msk [vmem:[%s226 + $0x1c] sm:$0xf] %vm10175, %v10054
      %10184 = vst.msk [vmem:[%s226 + $0x20] sm:$0xf] %vm10175, %v10055
      %10185 = vst.msk [vmem:[%s226 + $0x24] sm:$0xf] %vm10175, %v10056
      %10186 = vst.msk [vmem:[%s226 + $0x28] sm:$0xf] %vm10175, %v10057
      %10187 = vst.msk [vmem:[%s226 + $0x2c] sm:$0xf] %vm10175, %v10058
      %10188 = vst.msk [vmem:[%s226 + $0x30] sm:$0xf] %vm10175, %v10059
      %10189 = vst.msk [vmem:[%s226 + $0x34] sm:$0xf] %vm10175, %v10060
      %10190 = vst.msk [vmem:[%s226 + $0x38] sm:$0xf] %vm10175, %v10061
      %10191 = vst.msk [vmem:[%s226 + $0x3c] sm:$0xf] %vm10175, %v10062
      %10192 = vst.msk [vmem:[%s226 + $0x40] sm:$0xf] %vm10175, %v10063
      %10193 = vst.msk [vmem:[%s226 + $0x44] sm:$0xf] %vm10175, %v10064
      %10194 = vst.msk [vmem:[%s226 + $0x48] sm:$0xf] %vm10175, %v10065
      %10195 = vst.msk [vmem:[%s226 + $0x4c] sm:$0xf] %vm10175, %v10066
      %10196 = vst.msk [vmem:[%s226 + $0x50] sm:$0xf] %vm10175, %v10067
      %10197 = vst.msk [vmem:[%s226 + $0x54] sm:$0xf] %vm10175, %v10068
      %10198 = vst.msk [vmem:[%s226 + $0x58] sm:$0xf] %vm10175, %v10069
      %10199 = vst.msk [vmem:[%s226 + $0x5c] sm:$0xf] %vm10175, %v10070
      %10200 = vst.msk [vmem:[%s226 + $0x60] sm:$0xf] %vm10175, %v10071
      %10201 = vst.msk [vmem:[%s226 + $0x64] sm:$0xf] %vm10175, %v10072
      %10202 = vst.msk [vmem:[%s226 + $0x68] sm:$0xf] %vm10175, %v10073
      %10203 = vst.msk [vmem:[%s226 + $0x6c] sm:$0xf] %vm10175, %v10074
      %10204 = vst.msk [vmem:[%s226 + $0x70] sm:$0xf] %vm10175, %v10075
      %10205 = vst.msk [vmem:[%s226 + $0x74] sm:$0xf] %vm10175, %v10076
      %10206 = vst.msk [vmem:[%s226 + $0x78] sm:$0xf] %vm10175, %v10077
      %10207 = vst.msk [vmem:[%s226 + $0x7c] sm:$0xf] %vm10175, %v10078
      %10208 = vst.msk [vmem:[%s226 + $0x80] sm:$0xf] %vm10175, %v10079
      %10209 = vst.msk [vmem:[%s226 + $0x84] sm:$0xf] %vm10175, %v10080
      %10210 = vst.msk [vmem:[%s226 + $0x88] sm:$0xf] %vm10175, %v10081
      %10211 = vst.msk [vmem:[%s226 + $0x8c] sm:$0xf] %vm10175, %v10082
      %10212 = vst.msk [vmem:[%s226 + $0x90] sm:$0xf] %vm10175, %v10083
      %10213 = vst.msk [vmem:[%s226 + $0x94] sm:$0xf] %vm10175, %v10084
      %10214 = vst.msk [vmem:[%s226 + $0x98] sm:$0xf] %vm10175, %v10085
      %10215 = vst.msk [vmem:[%s226 + $0x9c] sm:$0xf] %vm10175, %v10086
      %10216 = vst.msk [vmem:[%s226 + $0xa0] sm:$0xf] %vm10175, %v10087
      %10217 = vst.msk [vmem:[%s226 + $0xa4] sm:$0xf] %vm10175, %v10088
      %10218 = vst.msk [vmem:[%s226 + $0xa8] sm:$0xf] %vm10175, %v10089
      %10219 = vst.msk [vmem:[%s226 + $0xac] sm:$0xf] %vm10175, %v10090
      %10220 = vst.msk [vmem:[%s226 + $0xb0] sm:$0xf] %vm10175, %v10091
      %10221 = vst.msk [vmem:[%s226 + $0xb4] sm:$0xf] %vm10175, %v10092
      %10222 = vst.msk [vmem:[%s226 + $0xb8] sm:$0xf] %vm10175, %v10093
      %10223 = vst.msk [vmem:[%s226 + $0xbc] sm:$0xf] %vm10175, %v10094
      %10224 = vst.msk [vmem:[%s226 + $0xc0] sm:$0xf] %vm10175, %v10095
      %10225 = vst.msk [vmem:[%s226 + $0xc4] sm:$0xf] %vm10175, %v10096
      %10226 = vst.msk [vmem:[%s226 + $0xc8] sm:$0xf] %vm10175, %v10097
      %10227 = vst.msk [vmem:[%s226 + $0xcc] sm:$0xf] %vm10175, %v10098
      %10228 = vst.msk [vmem:[%s226 + $0xd0] sm:$0xf] %vm10175, %v10099
      %10229 = vst.msk [vmem:[%s226 + $0xd4] sm:$0xf] %vm10175, %v10100
      %10230 = vst.msk [vmem:[%s226 + $0xd8] sm:$0xf] %vm10175, %v10101
      %10231 = vst.msk [vmem:[%s226 + $0xdc] sm:$0xf] %vm10175, %v10102
      %10232 = vst.msk [vmem:[%s226 + $0xe0] sm:$0xf] %vm10175, %v10103
      %10233 = vst.msk [vmem:[%s226 + $0xe4] sm:$0xf] %vm10175, %v10104
      %10234 = vst.msk [vmem:[%s226 + $0xe8] sm:$0xf] %vm10175, %v10105
      %10235 = vst.msk [vmem:[%s226 + $0xec] sm:$0xf] %vm10175, %v10106
      %10236 = vst.msk [vmem:[%s226 + $0xf0] sm:$0xf] %vm10175, %v10107
      %10237 = vst.msk [vmem:[%s226 + $0xf4] sm:$0xf] %vm10175, %v10108
      %10238 = vst.msk [vmem:[%s226 + $0xf8] sm:$0xf] %vm10175, %v10109
      %10239 = vst.msk [vmem:[%s226 + $0xfc] sm:$0xf] %vm10175, %v10110
      %s10240 = smul.u32 64, %s16
      %p10241 = scmp.lt.s32.totalorder %s10240, 127
      %s10242 = scalar_select %p10241, %s10240, 127
      %s10243 = smul.addr %s10242, 4
      %s10244 = scalar_lea.vmem %s5, %s10243
      // Predicated region
      $region41: #{tpu_custom_call.1} parent=39 // pred_check
        %p10245 = pneg %p144
      $region42: #{tpu_custom_call.1} parent=39 // pred_check_branch
        %10247 = sbr.rel (%p10245) target = $region44
      $region43: #{tpu_custom_call.1} parent=39 // pred_region
        %s10248 = smul.u32 64, %s16
      $region44: #{tpu_custom_call.1} parent=39 // pred_fallthru
        _
    $region40: #{tpu_custom_call.1} parent=5 // pred_fallthru
      _
    %p10249 = scmp.le.s32.totalorder 2, %s11
    // Predicated region
    $region45: #{tpu_custom_call.1} parent=5 // pred_check
      %p10250 = pneg %p10249
    $region46: #{tpu_custom_call.1} parent=5 // pred_check_branch
      %10252 = sbr.rel (%p10250) target = $region48
    $region47: #{tpu_custom_call.1} parent=5 // pred_region
      %s10253 = ssub.s32 %s11, 2
      // Predicated region
      $region49: #{tpu_custom_call.1} parent=47 // pred_check
        %p10254 = pneg %p150
      $region50: #{tpu_custom_call.1} parent=47 // pred_check_branch
        %10256 = sbr.rel (%p10254) target = $region52
      $region51: #{tpu_custom_call.1} parent=47 // pred_region
        %s10257 = smul.u32 64, %s17
        %p10258 = scmp.lt.s32.totalorder %s10257, 127
        %s10259 = scalar_select %p10258, %s10257, 127
        %s10260 = smul.addr %s10259, 4
        %s10261 = scalar_lea.vmem %s5, %s10260
      $region52: #{tpu_custom_call.1} parent=47 // pred_fallthru
        _
    $region48: #{tpu_custom_call.1} parent=5 // pred_fallthru
      _
  $region6: #{tpu_custom_call.1} parent=0 // loop_footer
    %s15 = sadd.s32 1, %s11
  $region7: #{tpu_custom_call.1} parent=0 // loop_footer_branch
    %10 = sbr.rel target = $region3
  $region8: #{tpu_custom_call.1} parent=0 // loop_exit
    _

</llo_original>
